<compile_context>
chip_gen: v7x
topology: tpu7x:2x2x1
jax: 0.10.0
libtpu: 0.0.40
codegen_flags: <defaults>
</compile_context>

<pallas_src>
import functools

import jax
import jax.numpy as jnp
from jax.experimental import pallas as pl
from jax.experimental.pallas import tpu as pltpu


# -----------------------------------------------------------------------------
# Fused Inception kernel
# -----------------------------------------------------------------------------
def _inception_kernel(x_ref, wred_ref, bred_ref, wbig_ref, bbig_ref, out_ref,
                      xpool_ref, p3_ref, p5_ref, patch_ref,
                      *, H, W, Cin, c3r, c5r):
    """One image per grid step.

    x_ref    : (1, H, W, Cin)        f32   NHWC input tile
    wred_ref : (Cin, c3r + c5r)      bf16  fused 1x1 reduce weights (b2red|b3red)
    bred_ref : (1, c3r + c5r)        f32
    wbig_ref : (Ktot, Cpad)          bf16  packed im2col weights, all 4 branches
    bbig_ref : (1, Cpad)             f32
    out_ref  : (1, H*W, Cpad)        f32   lane-dense fused output
    scratch  : xpool (-inf padded x), p3/p5 (zero-padded reduce outputs),
               patch (H*W, Ktot) fused im2col buffer.
    """
    HW = H * W
    x = x_ref[0]                                   # (H, W, Cin) f32
    x_flat = x.reshape(HW, Cin)

    # ---- fused 1x1 reduce convs for branch2/branch3 (shared LHS, one matmul)
    y_red = jnp.dot(x_flat.astype(jnp.bfloat16), wred_ref[...],
                    preferred_element_type=jnp.float32)
    y_red = jnp.maximum(y_red + bred_ref[...], 0.0)          # (HW, c3r+c5r)
    y3 = y_red[:, :c3r].reshape(H, W, c3r)                   # branch2 reduce
    y5 = y_red[:, c3r:].reshape(H, W, c5r)                   # branch3 reduce

    # ---- zero-padded intermediates stay resident in VMEM scratch -----------
    p3_ref[...] = jnp.zeros_like(p3_ref)
    p3_ref[1:H + 1, 1:W + 1, :] = y3
    p5_ref[...] = jnp.zeros_like(p5_ref)
    p5_ref[2:H + 2, 2:W + 2, :] = y5

    # ---- 3x3 maxpool, stride 1, pad 1 (separable, -inf border in scratch) --
    xpool_ref[...] = jnp.full_like(xpool_ref, -jnp.inf)
    xpool_ref[1:H + 1, 1:W + 1, :] = x
    rows = jnp.maximum(
        jnp.maximum(xpool_ref[0:H, :, :], xpool_ref[1:H + 1, :, :]),
        xpool_ref[2:H + 2, :, :])                            # (H, W+2, Cin)
    pooled = jnp.maximum(
        jnp.maximum(rows[:, 0:W, :], rows[:, 1:W + 1, :]),
        rows[:, 2:W + 2, :])                                 # (H, W, Cin)

    # ---- build the fused im2col patch buffer once in VMEM ------------------
    patch_ref[:, 0:Cin] = x_flat                             # branch1 LHS
    patch_ref[:, Cin:2 * Cin] = pooled.reshape(HW, Cin)      # branch4 LHS
    col = 2 * Cin
    for dy in range(3):                                      # branch2 3x3 taps
        for dx in range(3):
            patch_ref[:, col:col + c3r] = (
                p3_ref[dy:dy + H, dx:dx + W, :].reshape(HW, c3r))
            col += c3r
    for dy in range(5):                                      # branch3 5x5 taps
        for dx in range(5):
            patch_ref[:, col:col + c5r] = (
                p5_ref[dy:dy + H, dx:dx + W, :].reshape(HW, c5r))
            col += c5r

    # ---- one MXU matmul for all four branches (disjoint output columns) ----
    acc = jnp.dot(patch_ref[...].astype(jnp.bfloat16), wbig_ref[...],
                  preferred_element_type=jnp.float32)        # (HW, Cpad) f32
    out_ref[0] = jnp.maximum(acc + bbig_ref[...], 0.0)       # bias+ReLU in f32


# -----------------------------------------------------------------------------
# Parameter init (HWIO layout) and one-time packing into the fused layout
# -----------------------------------------------------------------------------
def init_inception_params(key, in_channels, ch1x1, ch3x3red, ch3x3,
                          ch5x5red, ch5x5, pool_proj):
    def conv_params(k, kh, cin, cout):
        kw_, kb_ = jax.random.split(k)
        w = jax.random.normal(kw_, (kh, kh, cin, cout), jnp.float32) * 0.1
        b = jax.random.normal(kb_, (cout,), jnp.float32) * 0.1
        return w, b

    keys = jax.random.split(key, 6)
    return {
        "b1": conv_params(keys[0], 1, in_channels, ch1x1),
        "b2_red": conv_params(keys[1], 1, in_channels, ch3x3red),
        "b2": conv_params(keys[2], 3, ch3x3red, ch3x3),
        "b3_red": conv_params(keys[3], 1, in_channels, ch5x5red),
        "b3": conv_params(keys[4], 5, ch5x5red, ch5x5),
        "b4": conv_params(keys[5], 1, in_channels, pool_proj),
    }


def pack_inception_params(params, in_channels):
    """One-time packing of HWIO weights into the fused-kernel layout."""
    w1, b1 = params["b1"]
    w2r, b2r = params["b2_red"]
    w2, b2 = params["b2"]
    w3r, b3r = params["b3_red"]
    w3, b3 = params["b3"]
    w4, b4 = params["b4"]
    Cin = in_channels
    ch1, c3r, c3 = w1.shape[3], w2r.shape[3], w2.shape[3]
    c5r, c5, cp = w3r.shape[3], w3.shape[3], w4.shape[3]
    Ctot = ch1 + c3 + c5 + cp
    Cpad = max(128, -(-Ctot // 128) * 128)        # lane-dense (multiple of 128)

    # fused 1x1 reduce: [branch2 reduce | branch3 reduce], shared LHS x.
    wred = jnp.concatenate([w2r[0, 0], w3r[0, 0]], axis=1)   # (Cin, c3r+c5r)
    bred = jnp.concatenate([b2r, b3r]).reshape(1, -1)

    # one big (Ktot, Cpad) matmul: rows = [x | pooled | im2col3 | im2col5],
    # output columns = [branch1 | branch2 | branch3 | branch4 | zero pad].
    Ktot = 2 * Cin + 9 * c3r + 25 * c5r
    wbig = jnp.zeros((Ktot, Cpad), jnp.float32)
    bbig = jnp.zeros((Cpad,), jnp.float32)

    wbig = wbig.at[0:Cin, 0:ch1].set(w1[0, 0])               # branch1 1x1
    bbig = bbig.at[0:ch1].set(b1)
    o4 = ch1 + c3 + c5
    wbig = wbig.at[Cin:2 * Cin, o4:o4 + cp].set(w4[0, 0])    # branch4 pool-proj
    bbig = bbig.at[o4:o4 + cp].set(b4)
    row = 2 * Cin
    for dy in range(3):                                      # branch2 3x3
        for dx in range(3):
            wbig = wbig.at[row:row + c3r, ch1:ch1 + c3].set(w2[dy, dx])
            row += c3r
    bbig = bbig.at[ch1:ch1 + c3].set(b2)
    for dy in range(5):                                      # branch3 5x5
        for dx in range(5):
            wbig = wbig.at[row:row + c5r,
                           ch1 + c3:ch1 + c3 + c5].set(w3[dy, dx])
            row += c5r
    bbig = bbig.at[ch1 + c3:ch1 + c3 + c5].set(b3)

    packed = {
        "wred": wred.astype(jnp.bfloat16),
        "bred": bred,
        "wbig": wbig.astype(jnp.bfloat16),
        "bbig": bbig.reshape(1, -1),
    }
    dims = (ch1, c3r, c3, c5r, c5, cp, Ctot, Cpad)
    return packed, dims


# -----------------------------------------------------------------------------
# Forward wrapper (single pallas_call; grid over batch, "parallel")
# -----------------------------------------------------------------------------
def inception_forward(packed, x_nchw, *, dims):
    """Matches PyTorch Inception.forward: NCHW in, NCHW out (channel concat)."""
    ch1, c3r, c3, c5r, c5, cp, Ctot, Cpad = dims
    N, Cin, H, W = x_nchw.shape
    CR = c3r + c5r
    Ktot = 2 * Cin + 9 * c3r + 25 * c5r
    x = jnp.transpose(x_nchw, (0, 2, 3, 1))                  # NCHW -> NHWC

    kernel = functools.partial(_inception_kernel, H=H, W=W, Cin=Cin,
                               c3r=c3r, c5r=c5r)
    out = pl.pallas_call(
        kernel,
        out_shape=jax.ShapeDtypeStruct((N, H * W, Cpad), jnp.float32),
        grid_spec=pltpu.PrefetchScalarGridSpec(
            num_scalar_prefetch=0,
            grid=(N,),
            in_specs=[
                pl.BlockSpec((1, H, W, Cin), lambda n: (n, 0, 0, 0)),
                pl.BlockSpec((Cin, CR), lambda n: (0, 0)),
                pl.BlockSpec((1, CR), lambda n: (0, 0)),
                pl.BlockSpec((Ktot, Cpad), lambda n: (0, 0)),
                pl.BlockSpec((1, Cpad), lambda n: (0, 0)),
            ],
            out_specs=pl.BlockSpec((1, H * W, Cpad), lambda n: (n, 0, 0)),
            scratch_shapes=[
                pltpu.VMEM((H + 2, W + 2, Cin), jnp.float32),   # -inf padded x
                pltpu.VMEM((H + 2, W + 2, c3r), jnp.float32),   # padded b2red
                pltpu.VMEM((H + 4, W + 4, c5r), jnp.float32),   # padded b3red
                pltpu.VMEM((H * W, Ktot), jnp.float32),         # im2col patches
            ],
        ),
        compiler_params=pltpu.CompilerParams(
            dimension_semantics=("parallel",),
            vmem_limit_bytes=32 * 1024 * 1024,
        ),
    )(x, packed["wred"], packed["bred"], packed["wbig"], packed["bbig"])

    out = out.reshape(N, H, W, Cpad)[..., :Ctot]             # drop lane padding
    return jnp.transpose(out, (0, 3, 1, 2))                  # NHWC -> NCHW


# -----------------------------------------------------------------------------
# Pure-JAX f32 reference (correctness check only)
# -----------------------------------------------------------------------------
def _ref_conv_relu(x_nhwc, w_hwio, b, padding):
    y = jax.lax.conv_general_dilated(
        x_nhwc, w_hwio, window_strides=(1, 1),
        padding=[(padding, padding), (padding, padding)],
        dimension_numbers=("NHWC", "HWIO", "NHWC"))
    return jnp.maximum(y + b[None, None, None, :], 0.0)


def _ref_forward(params, x_nchw):
    x = jnp.transpose(x_nchw, (0, 2, 3, 1))
    b1 = _ref_conv_relu(x, *params["b1"], 0)
    b2 = _ref_conv_relu(_ref_conv_relu(x, *params["b2_red"], 0), *params["b2"], 1)
    b3 = _ref_conv_relu(_ref_conv_relu(x, *params["b3_red"], 0), *params["b3"], 2)
    pooled = jax.lax.reduce_window(
        x, -jnp.inf, jax.lax.max, (1, 3, 3, 1), (1, 1, 1, 1),
        [(0, 0), (1, 1), (1, 1), (0, 0)])
    b4 = _ref_conv_relu(pooled, *params["b4"], 0)
    out = jnp.concatenate([b1, b2, b3, b4], axis=-1)
    return jnp.transpose(out, (0, 3, 1, 2))


# -----------------------------------------------------------------------------
if __name__ == "__main__":
    key = jax.random.PRNGKey(0)
    kx, kp = jax.random.split(key)

    # Small shapes consistent with the module.
    N, Cin, H, W = 2, 4, 16, 16
    ch1x1, ch3x3red, ch3x3, ch5x5red, ch5x5, pool_proj = 8, 4, 8, 4, 8, 8

    x = jax.random.normal(kx, (N, Cin, H, W), jnp.float32)
    params = init_inception_params(
        kp, Cin, ch1x1, ch3x3red, ch3x3, ch5x5red, ch5x5, pool_proj)

    packed, dims = pack_inception_params(params, Cin)
    fwd = jax.jit(functools.partial(inception_forward, dims=dims))

    out = jax.block_until_ready(fwd(packed, x))

    expected_channels = ch1x1 + ch3x3 + ch5x5 + pool_proj
    assert out.shape == (N, expected_channels, H, W), out.shape

    ref = jax.block_until_ready(_ref_forward(params, x))
    max_err = float(jnp.max(jnp.abs(out - ref)))
    # bf16 MXU operands with f32 accumulation -> loosened tolerance.
    assert jnp.allclose(out, ref, rtol=2e-2, atol=2e-2), max_err

    print("KERNEL_OK")
</pallas_src>

<mosaic_0001>
module attributes {stable_mosaic.version = 11 : i64} {
  func.func @_inception_kernel(%arg0: i32, %arg1: memref<1x16x16x4xf32, #tpu.memory_space<vmem>>, %arg2: memref<4x8xbf16, #tpu.memory_space<vmem>>, %arg3: memref<1x8xf32, #tpu.memory_space<vmem>>, %arg4: memref<144x128xbf16, #tpu.memory_space<vmem>>, %arg5: memref<1x128xf32, #tpu.memory_space<vmem>>, %arg6: memref<1x256x128xf32, #tpu.memory_space<vmem>>, %arg7: memref<18x18x4xf32, #tpu.memory_space<vmem>>, %arg8: memref<18x18x4xf32, #tpu.memory_space<vmem>>, %arg9: memref<20x20x4xf32, #tpu.memory_space<vmem>>, %arg10: memref<256x144xf32, #tpu.memory_space<vmem>>) attributes {dimension_semantics = [#tpu.dimension_semantics<parallel>], iteration_bounds = array<i64: 2>, scalar_prefetch = 0 : i64, scratch_operands = 4 : i64, tpu.core_type = #tpu.core_type<tc>, window_params = [{transform_indices = @transform_0, window_bounds = array<i64: 1, 16, 16, 4>}, {pipeline_mode = #tpu.pipeline_mode<synchronous>, transform_indices = @transform_1, window_bounds = array<i64: 4, 8>}, {pipeline_mode = #tpu.pipeline_mode<synchronous>, transform_indices = @transform_2, window_bounds = array<i64: 1, 8>}, {pipeline_mode = #tpu.pipeline_mode<synchronous>, transform_indices = @transform_3, window_bounds = array<i64: 144, 128>}, {pipeline_mode = #tpu.pipeline_mode<synchronous>, transform_indices = @transform_4, window_bounds = array<i64: 1, 128>}, {transform_indices = @transform_5, window_bounds = array<i64: 1, 256, 128>}]} {
    %c0 = arith.constant 0 : index
    %c0_0 = arith.constant 0 : index
    %c0_1 = arith.constant 0 : index
    %c0_2 = arith.constant 0 : index
    %0 = vector.load %arg1[%c0, %c0_0, %c0_1, %c0_2] : memref<1x16x16x4xf32, #tpu.memory_space<vmem>>, vector<1x16x16x4xf32>
    %1 = vector.shape_cast %0 : vector<1x16x16x4xf32> to vector<16x16x4xf32>
    %2 = vector.shape_cast %1 : vector<16x16x4xf32> to vector<256x4xf32>
    %3 = arith.truncf %2 : vector<256x4xf32> to vector<256x4xbf16>
    %c0_3 = arith.constant 0 : index
    %c0_4 = arith.constant 0 : index
    %4 = vector.load %arg2[%c0_3, %c0_4] : memref<4x8xbf16, #tpu.memory_space<vmem>>, vector<4x8xbf16>
    %cst = arith.constant dense<0.000000e+00> : vector<256x8xf32>
    %5 = tpu.matmul %3, %4, %cst {dimension_numbers = #tpu.dot_dimension_numbers<[1], [0], [0], [1], [0, 0, 1, 1], [], []>} : vector<256x4xbf16>, vector<4x8xbf16>, vector<256x8xf32> -> vector<256x8xf32>
    %c0_5 = arith.constant 0 : index
    %c0_6 = arith.constant 0 : index
    %6 = vector.load %arg3[%c0_5, %c0_6] : memref<1x8xf32, #tpu.memory_space<vmem>>, vector<1x8xf32>
    %7 = vector.broadcast %6 : vector<1x8xf32> to vector<256x8xf32>
    %8 = arith.addf %5, %7 : vector<256x8xf32>
    %cst_7 = arith.constant 0.000000e+00 : f32
    %9 = vector.broadcast %cst_7 : f32 to vector<256x8xf32>
    %10 = arith.maximumf %8, %9 : vector<256x8xf32>
    %11 = vector.extract_strided_slice %10 {offsets = [0, 0], sizes = [256, 4], strides = [1, 1]} : vector<256x8xf32> to vector<256x4xf32>
    %12 = vector.shape_cast %11 : vector<256x4xf32> to vector<16x16x4xf32>
    %13 = vector.extract_strided_slice %10 {offsets = [0, 4], sizes = [256, 4], strides = [1, 1]} : vector<256x8xf32> to vector<256x4xf32>
    %14 = vector.shape_cast %13 : vector<256x4xf32> to vector<16x16x4xf32>
    %cst_8 = arith.constant 0.000000e+00 : f32
    %15 = vector.broadcast %cst_8 : f32 to vector<18x18x4xf32>
    %c0_9 = arith.constant 0 : index
    %c0_10 = arith.constant 0 : index
    %c0_11 = arith.constant 0 : index
    %16 = vector.load %arg8[%c0_9, %c0_10, %c0_11] : memref<18x18x4xf32, #tpu.memory_space<vmem>>, vector<18x18x4xf32>
    tpu.vector_store %arg8[%c0_9, %c0_10, %c0_11], %15 {strides = array<i32>} : memref<18x18x4xf32, #tpu.memory_space<vmem>>, vector<18x18x4xf32>,
    %c1 = arith.constant 1 : index
    %c1_12 = arith.constant 1 : index
    %c0_13 = arith.constant 0 : index
    %17 = vector.load %arg8[%c1, %c1_12, %c0_13] : memref<18x18x4xf32, #tpu.memory_space<vmem>>, vector<16x16x4xf32>
    tpu.vector_store %arg8[%c1, %c1_12, %c0_13], %12 {strides = array<i32>} : memref<18x18x4xf32, #tpu.memory_space<vmem>>, vector<16x16x4xf32>,
    %cst_14 = arith.constant 0.000000e+00 : f32
    %18 = vector.broadcast %cst_14 : f32 to vector<20x20x4xf32>
    %c0_15 = arith.constant 0 : index
    %c0_16 = arith.constant 0 : index
    %c0_17 = arith.constant 0 : index
    %19 = vector.load %arg9[%c0_15, %c0_16, %c0_17] : memref<20x20x4xf32, #tpu.memory_space<vmem>>, vector<20x20x4xf32>
    tpu.vector_store %arg9[%c0_15, %c0_16, %c0_17], %18 {strides = array<i32>} : memref<20x20x4xf32, #tpu.memory_space<vmem>>, vector<20x20x4xf32>,
    %c2 = arith.constant 2 : index
    %c2_18 = arith.constant 2 : index
    %c0_19 = arith.constant 0 : index
    %20 = vector.load %arg9[%c2, %c2_18, %c0_19] : memref<20x20x4xf32, #tpu.memory_space<vmem>>, vector<16x16x4xf32>
    tpu.vector_store %arg9[%c2, %c2_18, %c0_19], %14 {strides = array<i32>} : memref<20x20x4xf32, #tpu.memory_space<vmem>>, vector<16x16x4xf32>,
    %cst_20 = arith.constant 0xFF800000 : f32
    %21 = vector.broadcast %cst_20 : f32 to vector<18x18x4xf32>
    %c0_21 = arith.constant 0 : index
    %c0_22 = arith.constant 0 : index
    %c0_23 = arith.constant 0 : index
    %22 = vector.load %arg7[%c0_21, %c0_22, %c0_23] : memref<18x18x4xf32, #tpu.memory_space<vmem>>, vector<18x18x4xf32>
    tpu.vector_store %arg7[%c0_21, %c0_22, %c0_23], %21 {strides = array<i32>} : memref<18x18x4xf32, #tpu.memory_space<vmem>>, vector<18x18x4xf32>,
    %c1_24 = arith.constant 1 : index
    %c1_25 = arith.constant 1 : index
    %c0_26 = arith.constant 0 : index
    %23 = vector.load %arg7[%c1_24, %c1_25, %c0_26] : memref<18x18x4xf32, #tpu.memory_space<vmem>>, vector<16x16x4xf32>
    tpu.vector_store %arg7[%c1_24, %c1_25, %c0_26], %1 {strides = array<i32>} : memref<18x18x4xf32, #tpu.memory_space<vmem>>, vector<16x16x4xf32>,
    %c0_27 = arith.constant 0 : index
    %c0_28 = arith.constant 0 : index
    %c0_29 = arith.constant 0 : index
    %24 = vector.load %arg7[%c0_27, %c0_28, %c0_29] : memref<18x18x4xf32, #tpu.memory_space<vmem>>, vector<16x18x4xf32>
    %c1_30 = arith.constant 1 : index
    %c0_31 = arith.constant 0 : index
    %c0_32 = arith.constant 0 : index
    %25 = vector.load %arg7[%c1_30, %c0_31, %c0_32] : memref<18x18x4xf32, #tpu.memory_space<vmem>>, vector<16x18x4xf32>
    %26 = arith.maximumf %24, %25 : vector<16x18x4xf32>
    %c2_33 = arith.constant 2 : index
    %c0_34 = arith.constant 0 : index
    %c0_35 = arith.constant 0 : index
    %27 = vector.load %arg7[%c2_33, %c0_34, %c0_35] : memref<18x18x4xf32, #tpu.memory_space<vmem>>, vector<16x18x4xf32>
    %28 = arith.maximumf %26, %27 : vector<16x18x4xf32>
    %29 = vector.extract_strided_slice %28 {offsets = [0, 0, 0], sizes = [16, 16, 4], strides = [1, 1, 1]} : vector<16x18x4xf32> to vector<16x16x4xf32>
    %30 = vector.extract_strided_slice %28 {offsets = [0, 1, 0], sizes = [16, 16, 4], strides = [1, 1, 1]} : vector<16x18x4xf32> to vector<16x16x4xf32>
    %31 = arith.maximumf %29, %30 : vector<16x16x4xf32>
    %32 = vector.extract_strided_slice %28 {offsets = [0, 2, 0], sizes = [16, 16, 4], strides = [1, 1, 1]} : vector<16x18x4xf32> to vector<16x16x4xf32>
    %33 = arith.maximumf %31, %32 : vector<16x16x4xf32>
    %c0_36 = arith.constant 0 : index
    %c0_37 = arith.constant 0 : index
    %34 = vector.load %arg10[%c0_36, %c0_37] : memref<256x144xf32, #tpu.memory_space<vmem>>, vector<256x4xf32>
    tpu.vector_store %arg10[%c0_36, %c0_37], %2 {strides = array<i32>} : memref<256x144xf32, #tpu.memory_space<vmem>>, vector<256x4xf32>,
    %35 = vector.shape_cast %33 : vector<16x16x4xf32> to vector<256x4xf32>
    %c0_38 = arith.constant 0 : index
    %c4 = arith.constant 4 : index
    %36 = vector.load %arg10[%c0_38, %c4] : memref<256x144xf32, #tpu.memory_space<vmem>>, vector<256x4xf32>
    tpu.vector_store %arg10[%c0_38, %c4], %35 {strides = array<i32>} : memref<256x144xf32, #tpu.memory_space<vmem>>, vector<256x4xf32>,
    %c0_39 = arith.constant 0 : index
    %c0_40 = arith.constant 0 : index
    %c0_41 = arith.constant 0 : index
    %37 = vector.load %arg8[%c0_39, %c0_40, %c0_41] : memref<18x18x4xf32, #tpu.memory_space<vmem>>, vector<16x16x4xf32>
    %38 = vector.shape_cast %37 : vector<16x16x4xf32> to vector<256x4xf32>
    %c0_42 = arith.constant 0 : index
    %c8 = arith.constant 8 : index
    %39 = vector.load %arg10[%c0_42, %c8] : memref<256x144xf32, #tpu.memory_space<vmem>>, vector<256x4xf32>
    tpu.vector_store %arg10[%c0_42, %c8], %38 {strides = array<i32>} : memref<256x144xf32, #tpu.memory_space<vmem>>, vector<256x4xf32>,
    %c0_43 = arith.constant 0 : index
    %c1_44 = arith.constant 1 : index
    %c0_45 = arith.constant 0 : index
    %40 = vector.load %arg8[%c0_43, %c1_44, %c0_45] : memref<18x18x4xf32, #tpu.memory_space<vmem>>, vector<16x16x4xf32>
    %41 = vector.shape_cast %40 : vector<16x16x4xf32> to vector<256x4xf32>
    %c0_46 = arith.constant 0 : index
    %c12 = arith.constant 12 : index
    %42 = vector.load %arg10[%c0_46, %c12] : memref<256x144xf32, #tpu.memory_space<vmem>>, vector<256x4xf32>
    tpu.vector_store %arg10[%c0_46, %c12], %41 {strides = array<i32>} : memref<256x144xf32, #tpu.memory_space<vmem>>, vector<256x4xf32>,
    %c0_47 = arith.constant 0 : index
    %c2_48 = arith.constant 2 : index
    %c0_49 = arith.constant 0 : index
    %43 = vector.load %arg8[%c0_47, %c2_48, %c0_49] : memref<18x18x4xf32, #tpu.memory_space<vmem>>, vector<16x16x4xf32>
    %44 = vector.shape_cast %43 : vector<16x16x4xf32> to vector<256x4xf32>
    %c0_50 = arith.constant 0 : index
    %c16 = arith.constant 16 : index
    %45 = vector.load %arg10[%c0_50, %c16] : memref<256x144xf32, #tpu.memory_space<vmem>>, vector<256x4xf32>
    tpu.vector_store %arg10[%c0_50, %c16], %44 {strides = array<i32>} : memref<256x144xf32, #tpu.memory_space<vmem>>, vector<256x4xf32>,
    %c1_51 = arith.constant 1 : index
    %c0_52 = arith.constant 0 : index
    %c0_53 = arith.constant 0 : index
    %46 = vector.load %arg8[%c1_51, %c0_52, %c0_53] : memref<18x18x4xf32, #tpu.memory_space<vmem>>, vector<16x16x4xf32>
    %47 = vector.shape_cast %46 : vector<16x16x4xf32> to vector<256x4xf32>
    %c0_54 = arith.constant 0 : index
    %c20 = arith.constant 20 : index
    %48 = vector.load %arg10[%c0_54, %c20] : memref<256x144xf32, #tpu.memory_space<vmem>>, vector<256x4xf32>
    tpu.vector_store %arg10[%c0_54, %c20], %47 {strides = array<i32>} : memref<256x144xf32, #tpu.memory_space<vmem>>, vector<256x4xf32>,
    %c1_55 = arith.constant 1 : index
    %c1_56 = arith.constant 1 : index
    %c0_57 = arith.constant 0 : index
    %49 = vector.load %arg8[%c1_55, %c1_56, %c0_57] : memref<18x18x4xf32, #tpu.memory_space<vmem>>, vector<16x16x4xf32>
    %50 = vector.shape_cast %49 : vector<16x16x4xf32> to vector<256x4xf32>
    %c0_58 = arith.constant 0 : index
    %c24 = arith.constant 24 : index
    %51 = vector.load %arg10[%c0_58, %c24] : memref<256x144xf32, #tpu.memory_space<vmem>>, vector<256x4xf32>
    tpu.vector_store %arg10[%c0_58, %c24], %50 {strides = array<i32>} : memref<256x144xf32, #tpu.memory_space<vmem>>, vector<256x4xf32>,
    %c1_59 = arith.constant 1 : index
    %c2_60 = arith.constant 2 : index
    %c0_61 = arith.constant 0 : index
    %52 = vector.load %arg8[%c1_59, %c2_60, %c0_61] : memref<18x18x4xf32, #tpu.memory_space<vmem>>, vector<16x16x4xf32>
    %53 = vector.shape_cast %52 : vector<16x16x4xf32> to vector<256x4xf32>
    %c0_62 = arith.constant 0 : index
    %c28 = arith.constant 28 : index
    %54 = vector.load %arg10[%c0_62, %c28] : memref<256x144xf32, #tpu.memory_space<vmem>>, vector<256x4xf32>
    tpu.vector_store %arg10[%c0_62, %c28], %53 {strides = array<i32>} : memref<256x144xf32, #tpu.memory_space<vmem>>, vector<256x4xf32>,
    %c2_63 = arith.constant 2 : index
    %c0_64 = arith.constant 0 : index
    %c0_65 = arith.constant 0 : index
    %55 = vector.load %arg8[%c2_63, %c0_64, %c0_65] : memref<18x18x4xf32, #tpu.memory_space<vmem>>, vector<16x16x4xf32>
    %56 = vector.shape_cast %55 : vector<16x16x4xf32> to vector<256x4xf32>
    %c0_66 = arith.constant 0 : index
    %c32 = arith.constant 32 : index
    %57 = vector.load %arg10[%c0_66, %c32] : memref<256x144xf32, #tpu.memory_space<vmem>>, vector<256x4xf32>
    tpu.vector_store %arg10[%c0_66, %c32], %56 {strides = array<i32>} : memref<256x144xf32, #tpu.memory_space<vmem>>, vector<256x4xf32>,
    %c2_67 = arith.constant 2 : index
    %c1_68 = arith.constant 1 : index
    %c0_69 = arith.constant 0 : index
    %58 = vector.load %arg8[%c2_67, %c1_68, %c0_69] : memref<18x18x4xf32, #tpu.memory_space<vmem>>, vector<16x16x4xf32>
    %59 = vector.shape_cast %58 : vector<16x16x4xf32> to vector<256x4xf32>
    %c0_70 = arith.constant 0 : index
    %c36 = arith.constant 36 : index
    %60 = vector.load %arg10[%c0_70, %c36] : memref<256x144xf32, #tpu.memory_space<vmem>>, vector<256x4xf32>
    tpu.vector_store %arg10[%c0_70, %c36], %59 {strides = array<i32>} : memref<256x144xf32, #tpu.memory_space<vmem>>, vector<256x4xf32>,
    %c2_71 = arith.constant 2 : index
    %c2_72 = arith.constant 2 : index
    %c0_73 = arith.constant 0 : index
    %61 = vector.load %arg8[%c2_71, %c2_72, %c0_73] : memref<18x18x4xf32, #tpu.memory_space<vmem>>, vector<16x16x4xf32>
    %62 = vector.shape_cast %61 : vector<16x16x4xf32> to vector<256x4xf32>
    %c0_74 = arith.constant 0 : index
    %c40 = arith.constant 40 : index
    %63 = vector.load %arg10[%c0_74, %c40] : memref<256x144xf32, #tpu.memory_space<vmem>>, vector<256x4xf32>
    tpu.vector_store %arg10[%c0_74, %c40], %62 {strides = array<i32>} : memref<256x144xf32, #tpu.memory_space<vmem>>, vector<256x4xf32>,
    %c0_75 = arith.constant 0 : index
    %c0_76 = arith.constant 0 : index
    %c0_77 = arith.constant 0 : index
    %64 = vector.load %arg9[%c0_75, %c0_76, %c0_77] : memref<20x20x4xf32, #tpu.memory_space<vmem>>, vector<16x16x4xf32>
    %65 = vector.shape_cast %64 : vector<16x16x4xf32> to vector<256x4xf32>
    %c0_78 = arith.constant 0 : index
    %c44 = arith.constant 44 : index
    %66 = vector.load %arg10[%c0_78, %c44] : memref<256x144xf32, #tpu.memory_space<vmem>>, vector<256x4xf32>
    tpu.vector_store %arg10[%c0_78, %c44], %65 {strides = array<i32>} : memref<256x144xf32, #tpu.memory_space<vmem>>, vector<256x4xf32>,
    %c0_79 = arith.constant 0 : index
    %c1_80 = arith.constant 1 : index
    %c0_81 = arith.constant 0 : index
    %67 = vector.load %arg9[%c0_79, %c1_80, %c0_81] : memref<20x20x4xf32, #tpu.memory_space<vmem>>, vector<16x16x4xf32>
    %68 = vector.shape_cast %67 : vector<16x16x4xf32> to vector<256x4xf32>
    %c0_82 = arith.constant 0 : index
    %c48 = arith.constant 48 : index
    %69 = vector.load %arg10[%c0_82, %c48] : memref<256x144xf32, #tpu.memory_space<vmem>>, vector<256x4xf32>
    tpu.vector_store %arg10[%c0_82, %c48], %68 {strides = array<i32>} : memref<256x144xf32, #tpu.memory_space<vmem>>, vector<256x4xf32>,
    %c0_83 = arith.constant 0 : index
    %c2_84 = arith.constant 2 : index
    %c0_85 = arith.constant 0 : index
    %70 = vector.load %arg9[%c0_83, %c2_84, %c0_85] : memref<20x20x4xf32, #tpu.memory_space<vmem>>, vector<16x16x4xf32>
    %71 = vector.shape_cast %70 : vector<16x16x4xf32> to vector<256x4xf32>
    %c0_86 = arith.constant 0 : index
    %c52 = arith.constant 52 : index
    %72 = vector.load %arg10[%c0_86, %c52] : memref<256x144xf32, #tpu.memory_space<vmem>>, vector<256x4xf32>
    tpu.vector_store %arg10[%c0_86, %c52], %71 {strides = array<i32>} : memref<256x144xf32, #tpu.memory_space<vmem>>, vector<256x4xf32>,
    %c0_87 = arith.constant 0 : index
    %c3 = arith.constant 3 : index
    %c0_88 = arith.constant 0 : index
    %73 = vector.load %arg9[%c0_87, %c3, %c0_88] : memref<20x20x4xf32, #tpu.memory_space<vmem>>, vector<16x16x4xf32>
    %74 = vector.shape_cast %73 : vector<16x16x4xf32> to vector<256x4xf32>
    %c0_89 = arith.constant 0 : index
    %c56 = arith.constant 56 : index
    %75 = vector.load %arg10[%c0_89, %c56] : memref<256x144xf32, #tpu.memory_space<vmem>>, vector<256x4xf32>
    tpu.vector_store %arg10[%c0_89, %c56], %74 {strides = array<i32>} : memref<256x144xf32, #tpu.memory_space<vmem>>, vector<256x4xf32>,
    %c0_90 = arith.constant 0 : index
    %c4_91 = arith.constant 4 : index
    %c0_92 = arith.constant 0 : index
    %76 = vector.load %arg9[%c0_90, %c4_91, %c0_92] : memref<20x20x4xf32, #tpu.memory_space<vmem>>, vector<16x16x4xf32>
    %77 = vector.shape_cast %76 : vector<16x16x4xf32> to vector<256x4xf32>
    %c0_93 = arith.constant 0 : index
    %c60 = arith.constant 60 : index
    %78 = vector.load %arg10[%c0_93, %c60] : memref<256x144xf32, #tpu.memory_space<vmem>>, vector<256x4xf32>
    tpu.vector_store %arg10[%c0_93, %c60], %77 {strides = array<i32>} : memref<256x144xf32, #tpu.memory_space<vmem>>, vector<256x4xf32>,
    %c1_94 = arith.constant 1 : index
    %c0_95 = arith.constant 0 : index
    %c0_96 = arith.constant 0 : index
    %79 = vector.load %arg9[%c1_94, %c0_95, %c0_96] : memref<20x20x4xf32, #tpu.memory_space<vmem>>, vector<16x16x4xf32>
    %80 = vector.shape_cast %79 : vector<16x16x4xf32> to vector<256x4xf32>
    %c0_97 = arith.constant 0 : index
    %c64 = arith.constant 64 : index
    %81 = vector.load %arg10[%c0_97, %c64] : memref<256x144xf32, #tpu.memory_space<vmem>>, vector<256x4xf32>
    tpu.vector_store %arg10[%c0_97, %c64], %80 {strides = array<i32>} : memref<256x144xf32, #tpu.memory_space<vmem>>, vector<256x4xf32>,
    %c1_98 = arith.constant 1 : index
    %c1_99 = arith.constant 1 : index
    %c0_100 = arith.constant 0 : index
    %82 = vector.load %arg9[%c1_98, %c1_99, %c0_100] : memref<20x20x4xf32, #tpu.memory_space<vmem>>, vector<16x16x4xf32>
    %83 = vector.shape_cast %82 : vector<16x16x4xf32> to vector<256x4xf32>
    %c0_101 = arith.constant 0 : index
    %c68 = arith.constant 68 : index
    %84 = vector.load %arg10[%c0_101, %c68] : memref<256x144xf32, #tpu.memory_space<vmem>>, vector<256x4xf32>
    tpu.vector_store %arg10[%c0_101, %c68], %83 {strides = array<i32>} : memref<256x144xf32, #tpu.memory_space<vmem>>, vector<256x4xf32>,
    %c1_102 = arith.constant 1 : index
    %c2_103 = arith.constant 2 : index
    %c0_104 = arith.constant 0 : index
    %85 = vector.load %arg9[%c1_102, %c2_103, %c0_104] : memref<20x20x4xf32, #tpu.memory_space<vmem>>, vector<16x16x4xf32>
    %86 = vector.shape_cast %85 : vector<16x16x4xf32> to vector<256x4xf32>
    %c0_105 = arith.constant 0 : index
    %c72 = arith.constant 72 : index
    %87 = vector.load %arg10[%c0_105, %c72] : memref<256x144xf32, #tpu.memory_space<vmem>>, vector<256x4xf32>
    tpu.vector_store %arg10[%c0_105, %c72], %86 {strides = array<i32>} : memref<256x144xf32, #tpu.memory_space<vmem>>, vector<256x4xf32>,
    %c1_106 = arith.constant 1 : index
    %c3_107 = arith.constant 3 : index
    %c0_108 = arith.constant 0 : index
    %88 = vector.load %arg9[%c1_106, %c3_107, %c0_108] : memref<20x20x4xf32, #tpu.memory_space<vmem>>, vector<16x16x4xf32>
    %89 = vector.shape_cast %88 : vector<16x16x4xf32> to vector<256x4xf32>
    %c0_109 = arith.constant 0 : index
    %c76 = arith.constant 76 : index
    %90 = vector.load %arg10[%c0_109, %c76] : memref<256x144xf32, #tpu.memory_space<vmem>>, vector<256x4xf32>
    tpu.vector_store %arg10[%c0_109, %c76], %89 {strides = array<i32>} : memref<256x144xf32, #tpu.memory_space<vmem>>, vector<256x4xf32>,
    %c1_110 = arith.constant 1 : index
    %c4_111 = arith.constant 4 : index
    %c0_112 = arith.constant 0 : index
    %91 = vector.load %arg9[%c1_110, %c4_111, %c0_112] : memref<20x20x4xf32, #tpu.memory_space<vmem>>, vector<16x16x4xf32>
    %92 = vector.shape_cast %91 : vector<16x16x4xf32> to vector<256x4xf32>
    %c0_113 = arith.constant 0 : index
    %c80 = arith.constant 80 : index
    %93 = vector.load %arg10[%c0_113, %c80] : memref<256x144xf32, #tpu.memory_space<vmem>>, vector<256x4xf32>
    tpu.vector_store %arg10[%c0_113, %c80], %92 {strides = array<i32>} : memref<256x144xf32, #tpu.memory_space<vmem>>, vector<256x4xf32>,
    %c2_114 = arith.constant 2 : index
    %c0_115 = arith.constant 0 : index
    %c0_116 = arith.constant 0 : index
    %94 = vector.load %arg9[%c2_114, %c0_115, %c0_116] : memref<20x20x4xf32, #tpu.memory_space<vmem>>, vector<16x16x4xf32>
    %95 = vector.shape_cast %94 : vector<16x16x4xf32> to vector<256x4xf32>
    %c0_117 = arith.constant 0 : index
    %c84 = arith.constant 84 : index
    %96 = vector.load %arg10[%c0_117, %c84] : memref<256x144xf32, #tpu.memory_space<vmem>>, vector<256x4xf32>
    tpu.vector_store %arg10[%c0_117, %c84], %95 {strides = array<i32>} : memref<256x144xf32, #tpu.memory_space<vmem>>, vector<256x4xf32>,
    %c2_118 = arith.constant 2 : index
    %c1_119 = arith.constant 1 : index
    %c0_120 = arith.constant 0 : index
    %97 = vector.load %arg9[%c2_118, %c1_119, %c0_120] : memref<20x20x4xf32, #tpu.memory_space<vmem>>, vector<16x16x4xf32>
    %98 = vector.shape_cast %97 : vector<16x16x4xf32> to vector<256x4xf32>
    %c0_121 = arith.constant 0 : index
    %c88 = arith.constant 88 : index
    %99 = vector.load %arg10[%c0_121, %c88] : memref<256x144xf32, #tpu.memory_space<vmem>>, vector<256x4xf32>
    tpu.vector_store %arg10[%c0_121, %c88], %98 {strides = array<i32>} : memref<256x144xf32, #tpu.memory_space<vmem>>, vector<256x4xf32>,
    %c2_122 = arith.constant 2 : index
    %c2_123 = arith.constant 2 : index
    %c0_124 = arith.constant 0 : index
    %100 = vector.load %arg9[%c2_122, %c2_123, %c0_124] : memref<20x20x4xf32, #tpu.memory_space<vmem>>, vector<16x16x4xf32>
    %101 = vector.shape_cast %100 : vector<16x16x4xf32> to vector<256x4xf32>
    %c0_125 = arith.constant 0 : index
    %c92 = arith.constant 92 : index
    %102 = vector.load %arg10[%c0_125, %c92] : memref<256x144xf32, #tpu.memory_space<vmem>>, vector<256x4xf32>
    tpu.vector_store %arg10[%c0_125, %c92], %101 {strides = array<i32>} : memref<256x144xf32, #tpu.memory_space<vmem>>, vector<256x4xf32>,
    %c2_126 = arith.constant 2 : index
    %c3_127 = arith.constant 3 : index
    %c0_128 = arith.constant 0 : index
    %103 = vector.load %arg9[%c2_126, %c3_127, %c0_128] : memref<20x20x4xf32, #tpu.memory_space<vmem>>, vector<16x16x4xf32>
    %104 = vector.shape_cast %103 : vector<16x16x4xf32> to vector<256x4xf32>
    %c0_129 = arith.constant 0 : index
    %c96 = arith.constant 96 : index
    %105 = vector.load %arg10[%c0_129, %c96] : memref<256x144xf32, #tpu.memory_space<vmem>>, vector<256x4xf32>
    tpu.vector_store %arg10[%c0_129, %c96], %104 {strides = array<i32>} : memref<256x144xf32, #tpu.memory_space<vmem>>, vector<256x4xf32>,
    %c2_130 = arith.constant 2 : index
    %c4_131 = arith.constant 4 : index
    %c0_132 = arith.constant 0 : index
    %106 = vector.load %arg9[%c2_130, %c4_131, %c0_132] : memref<20x20x4xf32, #tpu.memory_space<vmem>>, vector<16x16x4xf32>
    %107 = vector.shape_cast %106 : vector<16x16x4xf32> to vector<256x4xf32>
    %c0_133 = arith.constant 0 : index
    %c100 = arith.constant 100 : index
    %108 = vector.load %arg10[%c0_133, %c100] : memref<256x144xf32, #tpu.memory_space<vmem>>, vector<256x4xf32>
    tpu.vector_store %arg10[%c0_133, %c100], %107 {strides = array<i32>} : memref<256x144xf32, #tpu.memory_space<vmem>>, vector<256x4xf32>,
    %c3_134 = arith.constant 3 : index
    %c0_135 = arith.constant 0 : index
    %c0_136 = arith.constant 0 : index
    %109 = vector.load %arg9[%c3_134, %c0_135, %c0_136] : memref<20x20x4xf32, #tpu.memory_space<vmem>>, vector<16x16x4xf32>
    %110 = vector.shape_cast %109 : vector<16x16x4xf32> to vector<256x4xf32>
    %c0_137 = arith.constant 0 : index
    %c104 = arith.constant 104 : index
    %111 = vector.load %arg10[%c0_137, %c104] : memref<256x144xf32, #tpu.memory_space<vmem>>, vector<256x4xf32>
    tpu.vector_store %arg10[%c0_137, %c104], %110 {strides = array<i32>} : memref<256x144xf32, #tpu.memory_space<vmem>>, vector<256x4xf32>,
    %c3_138 = arith.constant 3 : index
    %c1_139 = arith.constant 1 : index
    %c0_140 = arith.constant 0 : index
    %112 = vector.load %arg9[%c3_138, %c1_139, %c0_140] : memref<20x20x4xf32, #tpu.memory_space<vmem>>, vector<16x16x4xf32>
    %113 = vector.shape_cast %112 : vector<16x16x4xf32> to vector<256x4xf32>
    %c0_141 = arith.constant 0 : index
    %c108 = arith.constant 108 : index
    %114 = vector.load %arg10[%c0_141, %c108] : memref<256x144xf32, #tpu.memory_space<vmem>>, vector<256x4xf32>
    tpu.vector_store %arg10[%c0_141, %c108], %113 {strides = array<i32>} : memref<256x144xf32, #tpu.memory_space<vmem>>, vector<256x4xf32>,
    %c3_142 = arith.constant 3 : index
    %c2_143 = arith.constant 2 : index
    %c0_144 = arith.constant 0 : index
    %115 = vector.load %arg9[%c3_142, %c2_143, %c0_144] : memref<20x20x4xf32, #tpu.memory_space<vmem>>, vector<16x16x4xf32>
    %116 = vector.shape_cast %115 : vector<16x16x4xf32> to vector<256x4xf32>
    %c0_145 = arith.constant 0 : index
    %c112 = arith.constant 112 : index
    %117 = vector.load %arg10[%c0_145, %c112] : memref<256x144xf32, #tpu.memory_space<vmem>>, vector<256x4xf32>
    tpu.vector_store %arg10[%c0_145, %c112], %116 {strides = array<i32>} : memref<256x144xf32, #tpu.memory_space<vmem>>, vector<256x4xf32>,
    %c3_146 = arith.constant 3 : index
    %c3_147 = arith.constant 3 : index
    %c0_148 = arith.constant 0 : index
    %118 = vector.load %arg9[%c3_146, %c3_147, %c0_148] : memref<20x20x4xf32, #tpu.memory_space<vmem>>, vector<16x16x4xf32>
    %119 = vector.shape_cast %118 : vector<16x16x4xf32> to vector<256x4xf32>
    %c0_149 = arith.constant 0 : index
    %c116 = arith.constant 116 : index
    %120 = vector.load %arg10[%c0_149, %c116] : memref<256x144xf32, #tpu.memory_space<vmem>>, vector<256x4xf32>
    tpu.vector_store %arg10[%c0_149, %c116], %119 {strides = array<i32>} : memref<256x144xf32, #tpu.memory_space<vmem>>, vector<256x4xf32>,
    %c3_150 = arith.constant 3 : index
    %c4_151 = arith.constant 4 : index
    %c0_152 = arith.constant 0 : index
    %121 = vector.load %arg9[%c3_150, %c4_151, %c0_152] : memref<20x20x4xf32, #tpu.memory_space<vmem>>, vector<16x16x4xf32>
    %122 = vector.shape_cast %121 : vector<16x16x4xf32> to vector<256x4xf32>
    %c0_153 = arith.constant 0 : index
    %c120 = arith.constant 120 : index
    %123 = vector.load %arg10[%c0_153, %c120] : memref<256x144xf32, #tpu.memory_space<vmem>>, vector<256x4xf32>
    tpu.vector_store %arg10[%c0_153, %c120], %122 {strides = array<i32>} : memref<256x144xf32, #tpu.memory_space<vmem>>, vector<256x4xf32>,
    %c4_154 = arith.constant 4 : index
    %c0_155 = arith.constant 0 : index
    %c0_156 = arith.constant 0 : index
    %124 = vector.load %arg9[%c4_154, %c0_155, %c0_156] : memref<20x20x4xf32, #tpu.memory_space<vmem>>, vector<16x16x4xf32>
    %125 = vector.shape_cast %124 : vector<16x16x4xf32> to vector<256x4xf32>
    %c0_157 = arith.constant 0 : index
    %c124 = arith.constant 124 : index
    %126 = vector.load %arg10[%c0_157, %c124] : memref<256x144xf32, #tpu.memory_space<vmem>>, vector<256x4xf32>
    tpu.vector_store %arg10[%c0_157, %c124], %125 {strides = array<i32>} : memref<256x144xf32, #tpu.memory_space<vmem>>, vector<256x4xf32>,
    %c4_158 = arith.constant 4 : index
    %c1_159 = arith.constant 1 : index
    %c0_160 = arith.constant 0 : index
    %127 = vector.load %arg9[%c4_158, %c1_159, %c0_160] : memref<20x20x4xf32, #tpu.memory_space<vmem>>, vector<16x16x4xf32>
    %128 = vector.shape_cast %127 : vector<16x16x4xf32> to vector<256x4xf32>
    %c0_161 = arith.constant 0 : index
    %c128 = arith.constant 128 : index
    %129 = vector.load %arg10[%c0_161, %c128] : memref<256x144xf32, #tpu.memory_space<vmem>>, vector<256x4xf32>
    tpu.vector_store %arg10[%c0_161, %c128], %128 {strides = array<i32>} : memref<256x144xf32, #tpu.memory_space<vmem>>, vector<256x4xf32>,
    %c4_162 = arith.constant 4 : index
    %c2_163 = arith.constant 2 : index
    %c0_164 = arith.constant 0 : index
    %130 = vector.load %arg9[%c4_162, %c2_163, %c0_164] : memref<20x20x4xf32, #tpu.memory_space<vmem>>, vector<16x16x4xf32>
    %131 = vector.shape_cast %130 : vector<16x16x4xf32> to vector<256x4xf32>
    %c0_165 = arith.constant 0 : index
    %c132 = arith.constant 132 : index
    %132 = vector.load %arg10[%c0_165, %c132] : memref<256x144xf32, #tpu.memory_space<vmem>>, vector<256x4xf32>
    tpu.vector_store %arg10[%c0_165, %c132], %131 {strides = array<i32>} : memref<256x144xf32, #tpu.memory_space<vmem>>, vector<256x4xf32>,
    %c4_166 = arith.constant 4 : index
    %c3_167 = arith.constant 3 : index
    %c0_168 = arith.constant 0 : index
    %133 = vector.load %arg9[%c4_166, %c3_167, %c0_168] : memref<20x20x4xf32, #tpu.memory_space<vmem>>, vector<16x16x4xf32>
    %134 = vector.shape_cast %133 : vector<16x16x4xf32> to vector<256x4xf32>
    %c0_169 = arith.constant 0 : index
    %c136 = arith.constant 136 : index
    %135 = vector.load %arg10[%c0_169, %c136] : memref<256x144xf32, #tpu.memory_space<vmem>>, vector<256x4xf32>
    tpu.vector_store %arg10[%c0_169, %c136], %134 {strides = array<i32>} : memref<256x144xf32, #tpu.memory_space<vmem>>, vector<256x4xf32>,
    %c4_170 = arith.constant 4 : index
    %c4_171 = arith.constant 4 : index
    %c0_172 = arith.constant 0 : index
    %136 = vector.load %arg9[%c4_170, %c4_171, %c0_172] : memref<20x20x4xf32, #tpu.memory_space<vmem>>, vector<16x16x4xf32>
    %137 = vector.shape_cast %136 : vector<16x16x4xf32> to vector<256x4xf32>
    %c0_173 = arith.constant 0 : index
    %c140 = arith.constant 140 : index
    %138 = vector.load %arg10[%c0_173, %c140] : memref<256x144xf32, #tpu.memory_space<vmem>>, vector<256x4xf32>
    tpu.vector_store %arg10[%c0_173, %c140], %137 {strides = array<i32>} : memref<256x144xf32, #tpu.memory_space<vmem>>, vector<256x4xf32>,
    %c0_174 = arith.constant 0 : index
    %c0_175 = arith.constant 0 : index
    %139 = vector.load %arg10[%c0_174, %c0_175] : memref<256x144xf32, #tpu.memory_space<vmem>>, vector<256x144xf32>
    %140 = arith.truncf %139 : vector<256x144xf32> to vector<256x144xbf16>
    %c0_176 = arith.constant 0 : index
    %c0_177 = arith.constant 0 : index
    %141 = vector.load %arg4[%c0_176, %c0_177] : memref<144x128xbf16, #tpu.memory_space<vmem>>, vector<144x128xbf16>
    %cst_178 = arith.constant dense<0.000000e+00> : vector<256x128xf32>
    %142 = tpu.matmul %140, %141, %cst_178 {dimension_numbers = #tpu.dot_dimension_numbers<[1], [0], [0], [1], [0, 0, 1, 1], [], []>} : vector<256x144xbf16>, vector<144x128xbf16>, vector<256x128xf32> -> vector<256x128xf32>
    %c0_179 = arith.constant 0 : index
    %c0_180 = arith.constant 0 : index
    %143 = vector.load %arg5[%c0_179, %c0_180] : memref<1x128xf32, #tpu.memory_space<vmem>>, vector<1x128xf32>
    %144 = vector.broadcast %143 : vector<1x128xf32> to vector<256x128xf32>
    %145 = arith.addf %142, %144 : vector<256x128xf32>
    %cst_181 = arith.constant 0.000000e+00 : f32
    %146 = vector.broadcast %cst_181 : f32 to vector<256x128xf32>
    %147 = arith.maximumf %145, %146 : vector<256x128xf32>
    %c0_182 = arith.constant 0 : index
    %c0_183 = arith.constant 0 : index
    %c0_184 = arith.constant 0 : index
    %148 = vector.load %arg6[%c0_182, %c0_183, %c0_184] : memref<1x256x128xf32, #tpu.memory_space<vmem>>, vector<1x256x128xf32>
    %149 = vector.shape_cast %148 : vector<1x256x128xf32> to vector<256x128xf32>
    %150 = vector.shape_cast %147 : vector<256x128xf32> to vector<1x256x128xf32>
    tpu.vector_store %arg6[%c0_182, %c0_183, %c0_184], %150 {strides = array<i32>} : memref<1x256x128xf32, #tpu.memory_space<vmem>>, vector<1x256x128xf32>,
    return
  }
  func.func @transform_0(%arg0: i32) -> (i32, i32, i32, i32) {
    %c0_i32 = arith.constant 0 : i32
    %c0_i32_0 = arith.constant 0 : i32
    %c0_i32_1 = arith.constant 0 : i32
    %c0_i32_2 = arith.constant 0 : i32
    return %arg0, %c0_i32, %c0_i32_0, %c0_i32_1 : i32, i32, i32, i32
  }
  func.func @transform_1(%arg0: i32) -> (i32, i32) {
    %c0_i32 = arith.constant 0 : i32
    %c0_i32_0 = arith.constant 0 : i32
    %c0_i32_1 = arith.constant 0 : i32
    return %c0_i32, %c0_i32_0 : i32, i32
  }
  func.func @transform_2(%arg0: i32) -> (i32, i32) {
    %c0_i32 = arith.constant 0 : i32
    %c0_i32_0 = arith.constant 0 : i32
    %c0_i32_1 = arith.constant 0 : i32
    return %c0_i32, %c0_i32_0 : i32, i32
  }
  func.func @transform_3(%arg0: i32) -> (i32, i32) {
    %c0_i32 = arith.constant 0 : i32
    %c0_i32_0 = arith.constant 0 : i32
    %c0_i32_1 = arith.constant 0 : i32
    return %c0_i32, %c0_i32_0 : i32, i32
  }
  func.func @transform_4(%arg0: i32) -> (i32, i32) {
    %c0_i32 = arith.constant 0 : i32
    %c0_i32_0 = arith.constant 0 : i32
    %c0_i32_1 = arith.constant 0 : i32
    return %c0_i32, %c0_i32_0 : i32, i32
  }
  func.func @transform_5(%arg0: i32) -> (i32, i32, i32) {
    %c0_i32 = arith.constant 0 : i32
    %c0_i32_0 = arith.constant 0 : i32
    %c0_i32_1 = arith.constant 0 : i32
    return %arg0, %c0_i32, %c0_i32_0 : i32, i32, i32
  }
}

</mosaic_0001>

<llo_original>
// kernel: inception_forward.1
$region0: #{inception_forward.1}
  #allocation0 [shape = 'u32[]', space=smem, size = 0x4, offset = 0x4, fixed_abs, tag = 'smem constant byte address 0x4 - core index']
  #allocation1 [shape = 'u32[144,128]{1,0:T(1,128)}', space=vmem, size = 0x12000, scoped, tag = 'internal scratch']
  #allocation2 [shape = 'f32[18,18,4]{2,1,0:T(8,128)}', space=vmem, size = 0x36000, scoped, tag = 'scratch operand']
  #allocation3 [shape = 'f32[18,18,4]{2,1,0:T(8,128)}', space=vmem, size = 0x36000, scoped, tag = 'scratch operand']
  #allocation4 [shape = 'f32[20,20,4]{2,1,0:T(8,128)}', space=vmem, size = 0x3c000, scoped, tag = 'scratch operand']
  #allocation5 [shape = 'f32[256,144]{1,0:T(8,128)}', space=vmem, size = 0x40000, scoped, tag = 'scratch operand']
  %s0 = inlined_call_operand.vmem [shape: f32[2,16,16,4], index: 0, kind: input, shape index: {}]
  %s1 = inlined_call_operand.vmem [shape: bf16[4,8], index: 1, kind: input, shape index: {}]
  %s2 = inlined_call_operand.vmem [shape: f32[1,8], index: 2, kind: input, shape index: {}]
  %s3 = inlined_call_operand.vmem [shape: bf16[144,128], index: 3, kind: input, shape index: {}]
  %s4 = inlined_call_operand.vmem [shape: f32[1,128], index: 4, kind: input, shape index: {}]
  %s5 = inlined_call_operand.vmem [shape: f32[2,256,128], index: 5, kind: output, shape index: {}]
  %s6 = sld [smem:[#allocation0]]
  $region53: #{inception_forward.1} parent=0
    _
  %s8 = ssub.s32 1, %s6
  %s9 = scalar_select 0, %s8, %s6
  loop: start=0, step=1, limit=4
  $region2: #{inception_forward.1} parent=0 // loop_pre_header
    _
  $region3: #{inception_forward.1} parent=0 // loop_header
    %s11 = sphi 0, %s15
    %p12 = scmp.ge.s32.totalorder %s11, 4
    %s21 = sphi 0, %s23
    %s24 = sphi 0, %s21
    %s25 = sphi 0, %s24
    %s41 = sphi 0, %s25
    %s45 = sphi 0, %s45
    %s47 = sphi 0, %s45
    %s48 = sphi 0, %s47
    %s62 = sphi 0, %s48
    %s66 = sphi 0, %s66
    %s68 = sphi 0, %s66
    %s69 = sphi 0, %s68
    %s83 = sphi 0, %s69
    %s87 = sphi 0, %s87
    %s89 = sphi 0, %s87
    %s90 = sphi 0, %s89
    %s104 = sphi 0, %s90
    %s108 = sphi 0, %s108
    %s110 = sphi 0, %s108
    %s111 = sphi 0, %s110
    %s125 = sphi 0, %s111
    %s131 = sphi 0, %s133
    %s134 = sphi 0, %s131
    %s135 = sphi 0, %s134
    %s151 = sphi 0, %s135
  $region4: #{inception_forward.1} parent=0 // loop_header_branch
    %14 = sbr.rel (%p12) target = $region8
  $region5: #{inception_forward.1} parent=0 // loop_body
    %s16 = ssub.s32 %s11, 1
    %s17 = ssub.s32 %s11, 2
    %s18 = sadd.s32 %s11, 1
    %s19 = ssub.s32 %s11, %s18
    %p20 = scmp.eq.s32.totalorder %s19, 0
    %s22 = sadd.s32 %s21, 1
    %s23 = scalar_select %p20, %s21, %s22
    %p26 = pneg %p20
    %p27 = scmp.eq.s32.totalorder %s11, 1
    %p28 = por %p26, %p27
    %p29 = scmp.ne.s32.totalorder %s21, %s24
    %p30 = scmp.eq.s32.totalorder %s11, 0
    %p31 = por %p29, %p30
    %p32 = scmp.ne.s32.totalorder %s21, %s24
    %p33 = scmp.eq.s32.totalorder %s16, 1
    %p34 = por %p32, %p33
    %p35 = scmp.ne.s32.totalorder %s24, %s25
    %p36 = scmp.eq.s32.totalorder %s16, 0
    %p37 = por %p35, %p36
    %p38 = scmp.ne.s32.totalorder %s24, %s25
    %p39 = scmp.eq.s32.totalorder %s17, 1
    %p40 = por %p38, %p39
    %p42 = scmp.ne.s32.totalorder %s25, %s41
    %p43 = scmp.eq.s32.totalorder %s17, 0
    %p44 = por %p42, %p43
    %s46 = sadd.s32 %s45, 1
    %p49 = scmp.eq.s32.totalorder %s11, 1
    %p50 = scmp.ne.s32.totalorder %s45, %s47
    %p51 = scmp.eq.s32.totalorder %s11, 0
    %p52 = por %p50, %p51
    %p53 = scmp.ne.s32.totalorder %s45, %s47
    %p54 = scmp.eq.s32.totalorder %s16, 1
    %p55 = por %p53, %p54
    %p56 = scmp.ne.s32.totalorder %s47, %s48
    %p57 = scmp.eq.s32.totalorder %s16, 0
    %p58 = por %p56, %p57
    %p59 = scmp.ne.s32.totalorder %s47, %s48
    %p60 = scmp.eq.s32.totalorder %s17, 1
    %p61 = por %p59, %p60
    %p63 = scmp.ne.s32.totalorder %s48, %s62
    %p64 = scmp.eq.s32.totalorder %s17, 0
    %p65 = por %p63, %p64
    %s67 = sadd.s32 %s66, 1
    %p70 = scmp.eq.s32.totalorder %s11, 1
    %p71 = scmp.ne.s32.totalorder %s66, %s68
    %p72 = scmp.eq.s32.totalorder %s11, 0
    %p73 = por %p71, %p72
    %p74 = scmp.ne.s32.totalorder %s66, %s68
    %p75 = scmp.eq.s32.totalorder %s16, 1
    %p76 = por %p74, %p75
    %p77 = scmp.ne.s32.totalorder %s68, %s69
    %p78 = scmp.eq.s32.totalorder %s16, 0
    %p79 = por %p77, %p78
    %p80 = scmp.ne.s32.totalorder %s68, %s69
    %p81 = scmp.eq.s32.totalorder %s17, 1
    %p82 = por %p80, %p81
    %p84 = scmp.ne.s32.totalorder %s69, %s83
    %p85 = scmp.eq.s32.totalorder %s17, 0
    %p86 = por %p84, %p85
    %s88 = sadd.s32 %s87, 1
    %p91 = scmp.eq.s32.totalorder %s11, 1
    %p92 = scmp.ne.s32.totalorder %s87, %s89
    %p93 = scmp.eq.s32.totalorder %s11, 0
    %p94 = por %p92, %p93
    %p95 = scmp.ne.s32.totalorder %s87, %s89
    %p96 = scmp.eq.s32.totalorder %s16, 1
    %p97 = por %p95, %p96
    %p98 = scmp.ne.s32.totalorder %s89, %s90
    %p99 = scmp.eq.s32.totalorder %s16, 0
    %p100 = por %p98, %p99
    %p101 = scmp.ne.s32.totalorder %s89, %s90
    %p102 = scmp.eq.s32.totalorder %s17, 1
    %p103 = por %p101, %p102
    %p105 = scmp.ne.s32.totalorder %s90, %s104
    %p106 = scmp.eq.s32.totalorder %s17, 0
    %p107 = por %p105, %p106
    %s109 = sadd.s32 %s108, 1
    %p112 = scmp.eq.s32.totalorder %s11, 1
    %p113 = scmp.ne.s32.totalorder %s108, %s110
    %p114 = scmp.eq.s32.totalorder %s11, 0
    %p115 = por %p113, %p114
    %p116 = scmp.ne.s32.totalorder %s108, %s110
    %p117 = scmp.eq.s32.totalorder %s16, 1
    %p118 = por %p116, %p117
    %p119 = scmp.ne.s32.totalorder %s110, %s111
    %p120 = scmp.eq.s32.totalorder %s16, 0
    %p121 = por %p119, %p120
    %p122 = scmp.ne.s32.totalorder %s110, %s111
    %p123 = scmp.eq.s32.totalorder %s17, 1
    %p124 = por %p122, %p123
    %p126 = scmp.ne.s32.totalorder %s111, %s125
    %p127 = scmp.eq.s32.totalorder %s17, 0
    %p128 = por %p126, %p127
    %s129 = ssub.s32 %s11, %s18
    %p130 = scmp.eq.s32.totalorder %s129, 0
    %s132 = sadd.s32 %s131, 1
    %s133 = scalar_select %p130, %s131, %s132
    %p136 = pneg %p130
    %p137 = scmp.eq.s32.totalorder %s11, 1
    %p138 = por %p136, %p137
    %p139 = scmp.ne.s32.totalorder %s131, %s134
    %p140 = scmp.eq.s32.totalorder %s11, 0
    %p141 = por %p139, %p140
    %p142 = scmp.ne.s32.totalorder %s131, %s134
    %p143 = scmp.eq.s32.totalorder %s16, 1
    %p144 = por %p142, %p143
    %p145 = scmp.ne.s32.totalorder %s134, %s135
    %p146 = scmp.eq.s32.totalorder %s16, 0
    %p147 = por %p145, %p146
    %p148 = scmp.ne.s32.totalorder %s134, %s135
    %p149 = scmp.eq.s32.totalorder %s17, 1
    %p150 = por %p148, %p149
    %p152 = scmp.ne.s32.totalorder %s135, %s151
    %p153 = scmp.eq.s32.totalorder %s17, 0
    %p154 = por %p152, %p153
    %p155 = scmp.le.s32.totalorder 1, %s11
    %p156 = scmp.lt.s32.totalorder %s11, 3
    %p157 = pnand %p155, %p156
    %p158 = pneg %p157
    // Predicated region
    $region9: #{inception_forward.1} parent=5 // pred_check
      _
    $region10: #{inception_forward.1} parent=5 // pred_check_branch
      %160 = sbr.rel (%p157) target = $region12
    $region11: #{inception_forward.1} parent=5 // pred_region
      %s161 = ssub.s32 %s11, 1
      // Predicated region
      $region13: #{inception_forward.1} parent=11 // pred_check
        %p162 = pneg %p58
      $region14: #{inception_forward.1} parent=11 // pred_check_branch
        %164 = sbr.rel (%p162) target = $region16
      $region15: #{inception_forward.1} parent=11 // pred_region
        _
      $region16: #{inception_forward.1} parent=11 // pred_fallthru
        _
      // Predicated region
      $region17: #{inception_forward.1} parent=11 // pred_check
        %p165 = pneg %p79
      $region18: #{inception_forward.1} parent=11 // pred_check_branch
        %167 = sbr.rel (%p165) target = $region20
      $region19: #{inception_forward.1} parent=11 // pred_region
        _
      $region20: #{inception_forward.1} parent=11 // pred_fallthru
        _
      // Predicated region
      $region21: #{inception_forward.1} parent=11 // pred_check
        %p168 = pneg %p100
      $region22: #{inception_forward.1} parent=11 // pred_check_branch
        %170 = sbr.rel (%p168) target = $region24
      $region23: #{inception_forward.1} parent=11 // pred_region
        _
      $region24: #{inception_forward.1} parent=11 // pred_fallthru
        _
      // Predicated region
      $region25: #{inception_forward.1} parent=11 // pred_check
        %p171 = pneg %p121
      $region26: #{inception_forward.1} parent=11 // pred_check_branch
        %173 = sbr.rel (%p171) target = $region28
      $region27: #{inception_forward.1} parent=11 // pred_region
        _
      $region28: #{inception_forward.1} parent=11 // pred_fallthru
        _
    $region12: #{inception_forward.1} parent=5 // pred_fallthru
      _
    %p174 = scmp.lt.s32.totalorder %s11, 2
    // Predicated region
    $region29: #{inception_forward.1} parent=5 // pred_check
      %p175 = pneg %p174
    $region30: #{inception_forward.1} parent=5 // pred_check_branch
      %177 = sbr.rel (%p175) target = $region32
    $region31: #{inception_forward.1} parent=5 // pred_region
      // Predicated region
      $region33: #{inception_forward.1} parent=31 // pred_check
        %p178 = pneg %p31
      $region34: #{inception_forward.1} parent=31 // pred_check_branch
        %180 = sbr.rel (%p178) target = $region36
      $region35: #{inception_forward.1} parent=31 // pred_region
        %p181 = scmp.lt.s32.totalorder %s11, 1
        %s182 = scalar_select %p181, %s11, 1
        %s183 = smul.addr %s182, 32
        %s184 = smul.addr %s183, 8
        %s185 = scalar_lea.vmem %s0, %s184
      $region36: #{inception_forward.1} parent=31 // pred_fallthru
        _
    $region32: #{inception_forward.1} parent=5 // pred_fallthru
      _
    %p186 = scmp.le.s32.totalorder 1, %s11
    %p187 = scmp.lt.s32.totalorder %s11, 3
    %p188 = pnand %p186, %p187
    %p189 = pneg %p188
    // Predicated region
    $region37: #{inception_forward.1} parent=5 // pred_check
      _
    $region38: #{inception_forward.1} parent=5 // pred_check_branch
      %191 = sbr.rel (%p188) target = $region40
    $region39: #{inception_forward.1} parent=5 // pred_region
      %s192 = ssub.s32 %s11, 1
      %p193 = scmp.lt.s32.totalorder %s16, 1
      %s194 = scalar_select %p193, %s16, 1
      %s195 = smul.addr %s194, 32
      %s196 = smul.addr %s195, 8
      %s197 = scalar_lea.vmem %s0, %s196
      %p198 = pneg %p37
      %p199 = pneg %p34
      %p200 = pneg %p58
      %p201 = pneg %p55
      %p202 = pneg %p79
      %p203 = pneg %p76
      %p204 = pneg %p100
      %p205 = pneg %p97
      %p206 = pneg %p121
      %p207 = pneg %p118
      %p208 = pneg %p147
      %p209 = pneg %p144
      %p210 = scmp.lt.s32.totalorder %s16, 1
      %s211 = scalar_select %p210, %s16, 1
      %s212 = smul.addr %s211, 32
      %s213 = smul.addr %s212, 8
      %s214 = scalar_lea.vmem %s5, %s213
      %p215 = scmp.lt.s32.totalorder %s16, 1
      %s216 = scalar_select %p215, %s16, 1
      %s217 = smul.addr %s216, 32
      %s218 = smul.addr %s217, 8
      %s219 = scalar_lea.vmem %s0, %s218
      %p220 = scmp.lt.s32.totalorder %s16, 1
      %s221 = scalar_select %p220, %s16, 1
      %s222 = smul.addr %s221, 32
      %s223 = smul.addr %s222, 8
      %s224 = scalar_lea.vmem %s5, %s223
      %v226 = vld [vmem:[%s219] sm:$0xff]
      %v227 = vld [vmem:[%s219 + $0x8] sm:$0xff]
      %v228 = vld [vmem:[%s219 + $0x10] sm:$0xff]
      %v229 = vld [vmem:[%s219 + $0x18] sm:$0xff]
      %v230 = vld [vmem:[%s219 + $0x20] sm:$0xff]
      %v231 = vld [vmem:[%s219 + $0x28] sm:$0xff]
      %v232 = vld [vmem:[%s219 + $0x30] sm:$0xff]
      %v233 = vld [vmem:[%s219 + $0x38] sm:$0xff]
      %v234 = vld [vmem:[%s219 + $0x40] sm:$0xff]
      %v235 = vld [vmem:[%s219 + $0x48] sm:$0xff]
      %v236 = vld [vmem:[%s219 + $0x50] sm:$0xff]
      %v237 = vld [vmem:[%s219 + $0x58] sm:$0xff]
      %v238 = vld [vmem:[%s219 + $0x60] sm:$0xff]
      %v239 = vld [vmem:[%s219 + $0x68] sm:$0xff]
      %v240 = vld [vmem:[%s219 + $0x70] sm:$0xff]
      %v241 = vld [vmem:[%s219 + $0x78] sm:$0xff]
      %v242 = vld [vmem:[%s219 + $0x80] sm:$0xff]
      %v243 = vld [vmem:[%s219 + $0x88] sm:$0xff]
      %v244 = vld [vmem:[%s219 + $0x90] sm:$0xff]
      %v245 = vld [vmem:[%s219 + $0x98] sm:$0xff]
      %v246 = vld [vmem:[%s219 + $0xa0] sm:$0xff]
      %v247 = vld [vmem:[%s219 + $0xa8] sm:$0xff]
      %v248 = vld [vmem:[%s219 + $0xb0] sm:$0xff]
      %v249 = vld [vmem:[%s219 + $0xb8] sm:$0xff]
      %v250 = vld [vmem:[%s219 + $0xc0] sm:$0xff]
      %v251 = vld [vmem:[%s219 + $0xc8] sm:$0xff]
      %v252 = vld [vmem:[%s219 + $0xd0] sm:$0xff]
      %v253 = vld [vmem:[%s219 + $0xd8] sm:$0xff]
      %v254 = vld [vmem:[%s219 + $0xe0] sm:$0xff]
      %v255 = vld [vmem:[%s219 + $0xe8] sm:$0xff]
      %v256 = vld [vmem:[%s219 + $0xf0] sm:$0xff]
      %v257 = vld [vmem:[%s219 + $0xf8] sm:$0xff]
      %v258 = vpack.c.bf16 %v227, %v226
      %v259 = vpack.c.bf16 %v229, %v228
      %v260 = vpack.c.bf16 %v231, %v230
      %v261 = vpack.c.bf16 %v233, %v232
      %v262 = vpack.c.bf16 %v235, %v234
      %v263 = vpack.c.bf16 %v237, %v236
      %v264 = vpack.c.bf16 %v239, %v238
      %v265 = vpack.c.bf16 %v241, %v240
      %v266 = vpack.c.bf16 %v243, %v242
      %v267 = vpack.c.bf16 %v245, %v244
      %v268 = vpack.c.bf16 %v247, %v246
      %v269 = vpack.c.bf16 %v249, %v248
      %v270 = vpack.c.bf16 %v251, %v250
      %v271 = vpack.c.bf16 %v253, %v252
      %v272 = vpack.c.bf16 %v255, %v254
      %v273 = vpack.c.bf16 %v257, %v256
      %v274 = vld [vmem:[%s1] sm:$0x3]
      %v275 = vld [vmem:[%s2] sm:$0x1]
      %v277 = vlaneseq
      %v278 = vshrl.u32 %v277, 7
      %v279 = vsub.s32 0, %v278
      %v280 = vrot.slane %v275, %v279
      %vm282 = vcmask 31744
      %v284 = vsel %vm282, %v258, 0
      %v287 = vsel %vm282, %v259, 0
      %v290 = vsel %vm282, %v260, 0
      %v293 = vsel %vm282, %v261, 0
      %v296 = vsel %vm282, %v262, 0
      %v299 = vsel %vm282, %v263, 0
      %v302 = vsel %vm282, %v264, 0
      %v305 = vsel %vm282, %v265, 0
      %v308 = vsel %vm282, %v266, 0
      %v311 = vsel %vm282, %v267, 0
      %v314 = vsel %vm282, %v268, 0
      %v317 = vsel %vm282, %v269, 0
      %v320 = vsel %vm282, %v270, 0
      %v323 = vsel %vm282, %v271, 0
      %v326 = vsel %vm282, %v272, 0
      %v329 = vsel %vm282, %v273, 0
      %vm331 = vcmask 1041408
      %v333 = vsel %vm331, %v274, 0
      %335 = vmatprep.subr.bf16.mxu0 0
      %336 = vmatpush1.bf16.msra.mxu0 %v333
      %337 = vmatprep.subr.bf16.mxu0 0
      %338 = vmatpush1.bf16.msra.mxu0 0
      %339 = vmatprep.subr.bf16.mxu0 0
      %340 = vmatpush1.bf16.msra.mxu0 0
      %341 = vmatprep.subr.bf16.mxu0 0
      %342 = vmatpush1.bf16.msra.mxu0 0
      %343 = vmatprep.subr.bf16.mxu0 0
      %344 = vmatpush1.bf16.msra.mxu0 0
      %345 = vmatprep.subr.bf16.mxu0 0
      %346 = vmatpush1.bf16.msra.mxu0 0
      %347 = vmatprep.subr.bf16.mxu0 0
      %348 = vmatpush1.bf16.msra.mxu0 0
      %349 = vmatprep.subr.bf16.mxu0 0
      %350 = vmatpush1.bf16.msra.mxu0 0
      %351 = vmatprep.subr.bf16.mxu0 0
      %352 = vmatpush1.bf16.msra.mxu0 0
      %353 = vmatprep.subr.bf16.mxu0 0
      %354 = vmatpush1.bf16.msra.mxu0 0
      %355 = vmatprep.subr.bf16.mxu0 0
      %356 = vmatpush1.bf16.msra.mxu0 0
      %357 = vmatprep.subr.bf16.mxu0 0
      %358 = vmatpush1.bf16.msra.mxu0 0
      %359 = vmatprep.subr.bf16.mxu0 0
      %360 = vmatpush1.bf16.msra.mxu0 0
      %361 = vmatprep.subr.bf16.mxu0 0
      %362 = vmatpush1.bf16.msra.mxu0 0
      %363 = vmatprep.subr.bf16.mxu0 0
      %364 = vmatpush1.bf16.msra.mxu0 0
      %365 = vmatprep.subr.bf16.mxu0 0
      %366 = vmatpush1.bf16.msra.mxu0 0
      %367 = vmatprep.mubr.bf16.mxu0 0
      %368 = vmatmul.mubr.bf16.gmra.mrb[0].mxu0 %v284
      %v369 = vpop.f32.mrb[0].mxu0
      %v370 = vadd.f32 %v280, %v369
      %v371 = vpop.f32.mrb[0].mxu0
      %v372 = vpop.f32.mrb[0].mxu0
      %v373 = vadd.f32 %v280, %v372
      %v374 = vpop.f32.mrb[0].mxu0
      %375 = vmatprep.mubr.bf16.mxu0 0
      %376 = vmatmul.mubr.bf16.gmra.mrb[0].mxu0 %v287
      %v377 = vpop.f32.mrb[0].mxu0
      %v378 = vadd.f32 %v280, %v377
      %v379 = vpop.f32.mrb[0].mxu0
      %v380 = vpop.f32.mrb[0].mxu0
      %v381 = vadd.f32 %v280, %v380
      %v382 = vpop.f32.mrb[0].mxu0
      %383 = vmatprep.mubr.bf16.mxu0 0
      %384 = vmatmul.mubr.bf16.gmra.mrb[0].mxu0 %v290
      %v385 = vpop.f32.mrb[0].mxu0
      %v386 = vadd.f32 %v280, %v385
      %v387 = vpop.f32.mrb[0].mxu0
      %v388 = vpop.f32.mrb[0].mxu0
      %v389 = vadd.f32 %v280, %v388
      %v390 = vpop.f32.mrb[0].mxu0
      %391 = vmatprep.mubr.bf16.mxu0 0
      %392 = vmatmul.mubr.bf16.gmra.mrb[0].mxu0 %v293
      %v393 = vpop.f32.mrb[0].mxu0
      %v394 = vadd.f32 %v280, %v393
      %v395 = vpop.f32.mrb[0].mxu0
      %v396 = vpop.f32.mrb[0].mxu0
      %v397 = vadd.f32 %v280, %v396
      %v398 = vpop.f32.mrb[0].mxu0
      %399 = vmatprep.mubr.bf16.mxu0 0
      %400 = vmatmul.mubr.bf16.gmra.mrb[0].mxu0 %v296
      %v401 = vpop.f32.mrb[0].mxu0
      %v402 = vadd.f32 %v280, %v401
      %v403 = vpop.f32.mrb[0].mxu0
      %v404 = vpop.f32.mrb[0].mxu0
      %v405 = vadd.f32 %v280, %v404
      %v406 = vpop.f32.mrb[0].mxu0
      %407 = vmatprep.mubr.bf16.mxu0 0
      %408 = vmatmul.mubr.bf16.gmra.mrb[0].mxu0 %v299
      %v409 = vpop.f32.mrb[0].mxu0
      %v410 = vadd.f32 %v280, %v409
      %v411 = vpop.f32.mrb[0].mxu0
      %v412 = vpop.f32.mrb[0].mxu0
      %v413 = vadd.f32 %v280, %v412
      %v414 = vpop.f32.mrb[0].mxu0
      %415 = vmatprep.mubr.bf16.mxu0 0
      %416 = vmatmul.mubr.bf16.gmra.mrb[0].mxu0 %v302
      %v417 = vpop.f32.mrb[0].mxu0
      %v418 = vadd.f32 %v280, %v417
      %v419 = vpop.f32.mrb[0].mxu0
      %v420 = vpop.f32.mrb[0].mxu0
      %v421 = vadd.f32 %v280, %v420
      %v422 = vpop.f32.mrb[0].mxu0
      %423 = vmatprep.mubr.bf16.mxu0 0
      %424 = vmatmul.mubr.bf16.gmra.mrb[0].mxu0 %v305
      %v425 = vpop.f32.mrb[0].mxu0
      %v426 = vadd.f32 %v280, %v425
      %v427 = vpop.f32.mrb[0].mxu0
      %v428 = vpop.f32.mrb[0].mxu0
      %v429 = vadd.f32 %v280, %v428
      %v430 = vpop.f32.mrb[0].mxu0
      %431 = vmatprep.mubr.bf16.mxu0 0
      %432 = vmatmul.mubr.bf16.gmra.mrb[0].mxu0 %v308
      %v433 = vpop.f32.mrb[0].mxu0
      %v434 = vadd.f32 %v280, %v433
      %v435 = vpop.f32.mrb[0].mxu0
      %v436 = vpop.f32.mrb[0].mxu0
      %v437 = vadd.f32 %v280, %v436
      %v438 = vpop.f32.mrb[0].mxu0
      %439 = vmatprep.mubr.bf16.mxu0 0
      %440 = vmatmul.mubr.bf16.gmra.mrb[0].mxu0 %v311
      %v441 = vpop.f32.mrb[0].mxu0
      %v442 = vadd.f32 %v280, %v441
      %v443 = vpop.f32.mrb[0].mxu0
      %v444 = vpop.f32.mrb[0].mxu0
      %v445 = vadd.f32 %v280, %v444
      %v446 = vpop.f32.mrb[0].mxu0
      %447 = vmatprep.mubr.bf16.mxu0 0
      %448 = vmatmul.mubr.bf16.gmra.mrb[0].mxu0 %v314
      %v449 = vpop.f32.mrb[0].mxu0
      %v450 = vadd.f32 %v280, %v449
      %v451 = vpop.f32.mrb[0].mxu0
      %v452 = vpop.f32.mrb[0].mxu0
      %v453 = vadd.f32 %v280, %v452
      %v454 = vpop.f32.mrb[0].mxu0
      %455 = vmatprep.mubr.bf16.mxu0 0
      %456 = vmatmul.mubr.bf16.gmra.mrb[0].mxu0 %v317
      %v457 = vpop.f32.mrb[0].mxu0
      %v458 = vadd.f32 %v280, %v457
      %v459 = vpop.f32.mrb[0].mxu0
      %v460 = vpop.f32.mrb[0].mxu0
      %v461 = vadd.f32 %v280, %v460
      %v462 = vpop.f32.mrb[0].mxu0
      %463 = vmatprep.mubr.bf16.mxu0 0
      %464 = vmatmul.mubr.bf16.gmra.mrb[0].mxu0 %v320
      %v465 = vpop.f32.mrb[0].mxu0
      %v466 = vadd.f32 %v280, %v465
      %v467 = vpop.f32.mrb[0].mxu0
      %v468 = vpop.f32.mrb[0].mxu0
      %v469 = vadd.f32 %v280, %v468
      %v470 = vpop.f32.mrb[0].mxu0
      %471 = vmatprep.mubr.bf16.mxu0 0
      %472 = vmatmul.mubr.bf16.gmra.mrb[0].mxu0 %v323
      %v473 = vpop.f32.mrb[0].mxu0
      %v474 = vadd.f32 %v280, %v473
      %v475 = vpop.f32.mrb[0].mxu0
      %v476 = vpop.f32.mrb[0].mxu0
      %v477 = vadd.f32 %v280, %v476
      %v478 = vpop.f32.mrb[0].mxu0
      %479 = vmatprep.mubr.bf16.mxu0 0
      %480 = vmatmul.mubr.bf16.gmra.mrb[0].mxu0 %v326
      %v481 = vpop.f32.mrb[0].mxu0
      %v482 = vadd.f32 %v280, %v481
      %v483 = vpop.f32.mrb[0].mxu0
      %v484 = vpop.f32.mrb[0].mxu0
      %v485 = vadd.f32 %v280, %v484
      %v486 = vpop.f32.mrb[0].mxu0
      %487 = vmatprep.mubr.bf16.mxu0 0
      %488 = vmatmul.mubr.bf16.gmra.mrb[0].mxu0 %v329
      %v489 = vpop.f32.mrb[0].mxu0
      %v490 = vadd.f32 %v280, %v489
      %v491 = vpop.f32.mrb[0].mxu0
      %v492 = vpop.f32.mrb[0].mxu0
      %v493 = vadd.f32 %v280, %v492
      %v494 = vpop.f32.mrb[0].mxu0
      %495 = vdwg.mxu0
      %v496 = vmax.f32 %v370, 0.0
      %v497 = vmax.f32 %v373, 0.0
      %v498 = vmax.f32 %v378, 0.0
      %v499 = vmax.f32 %v381, 0.0
      %v500 = vmax.f32 %v386, 0.0
      %v501 = vmax.f32 %v389, 0.0
      %v502 = vmax.f32 %v394, 0.0
      %v503 = vmax.f32 %v397, 0.0
      %v504 = vmax.f32 %v402, 0.0
      %v505 = vmax.f32 %v405, 0.0
      %v506 = vmax.f32 %v410, 0.0
      %v507 = vmax.f32 %v413, 0.0
      %v508 = vmax.f32 %v418, 0.0
      %v509 = vmax.f32 %v421, 0.0
      %v510 = vmax.f32 %v426, 0.0
      %v511 = vmax.f32 %v429, 0.0
      %v512 = vmax.f32 %v434, 0.0
      %v513 = vmax.f32 %v437, 0.0
      %v514 = vmax.f32 %v442, 0.0
      %v515 = vmax.f32 %v445, 0.0
      %v516 = vmax.f32 %v450, 0.0
      %v517 = vmax.f32 %v453, 0.0
      %v518 = vmax.f32 %v458, 0.0
      %v519 = vmax.f32 %v461, 0.0
      %v520 = vmax.f32 %v466, 0.0
      %v521 = vmax.f32 %v469, 0.0
      %v522 = vmax.f32 %v474, 0.0
      %v523 = vmax.f32 %v477, 0.0
      %v524 = vmax.f32 %v482, 0.0
      %v525 = vmax.f32 %v485, 0.0
      %v526 = vmax.f32 %v490, 0.0
      %v527 = vmax.f32 %v493, 0.0
      %528 = vst.msk [vmem:[#allocation3] sm:$0xff] %vm282, 0.0
      %529 = vst.msk [vmem:[#allocation3 + $0x8] sm:$0xff] %vm282, 0.0
      %vm530 = vcmask 25600
      %531 = vst.msk [vmem:[#allocation3 + $0x10] sm:$0x3] %vm530, 0.0
      %532 = vst.msk [vmem:[#allocation3 + $0x18] sm:$0xff] %vm282, 0.0
      %533 = vst.msk [vmem:[#allocation3 + $0x20] sm:$0xff] %vm282, 0.0
      %534 = vst.msk [vmem:[#allocation3 + $0x28] sm:$0x3] %vm530, 0.0
      %535 = vst.msk [vmem:[#allocation3 + $0x30] sm:$0xff] %vm282, 0.0
      %536 = vst.msk [vmem:[#allocation3 + $0x38] sm:$0xff] %vm282, 0.0
      %537 = vst.msk [vmem:[#allocation3 + $0x40] sm:$0x3] %vm530, 0.0
      %538 = vst.msk [vmem:[#allocation3 + $0x48] sm:$0xff] %vm282, 0.0
      %539 = vst.msk [vmem:[#allocation3 + $0x50] sm:$0xff] %vm282, 0.0
      %540 = vst.msk [vmem:[#allocation3 + $0x58] sm:$0x3] %vm530, 0.0
      %541 = vst.msk [vmem:[#allocation3 + $0x60] sm:$0xff] %vm282, 0.0
      %542 = vst.msk [vmem:[#allocation3 + $0x68] sm:$0xff] %vm282, 0.0
      %543 = vst.msk [vmem:[#allocation3 + $0x70] sm:$0x3] %vm530, 0.0
      %544 = vst.msk [vmem:[#allocation3 + $0x78] sm:$0xff] %vm282, 0.0
      %545 = vst.msk [vmem:[#allocation3 + $0x80] sm:$0xff] %vm282, 0.0
      %546 = vst.msk [vmem:[#allocation3 + $0x88] sm:$0x3] %vm530, 0.0
      %547 = vst.msk [vmem:[#allocation3 + $0x90] sm:$0xff] %vm282, 0.0
      %548 = vst.msk [vmem:[#allocation3 + $0x98] sm:$0xff] %vm282, 0.0
      %549 = vst.msk [vmem:[#allocation3 + $0xa0] sm:$0x3] %vm530, 0.0
      %550 = vst.msk [vmem:[#allocation3 + $0xa8] sm:$0xff] %vm282, 0.0
      %551 = vst.msk [vmem:[#allocation3 + $0xb0] sm:$0xff] %vm282, 0.0
      %552 = vst.msk [vmem:[#allocation3 + $0xb8] sm:$0x3] %vm530, 0.0
      %553 = vst.msk [vmem:[#allocation3 + $0xc0] sm:$0xff] %vm282, 0.0
      %554 = vst.msk [vmem:[#allocation3 + $0xc8] sm:$0xff] %vm282, 0.0
      %555 = vst.msk [vmem:[#allocation3 + $0xd0] sm:$0x3] %vm530, 0.0
      %556 = vst.msk [vmem:[#allocation3 + $0xd8] sm:$0xff] %vm282, 0.0
      %557 = vst.msk [vmem:[#allocation3 + $0xe0] sm:$0xff] %vm282, 0.0
      %558 = vst.msk [vmem:[#allocation3 + $0xe8] sm:$0x3] %vm530, 0.0
      %559 = vst.msk [vmem:[#allocation3 + $0xf0] sm:$0xff] %vm282, 0.0
      %560 = vst.msk [vmem:[#allocation3 + $0xf8] sm:$0xff] %vm282, 0.0
      %561 = vst.msk [vmem:[#allocation3 + $0x100] sm:$0x3] %vm530, 0.0
      %562 = vst.msk [vmem:[#allocation3 + $0x108] sm:$0xff] %vm282, 0.0
      %563 = vst.msk [vmem:[#allocation3 + $0x110] sm:$0xff] %vm282, 0.0
      %564 = vst.msk [vmem:[#allocation3 + $0x118] sm:$0x3] %vm530, 0.0
      %565 = vst.msk [vmem:[#allocation3 + $0x120] sm:$0xff] %vm282, 0.0
      %566 = vst.msk [vmem:[#allocation3 + $0x128] sm:$0xff] %vm282, 0.0
      %567 = vst.msk [vmem:[#allocation3 + $0x130] sm:$0x3] %vm530, 0.0
      %568 = vst.msk [vmem:[#allocation3 + $0x138] sm:$0xff] %vm282, 0.0
      %569 = vst.msk [vmem:[#allocation3 + $0x140] sm:$0xff] %vm282, 0.0
      %570 = vst.msk [vmem:[#allocation3 + $0x148] sm:$0x3] %vm530, 0.0
      %571 = vst.msk [vmem:[#allocation3 + $0x150] sm:$0xff] %vm282, 0.0
      %572 = vst.msk [vmem:[#allocation3 + $0x158] sm:$0xff] %vm282, 0.0
      %573 = vst.msk [vmem:[#allocation3 + $0x160] sm:$0x3] %vm530, 0.0
      %574 = vst.msk [vmem:[#allocation3 + $0x168] sm:$0xff] %vm282, 0.0
      %575 = vst.msk [vmem:[#allocation3 + $0x170] sm:$0xff] %vm282, 0.0
      %576 = vst.msk [vmem:[#allocation3 + $0x178] sm:$0x3] %vm530, 0.0
      %577 = vst.msk [vmem:[#allocation3 + $0x180] sm:$0xff] %vm282, 0.0
      %578 = vst.msk [vmem:[#allocation3 + $0x188] sm:$0xff] %vm282, 0.0
      %579 = vst.msk [vmem:[#allocation3 + $0x190] sm:$0x3] %vm530, 0.0
      %580 = vst.msk [vmem:[#allocation3 + $0x198] sm:$0xff] %vm282, 0.0
      %581 = vst.msk [vmem:[#allocation3 + $0x1a0] sm:$0xff] %vm282, 0.0
      %582 = vst.msk [vmem:[#allocation3 + $0x1a8] sm:$0x3] %vm530, 0.0
      %s583 = scalar_lea.vmem [#allocation3], 24
      %584 = vst.msk [vmem:[%s583 + $0x1] sm:$0xff] %vm282, %v496
      %585 = vst.msk [vmem:[%s583 + $0x9] sm:$0xff] %vm282, %v497
      %586 = vst.msk [vmem:[%s583 + $0x19] sm:$0xff] %vm282, %v498
      %587 = vst.msk [vmem:[%s583 + $0x21] sm:$0xff] %vm282, %v499
      %588 = vst.msk [vmem:[%s583 + $0x31] sm:$0xff] %vm282, %v500
      %589 = vst.msk [vmem:[%s583 + $0x39] sm:$0xff] %vm282, %v501
      %590 = vst.msk [vmem:[%s583 + $0x49] sm:$0xff] %vm282, %v502
      %591 = vst.msk [vmem:[%s583 + $0x51] sm:$0xff] %vm282, %v503
      %592 = vst.msk [vmem:[%s583 + $0x61] sm:$0xff] %vm282, %v504
      %593 = vst.msk [vmem:[%s583 + $0x69] sm:$0xff] %vm282, %v505
      %594 = vst.msk [vmem:[%s583 + $0x79] sm:$0xff] %vm282, %v506
      %595 = vst.msk [vmem:[%s583 + $0x81] sm:$0xff] %vm282, %v507
      %596 = vst.msk [vmem:[%s583 + $0x91] sm:$0xff] %vm282, %v508
      %597 = vst.msk [vmem:[%s583 + $0x99] sm:$0xff] %vm282, %v509
      %598 = vst.msk [vmem:[%s583 + $0xa9] sm:$0xff] %vm282, %v510
      %599 = vst.msk [vmem:[%s583 + $0xb1] sm:$0xff] %vm282, %v511
      %600 = vst.msk [vmem:[%s583 + $0xc1] sm:$0xff] %vm282, %v512
      %601 = vst.msk [vmem:[%s583 + $0xc9] sm:$0xff] %vm282, %v513
      %602 = vst.msk [vmem:[%s583 + $0xd9] sm:$0xff] %vm282, %v514
      %603 = vst.msk [vmem:[%s583 + $0xe1] sm:$0xff] %vm282, %v515
      %604 = vst.msk [vmem:[%s583 + $0xf1] sm:$0xff] %vm282, %v516
      %605 = vst.msk [vmem:[%s583 + $0xf9] sm:$0xff] %vm282, %v517
      %606 = vst.msk [vmem:[%s583 + $0x109] sm:$0xff] %vm282, %v518
      %607 = vst.msk [vmem:[%s583 + $0x111] sm:$0xff] %vm282, %v519
      %608 = vst.msk [vmem:[%s583 + $0x121] sm:$0xff] %vm282, %v520
      %609 = vst.msk [vmem:[%s583 + $0x129] sm:$0xff] %vm282, %v521
      %610 = vst.msk [vmem:[%s583 + $0x139] sm:$0xff] %vm282, %v522
      %611 = vst.msk [vmem:[%s583 + $0x141] sm:$0xff] %vm282, %v523
      %612 = vst.msk [vmem:[%s583 + $0x151] sm:$0xff] %vm282, %v524
      %613 = vst.msk [vmem:[%s583 + $0x159] sm:$0xff] %vm282, %v525
      %614 = vst.msk [vmem:[%s583 + $0x169] sm:$0xff] %vm282, %v526
      %615 = vst.msk [vmem:[%s583 + $0x171] sm:$0xff] %vm282, %v527
      %616 = vst.msk [vmem:[#allocation4] sm:$0xff] %vm282, 0.0
      %617 = vst.msk [vmem:[#allocation4 + $0x8] sm:$0xff] %vm282, 0.0
      %vm618 = vcmask 27648
      %619 = vst.msk [vmem:[#allocation4 + $0x10] sm:$0xf] %vm618, 0.0
      %620 = vst.msk [vmem:[#allocation4 + $0x18] sm:$0xff] %vm282, 0.0
      %621 = vst.msk [vmem:[#allocation4 + $0x20] sm:$0xff] %vm282, 0.0
      %622 = vst.msk [vmem:[#allocation4 + $0x28] sm:$0xf] %vm618, 0.0
      %623 = vst.msk [vmem:[#allocation4 + $0x30] sm:$0xff] %vm282, 0.0
      %624 = vst.msk [vmem:[#allocation4 + $0x38] sm:$0xff] %vm282, 0.0
      %625 = vst.msk [vmem:[#allocation4 + $0x40] sm:$0xf] %vm618, 0.0
      %626 = vst.msk [vmem:[#allocation4 + $0x48] sm:$0xff] %vm282, 0.0
      %627 = vst.msk [vmem:[#allocation4 + $0x50] sm:$0xff] %vm282, 0.0
      %628 = vst.msk [vmem:[#allocation4 + $0x58] sm:$0xf] %vm618, 0.0
      %629 = vst.msk [vmem:[#allocation4 + $0x60] sm:$0xff] %vm282, 0.0
      %630 = vst.msk [vmem:[#allocation4 + $0x68] sm:$0xff] %vm282, 0.0
      %631 = vst.msk [vmem:[#allocation4 + $0x70] sm:$0xf] %vm618, 0.0
      %632 = vst.msk [vmem:[#allocation4 + $0x78] sm:$0xff] %vm282, 0.0
      %633 = vst.msk [vmem:[#allocation4 + $0x80] sm:$0xff] %vm282, 0.0
      %634 = vst.msk [vmem:[#allocation4 + $0x88] sm:$0xf] %vm618, 0.0
      %635 = vst.msk [vmem:[#allocation4 + $0x90] sm:$0xff] %vm282, 0.0
      %636 = vst.msk [vmem:[#allocation4 + $0x98] sm:$0xff] %vm282, 0.0
      %637 = vst.msk [vmem:[#allocation4 + $0xa0] sm:$0xf] %vm618, 0.0
      %638 = vst.msk [vmem:[#allocation4 + $0xa8] sm:$0xff] %vm282, 0.0
      %639 = vst.msk [vmem:[#allocation4 + $0xb0] sm:$0xff] %vm282, 0.0
      %640 = vst.msk [vmem:[#allocation4 + $0xb8] sm:$0xf] %vm618, 0.0
      %641 = vst.msk [vmem:[#allocation4 + $0xc0] sm:$0xff] %vm282, 0.0
      %642 = vst.msk [vmem:[#allocation4 + $0xc8] sm:$0xff] %vm282, 0.0
      %643 = vst.msk [vmem:[#allocation4 + $0xd0] sm:$0xf] %vm618, 0.0
      %644 = vst.msk [vmem:[#allocation4 + $0xd8] sm:$0xff] %vm282, 0.0
      %645 = vst.msk [vmem:[#allocation4 + $0xe0] sm:$0xff] %vm282, 0.0
      %646 = vst.msk [vmem:[#allocation4 + $0xe8] sm:$0xf] %vm618, 0.0
      %647 = vst.msk [vmem:[#allocation4 + $0xf0] sm:$0xff] %vm282, 0.0
      %648 = vst.msk [vmem:[#allocation4 + $0xf8] sm:$0xff] %vm282, 0.0
      %649 = vst.msk [vmem:[#allocation4 + $0x100] sm:$0xf] %vm618, 0.0
      %650 = vst.msk [vmem:[#allocation4 + $0x108] sm:$0xff] %vm282, 0.0
      %651 = vst.msk [vmem:[#allocation4 + $0x110] sm:$0xff] %vm282, 0.0
      %652 = vst.msk [vmem:[#allocation4 + $0x118] sm:$0xf] %vm618, 0.0
      %653 = vst.msk [vmem:[#allocation4 + $0x120] sm:$0xff] %vm282, 0.0
      %654 = vst.msk [vmem:[#allocation4 + $0x128] sm:$0xff] %vm282, 0.0
      %655 = vst.msk [vmem:[#allocation4 + $0x130] sm:$0xf] %vm618, 0.0
      %656 = vst.msk [vmem:[#allocation4 + $0x138] sm:$0xff] %vm282, 0.0
      %657 = vst.msk [vmem:[#allocation4 + $0x140] sm:$0xff] %vm282, 0.0
      %658 = vst.msk [vmem:[#allocation4 + $0x148] sm:$0xf] %vm618, 0.0
      %659 = vst.msk [vmem:[#allocation4 + $0x150] sm:$0xff] %vm282, 0.0
      %660 = vst.msk [vmem:[#allocation4 + $0x158] sm:$0xff] %vm282, 0.0
      %661 = vst.msk [vmem:[#allocation4 + $0x160] sm:$0xf] %vm618, 0.0
      %662 = vst.msk [vmem:[#allocation4 + $0x168] sm:$0xff] %vm282, 0.0
      %663 = vst.msk [vmem:[#allocation4 + $0x170] sm:$0xff] %vm282, 0.0
      %664 = vst.msk [vmem:[#allocation4 + $0x178] sm:$0xf] %vm618, 0.0
      %665 = vst.msk [vmem:[#allocation4 + $0x180] sm:$0xff] %vm282, 0.0
      %666 = vst.msk [vmem:[#allocation4 + $0x188] sm:$0xff] %vm282, 0.0
      %667 = vst.msk [vmem:[#allocation4 + $0x190] sm:$0xf] %vm618, 0.0
      %668 = vst.msk [vmem:[#allocation4 + $0x198] sm:$0xff] %vm282, 0.0
      %669 = vst.msk [vmem:[#allocation4 + $0x1a0] sm:$0xff] %vm282, 0.0
      %670 = vst.msk [vmem:[#allocation4 + $0x1a8] sm:$0xf] %vm618, 0.0
      %671 = vst.msk [vmem:[#allocation4 + $0x1b0] sm:$0xff] %vm282, 0.0
      %672 = vst.msk [vmem:[#allocation4 + $0x1b8] sm:$0xff] %vm282, 0.0
      %673 = vst.msk [vmem:[#allocation4 + $0x1c0] sm:$0xf] %vm618, 0.0
      %674 = vst.msk [vmem:[#allocation4 + $0x1c8] sm:$0xff] %vm282, 0.0
      %675 = vst.msk [vmem:[#allocation4 + $0x1d0] sm:$0xff] %vm282, 0.0
      %676 = vst.msk [vmem:[#allocation4 + $0x1d8] sm:$0xf] %vm618, 0.0
      %709 = vrot.lane.b32.xlu0 %v496, 124
      %v710 = vpop.permute.xlu0 %709
      %711 = vrot.lane.b32.xlu0 %v497, 124
      %v712 = vpop.permute.xlu0 %711
      %713 = vrot.lane.b32.xlu0 %v498, 124
      %v714 = vpop.permute.xlu0 %713
      %715 = vrot.lane.b32.xlu0 %v499, 124
      %v716 = vpop.permute.xlu0 %715
      %717 = vrot.lane.b32.xlu0 %v500, 124
      %v718 = vpop.permute.xlu0 %717
      %719 = vrot.lane.b32.xlu0 %v501, 124
      %v720 = vpop.permute.xlu0 %719
      %721 = vrot.lane.b32.xlu0 %v502, 124
      %v722 = vpop.permute.xlu0 %721
      %723 = vrot.lane.b32.xlu0 %v503, 124
      %v724 = vpop.permute.xlu0 %723
      %725 = vrot.lane.b32.xlu0 %v504, 124
      %v726 = vpop.permute.xlu0 %725
      %727 = vrot.lane.b32.xlu0 %v505, 124
      %v728 = vpop.permute.xlu0 %727
      %729 = vrot.lane.b32.xlu0 %v506, 124
      %v730 = vpop.permute.xlu0 %729
      %731 = vrot.lane.b32.xlu0 %v507, 124
      %v732 = vpop.permute.xlu0 %731
      %733 = vrot.lane.b32.xlu0 %v508, 124
      %v734 = vpop.permute.xlu0 %733
      %735 = vrot.lane.b32.xlu0 %v509, 124
      %v736 = vpop.permute.xlu0 %735
      %737 = vrot.lane.b32.xlu0 %v510, 124
      %v738 = vpop.permute.xlu0 %737
      %739 = vrot.lane.b32.xlu0 %v511, 124
      %v740 = vpop.permute.xlu0 %739
      %741 = vrot.lane.b32.xlu0 %v512, 124
      %v742 = vpop.permute.xlu0 %741
      %743 = vrot.lane.b32.xlu0 %v513, 124
      %v744 = vpop.permute.xlu0 %743
      %745 = vrot.lane.b32.xlu0 %v514, 124
      %v746 = vpop.permute.xlu0 %745
      %747 = vrot.lane.b32.xlu0 %v515, 124
      %v748 = vpop.permute.xlu0 %747
      %749 = vrot.lane.b32.xlu0 %v516, 124
      %v750 = vpop.permute.xlu0 %749
      %751 = vrot.lane.b32.xlu0 %v517, 124
      %v752 = vpop.permute.xlu0 %751
      %753 = vrot.lane.b32.xlu0 %v518, 124
      %v754 = vpop.permute.xlu0 %753
      %755 = vrot.lane.b32.xlu0 %v519, 124
      %v756 = vpop.permute.xlu0 %755
      %757 = vrot.lane.b32.xlu0 %v520, 124
      %v758 = vpop.permute.xlu0 %757
      %759 = vrot.lane.b32.xlu0 %v521, 124
      %v760 = vpop.permute.xlu0 %759
      %761 = vrot.lane.b32.xlu0 %v522, 124
      %v762 = vpop.permute.xlu0 %761
      %763 = vrot.lane.b32.xlu0 %v523, 124
      %v764 = vpop.permute.xlu0 %763
      %765 = vrot.lane.b32.xlu0 %v524, 124
      %v766 = vpop.permute.xlu0 %765
      %767 = vrot.lane.b32.xlu0 %v525, 124
      %v768 = vpop.permute.xlu0 %767
      %769 = vrot.lane.b32.xlu0 %v526, 124
      %v770 = vpop.permute.xlu0 %769
      %771 = vrot.lane.b32.xlu0 %v527, 124
      %v772 = vpop.permute.xlu0 %771
      %s805 = scalar_lea.vmem [#allocation4], 48
      %806 = vst.msk [vmem:[%s805 + $0x2] sm:$0xff] %vm282, %v710
      %807 = vst.msk [vmem:[%s805 + $0xa] sm:$0xff] %vm282, %v712
      %808 = vst.msk [vmem:[%s805 + $0x1a] sm:$0xff] %vm282, %v714
      %809 = vst.msk [vmem:[%s805 + $0x22] sm:$0xff] %vm282, %v716
      %810 = vst.msk [vmem:[%s805 + $0x32] sm:$0xff] %vm282, %v718
      %811 = vst.msk [vmem:[%s805 + $0x3a] sm:$0xff] %vm282, %v720
      %812 = vst.msk [vmem:[%s805 + $0x4a] sm:$0xff] %vm282, %v722
      %813 = vst.msk [vmem:[%s805 + $0x52] sm:$0xff] %vm282, %v724
      %814 = vst.msk [vmem:[%s805 + $0x62] sm:$0xff] %vm282, %v726
      %815 = vst.msk [vmem:[%s805 + $0x6a] sm:$0xff] %vm282, %v728
      %816 = vst.msk [vmem:[%s805 + $0x7a] sm:$0xff] %vm282, %v730
      %817 = vst.msk [vmem:[%s805 + $0x82] sm:$0xff] %vm282, %v732
      %818 = vst.msk [vmem:[%s805 + $0x92] sm:$0xff] %vm282, %v734
      %819 = vst.msk [vmem:[%s805 + $0x9a] sm:$0xff] %vm282, %v736
      %820 = vst.msk [vmem:[%s805 + $0xaa] sm:$0xff] %vm282, %v738
      %821 = vst.msk [vmem:[%s805 + $0xb2] sm:$0xff] %vm282, %v740
      %822 = vst.msk [vmem:[%s805 + $0xc2] sm:$0xff] %vm282, %v742
      %823 = vst.msk [vmem:[%s805 + $0xca] sm:$0xff] %vm282, %v744
      %824 = vst.msk [vmem:[%s805 + $0xda] sm:$0xff] %vm282, %v746
      %825 = vst.msk [vmem:[%s805 + $0xe2] sm:$0xff] %vm282, %v748
      %826 = vst.msk [vmem:[%s805 + $0xf2] sm:$0xff] %vm282, %v750
      %827 = vst.msk [vmem:[%s805 + $0xfa] sm:$0xff] %vm282, %v752
      %828 = vst.msk [vmem:[%s805 + $0x10a] sm:$0xff] %vm282, %v754
      %829 = vst.msk [vmem:[%s805 + $0x112] sm:$0xff] %vm282, %v756
      %830 = vst.msk [vmem:[%s805 + $0x122] sm:$0xff] %vm282, %v758
      %831 = vst.msk [vmem:[%s805 + $0x12a] sm:$0xff] %vm282, %v760
      %832 = vst.msk [vmem:[%s805 + $0x13a] sm:$0xff] %vm282, %v762
      %833 = vst.msk [vmem:[%s805 + $0x142] sm:$0xff] %vm282, %v764
      %834 = vst.msk [vmem:[%s805 + $0x152] sm:$0xff] %vm282, %v766
      %835 = vst.msk [vmem:[%s805 + $0x15a] sm:$0xff] %vm282, %v768
      %836 = vst.msk [vmem:[%s805 + $0x16a] sm:$0xff] %vm282, %v770
      %837 = vst.msk [vmem:[%s805 + $0x172] sm:$0xff] %vm282, %v772
      %838 = vst.msk [vmem:[#allocation2] sm:$0xff] %vm282, -inf
      %839 = vst.msk [vmem:[#allocation2 + $0x8] sm:$0xff] %vm282, -inf
      %840 = vst.msk [vmem:[#allocation2 + $0x10] sm:$0x3] %vm530, -inf
      %841 = vst.msk [vmem:[#allocation2 + $0x18] sm:$0xff] %vm282, -inf
      %842 = vst.msk [vmem:[#allocation2 + $0x20] sm:$0xff] %vm282, -inf
      %843 = vst.msk [vmem:[#allocation2 + $0x28] sm:$0x3] %vm530, -inf
      %844 = vst.msk [vmem:[#allocation2 + $0x30] sm:$0xff] %vm282, -inf
      %845 = vst.msk [vmem:[#allocation2 + $0x38] sm:$0xff] %vm282, -inf
      %846 = vst.msk [vmem:[#allocation2 + $0x40] sm:$0x3] %vm530, -inf
      %847 = vst.msk [vmem:[#allocation2 + $0x48] sm:$0xff] %vm282, -inf
      %848 = vst.msk [vmem:[#allocation2 + $0x50] sm:$0xff] %vm282, -inf
      %849 = vst.msk [vmem:[#allocation2 + $0x58] sm:$0x3] %vm530, -inf
      %850 = vst.msk [vmem:[#allocation2 + $0x60] sm:$0xff] %vm282, -inf
      %851 = vst.msk [vmem:[#allocation2 + $0x68] sm:$0xff] %vm282, -inf
      %852 = vst.msk [vmem:[#allocation2 + $0x70] sm:$0x3] %vm530, -inf
      %853 = vst.msk [vmem:[#allocation2 + $0x78] sm:$0xff] %vm282, -inf
      %854 = vst.msk [vmem:[#allocation2 + $0x80] sm:$0xff] %vm282, -inf
      %855 = vst.msk [vmem:[#allocation2 + $0x88] sm:$0x3] %vm530, -inf
      %856 = vst.msk [vmem:[#allocation2 + $0x90] sm:$0xff] %vm282, -inf
      %857 = vst.msk [vmem:[#allocation2 + $0x98] sm:$0xff] %vm282, -inf
      %858 = vst.msk [vmem:[#allocation2 + $0xa0] sm:$0x3] %vm530, -inf
      %859 = vst.msk [vmem:[#allocation2 + $0xa8] sm:$0xff] %vm282, -inf
      %860 = vst.msk [vmem:[#allocation2 + $0xb0] sm:$0xff] %vm282, -inf
      %861 = vst.msk [vmem:[#allocation2 + $0xb8] sm:$0x3] %vm530, -inf
      %862 = vst.msk [vmem:[#allocation2 + $0xc0] sm:$0xff] %vm282, -inf
      %863 = vst.msk [vmem:[#allocation2 + $0xc8] sm:$0xff] %vm282, -inf
      %864 = vst.msk [vmem:[#allocation2 + $0xd0] sm:$0x3] %vm530, -inf
      %865 = vst.msk [vmem:[#allocation2 + $0xd8] sm:$0xff] %vm282, -inf
      %866 = vst.msk [vmem:[#allocation2 + $0xe0] sm:$0xff] %vm282, -inf
      %867 = vst.msk [vmem:[#allocation2 + $0xe8] sm:$0x3] %vm530, -inf
      %868 = vst.msk [vmem:[#allocation2 + $0xf0] sm:$0xff] %vm282, -inf
      %869 = vst.msk [vmem:[#allocation2 + $0xf8] sm:$0xff] %vm282, -inf
      %870 = vst.msk [vmem:[#allocation2 + $0x100] sm:$0x3] %vm530, -inf
      %871 = vst.msk [vmem:[#allocation2 + $0x108] sm:$0xff] %vm282, -inf
      %872 = vst.msk [vmem:[#allocation2 + $0x110] sm:$0xff] %vm282, -inf
      %873 = vst.msk [vmem:[#allocation2 + $0x118] sm:$0x3] %vm530, -inf
      %874 = vst.msk [vmem:[#allocation2 + $0x120] sm:$0xff] %vm282, -inf
      %875 = vst.msk [vmem:[#allocation2 + $0x128] sm:$0xff] %vm282, -inf
      %876 = vst.msk [vmem:[#allocation2 + $0x130] sm:$0x3] %vm530, -inf
      %877 = vst.msk [vmem:[#allocation2 + $0x138] sm:$0xff] %vm282, -inf
      %878 = vst.msk [vmem:[#allocation2 + $0x140] sm:$0xff] %vm282, -inf
      %879 = vst.msk [vmem:[#allocation2 + $0x148] sm:$0x3] %vm530, -inf
      %880 = vst.msk [vmem:[#allocation2 + $0x150] sm:$0xff] %vm282, -inf
      %881 = vst.msk [vmem:[#allocation2 + $0x158] sm:$0xff] %vm282, -inf
      %882 = vst.msk [vmem:[#allocation2 + $0x160] sm:$0x3] %vm530, -inf
      %883 = vst.msk [vmem:[#allocation2 + $0x168] sm:$0xff] %vm282, -inf
      %884 = vst.msk [vmem:[#allocation2 + $0x170] sm:$0xff] %vm282, -inf
      %885 = vst.msk [vmem:[#allocation2 + $0x178] sm:$0x3] %vm530, -inf
      %886 = vst.msk [vmem:[#allocation2 + $0x180] sm:$0xff] %vm282, -inf
      %887 = vst.msk [vmem:[#allocation2 + $0x188] sm:$0xff] %vm282, -inf
      %888 = vst.msk [vmem:[#allocation2 + $0x190] sm:$0x3] %vm530, -inf
      %889 = vst.msk [vmem:[#allocation2 + $0x198] sm:$0xff] %vm282, -inf
      %890 = vst.msk [vmem:[#allocation2 + $0x1a0] sm:$0xff] %vm282, -inf
      %891 = vst.msk [vmem:[#allocation2 + $0x1a8] sm:$0x3] %vm530, -inf
      %s892 = scalar_lea.vmem [#allocation2], 24
      %893 = vst.msk [vmem:[%s892 + $0x1] sm:$0xff] %vm282, %v226
      %894 = vst.msk [vmem:[%s892 + $0x9] sm:$0xff] %vm282, %v227
      %895 = vst.msk [vmem:[%s892 + $0x19] sm:$0xff] %vm282, %v228
      %896 = vst.msk [vmem:[%s892 + $0x21] sm:$0xff] %vm282, %v229
      %897 = vst.msk [vmem:[%s892 + $0x31] sm:$0xff] %vm282, %v230
      %898 = vst.msk [vmem:[%s892 + $0x39] sm:$0xff] %vm282, %v231
      %899 = vst.msk [vmem:[%s892 + $0x49] sm:$0xff] %vm282, %v232
      %900 = vst.msk [vmem:[%s892 + $0x51] sm:$0xff] %vm282, %v233
      %901 = vst.msk [vmem:[%s892 + $0x61] sm:$0xff] %vm282, %v234
      %902 = vst.msk [vmem:[%s892 + $0x69] sm:$0xff] %vm282, %v235
      %903 = vst.msk [vmem:[%s892 + $0x79] sm:$0xff] %vm282, %v236
      %904 = vst.msk [vmem:[%s892 + $0x81] sm:$0xff] %vm282, %v237
      %905 = vst.msk [vmem:[%s892 + $0x91] sm:$0xff] %vm282, %v238
      %906 = vst.msk [vmem:[%s892 + $0x99] sm:$0xff] %vm282, %v239
      %907 = vst.msk [vmem:[%s892 + $0xa9] sm:$0xff] %vm282, %v240
      %908 = vst.msk [vmem:[%s892 + $0xb1] sm:$0xff] %vm282, %v241
      %909 = vst.msk [vmem:[%s892 + $0xc1] sm:$0xff] %vm282, %v242
      %910 = vst.msk [vmem:[%s892 + $0xc9] sm:$0xff] %vm282, %v243
      %911 = vst.msk [vmem:[%s892 + $0xd9] sm:$0xff] %vm282, %v244
      %912 = vst.msk [vmem:[%s892 + $0xe1] sm:$0xff] %vm282, %v245
      %913 = vst.msk [vmem:[%s892 + $0xf1] sm:$0xff] %vm282, %v246
      %914 = vst.msk [vmem:[%s892 + $0xf9] sm:$0xff] %vm282, %v247
      %915 = vst.msk [vmem:[%s892 + $0x109] sm:$0xff] %vm282, %v248
      %916 = vst.msk [vmem:[%s892 + $0x111] sm:$0xff] %vm282, %v249
      %917 = vst.msk [vmem:[%s892 + $0x121] sm:$0xff] %vm282, %v250
      %918 = vst.msk [vmem:[%s892 + $0x129] sm:$0xff] %vm282, %v251
      %919 = vst.msk [vmem:[%s892 + $0x139] sm:$0xff] %vm282, %v252
      %920 = vst.msk [vmem:[%s892 + $0x141] sm:$0xff] %vm282, %v253
      %921 = vst.msk [vmem:[%s892 + $0x151] sm:$0xff] %vm282, %v254
      %922 = vst.msk [vmem:[%s892 + $0x159] sm:$0xff] %vm282, %v255
      %923 = vst.msk [vmem:[%s892 + $0x169] sm:$0xff] %vm282, %v256
      %924 = vst.msk [vmem:[%s892 + $0x171] sm:$0xff] %vm282, %v257
      %v925 = vld [vmem:[#allocation2] sm:$0xff]
      %v926 = vld [vmem:[#allocation2 + $0x8] sm:$0xff]
      %v927 = vld [vmem:[#allocation2 + $0x10] sm:$0x3]
      %v928 = vld [vmem:[#allocation2 + $0x18] sm:$0xff]
      %v929 = vld [vmem:[#allocation2 + $0x20] sm:$0xff]
      %v930 = vld [vmem:[#allocation2 + $0x28] sm:$0x3]
      %v931 = vld [vmem:[#allocation2 + $0x30] sm:$0xff]
      %v932 = vld [vmem:[#allocation2 + $0x38] sm:$0xff]
      %v933 = vld [vmem:[#allocation2 + $0x40] sm:$0x3]
      %v934 = vld [vmem:[#allocation2 + $0x48] sm:$0xff]
      %v935 = vld [vmem:[#allocation2 + $0x50] sm:$0xff]
      %v936 = vld [vmem:[#allocation2 + $0x58] sm:$0x3]
      %v937 = vld [vmem:[#allocation2 + $0x60] sm:$0xff]
      %v938 = vld [vmem:[#allocation2 + $0x68] sm:$0xff]
      %v939 = vld [vmem:[#allocation2 + $0x70] sm:$0x3]
      %v940 = vld [vmem:[#allocation2 + $0x78] sm:$0xff]
      %v941 = vld [vmem:[#allocation2 + $0x80] sm:$0xff]
      %v942 = vld [vmem:[#allocation2 + $0x88] sm:$0x3]
      %v943 = vld [vmem:[#allocation2 + $0x90] sm:$0xff]
      %v944 = vld [vmem:[#allocation2 + $0x98] sm:$0xff]
      %v945 = vld [vmem:[#allocation2 + $0xa0] sm:$0x3]
      %v946 = vld [vmem:[#allocation2 + $0xa8] sm:$0xff]
      %v947 = vld [vmem:[#allocation2 + $0xb0] sm:$0xff]
      %v948 = vld [vmem:[#allocation2 + $0xb8] sm:$0x3]
      %v949 = vld [vmem:[#allocation2 + $0xc0] sm:$0xff]
      %v950 = vld [vmem:[#allocation2 + $0xc8] sm:$0xff]
      %v951 = vld [vmem:[#allocation2 + $0xd0] sm:$0x3]
      %v952 = vld [vmem:[#allocation2 + $0xd8] sm:$0xff]
      %v953 = vld [vmem:[#allocation2 + $0xe0] sm:$0xff]
      %v954 = vld [vmem:[#allocation2 + $0xe8] sm:$0x3]
      %v955 = vld [vmem:[#allocation2 + $0xf0] sm:$0xff]
      %v956 = vld [vmem:[#allocation2 + $0xf8] sm:$0xff]
      %v957 = vld [vmem:[#allocation2 + $0x100] sm:$0x3]
      %v958 = vld [vmem:[#allocation2 + $0x108] sm:$0xff]
      %v959 = vld [vmem:[#allocation2 + $0x110] sm:$0xff]
      %v960 = vld [vmem:[#allocation2 + $0x118] sm:$0x3]
      %v961 = vld [vmem:[#allocation2 + $0x120] sm:$0xff]
      %v962 = vld [vmem:[#allocation2 + $0x128] sm:$0xff]
      %v963 = vld [vmem:[#allocation2 + $0x130] sm:$0x3]
      %v964 = vld [vmem:[#allocation2 + $0x138] sm:$0xff]
      %v965 = vld [vmem:[#allocation2 + $0x140] sm:$0xff]
      %v966 = vld [vmem:[#allocation2 + $0x148] sm:$0x3]
      %v967 = vld [vmem:[#allocation2 + $0x150] sm:$0xff]
      %v968 = vld [vmem:[#allocation2 + $0x158] sm:$0xff]
      %v969 = vld [vmem:[#allocation2 + $0x160] sm:$0x3]
      %v970 = vld [vmem:[#allocation2 + $0x168] sm:$0xff]
      %v971 = vld [vmem:[#allocation2 + $0x170] sm:$0xff]
      %v972 = vld [vmem:[#allocation2 + $0x178] sm:$0x3]
      %v973 = vld [vmem:[%s892] sm:$0xff]
      %v974 = vld [vmem:[%s892 + $0x8] sm:$0xff]
      %v975 = vld [vmem:[%s892 + $0x10] sm:$0x3]
      %v976 = vld [vmem:[%s892 + $0x18] sm:$0xff]
      %v977 = vld [vmem:[%s892 + $0x20] sm:$0xff]
      %v978 = vld [vmem:[%s892 + $0x28] sm:$0x3]
      %v979 = vld [vmem:[%s892 + $0x30] sm:$0xff]
      %v980 = vld [vmem:[%s892 + $0x38] sm:$0xff]
      %v981 = vld [vmem:[%s892 + $0x40] sm:$0x3]
      %v982 = vld [vmem:[%s892 + $0x48] sm:$0xff]
      %v983 = vld [vmem:[%s892 + $0x50] sm:$0xff]
      %v984 = vld [vmem:[%s892 + $0x58] sm:$0x3]
      %v985 = vld [vmem:[%s892 + $0x60] sm:$0xff]
      %v986 = vld [vmem:[%s892 + $0x68] sm:$0xff]
      %v987 = vld [vmem:[%s892 + $0x70] sm:$0x3]
      %v988 = vld [vmem:[%s892 + $0x78] sm:$0xff]
      %v989 = vld [vmem:[%s892 + $0x80] sm:$0xff]
      %v990 = vld [vmem:[%s892 + $0x88] sm:$0x3]
      %v991 = vld [vmem:[%s892 + $0x90] sm:$0xff]
      %v992 = vld [vmem:[%s892 + $0x98] sm:$0xff]
      %v993 = vld [vmem:[%s892 + $0xa0] sm:$0x3]
      %v994 = vld [vmem:[%s892 + $0xa8] sm:$0xff]
      %v995 = vld [vmem:[%s892 + $0xb0] sm:$0xff]
      %v996 = vld [vmem:[%s892 + $0xb8] sm:$0x3]
      %v997 = vld [vmem:[%s892 + $0xc0] sm:$0xff]
      %v998 = vld [vmem:[%s892 + $0xc8] sm:$0xff]
      %v999 = vld [vmem:[%s892 + $0xd0] sm:$0x3]
      %v1000 = vld [vmem:[%s892 + $0xd8] sm:$0xff]
      %v1001 = vld [vmem:[%s892 + $0xe0] sm:$0xff]
      %v1002 = vld [vmem:[%s892 + $0xe8] sm:$0x3]
      %v1003 = vld [vmem:[%s892 + $0xf0] sm:$0xff]
      %v1004 = vld [vmem:[%s892 + $0xf8] sm:$0xff]
      %v1005 = vld [vmem:[%s892 + $0x100] sm:$0x3]
      %v1006 = vld [vmem:[%s892 + $0x108] sm:$0xff]
      %v1007 = vld [vmem:[%s892 + $0x110] sm:$0xff]
      %v1008 = vld [vmem:[%s892 + $0x118] sm:$0x3]
      %v1009 = vld [vmem:[%s892 + $0x120] sm:$0xff]
      %v1010 = vld [vmem:[%s892 + $0x128] sm:$0xff]
      %v1011 = vld [vmem:[%s892 + $0x130] sm:$0x3]
      %v1012 = vld [vmem:[%s892 + $0x138] sm:$0xff]
      %v1013 = vld [vmem:[%s892 + $0x140] sm:$0xff]
      %v1014 = vld [vmem:[%s892 + $0x148] sm:$0x3]
      %v1015 = vld [vmem:[%s892 + $0x150] sm:$0xff]
      %v1016 = vld [vmem:[%s892 + $0x158] sm:$0xff]
      %v1017 = vld [vmem:[%s892 + $0x160] sm:$0x3]
      %v1018 = vld [vmem:[%s892 + $0x168] sm:$0xff]
      %v1019 = vld [vmem:[%s892 + $0x170] sm:$0xff]
      %v1020 = vld [vmem:[%s892 + $0x178] sm:$0x3]
      %v1021 = vmax.f32 %v925, %v973
      %v1022 = vmax.f32 %v926, %v974
      %v1023 = vmax.f32 %v927, %v975
      %v1024 = vmax.f32 %v928, %v976
      %v1025 = vmax.f32 %v929, %v977
      %v1026 = vmax.f32 %v930, %v978
      %v1027 = vmax.f32 %v931, %v979
      %v1028 = vmax.f32 %v932, %v980
      %v1029 = vmax.f32 %v933, %v981
      %v1030 = vmax.f32 %v934, %v982
      %v1031 = vmax.f32 %v935, %v983
      %v1032 = vmax.f32 %v936, %v984
      %v1033 = vmax.f32 %v937, %v985
      %v1034 = vmax.f32 %v938, %v986
      %v1035 = vmax.f32 %v939, %v987
      %v1036 = vmax.f32 %v940, %v988
      %v1037 = vmax.f32 %v941, %v989
      %v1038 = vmax.f32 %v942, %v990
      %v1039 = vmax.f32 %v943, %v991
      %v1040 = vmax.f32 %v944, %v992
      %v1041 = vmax.f32 %v945, %v993
      %v1042 = vmax.f32 %v946, %v994
      %v1043 = vmax.f32 %v947, %v995
      %v1044 = vmax.f32 %v948, %v996
      %v1045 = vmax.f32 %v949, %v997
      %v1046 = vmax.f32 %v950, %v998
      %v1047 = vmax.f32 %v951, %v999
      %v1048 = vmax.f32 %v952, %v1000
      %v1049 = vmax.f32 %v953, %v1001
      %v1050 = vmax.f32 %v954, %v1002
      %v1051 = vmax.f32 %v955, %v1003
      %v1052 = vmax.f32 %v956, %v1004
      %v1053 = vmax.f32 %v957, %v1005
      %v1054 = vmax.f32 %v958, %v1006
      %v1055 = vmax.f32 %v959, %v1007
      %v1056 = vmax.f32 %v960, %v1008
      %v1057 = vmax.f32 %v961, %v1009
      %v1058 = vmax.f32 %v962, %v1010
      %v1059 = vmax.f32 %v963, %v1011
      %v1060 = vmax.f32 %v964, %v1012
      %v1061 = vmax.f32 %v965, %v1013
      %v1062 = vmax.f32 %v966, %v1014
      %v1063 = vmax.f32 %v967, %v1015
      %v1064 = vmax.f32 %v968, %v1016
      %v1065 = vmax.f32 %v969, %v1017
      %v1066 = vmax.f32 %v970, %v1018
      %v1067 = vmax.f32 %v971, %v1019
      %v1068 = vmax.f32 %v972, %v1020
      %s1069 = scalar_lea.vmem [#allocation2], 48
      %v1070 = vld [vmem:[%s1069] sm:$0xff]
      %v1071 = vld [vmem:[%s1069 + $0x8] sm:$0xff]
      %v1072 = vld [vmem:[%s1069 + $0x10] sm:$0x3]
      %v1073 = vld [vmem:[%s1069 + $0x18] sm:$0xff]
      %v1074 = vld [vmem:[%s1069 + $0x20] sm:$0xff]
      %v1075 = vld [vmem:[%s1069 + $0x28] sm:$0x3]
      %v1076 = vld [vmem:[%s1069 + $0x30] sm:$0xff]
      %v1077 = vld [vmem:[%s1069 + $0x38] sm:$0xff]
      %v1078 = vld [vmem:[%s1069 + $0x40] sm:$0x3]
      %v1079 = vld [vmem:[%s1069 + $0x48] sm:$0xff]
      %v1080 = vld [vmem:[%s1069 + $0x50] sm:$0xff]
      %v1081 = vld [vmem:[%s1069 + $0x58] sm:$0x3]
      %v1082 = vld [vmem:[%s1069 + $0x60] sm:$0xff]
      %v1083 = vld [vmem:[%s1069 + $0x68] sm:$0xff]
      %v1084 = vld [vmem:[%s1069 + $0x70] sm:$0x3]
      %v1085 = vld [vmem:[%s1069 + $0x78] sm:$0xff]
      %v1086 = vld [vmem:[%s1069 + $0x80] sm:$0xff]
      %v1087 = vld [vmem:[%s1069 + $0x88] sm:$0x3]
      %v1088 = vld [vmem:[%s1069 + $0x90] sm:$0xff]
      %v1089 = vld [vmem:[%s1069 + $0x98] sm:$0xff]
      %v1090 = vld [vmem:[%s1069 + $0xa0] sm:$0x3]
      %v1091 = vld [vmem:[%s1069 + $0xa8] sm:$0xff]
      %v1092 = vld [vmem:[%s1069 + $0xb0] sm:$0xff]
      %v1093 = vld [vmem:[%s1069 + $0xb8] sm:$0x3]
      %v1094 = vld [vmem:[%s1069 + $0xc0] sm:$0xff]
      %v1095 = vld [vmem:[%s1069 + $0xc8] sm:$0xff]
      %v1096 = vld [vmem:[%s1069 + $0xd0] sm:$0x3]
      %v1097 = vld [vmem:[%s1069 + $0xd8] sm:$0xff]
      %v1098 = vld [vmem:[%s1069 + $0xe0] sm:$0xff]
      %v1099 = vld [vmem:[%s1069 + $0xe8] sm:$0x3]
      %v1100 = vld [vmem:[%s1069 + $0xf0] sm:$0xff]
      %v1101 = vld [vmem:[%s1069 + $0xf8] sm:$0xff]
      %v1102 = vld [vmem:[%s1069 + $0x100] sm:$0x3]
      %v1103 = vld [vmem:[%s1069 + $0x108] sm:$0xff]
      %v1104 = vld [vmem:[%s1069 + $0x110] sm:$0xff]
      %v1105 = vld [vmem:[%s1069 + $0x118] sm:$0x3]
      %v1106 = vld [vmem:[%s1069 + $0x120] sm:$0xff]
      %v1107 = vld [vmem:[%s1069 + $0x128] sm:$0xff]
      %v1108 = vld [vmem:[%s1069 + $0x130] sm:$0x3]
      %v1109 = vld [vmem:[%s1069 + $0x138] sm:$0xff]
      %v1110 = vld [vmem:[%s1069 + $0x140] sm:$0xff]
      %v1111 = vld [vmem:[%s1069 + $0x148] sm:$0x3]
      %v1112 = vld [vmem:[%s1069 + $0x150] sm:$0xff]
      %v1113 = vld [vmem:[%s1069 + $0x158] sm:$0xff]
      %v1114 = vld [vmem:[%s1069 + $0x160] sm:$0x3]
      %v1115 = vld [vmem:[%s1069 + $0x168] sm:$0xff]
      %v1116 = vld [vmem:[%s1069 + $0x170] sm:$0xff]
      %v1117 = vld [vmem:[%s1069 + $0x178] sm:$0x3]
      %v1118 = vmax.f32 %v1021, %v1070
      %v1119 = vmax.f32 %v1022, %v1071
      %v1120 = vmax.f32 %v1023, %v1072
      %v1121 = vmax.f32 %v1024, %v1073
      %v1122 = vmax.f32 %v1025, %v1074
      %v1123 = vmax.f32 %v1026, %v1075
      %v1124 = vmax.f32 %v1027, %v1076
      %v1125 = vmax.f32 %v1028, %v1077
      %v1126 = vmax.f32 %v1029, %v1078
      %v1127 = vmax.f32 %v1030, %v1079
      %v1128 = vmax.f32 %v1031, %v1080
      %v1129 = vmax.f32 %v1032, %v1081
      %v1130 = vmax.f32 %v1033, %v1082
      %v1131 = vmax.f32 %v1034, %v1083
      %v1132 = vmax.f32 %v1035, %v1084
      %v1133 = vmax.f32 %v1036, %v1085
      %v1134 = vmax.f32 %v1037, %v1086
      %v1135 = vmax.f32 %v1038, %v1087
      %v1136 = vmax.f32 %v1039, %v1088
      %v1137 = vmax.f32 %v1040, %v1089
      %v1138 = vmax.f32 %v1041, %v1090
      %v1139 = vmax.f32 %v1042, %v1091
      %v1140 = vmax.f32 %v1043, %v1092
      %v1141 = vmax.f32 %v1044, %v1093
      %v1142 = vmax.f32 %v1045, %v1094
      %v1143 = vmax.f32 %v1046, %v1095
      %v1144 = vmax.f32 %v1047, %v1096
      %v1145 = vmax.f32 %v1048, %v1097
      %v1146 = vmax.f32 %v1049, %v1098
      %v1147 = vmax.f32 %v1050, %v1099
      %v1148 = vmax.f32 %v1051, %v1100
      %v1149 = vmax.f32 %v1052, %v1101
      %v1150 = vmax.f32 %v1053, %v1102
      %v1151 = vmax.f32 %v1054, %v1103
      %v1152 = vmax.f32 %v1055, %v1104
      %v1153 = vmax.f32 %v1056, %v1105
      %v1154 = vmax.f32 %v1057, %v1106
      %v1155 = vmax.f32 %v1058, %v1107
      %v1156 = vmax.f32 %v1059, %v1108
      %v1157 = vmax.f32 %v1060, %v1109
      %v1158 = vmax.f32 %v1061, %v1110
      %v1159 = vmax.f32 %v1062, %v1111
      %v1160 = vmax.f32 %v1063, %v1112
      %v1161 = vmax.f32 %v1064, %v1113
      %v1162 = vmax.f32 %v1065, %v1114
      %v1163 = vmax.f32 %v1066, %v1115
      %v1164 = vmax.f32 %v1067, %v1116
      %v1165 = vmax.f32 %v1068, %v1117
      %vm1214 = vcmask 1046528
      %v1215 = vrot.slane %v1118, 1
      %v1216 = vrot.slane %v1119, 1
      %v1217 = vsel %vm1214, %v1215, %v1216
      %v1218 = vrot.slane %v1120, 1
      %v1219 = vsel %vm1214, %v1216, %v1218
      %v1220 = vrot.slane %v1121, 1
      %v1221 = vrot.slane %v1122, 1
      %v1222 = vsel %vm1214, %v1220, %v1221
      %v1223 = vrot.slane %v1123, 1
      %v1224 = vsel %vm1214, %v1221, %v1223
      %v1225 = vrot.slane %v1124, 1
      %v1226 = vrot.slane %v1125, 1
      %v1227 = vsel %vm1214, %v1225, %v1226
      %v1228 = vrot.slane %v1126, 1
      %v1229 = vsel %vm1214, %v1226, %v1228
      %v1230 = vrot.slane %v1127, 1
      %v1231 = vrot.slane %v1128, 1
      %v1232 = vsel %vm1214, %v1230, %v1231
      %v1233 = vrot.slane %v1129, 1
      %v1234 = vsel %vm1214, %v1231, %v1233
      %v1235 = vrot.slane %v1130, 1
      %v1236 = vrot.slane %v1131, 1
      %v1237 = vsel %vm1214, %v1235, %v1236
      %v1238 = vrot.slane %v1132, 1
      %v1239 = vsel %vm1214, %v1236, %v1238
      %v1240 = vrot.slane %v1133, 1
      %v1241 = vrot.slane %v1134, 1
      %v1242 = vsel %vm1214, %v1240, %v1241
      %v1243 = vrot.slane %v1135, 1
      %v1244 = vsel %vm1214, %v1241, %v1243
      %v1245 = vrot.slane %v1136, 1
      %v1246 = vrot.slane %v1137, 1
      %v1247 = vsel %vm1214, %v1245, %v1246
      %v1248 = vrot.slane %v1138, 1
      %v1249 = vsel %vm1214, %v1246, %v1248
      %v1250 = vrot.slane %v1139, 1
      %v1251 = vrot.slane %v1140, 1
      %v1252 = vsel %vm1214, %v1250, %v1251
      %v1253 = vrot.slane %v1141, 1
      %v1254 = vsel %vm1214, %v1251, %v1253
      %v1255 = vrot.slane %v1142, 1
      %v1256 = vrot.slane %v1143, 1
      %v1257 = vsel %vm1214, %v1255, %v1256
      %v1258 = vrot.slane %v1144, 1
      %v1259 = vsel %vm1214, %v1256, %v1258
      %v1260 = vrot.slane %v1145, 1
      %v1261 = vrot.slane %v1146, 1
      %v1262 = vsel %vm1214, %v1260, %v1261
      %v1263 = vrot.slane %v1147, 1
      %v1264 = vsel %vm1214, %v1261, %v1263
      %v1265 = vrot.slane %v1148, 1
      %v1266 = vrot.slane %v1149, 1
      %v1267 = vsel %vm1214, %v1265, %v1266
      %v1268 = vrot.slane %v1150, 1
      %v1269 = vsel %vm1214, %v1266, %v1268
      %v1270 = vrot.slane %v1151, 1
      %v1271 = vrot.slane %v1152, 1
      %v1272 = vsel %vm1214, %v1270, %v1271
      %v1273 = vrot.slane %v1153, 1
      %v1274 = vsel %vm1214, %v1271, %v1273
      %v1275 = vrot.slane %v1154, 1
      %v1276 = vrot.slane %v1155, 1
      %v1277 = vsel %vm1214, %v1275, %v1276
      %v1278 = vrot.slane %v1156, 1
      %v1279 = vsel %vm1214, %v1276, %v1278
      %v1280 = vrot.slane %v1157, 1
      %v1281 = vrot.slane %v1158, 1
      %v1282 = vsel %vm1214, %v1280, %v1281
      %v1283 = vrot.slane %v1159, 1
      %v1284 = vsel %vm1214, %v1281, %v1283
      %v1285 = vrot.slane %v1160, 1
      %v1286 = vrot.slane %v1161, 1
      %v1287 = vsel %vm1214, %v1285, %v1286
      %v1288 = vrot.slane %v1162, 1
      %v1289 = vsel %vm1214, %v1286, %v1288
      %v1290 = vrot.slane %v1163, 1
      %v1291 = vrot.slane %v1164, 1
      %v1292 = vsel %vm1214, %v1290, %v1291
      %v1293 = vrot.slane %v1165, 1
      %v1294 = vsel %vm1214, %v1291, %v1293
      %v1327 = vmax.f32 %v1118, %v1217
      %v1328 = vmax.f32 %v1119, %v1219
      %v1329 = vmax.f32 %v1121, %v1222
      %v1330 = vmax.f32 %v1122, %v1224
      %v1331 = vmax.f32 %v1124, %v1227
      %v1332 = vmax.f32 %v1125, %v1229
      %v1333 = vmax.f32 %v1127, %v1232
      %v1334 = vmax.f32 %v1128, %v1234
      %v1335 = vmax.f32 %v1130, %v1237
      %v1336 = vmax.f32 %v1131, %v1239
      %v1337 = vmax.f32 %v1133, %v1242
      %v1338 = vmax.f32 %v1134, %v1244
      %v1339 = vmax.f32 %v1136, %v1247
      %v1340 = vmax.f32 %v1137, %v1249
      %v1341 = vmax.f32 %v1139, %v1252
      %v1342 = vmax.f32 %v1140, %v1254
      %v1343 = vmax.f32 %v1142, %v1257
      %v1344 = vmax.f32 %v1143, %v1259
      %v1345 = vmax.f32 %v1145, %v1262
      %v1346 = vmax.f32 %v1146, %v1264
      %v1347 = vmax.f32 %v1148, %v1267
      %v1348 = vmax.f32 %v1149, %v1269
      %v1349 = vmax.f32 %v1151, %v1272
      %v1350 = vmax.f32 %v1152, %v1274
      %v1351 = vmax.f32 %v1154, %v1277
      %v1352 = vmax.f32 %v1155, %v1279
      %v1353 = vmax.f32 %v1157, %v1282
      %v1354 = vmax.f32 %v1158, %v1284
      %v1355 = vmax.f32 %v1160, %v1287
      %v1356 = vmax.f32 %v1161, %v1289
      %v1357 = vmax.f32 %v1163, %v1292
      %v1358 = vmax.f32 %v1164, %v1294
      %vm1359 = vcmask 1045504
      %v1360 = vrot.slane %v1118, 2
      %v1361 = vrot.slane %v1119, 2
      %v1362 = vsel %vm1359, %v1360, %v1361
      %v1363 = vrot.slane %v1120, 2
      %v1364 = vsel %vm1359, %v1361, %v1363
      %v1365 = vrot.slane %v1121, 2
      %v1366 = vrot.slane %v1122, 2
      %v1367 = vsel %vm1359, %v1365, %v1366
      %v1368 = vrot.slane %v1123, 2
      %v1369 = vsel %vm1359, %v1366, %v1368
      %v1370 = vrot.slane %v1124, 2
      %v1371 = vrot.slane %v1125, 2
      %v1372 = vsel %vm1359, %v1370, %v1371
      %v1373 = vrot.slane %v1126, 2
      %v1374 = vsel %vm1359, %v1371, %v1373
      %v1375 = vrot.slane %v1127, 2
      %v1376 = vrot.slane %v1128, 2
      %v1377 = vsel %vm1359, %v1375, %v1376
      %v1378 = vrot.slane %v1129, 2
      %v1379 = vsel %vm1359, %v1376, %v1378
      %v1380 = vrot.slane %v1130, 2
      %v1381 = vrot.slane %v1131, 2
      %v1382 = vsel %vm1359, %v1380, %v1381
      %v1383 = vrot.slane %v1132, 2
      %v1384 = vsel %vm1359, %v1381, %v1383
      %v1385 = vrot.slane %v1133, 2
      %v1386 = vrot.slane %v1134, 2
      %v1387 = vsel %vm1359, %v1385, %v1386
      %v1388 = vrot.slane %v1135, 2
      %v1389 = vsel %vm1359, %v1386, %v1388
      %v1390 = vrot.slane %v1136, 2
      %v1391 = vrot.slane %v1137, 2
      %v1392 = vsel %vm1359, %v1390, %v1391
      %v1393 = vrot.slane %v1138, 2
      %v1394 = vsel %vm1359, %v1391, %v1393
      %v1395 = vrot.slane %v1139, 2
      %v1396 = vrot.slane %v1140, 2
      %v1397 = vsel %vm1359, %v1395, %v1396
      %v1398 = vrot.slane %v1141, 2
      %v1399 = vsel %vm1359, %v1396, %v1398
      %v1400 = vrot.slane %v1142, 2
      %v1401 = vrot.slane %v1143, 2
      %v1402 = vsel %vm1359, %v1400, %v1401
      %v1403 = vrot.slane %v1144, 2
      %v1404 = vsel %vm1359, %v1401, %v1403
      %v1405 = vrot.slane %v1145, 2
      %v1406 = vrot.slane %v1146, 2
      %v1407 = vsel %vm1359, %v1405, %v1406
      %v1408 = vrot.slane %v1147, 2
      %v1409 = vsel %vm1359, %v1406, %v1408
      %v1410 = vrot.slane %v1148, 2
      %v1411 = vrot.slane %v1149, 2
      %v1412 = vsel %vm1359, %v1410, %v1411
      %v1413 = vrot.slane %v1150, 2
      %v1414 = vsel %vm1359, %v1411, %v1413
      %v1415 = vrot.slane %v1151, 2
      %v1416 = vrot.slane %v1152, 2
      %v1417 = vsel %vm1359, %v1415, %v1416
      %v1418 = vrot.slane %v1153, 2
      %v1419 = vsel %vm1359, %v1416, %v1418
      %v1420 = vrot.slane %v1154, 2
      %v1421 = vrot.slane %v1155, 2
      %v1422 = vsel %vm1359, %v1420, %v1421
      %v1423 = vrot.slane %v1156, 2
      %v1424 = vsel %vm1359, %v1421, %v1423
      %v1425 = vrot.slane %v1157, 2
      %v1426 = vrot.slane %v1158, 2
      %v1427 = vsel %vm1359, %v1425, %v1426
      %v1428 = vrot.slane %v1159, 2
      %v1429 = vsel %vm1359, %v1426, %v1428
      %v1430 = vrot.slane %v1160, 2
      %v1431 = vrot.slane %v1161, 2
      %v1432 = vsel %vm1359, %v1430, %v1431
      %v1433 = vrot.slane %v1162, 2
      %v1434 = vsel %vm1359, %v1431, %v1433
      %v1435 = vrot.slane %v1163, 2
      %v1436 = vrot.slane %v1164, 2
      %v1437 = vsel %vm1359, %v1435, %v1436
      %v1438 = vrot.slane %v1165, 2
      %v1439 = vsel %vm1359, %v1436, %v1438
      %v1472 = vmax.f32 %v1327, %v1362
      %v1473 = vmax.f32 %v1328, %v1364
      %v1474 = vmax.f32 %v1329, %v1367
      %v1475 = vmax.f32 %v1330, %v1369
      %v1476 = vmax.f32 %v1331, %v1372
      %v1477 = vmax.f32 %v1332, %v1374
      %v1478 = vmax.f32 %v1333, %v1377
      %v1479 = vmax.f32 %v1334, %v1379
      %v1480 = vmax.f32 %v1335, %v1382
      %v1481 = vmax.f32 %v1336, %v1384
      %v1482 = vmax.f32 %v1337, %v1387
      %v1483 = vmax.f32 %v1338, %v1389
      %v1484 = vmax.f32 %v1339, %v1392
      %v1485 = vmax.f32 %v1340, %v1394
      %v1486 = vmax.f32 %v1341, %v1397
      %v1487 = vmax.f32 %v1342, %v1399
      %v1488 = vmax.f32 %v1343, %v1402
      %v1489 = vmax.f32 %v1344, %v1404
      %v1490 = vmax.f32 %v1345, %v1407
      %v1491 = vmax.f32 %v1346, %v1409
      %v1492 = vmax.f32 %v1347, %v1412
      %v1493 = vmax.f32 %v1348, %v1414
      %v1494 = vmax.f32 %v1349, %v1417
      %v1495 = vmax.f32 %v1350, %v1419
      %v1496 = vmax.f32 %v1351, %v1422
      %v1497 = vmax.f32 %v1352, %v1424
      %v1498 = vmax.f32 %v1353, %v1427
      %v1499 = vmax.f32 %v1354, %v1429
      %v1500 = vmax.f32 %v1355, %v1432
      %v1501 = vmax.f32 %v1356, %v1434
      %v1502 = vmax.f32 %v1357, %v1437
      %v1503 = vmax.f32 %v1358, %v1439
      %1504 = vst.msk [vmem:[#allocation5] sm:$0xff] %vm282, %v226
      %1505 = vst.msk [vmem:[#allocation5 + $0x10] sm:$0xff] %vm282, %v227
      %1506 = vst.msk [vmem:[#allocation5 + $0x20] sm:$0xff] %vm282, %v228
      %1507 = vst.msk [vmem:[#allocation5 + $0x30] sm:$0xff] %vm282, %v229
      %1508 = vst.msk [vmem:[#allocation5 + $0x40] sm:$0xff] %vm282, %v230
      %1509 = vst.msk [vmem:[#allocation5 + $0x50] sm:$0xff] %vm282, %v231
      %1510 = vst.msk [vmem:[#allocation5 + $0x60] sm:$0xff] %vm282, %v232
      %1511 = vst.msk [vmem:[#allocation5 + $0x70] sm:$0xff] %vm282, %v233
      %1512 = vst.msk [vmem:[#allocation5 + $0x80] sm:$0xff] %vm282, %v234
      %1513 = vst.msk [vmem:[#allocation5 + $0x90] sm:$0xff] %vm282, %v235
      %1514 = vst.msk [vmem:[#allocation5 + $0xa0] sm:$0xff] %vm282, %v236
      %1515 = vst.msk [vmem:[#allocation5 + $0xb0] sm:$0xff] %vm282, %v237
      %1516 = vst.msk [vmem:[#allocation5 + $0xc0] sm:$0xff] %vm282, %v238
      %1517 = vst.msk [vmem:[#allocation5 + $0xd0] sm:$0xff] %vm282, %v239
      %1518 = vst.msk [vmem:[#allocation5 + $0xe0] sm:$0xff] %vm282, %v240
      %1519 = vst.msk [vmem:[#allocation5 + $0xf0] sm:$0xff] %vm282, %v241
      %1520 = vst.msk [vmem:[#allocation5 + $0x100] sm:$0xff] %vm282, %v242
      %1521 = vst.msk [vmem:[#allocation5 + $0x110] sm:$0xff] %vm282, %v243
      %1522 = vst.msk [vmem:[#allocation5 + $0x120] sm:$0xff] %vm282, %v244
      %1523 = vst.msk [vmem:[#allocation5 + $0x130] sm:$0xff] %vm282, %v245
      %1524 = vst.msk [vmem:[#allocation5 + $0x140] sm:$0xff] %vm282, %v246
      %1525 = vst.msk [vmem:[#allocation5 + $0x150] sm:$0xff] %vm282, %v247
      %1526 = vst.msk [vmem:[#allocation5 + $0x160] sm:$0xff] %vm282, %v248
      %1527 = vst.msk [vmem:[#allocation5 + $0x170] sm:$0xff] %vm282, %v249
      %1528 = vst.msk [vmem:[#allocation5 + $0x180] sm:$0xff] %vm282, %v250
      %1529 = vst.msk [vmem:[#allocation5 + $0x190] sm:$0xff] %vm282, %v251
      %1530 = vst.msk [vmem:[#allocation5 + $0x1a0] sm:$0xff] %vm282, %v252
      %1531 = vst.msk [vmem:[#allocation5 + $0x1b0] sm:$0xff] %vm282, %v253
      %1532 = vst.msk [vmem:[#allocation5 + $0x1c0] sm:$0xff] %vm282, %v254
      %1533 = vst.msk [vmem:[#allocation5 + $0x1d0] sm:$0xff] %vm282, %v255
      %1534 = vst.msk [vmem:[#allocation5 + $0x1e0] sm:$0xff] %vm282, %v256
      %1535 = vst.msk [vmem:[#allocation5 + $0x1f0] sm:$0xff] %vm282, %v257
      %1568 = vrot.lane.b32.xlu0 %v1472, 4
      %v1569 = vpop.permute.xlu0 %1568
      %1570 = vrot.lane.b32.xlu0 %v1473, 4
      %v1571 = vpop.permute.xlu0 %1570
      %1572 = vrot.lane.b32.xlu0 %v1474, 4
      %v1573 = vpop.permute.xlu0 %1572
      %1574 = vrot.lane.b32.xlu0 %v1475, 4
      %v1575 = vpop.permute.xlu0 %1574
      %1576 = vrot.lane.b32.xlu0 %v1476, 4
      %v1577 = vpop.permute.xlu0 %1576
      %1578 = vrot.lane.b32.xlu0 %v1477, 4
      %v1579 = vpop.permute.xlu0 %1578
      %1580 = vrot.lane.b32.xlu0 %v1478, 4
      %v1581 = vpop.permute.xlu0 %1580
      %1582 = vrot.lane.b32.xlu0 %v1479, 4
      %v1583 = vpop.permute.xlu0 %1582
      %1584 = vrot.lane.b32.xlu0 %v1480, 4
      %v1585 = vpop.permute.xlu0 %1584
      %1586 = vrot.lane.b32.xlu0 %v1481, 4
      %v1587 = vpop.permute.xlu0 %1586
      %1588 = vrot.lane.b32.xlu0 %v1482, 4
      %v1589 = vpop.permute.xlu0 %1588
      %1590 = vrot.lane.b32.xlu0 %v1483, 4
      %v1591 = vpop.permute.xlu0 %1590
      %1592 = vrot.lane.b32.xlu0 %v1484, 4
      %v1593 = vpop.permute.xlu0 %1592
      %1594 = vrot.lane.b32.xlu0 %v1485, 4
      %v1595 = vpop.permute.xlu0 %1594
      %1596 = vrot.lane.b32.xlu0 %v1486, 4
      %v1597 = vpop.permute.xlu0 %1596
      %1598 = vrot.lane.b32.xlu0 %v1487, 4
      %v1599 = vpop.permute.xlu0 %1598
      %1600 = vrot.lane.b32.xlu0 %v1488, 4
      %v1601 = vpop.permute.xlu0 %1600
      %1602 = vrot.lane.b32.xlu0 %v1489, 4
      %v1603 = vpop.permute.xlu0 %1602
      %1604 = vrot.lane.b32.xlu0 %v1490, 4
      %v1605 = vpop.permute.xlu0 %1604
      %1606 = vrot.lane.b32.xlu0 %v1491, 4
      %v1607 = vpop.permute.xlu0 %1606
      %1608 = vrot.lane.b32.xlu0 %v1492, 4
      %v1609 = vpop.permute.xlu0 %1608
      %1610 = vrot.lane.b32.xlu0 %v1493, 4
      %v1611 = vpop.permute.xlu0 %1610
      %1612 = vrot.lane.b32.xlu0 %v1494, 4
      %v1613 = vpop.permute.xlu0 %1612
      %1614 = vrot.lane.b32.xlu0 %v1495, 4
      %v1615 = vpop.permute.xlu0 %1614
      %1616 = vrot.lane.b32.xlu0 %v1496, 4
      %v1617 = vpop.permute.xlu0 %1616
      %1618 = vrot.lane.b32.xlu0 %v1497, 4
      %v1619 = vpop.permute.xlu0 %1618
      %1620 = vrot.lane.b32.xlu0 %v1498, 4
      %v1621 = vpop.permute.xlu0 %1620
      %1622 = vrot.lane.b32.xlu0 %v1499, 4
      %v1623 = vpop.permute.xlu0 %1622
      %1624 = vrot.lane.b32.xlu0 %v1500, 4
      %v1625 = vpop.permute.xlu0 %1624
      %1626 = vrot.lane.b32.xlu0 %v1501, 4
      %v1627 = vpop.permute.xlu0 %1626
      %1628 = vrot.lane.b32.xlu0 %v1502, 4
      %v1629 = vpop.permute.xlu0 %1628
      %1630 = vrot.lane.b32.xlu0 %v1503, 4
      %v1631 = vpop.permute.xlu0 %1630
      %vm1664 = vcmask 64544
      %1665 = vst.msk [vmem:[#allocation5] sm:$0xff] %vm1664, %v1569
      %1666 = vst.msk [vmem:[#allocation5 + $0x10] sm:$0xff] %vm1664, %v1571
      %1667 = vst.msk [vmem:[#allocation5 + $0x20] sm:$0xff] %vm1664, %v1573
      %1668 = vst.msk [vmem:[#allocation5 + $0x30] sm:$0xff] %vm1664, %v1575
      %1669 = vst.msk [vmem:[#allocation5 + $0x40] sm:$0xff] %vm1664, %v1577
      %1670 = vst.msk [vmem:[#allocation5 + $0x50] sm:$0xff] %vm1664, %v1579
      %1671 = vst.msk [vmem:[#allocation5 + $0x60] sm:$0xff] %vm1664, %v1581
      %1672 = vst.msk [vmem:[#allocation5 + $0x70] sm:$0xff] %vm1664, %v1583
      %1673 = vst.msk [vmem:[#allocation5 + $0x80] sm:$0xff] %vm1664, %v1585
      %1674 = vst.msk [vmem:[#allocation5 + $0x90] sm:$0xff] %vm1664, %v1587
      %1675 = vst.msk [vmem:[#allocation5 + $0xa0] sm:$0xff] %vm1664, %v1589
      %1676 = vst.msk [vmem:[#allocation5 + $0xb0] sm:$0xff] %vm1664, %v1591
      %1677 = vst.msk [vmem:[#allocation5 + $0xc0] sm:$0xff] %vm1664, %v1593
      %1678 = vst.msk [vmem:[#allocation5 + $0xd0] sm:$0xff] %vm1664, %v1595
      %1679 = vst.msk [vmem:[#allocation5 + $0xe0] sm:$0xff] %vm1664, %v1597
      %1680 = vst.msk [vmem:[#allocation5 + $0xf0] sm:$0xff] %vm1664, %v1599
      %1681 = vst.msk [vmem:[#allocation5 + $0x100] sm:$0xff] %vm1664, %v1601
      %1682 = vst.msk [vmem:[#allocation5 + $0x110] sm:$0xff] %vm1664, %v1603
      %1683 = vst.msk [vmem:[#allocation5 + $0x120] sm:$0xff] %vm1664, %v1605
      %1684 = vst.msk [vmem:[#allocation5 + $0x130] sm:$0xff] %vm1664, %v1607
      %1685 = vst.msk [vmem:[#allocation5 + $0x140] sm:$0xff] %vm1664, %v1609
      %1686 = vst.msk [vmem:[#allocation5 + $0x150] sm:$0xff] %vm1664, %v1611
      %1687 = vst.msk [vmem:[#allocation5 + $0x160] sm:$0xff] %vm1664, %v1613
      %1688 = vst.msk [vmem:[#allocation5 + $0x170] sm:$0xff] %vm1664, %v1615
      %1689 = vst.msk [vmem:[#allocation5 + $0x180] sm:$0xff] %vm1664, %v1617
      %1690 = vst.msk [vmem:[#allocation5 + $0x190] sm:$0xff] %vm1664, %v1619
      %1691 = vst.msk [vmem:[#allocation5 + $0x1a0] sm:$0xff] %vm1664, %v1621
      %1692 = vst.msk [vmem:[#allocation5 + $0x1b0] sm:$0xff] %vm1664, %v1623
      %1693 = vst.msk [vmem:[#allocation5 + $0x1c0] sm:$0xff] %vm1664, %v1625
      %1694 = vst.msk [vmem:[#allocation5 + $0x1d0] sm:$0xff] %vm1664, %v1627
      %1695 = vst.msk [vmem:[#allocation5 + $0x1e0] sm:$0xff] %vm1664, %v1629
      %1696 = vst.msk [vmem:[#allocation5 + $0x1f0] sm:$0xff] %vm1664, %v1631
      %v1697 = vld [vmem:[#allocation3] sm:$0xff]
      %v1698 = vld [vmem:[#allocation3 + $0x8] sm:$0xff]
      %v1699 = vld [vmem:[#allocation3 + $0x18] sm:$0xff]
      %v1700 = vld [vmem:[#allocation3 + $0x20] sm:$0xff]
      %v1701 = vld [vmem:[#allocation3 + $0x30] sm:$0xff]
      %v1702 = vld [vmem:[#allocation3 + $0x38] sm:$0xff]
      %v1703 = vld [vmem:[#allocation3 + $0x48] sm:$0xff]
      %v1704 = vld [vmem:[#allocation3 + $0x50] sm:$0xff]
      %v1705 = vld [vmem:[#allocation3 + $0x60] sm:$0xff]
      %v1706 = vld [vmem:[#allocation3 + $0x68] sm:$0xff]
      %v1707 = vld [vmem:[#allocation3 + $0x78] sm:$0xff]
      %v1708 = vld [vmem:[#allocation3 + $0x80] sm:$0xff]
      %v1709 = vld [vmem:[#allocation3 + $0x90] sm:$0xff]
      %v1710 = vld [vmem:[#allocation3 + $0x98] sm:$0xff]
      %v1711 = vld [vmem:[#allocation3 + $0xa8] sm:$0xff]
      %v1712 = vld [vmem:[#allocation3 + $0xb0] sm:$0xff]
      %v1713 = vld [vmem:[#allocation3 + $0xc0] sm:$0xff]
      %v1714 = vld [vmem:[#allocation3 + $0xc8] sm:$0xff]
      %v1715 = vld [vmem:[#allocation3 + $0xd8] sm:$0xff]
      %v1716 = vld [vmem:[#allocation3 + $0xe0] sm:$0xff]
      %v1717 = vld [vmem:[#allocation3 + $0xf0] sm:$0xff]
      %v1718 = vld [vmem:[#allocation3 + $0xf8] sm:$0xff]
      %v1719 = vld [vmem:[#allocation3 + $0x108] sm:$0xff]
      %v1720 = vld [vmem:[#allocation3 + $0x110] sm:$0xff]
      %v1721 = vld [vmem:[#allocation3 + $0x120] sm:$0xff]
      %v1722 = vld [vmem:[#allocation3 + $0x128] sm:$0xff]
      %v1723 = vld [vmem:[#allocation3 + $0x138] sm:$0xff]
      %v1724 = vld [vmem:[#allocation3 + $0x140] sm:$0xff]
      %v1725 = vld [vmem:[#allocation3 + $0x150] sm:$0xff]
      %v1726 = vld [vmem:[#allocation3 + $0x158] sm:$0xff]
      %v1727 = vld [vmem:[#allocation3 + $0x168] sm:$0xff]
      %v1728 = vld [vmem:[#allocation3 + $0x170] sm:$0xff]
      %1761 = vrot.lane.b32.xlu0 %v1697, 8
      %v1762 = vpop.permute.xlu0 %1761
      %1763 = vrot.lane.b32.xlu0 %v1698, 8
      %v1764 = vpop.permute.xlu0 %1763
      %1765 = vrot.lane.b32.xlu0 %v1699, 8
      %v1766 = vpop.permute.xlu0 %1765
      %1767 = vrot.lane.b32.xlu0 %v1700, 8
      %v1768 = vpop.permute.xlu0 %1767
      %1769 = vrot.lane.b32.xlu0 %v1701, 8
      %v1770 = vpop.permute.xlu0 %1769
      %1771 = vrot.lane.b32.xlu0 %v1702, 8
      %v1772 = vpop.permute.xlu0 %1771
      %1773 = vrot.lane.b32.xlu0 %v1703, 8
      %v1774 = vpop.permute.xlu0 %1773
      %1775 = vrot.lane.b32.xlu0 %v1704, 8
      %v1776 = vpop.permute.xlu0 %1775
      %1777 = vrot.lane.b32.xlu0 %v1705, 8
      %v1778 = vpop.permute.xlu0 %1777
      %1779 = vrot.lane.b32.xlu0 %v1706, 8
      %v1780 = vpop.permute.xlu0 %1779
      %1781 = vrot.lane.b32.xlu0 %v1707, 8
      %v1782 = vpop.permute.xlu0 %1781
      %1783 = vrot.lane.b32.xlu0 %v1708, 8
      %v1784 = vpop.permute.xlu0 %1783
      %1785 = vrot.lane.b32.xlu0 %v1709, 8
      %v1786 = vpop.permute.xlu0 %1785
      %1787 = vrot.lane.b32.xlu0 %v1710, 8
      %v1788 = vpop.permute.xlu0 %1787
      %1789 = vrot.lane.b32.xlu0 %v1711, 8
      %v1790 = vpop.permute.xlu0 %1789
      %1791 = vrot.lane.b32.xlu0 %v1712, 8
      %v1792 = vpop.permute.xlu0 %1791
      %1793 = vrot.lane.b32.xlu0 %v1713, 8
      %v1794 = vpop.permute.xlu0 %1793
      %1795 = vrot.lane.b32.xlu0 %v1714, 8
      %v1796 = vpop.permute.xlu0 %1795
      %1797 = vrot.lane.b32.xlu0 %v1715, 8
      %v1798 = vpop.permute.xlu0 %1797
      %1799 = vrot.lane.b32.xlu0 %v1716, 8
      %v1800 = vpop.permute.xlu0 %1799
      %1801 = vrot.lane.b32.xlu0 %v1717, 8
      %v1802 = vpop.permute.xlu0 %1801
      %1803 = vrot.lane.b32.xlu0 %v1718, 8
      %v1804 = vpop.permute.xlu0 %1803
      %1805 = vrot.lane.b32.xlu0 %v1719, 8
      %v1806 = vpop.permute.xlu0 %1805
      %1807 = vrot.lane.b32.xlu0 %v1720, 8
      %v1808 = vpop.permute.xlu0 %1807
      %1809 = vrot.lane.b32.xlu0 %v1721, 8
      %v1810 = vpop.permute.xlu0 %1809
      %1811 = vrot.lane.b32.xlu0 %v1722, 8
      %v1812 = vpop.permute.xlu0 %1811
      %1813 = vrot.lane.b32.xlu0 %v1723, 8
      %v1814 = vpop.permute.xlu0 %1813
      %1815 = vrot.lane.b32.xlu0 %v1724, 8
      %v1816 = vpop.permute.xlu0 %1815
      %1817 = vrot.lane.b32.xlu0 %v1725, 8
      %v1818 = vpop.permute.xlu0 %1817
      %1819 = vrot.lane.b32.xlu0 %v1726, 8
      %v1820 = vpop.permute.xlu0 %1819
      %1821 = vrot.lane.b32.xlu0 %v1727, 8
      %v1822 = vpop.permute.xlu0 %1821
      %1823 = vrot.lane.b32.xlu0 %v1728, 8
      %v1824 = vpop.permute.xlu0 %1823
      %vm1857 = vcmask 97344
      %1858 = vst.msk [vmem:[#allocation5] sm:$0xff] %vm1857, %v1762
      %1859 = vst.msk [vmem:[#allocation5 + $0x10] sm:$0xff] %vm1857, %v1764
      %1860 = vst.msk [vmem:[#allocation5 + $0x20] sm:$0xff] %vm1857, %v1766
      %1861 = vst.msk [vmem:[#allocation5 + $0x30] sm:$0xff] %vm1857, %v1768
      %1862 = vst.msk [vmem:[#allocation5 + $0x40] sm:$0xff] %vm1857, %v1770
      %1863 = vst.msk [vmem:[#allocation5 + $0x50] sm:$0xff] %vm1857, %v1772
      %1864 = vst.msk [vmem:[#allocation5 + $0x60] sm:$0xff] %vm1857, %v1774
      %1865 = vst.msk [vmem:[#allocation5 + $0x70] sm:$0xff] %vm1857, %v1776
      %1866 = vst.msk [vmem:[#allocation5 + $0x80] sm:$0xff] %vm1857, %v1778
      %1867 = vst.msk [vmem:[#allocation5 + $0x90] sm:$0xff] %vm1857, %v1780
      %1868 = vst.msk [vmem:[#allocation5 + $0xa0] sm:$0xff] %vm1857, %v1782
      %1869 = vst.msk [vmem:[#allocation5 + $0xb0] sm:$0xff] %vm1857, %v1784
      %1870 = vst.msk [vmem:[#allocation5 + $0xc0] sm:$0xff] %vm1857, %v1786
      %1871 = vst.msk [vmem:[#allocation5 + $0xd0] sm:$0xff] %vm1857, %v1788
      %1872 = vst.msk [vmem:[#allocation5 + $0xe0] sm:$0xff] %vm1857, %v1790
      %1873 = vst.msk [vmem:[#allocation5 + $0xf0] sm:$0xff] %vm1857, %v1792
      %1874 = vst.msk [vmem:[#allocation5 + $0x100] sm:$0xff] %vm1857, %v1794
      %1875 = vst.msk [vmem:[#allocation5 + $0x110] sm:$0xff] %vm1857, %v1796
      %1876 = vst.msk [vmem:[#allocation5 + $0x120] sm:$0xff] %vm1857, %v1798
      %1877 = vst.msk [vmem:[#allocation5 + $0x130] sm:$0xff] %vm1857, %v1800
      %1878 = vst.msk [vmem:[#allocation5 + $0x140] sm:$0xff] %vm1857, %v1802
      %1879 = vst.msk [vmem:[#allocation5 + $0x150] sm:$0xff] %vm1857, %v1804
      %1880 = vst.msk [vmem:[#allocation5 + $0x160] sm:$0xff] %vm1857, %v1806
      %1881 = vst.msk [vmem:[#allocation5 + $0x170] sm:$0xff] %vm1857, %v1808
      %1882 = vst.msk [vmem:[#allocation5 + $0x180] sm:$0xff] %vm1857, %v1810
      %1883 = vst.msk [vmem:[#allocation5 + $0x190] sm:$0xff] %vm1857, %v1812
      %1884 = vst.msk [vmem:[#allocation5 + $0x1a0] sm:$0xff] %vm1857, %v1814
      %1885 = vst.msk [vmem:[#allocation5 + $0x1b0] sm:$0xff] %vm1857, %v1816
      %1886 = vst.msk [vmem:[#allocation5 + $0x1c0] sm:$0xff] %vm1857, %v1818
      %1887 = vst.msk [vmem:[#allocation5 + $0x1d0] sm:$0xff] %vm1857, %v1820
      %1888 = vst.msk [vmem:[#allocation5 + $0x1e0] sm:$0xff] %vm1857, %v1822
      %1889 = vst.msk [vmem:[#allocation5 + $0x1f0] sm:$0xff] %vm1857, %v1824
      %v1890 = vld [vmem:[#allocation3 + $0x1] sm:$0xff]
      %v1891 = vld [vmem:[#allocation3 + $0x9] sm:$0xff]
      %v1892 = vld [vmem:[#allocation3 + $0x19] sm:$0xff]
      %v1893 = vld [vmem:[#allocation3 + $0x21] sm:$0xff]
      %v1894 = vld [vmem:[#allocation3 + $0x31] sm:$0xff]
      %v1895 = vld [vmem:[#allocation3 + $0x39] sm:$0xff]
      %v1896 = vld [vmem:[#allocation3 + $0x49] sm:$0xff]
      %v1897 = vld [vmem:[#allocation3 + $0x51] sm:$0xff]
      %v1898 = vld [vmem:[#allocation3 + $0x61] sm:$0xff]
      %v1899 = vld [vmem:[#allocation3 + $0x69] sm:$0xff]
      %v1900 = vld [vmem:[#allocation3 + $0x79] sm:$0xff]
      %v1901 = vld [vmem:[#allocation3 + $0x81] sm:$0xff]
      %v1902 = vld [vmem:[#allocation3 + $0x91] sm:$0xff]
      %v1903 = vld [vmem:[#allocation3 + $0x99] sm:$0xff]
      %v1904 = vld [vmem:[#allocation3 + $0xa9] sm:$0xff]
      %v1905 = vld [vmem:[#allocation3 + $0xb1] sm:$0xff]
      %v1906 = vld [vmem:[#allocation3 + $0xc1] sm:$0xff]
      %v1907 = vld [vmem:[#allocation3 + $0xc9] sm:$0xff]
      %v1908 = vld [vmem:[#allocation3 + $0xd9] sm:$0xff]
      %v1909 = vld [vmem:[#allocation3 + $0xe1] sm:$0xff]
      %v1910 = vld [vmem:[#allocation3 + $0xf1] sm:$0xff]
      %v1911 = vld [vmem:[#allocation3 + $0xf9] sm:$0xff]
      %v1912 = vld [vmem:[#allocation3 + $0x109] sm:$0xff]
      %v1913 = vld [vmem:[#allocation3 + $0x111] sm:$0xff]
      %v1914 = vld [vmem:[#allocation3 + $0x121] sm:$0xff]
      %v1915 = vld [vmem:[#allocation3 + $0x129] sm:$0xff]
      %v1916 = vld [vmem:[#allocation3 + $0x139] sm:$0xff]
      %v1917 = vld [vmem:[#allocation3 + $0x141] sm:$0xff]
      %v1918 = vld [vmem:[#allocation3 + $0x151] sm:$0xff]
      %v1919 = vld [vmem:[#allocation3 + $0x159] sm:$0xff]
      %v1920 = vld [vmem:[#allocation3 + $0x169] sm:$0xff]
      %v1921 = vld [vmem:[#allocation3 + $0x171] sm:$0xff]
      %1954 = vrot.lane.b32.xlu0 %v1890, 12
      %v1955 = vpop.permute.xlu0 %1954
      %1956 = vrot.lane.b32.xlu0 %v1891, 12
      %v1957 = vpop.permute.xlu0 %1956
      %1958 = vrot.lane.b32.xlu0 %v1892, 12
      %v1959 = vpop.permute.xlu0 %1958
      %1960 = vrot.lane.b32.xlu0 %v1893, 12
      %v1961 = vpop.permute.xlu0 %1960
      %1962 = vrot.lane.b32.xlu0 %v1894, 12
      %v1963 = vpop.permute.xlu0 %1962
      %1964 = vrot.lane.b32.xlu0 %v1895, 12
      %v1965 = vpop.permute.xlu0 %1964
      %1966 = vrot.lane.b32.xlu0 %v1896, 12
      %v1967 = vpop.permute.xlu0 %1966
      %1968 = vrot.lane.b32.xlu0 %v1897, 12
      %v1969 = vpop.permute.xlu0 %1968
      %1970 = vrot.lane.b32.xlu0 %v1898, 12
      %v1971 = vpop.permute.xlu0 %1970
      %1972 = vrot.lane.b32.xlu0 %v1899, 12
      %v1973 = vpop.permute.xlu0 %1972
      %1974 = vrot.lane.b32.xlu0 %v1900, 12
      %v1975 = vpop.permute.xlu0 %1974
      %1976 = vrot.lane.b32.xlu0 %v1901, 12
      %v1977 = vpop.permute.xlu0 %1976
      %1978 = vrot.lane.b32.xlu0 %v1902, 12
      %v1979 = vpop.permute.xlu0 %1978
      %1980 = vrot.lane.b32.xlu0 %v1903, 12
      %v1981 = vpop.permute.xlu0 %1980
      %1982 = vrot.lane.b32.xlu0 %v1904, 12
      %v1983 = vpop.permute.xlu0 %1982
      %1984 = vrot.lane.b32.xlu0 %v1905, 12
      %v1985 = vpop.permute.xlu0 %1984
      %1986 = vrot.lane.b32.xlu0 %v1906, 12
      %v1987 = vpop.permute.xlu0 %1986
      %1988 = vrot.lane.b32.xlu0 %v1907, 12
      %v1989 = vpop.permute.xlu0 %1988
      %1990 = vrot.lane.b32.xlu0 %v1908, 12
      %v1991 = vpop.permute.xlu0 %1990
      %1992 = vrot.lane.b32.xlu0 %v1909, 12
      %v1993 = vpop.permute.xlu0 %1992
      %1994 = vrot.lane.b32.xlu0 %v1910, 12
      %v1995 = vpop.permute.xlu0 %1994
      %1996 = vrot.lane.b32.xlu0 %v1911, 12
      %v1997 = vpop.permute.xlu0 %1996
      %1998 = vrot.lane.b32.xlu0 %v1912, 12
      %v1999 = vpop.permute.xlu0 %1998
      %2000 = vrot.lane.b32.xlu0 %v1913, 12
      %v2001 = vpop.permute.xlu0 %2000
      %2002 = vrot.lane.b32.xlu0 %v1914, 12
      %v2003 = vpop.permute.xlu0 %2002
      %2004 = vrot.lane.b32.xlu0 %v1915, 12
      %v2005 = vpop.permute.xlu0 %2004
      %2006 = vrot.lane.b32.xlu0 %v1916, 12
      %v2007 = vpop.permute.xlu0 %2006
      %2008 = vrot.lane.b32.xlu0 %v1917, 12
      %v2009 = vpop.permute.xlu0 %2008
      %2010 = vrot.lane.b32.xlu0 %v1918, 12
      %v2011 = vpop.permute.xlu0 %2010
      %2012 = vrot.lane.b32.xlu0 %v1919, 12
      %v2013 = vpop.permute.xlu0 %2012
      %2014 = vrot.lane.b32.xlu0 %v1920, 12
      %v2015 = vpop.permute.xlu0 %2014
      %2016 = vrot.lane.b32.xlu0 %v1921, 12
      %v2017 = vpop.permute.xlu0 %2016
      %vm2050 = vcmask 130144
      %2051 = vst.msk [vmem:[#allocation5] sm:$0xff] %vm2050, %v1955
      %2052 = vst.msk [vmem:[#allocation5 + $0x10] sm:$0xff] %vm2050, %v1957
      %2053 = vst.msk [vmem:[#allocation5 + $0x20] sm:$0xff] %vm2050, %v1959
      %2054 = vst.msk [vmem:[#allocation5 + $0x30] sm:$0xff] %vm2050, %v1961
      %2055 = vst.msk [vmem:[#allocation5 + $0x40] sm:$0xff] %vm2050, %v1963
      %2056 = vst.msk [vmem:[#allocation5 + $0x50] sm:$0xff] %vm2050, %v1965
      %2057 = vst.msk [vmem:[#allocation5 + $0x60] sm:$0xff] %vm2050, %v1967
      %2058 = vst.msk [vmem:[#allocation5 + $0x70] sm:$0xff] %vm2050, %v1969
      %2059 = vst.msk [vmem:[#allocation5 + $0x80] sm:$0xff] %vm2050, %v1971
      %2060 = vst.msk [vmem:[#allocation5 + $0x90] sm:$0xff] %vm2050, %v1973
      %2061 = vst.msk [vmem:[#allocation5 + $0xa0] sm:$0xff] %vm2050, %v1975
      %2062 = vst.msk [vmem:[#allocation5 + $0xb0] sm:$0xff] %vm2050, %v1977
      %2063 = vst.msk [vmem:[#allocation5 + $0xc0] sm:$0xff] %vm2050, %v1979
      %2064 = vst.msk [vmem:[#allocation5 + $0xd0] sm:$0xff] %vm2050, %v1981
      %2065 = vst.msk [vmem:[#allocation5 + $0xe0] sm:$0xff] %vm2050, %v1983
      %2066 = vst.msk [vmem:[#allocation5 + $0xf0] sm:$0xff] %vm2050, %v1985
      %2067 = vst.msk [vmem:[#allocation5 + $0x100] sm:$0xff] %vm2050, %v1987
      %2068 = vst.msk [vmem:[#allocation5 + $0x110] sm:$0xff] %vm2050, %v1989
      %2069 = vst.msk [vmem:[#allocation5 + $0x120] sm:$0xff] %vm2050, %v1991
      %2070 = vst.msk [vmem:[#allocation5 + $0x130] sm:$0xff] %vm2050, %v1993
      %2071 = vst.msk [vmem:[#allocation5 + $0x140] sm:$0xff] %vm2050, %v1995
      %2072 = vst.msk [vmem:[#allocation5 + $0x150] sm:$0xff] %vm2050, %v1997
      %2073 = vst.msk [vmem:[#allocation5 + $0x160] sm:$0xff] %vm2050, %v1999
      %2074 = vst.msk [vmem:[#allocation5 + $0x170] sm:$0xff] %vm2050, %v2001
      %2075 = vst.msk [vmem:[#allocation5 + $0x180] sm:$0xff] %vm2050, %v2003
      %2076 = vst.msk [vmem:[#allocation5 + $0x190] sm:$0xff] %vm2050, %v2005
      %2077 = vst.msk [vmem:[#allocation5 + $0x1a0] sm:$0xff] %vm2050, %v2007
      %2078 = vst.msk [vmem:[#allocation5 + $0x1b0] sm:$0xff] %vm2050, %v2009
      %2079 = vst.msk [vmem:[#allocation5 + $0x1c0] sm:$0xff] %vm2050, %v2011
      %2080 = vst.msk [vmem:[#allocation5 + $0x1d0] sm:$0xff] %vm2050, %v2013
      %2081 = vst.msk [vmem:[#allocation5 + $0x1e0] sm:$0xff] %vm2050, %v2015
      %2082 = vst.msk [vmem:[#allocation5 + $0x1f0] sm:$0xff] %vm2050, %v2017
      %v2083 = vld [vmem:[#allocation3 + $0x2] sm:$0xff]
      %v2084 = vld [vmem:[#allocation3 + $0xa] sm:$0xff]
      %v2085 = vld [vmem:[#allocation3 + $0x1a] sm:$0xff]
      %v2086 = vld [vmem:[#allocation3 + $0x22] sm:$0xff]
      %v2087 = vld [vmem:[#allocation3 + $0x32] sm:$0xff]
      %v2088 = vld [vmem:[#allocation3 + $0x3a] sm:$0xff]
      %v2089 = vld [vmem:[#allocation3 + $0x4a] sm:$0xff]
      %v2090 = vld [vmem:[#allocation3 + $0x52] sm:$0xff]
      %v2091 = vld [vmem:[#allocation3 + $0x62] sm:$0xff]
      %v2092 = vld [vmem:[#allocation3 + $0x6a] sm:$0xff]
      %v2093 = vld [vmem:[#allocation3 + $0x7a] sm:$0xff]
      %v2094 = vld [vmem:[#allocation3 + $0x82] sm:$0xff]
      %v2095 = vld [vmem:[#allocation3 + $0x92] sm:$0xff]
      %v2096 = vld [vmem:[#allocation3 + $0x9a] sm:$0xff]
      %v2097 = vld [vmem:[#allocation3 + $0xaa] sm:$0xff]
      %v2098 = vld [vmem:[#allocation3 + $0xb2] sm:$0xff]
      %v2099 = vld [vmem:[#allocation3 + $0xc2] sm:$0xff]
      %v2100 = vld [vmem:[#allocation3 + $0xca] sm:$0xff]
      %v2101 = vld [vmem:[#allocation3 + $0xda] sm:$0xff]
      %v2102 = vld [vmem:[#allocation3 + $0xe2] sm:$0xff]
      %v2103 = vld [vmem:[#allocation3 + $0xf2] sm:$0xff]
      %v2104 = vld [vmem:[#allocation3 + $0xfa] sm:$0xff]
      %v2105 = vld [vmem:[#allocation3 + $0x10a] sm:$0xff]
      %v2106 = vld [vmem:[#allocation3 + $0x112] sm:$0xff]
      %v2107 = vld [vmem:[#allocation3 + $0x122] sm:$0xff]
      %v2108 = vld [vmem:[#allocation3 + $0x12a] sm:$0xff]
      %v2109 = vld [vmem:[#allocation3 + $0x13a] sm:$0xff]
      %v2110 = vld [vmem:[#allocation3 + $0x142] sm:$0xff]
      %v2111 = vld [vmem:[#allocation3 + $0x152] sm:$0xff]
      %v2112 = vld [vmem:[#allocation3 + $0x15a] sm:$0xff]
      %v2113 = vld [vmem:[#allocation3 + $0x16a] sm:$0xff]
      %v2114 = vld [vmem:[#allocation3 + $0x172] sm:$0xff]
      %2147 = vrot.lane.b32.xlu0 %v2083, 16
      %v2148 = vpop.permute.xlu0 %2147
      %2149 = vrot.lane.b32.xlu0 %v2084, 16
      %v2150 = vpop.permute.xlu0 %2149
      %2151 = vrot.lane.b32.xlu0 %v2085, 16
      %v2152 = vpop.permute.xlu0 %2151
      %2153 = vrot.lane.b32.xlu0 %v2086, 16
      %v2154 = vpop.permute.xlu0 %2153
      %2155 = vrot.lane.b32.xlu0 %v2087, 16
      %v2156 = vpop.permute.xlu0 %2155
      %2157 = vrot.lane.b32.xlu0 %v2088, 16
      %v2158 = vpop.permute.xlu0 %2157
      %2159 = vrot.lane.b32.xlu0 %v2089, 16
      %v2160 = vpop.permute.xlu0 %2159
      %2161 = vrot.lane.b32.xlu0 %v2090, 16
      %v2162 = vpop.permute.xlu0 %2161
      %2163 = vrot.lane.b32.xlu0 %v2091, 16
      %v2164 = vpop.permute.xlu0 %2163
      %2165 = vrot.lane.b32.xlu0 %v2092, 16
      %v2166 = vpop.permute.xlu0 %2165
      %2167 = vrot.lane.b32.xlu0 %v2093, 16
      %v2168 = vpop.permute.xlu0 %2167
      %2169 = vrot.lane.b32.xlu0 %v2094, 16
      %v2170 = vpop.permute.xlu0 %2169
      %2171 = vrot.lane.b32.xlu0 %v2095, 16
      %v2172 = vpop.permute.xlu0 %2171
      %2173 = vrot.lane.b32.xlu0 %v2096, 16
      %v2174 = vpop.permute.xlu0 %2173
      %2175 = vrot.lane.b32.xlu0 %v2097, 16
      %v2176 = vpop.permute.xlu0 %2175
      %2177 = vrot.lane.b32.xlu0 %v2098, 16
      %v2178 = vpop.permute.xlu0 %2177
      %2179 = vrot.lane.b32.xlu0 %v2099, 16
      %v2180 = vpop.permute.xlu0 %2179
      %2181 = vrot.lane.b32.xlu0 %v2100, 16
      %v2182 = vpop.permute.xlu0 %2181
      %2183 = vrot.lane.b32.xlu0 %v2101, 16
      %v2184 = vpop.permute.xlu0 %2183
      %2185 = vrot.lane.b32.xlu0 %v2102, 16
      %v2186 = vpop.permute.xlu0 %2185
      %2187 = vrot.lane.b32.xlu0 %v2103, 16
      %v2188 = vpop.permute.xlu0 %2187
      %2189 = vrot.lane.b32.xlu0 %v2104, 16
      %v2190 = vpop.permute.xlu0 %2189
      %2191 = vrot.lane.b32.xlu0 %v2105, 16
      %v2192 = vpop.permute.xlu0 %2191
      %2193 = vrot.lane.b32.xlu0 %v2106, 16
      %v2194 = vpop.permute.xlu0 %2193
      %2195 = vrot.lane.b32.xlu0 %v2107, 16
      %v2196 = vpop.permute.xlu0 %2195
      %2197 = vrot.lane.b32.xlu0 %v2108, 16
      %v2198 = vpop.permute.xlu0 %2197
      %2199 = vrot.lane.b32.xlu0 %v2109, 16
      %v2200 = vpop.permute.xlu0 %2199
      %2201 = vrot.lane.b32.xlu0 %v2110, 16
      %v2202 = vpop.permute.xlu0 %2201
      %2203 = vrot.lane.b32.xlu0 %v2111, 16
      %v2204 = vpop.permute.xlu0 %2203
      %2205 = vrot.lane.b32.xlu0 %v2112, 16
      %v2206 = vpop.permute.xlu0 %2205
      %2207 = vrot.lane.b32.xlu0 %v2113, 16
      %v2208 = vpop.permute.xlu0 %2207
      %2209 = vrot.lane.b32.xlu0 %v2114, 16
      %v2210 = vpop.permute.xlu0 %2209
      %vm2243 = vcmask 162944
      %2244 = vst.msk [vmem:[#allocation5] sm:$0xff] %vm2243, %v2148
      %2245 = vst.msk [vmem:[#allocation5 + $0x10] sm:$0xff] %vm2243, %v2150
      %2246 = vst.msk [vmem:[#allocation5 + $0x20] sm:$0xff] %vm2243, %v2152
      %2247 = vst.msk [vmem:[#allocation5 + $0x30] sm:$0xff] %vm2243, %v2154
      %2248 = vst.msk [vmem:[#allocation5 + $0x40] sm:$0xff] %vm2243, %v2156
      %2249 = vst.msk [vmem:[#allocation5 + $0x50] sm:$0xff] %vm2243, %v2158
      %2250 = vst.msk [vmem:[#allocation5 + $0x60] sm:$0xff] %vm2243, %v2160
      %2251 = vst.msk [vmem:[#allocation5 + $0x70] sm:$0xff] %vm2243, %v2162
      %2252 = vst.msk [vmem:[#allocation5 + $0x80] sm:$0xff] %vm2243, %v2164
      %2253 = vst.msk [vmem:[#allocation5 + $0x90] sm:$0xff] %vm2243, %v2166
      %2254 = vst.msk [vmem:[#allocation5 + $0xa0] sm:$0xff] %vm2243, %v2168
      %2255 = vst.msk [vmem:[#allocation5 + $0xb0] sm:$0xff] %vm2243, %v2170
      %2256 = vst.msk [vmem:[#allocation5 + $0xc0] sm:$0xff] %vm2243, %v2172
      %2257 = vst.msk [vmem:[#allocation5 + $0xd0] sm:$0xff] %vm2243, %v2174
      %2258 = vst.msk [vmem:[#allocation5 + $0xe0] sm:$0xff] %vm2243, %v2176
      %2259 = vst.msk [vmem:[#allocation5 + $0xf0] sm:$0xff] %vm2243, %v2178
      %2260 = vst.msk [vmem:[#allocation5 + $0x100] sm:$0xff] %vm2243, %v2180
      %2261 = vst.msk [vmem:[#allocation5 + $0x110] sm:$0xff] %vm2243, %v2182
      %2262 = vst.msk [vmem:[#allocation5 + $0x120] sm:$0xff] %vm2243, %v2184
      %2263 = vst.msk [vmem:[#allocation5 + $0x130] sm:$0xff] %vm2243, %v2186
      %2264 = vst.msk [vmem:[#allocation5 + $0x140] sm:$0xff] %vm2243, %v2188
      %2265 = vst.msk [vmem:[#allocation5 + $0x150] sm:$0xff] %vm2243, %v2190
      %2266 = vst.msk [vmem:[#allocation5 + $0x160] sm:$0xff] %vm2243, %v2192
      %2267 = vst.msk [vmem:[#allocation5 + $0x170] sm:$0xff] %vm2243, %v2194
      %2268 = vst.msk [vmem:[#allocation5 + $0x180] sm:$0xff] %vm2243, %v2196
      %2269 = vst.msk [vmem:[#allocation5 + $0x190] sm:$0xff] %vm2243, %v2198
      %2270 = vst.msk [vmem:[#allocation5 + $0x1a0] sm:$0xff] %vm2243, %v2200
      %2271 = vst.msk [vmem:[#allocation5 + $0x1b0] sm:$0xff] %vm2243, %v2202
      %2272 = vst.msk [vmem:[#allocation5 + $0x1c0] sm:$0xff] %vm2243, %v2204
      %2273 = vst.msk [vmem:[#allocation5 + $0x1d0] sm:$0xff] %vm2243, %v2206
      %2274 = vst.msk [vmem:[#allocation5 + $0x1e0] sm:$0xff] %vm2243, %v2208
      %2275 = vst.msk [vmem:[#allocation5 + $0x1f0] sm:$0xff] %vm2243, %v2210
      %v2276 = vld [vmem:[%s583] sm:$0xff]
      %v2277 = vld [vmem:[%s583 + $0x8] sm:$0xff]
      %v2278 = vld [vmem:[%s583 + $0x18] sm:$0xff]
      %v2279 = vld [vmem:[%s583 + $0x20] sm:$0xff]
      %v2280 = vld [vmem:[%s583 + $0x30] sm:$0xff]
      %v2281 = vld [vmem:[%s583 + $0x38] sm:$0xff]
      %v2282 = vld [vmem:[%s583 + $0x48] sm:$0xff]
      %v2283 = vld [vmem:[%s583 + $0x50] sm:$0xff]
      %v2284 = vld [vmem:[%s583 + $0x60] sm:$0xff]
      %v2285 = vld [vmem:[%s583 + $0x68] sm:$0xff]
      %v2286 = vld [vmem:[%s583 + $0x78] sm:$0xff]
      %v2287 = vld [vmem:[%s583 + $0x80] sm:$0xff]
      %v2288 = vld [vmem:[%s583 + $0x90] sm:$0xff]
      %v2289 = vld [vmem:[%s583 + $0x98] sm:$0xff]
      %v2290 = vld [vmem:[%s583 + $0xa8] sm:$0xff]
      %v2291 = vld [vmem:[%s583 + $0xb0] sm:$0xff]
      %v2292 = vld [vmem:[%s583 + $0xc0] sm:$0xff]
      %v2293 = vld [vmem:[%s583 + $0xc8] sm:$0xff]
      %v2294 = vld [vmem:[%s583 + $0xd8] sm:$0xff]
      %v2295 = vld [vmem:[%s583 + $0xe0] sm:$0xff]
      %v2296 = vld [vmem:[%s583 + $0xf0] sm:$0xff]
      %v2297 = vld [vmem:[%s583 + $0xf8] sm:$0xff]
      %v2298 = vld [vmem:[%s583 + $0x108] sm:$0xff]
      %v2299 = vld [vmem:[%s583 + $0x110] sm:$0xff]
      %v2300 = vld [vmem:[%s583 + $0x120] sm:$0xff]
      %v2301 = vld [vmem:[%s583 + $0x128] sm:$0xff]
      %v2302 = vld [vmem:[%s583 + $0x138] sm:$0xff]
      %v2303 = vld [vmem:[%s583 + $0x140] sm:$0xff]
      %v2304 = vld [vmem:[%s583 + $0x150] sm:$0xff]
      %v2305 = vld [vmem:[%s583 + $0x158] sm:$0xff]
      %v2306 = vld [vmem:[%s583 + $0x168] sm:$0xff]
      %v2307 = vld [vmem:[%s583 + $0x170] sm:$0xff]
      %2340 = vrot.lane.b32.xlu0 %v2276, 20
      %v2341 = vpop.permute.xlu0 %2340
      %2342 = vrot.lane.b32.xlu0 %v2277, 20
      %v2343 = vpop.permute.xlu0 %2342
      %2344 = vrot.lane.b32.xlu0 %v2278, 20
      %v2345 = vpop.permute.xlu0 %2344
      %2346 = vrot.lane.b32.xlu0 %v2279, 20
      %v2347 = vpop.permute.xlu0 %2346
      %2348 = vrot.lane.b32.xlu0 %v2280, 20
      %v2349 = vpop.permute.xlu0 %2348
      %2350 = vrot.lane.b32.xlu0 %v2281, 20
      %v2351 = vpop.permute.xlu0 %2350
      %2352 = vrot.lane.b32.xlu0 %v2282, 20
      %v2353 = vpop.permute.xlu0 %2352
      %2354 = vrot.lane.b32.xlu0 %v2283, 20
      %v2355 = vpop.permute.xlu0 %2354
      %2356 = vrot.lane.b32.xlu0 %v2284, 20
      %v2357 = vpop.permute.xlu0 %2356
      %2358 = vrot.lane.b32.xlu0 %v2285, 20
      %v2359 = vpop.permute.xlu0 %2358
      %2360 = vrot.lane.b32.xlu0 %v2286, 20
      %v2361 = vpop.permute.xlu0 %2360
      %2362 = vrot.lane.b32.xlu0 %v2287, 20
      %v2363 = vpop.permute.xlu0 %2362
      %2364 = vrot.lane.b32.xlu0 %v2288, 20
      %v2365 = vpop.permute.xlu0 %2364
      %2366 = vrot.lane.b32.xlu0 %v2289, 20
      %v2367 = vpop.permute.xlu0 %2366
      %2368 = vrot.lane.b32.xlu0 %v2290, 20
      %v2369 = vpop.permute.xlu0 %2368
      %2370 = vrot.lane.b32.xlu0 %v2291, 20
      %v2371 = vpop.permute.xlu0 %2370
      %2372 = vrot.lane.b32.xlu0 %v2292, 20
      %v2373 = vpop.permute.xlu0 %2372
      %2374 = vrot.lane.b32.xlu0 %v2293, 20
      %v2375 = vpop.permute.xlu0 %2374
      %2376 = vrot.lane.b32.xlu0 %v2294, 20
      %v2377 = vpop.permute.xlu0 %2376
      %2378 = vrot.lane.b32.xlu0 %v2295, 20
      %v2379 = vpop.permute.xlu0 %2378
      %2380 = vrot.lane.b32.xlu0 %v2296, 20
      %v2381 = vpop.permute.xlu0 %2380
      %2382 = vrot.lane.b32.xlu0 %v2297, 20
      %v2383 = vpop.permute.xlu0 %2382
      %2384 = vrot.lane.b32.xlu0 %v2298, 20
      %v2385 = vpop.permute.xlu0 %2384
      %2386 = vrot.lane.b32.xlu0 %v2299, 20
      %v2387 = vpop.permute.xlu0 %2386
      %2388 = vrot.lane.b32.xlu0 %v2300, 20
      %v2389 = vpop.permute.xlu0 %2388
      %2390 = vrot.lane.b32.xlu0 %v2301, 20
      %v2391 = vpop.permute.xlu0 %2390
      %2392 = vrot.lane.b32.xlu0 %v2302, 20
      %v2393 = vpop.permute.xlu0 %2392
      %2394 = vrot.lane.b32.xlu0 %v2303, 20
      %v2395 = vpop.permute.xlu0 %2394
      %2396 = vrot.lane.b32.xlu0 %v2304, 20
      %v2397 = vpop.permute.xlu0 %2396
      %2398 = vrot.lane.b32.xlu0 %v2305, 20
      %v2399 = vpop.permute.xlu0 %2398
      %2400 = vrot.lane.b32.xlu0 %v2306, 20
      %v2401 = vpop.permute.xlu0 %2400
      %2402 = vrot.lane.b32.xlu0 %v2307, 20
      %v2403 = vpop.permute.xlu0 %2402
      %vm2436 = vcmask 195744
      %2437 = vst.msk [vmem:[#allocation5] sm:$0xff] %vm2436, %v2341
      %2438 = vst.msk [vmem:[#allocation5 + $0x10] sm:$0xff] %vm2436, %v2343
      %2439 = vst.msk [vmem:[#allocation5 + $0x20] sm:$0xff] %vm2436, %v2345
      %2440 = vst.msk [vmem:[#allocation5 + $0x30] sm:$0xff] %vm2436, %v2347
      %2441 = vst.msk [vmem:[#allocation5 + $0x40] sm:$0xff] %vm2436, %v2349
      %2442 = vst.msk [vmem:[#allocation5 + $0x50] sm:$0xff] %vm2436, %v2351
      %2443 = vst.msk [vmem:[#allocation5 + $0x60] sm:$0xff] %vm2436, %v2353
      %2444 = vst.msk [vmem:[#allocation5 + $0x70] sm:$0xff] %vm2436, %v2355
      %2445 = vst.msk [vmem:[#allocation5 + $0x80] sm:$0xff] %vm2436, %v2357
      %2446 = vst.msk [vmem:[#allocation5 + $0x90] sm:$0xff] %vm2436, %v2359
      %2447 = vst.msk [vmem:[#allocation5 + $0xa0] sm:$0xff] %vm2436, %v2361
      %2448 = vst.msk [vmem:[#allocation5 + $0xb0] sm:$0xff] %vm2436, %v2363
      %2449 = vst.msk [vmem:[#allocation5 + $0xc0] sm:$0xff] %vm2436, %v2365
      %2450 = vst.msk [vmem:[#allocation5 + $0xd0] sm:$0xff] %vm2436, %v2367
      %2451 = vst.msk [vmem:[#allocation5 + $0xe0] sm:$0xff] %vm2436, %v2369
      %2452 = vst.msk [vmem:[#allocation5 + $0xf0] sm:$0xff] %vm2436, %v2371
      %2453 = vst.msk [vmem:[#allocation5 + $0x100] sm:$0xff] %vm2436, %v2373
      %2454 = vst.msk [vmem:[#allocation5 + $0x110] sm:$0xff] %vm2436, %v2375
      %2455 = vst.msk [vmem:[#allocation5 + $0x120] sm:$0xff] %vm2436, %v2377
      %2456 = vst.msk [vmem:[#allocation5 + $0x130] sm:$0xff] %vm2436, %v2379
      %2457 = vst.msk [vmem:[#allocation5 + $0x140] sm:$0xff] %vm2436, %v2381
      %2458 = vst.msk [vmem:[#allocation5 + $0x150] sm:$0xff] %vm2436, %v2383
      %2459 = vst.msk [vmem:[#allocation5 + $0x160] sm:$0xff] %vm2436, %v2385
      %2460 = vst.msk [vmem:[#allocation5 + $0x170] sm:$0xff] %vm2436, %v2387
      %2461 = vst.msk [vmem:[#allocation5 + $0x180] sm:$0xff] %vm2436, %v2389
      %2462 = vst.msk [vmem:[#allocation5 + $0x190] sm:$0xff] %vm2436, %v2391
      %2463 = vst.msk [vmem:[#allocation5 + $0x1a0] sm:$0xff] %vm2436, %v2393
      %2464 = vst.msk [vmem:[#allocation5 + $0x1b0] sm:$0xff] %vm2436, %v2395
      %2465 = vst.msk [vmem:[#allocation5 + $0x1c0] sm:$0xff] %vm2436, %v2397
      %2466 = vst.msk [vmem:[#allocation5 + $0x1d0] sm:$0xff] %vm2436, %v2399
      %2467 = vst.msk [vmem:[#allocation5 + $0x1e0] sm:$0xff] %vm2436, %v2401
      %2468 = vst.msk [vmem:[#allocation5 + $0x1f0] sm:$0xff] %vm2436, %v2403
      %v2469 = vld [vmem:[%s583 + $0x1] sm:$0xff]
      %v2470 = vld [vmem:[%s583 + $0x9] sm:$0xff]
      %v2471 = vld [vmem:[%s583 + $0x19] sm:$0xff]
      %v2472 = vld [vmem:[%s583 + $0x21] sm:$0xff]
      %v2473 = vld [vmem:[%s583 + $0x31] sm:$0xff]
      %v2474 = vld [vmem:[%s583 + $0x39] sm:$0xff]
      %v2475 = vld [vmem:[%s583 + $0x49] sm:$0xff]
      %v2476 = vld [vmem:[%s583 + $0x51] sm:$0xff]
      %v2477 = vld [vmem:[%s583 + $0x61] sm:$0xff]
      %v2478 = vld [vmem:[%s583 + $0x69] sm:$0xff]
      %v2479 = vld [vmem:[%s583 + $0x79] sm:$0xff]
      %v2480 = vld [vmem:[%s583 + $0x81] sm:$0xff]
      %v2481 = vld [vmem:[%s583 + $0x91] sm:$0xff]
      %v2482 = vld [vmem:[%s583 + $0x99] sm:$0xff]
      %v2483 = vld [vmem:[%s583 + $0xa9] sm:$0xff]
      %v2484 = vld [vmem:[%s583 + $0xb1] sm:$0xff]
      %v2485 = vld [vmem:[%s583 + $0xc1] sm:$0xff]
      %v2486 = vld [vmem:[%s583 + $0xc9] sm:$0xff]
      %v2487 = vld [vmem:[%s583 + $0xd9] sm:$0xff]
      %v2488 = vld [vmem:[%s583 + $0xe1] sm:$0xff]
      %v2489 = vld [vmem:[%s583 + $0xf1] sm:$0xff]
      %v2490 = vld [vmem:[%s583 + $0xf9] sm:$0xff]
      %v2491 = vld [vmem:[%s583 + $0x109] sm:$0xff]
      %v2492 = vld [vmem:[%s583 + $0x111] sm:$0xff]
      %v2493 = vld [vmem:[%s583 + $0x121] sm:$0xff]
      %v2494 = vld [vmem:[%s583 + $0x129] sm:$0xff]
      %v2495 = vld [vmem:[%s583 + $0x139] sm:$0xff]
      %v2496 = vld [vmem:[%s583 + $0x141] sm:$0xff]
      %v2497 = vld [vmem:[%s583 + $0x151] sm:$0xff]
      %v2498 = vld [vmem:[%s583 + $0x159] sm:$0xff]
      %v2499 = vld [vmem:[%s583 + $0x169] sm:$0xff]
      %v2500 = vld [vmem:[%s583 + $0x171] sm:$0xff]
      %2533 = vrot.lane.b32.xlu0 %v2469, 24
      %v2534 = vpop.permute.xlu0 %2533
      %2535 = vrot.lane.b32.xlu0 %v2470, 24
      %v2536 = vpop.permute.xlu0 %2535
      %2537 = vrot.lane.b32.xlu0 %v2471, 24
      %v2538 = vpop.permute.xlu0 %2537
      %2539 = vrot.lane.b32.xlu0 %v2472, 24
      %v2540 = vpop.permute.xlu0 %2539
      %2541 = vrot.lane.b32.xlu0 %v2473, 24
      %v2542 = vpop.permute.xlu0 %2541
      %2543 = vrot.lane.b32.xlu0 %v2474, 24
      %v2544 = vpop.permute.xlu0 %2543
      %2545 = vrot.lane.b32.xlu0 %v2475, 24
      %v2546 = vpop.permute.xlu0 %2545
      %2547 = vrot.lane.b32.xlu0 %v2476, 24
      %v2548 = vpop.permute.xlu0 %2547
      %2549 = vrot.lane.b32.xlu0 %v2477, 24
      %v2550 = vpop.permute.xlu0 %2549
      %2551 = vrot.lane.b32.xlu0 %v2478, 24
      %v2552 = vpop.permute.xlu0 %2551
      %2553 = vrot.lane.b32.xlu0 %v2479, 24
      %v2554 = vpop.permute.xlu0 %2553
      %2555 = vrot.lane.b32.xlu0 %v2480, 24
      %v2556 = vpop.permute.xlu0 %2555
      %2557 = vrot.lane.b32.xlu0 %v2481, 24
      %v2558 = vpop.permute.xlu0 %2557
      %2559 = vrot.lane.b32.xlu0 %v2482, 24
      %v2560 = vpop.permute.xlu0 %2559
      %2561 = vrot.lane.b32.xlu0 %v2483, 24
      %v2562 = vpop.permute.xlu0 %2561
      %2563 = vrot.lane.b32.xlu0 %v2484, 24
      %v2564 = vpop.permute.xlu0 %2563
      %2565 = vrot.lane.b32.xlu0 %v2485, 24
      %v2566 = vpop.permute.xlu0 %2565
      %2567 = vrot.lane.b32.xlu0 %v2486, 24
      %v2568 = vpop.permute.xlu0 %2567
      %2569 = vrot.lane.b32.xlu0 %v2487, 24
      %v2570 = vpop.permute.xlu0 %2569
      %2571 = vrot.lane.b32.xlu0 %v2488, 24
      %v2572 = vpop.permute.xlu0 %2571
      %2573 = vrot.lane.b32.xlu0 %v2489, 24
      %v2574 = vpop.permute.xlu0 %2573
      %2575 = vrot.lane.b32.xlu0 %v2490, 24
      %v2576 = vpop.permute.xlu0 %2575
      %2577 = vrot.lane.b32.xlu0 %v2491, 24
      %v2578 = vpop.permute.xlu0 %2577
      %2579 = vrot.lane.b32.xlu0 %v2492, 24
      %v2580 = vpop.permute.xlu0 %2579
      %2581 = vrot.lane.b32.xlu0 %v2493, 24
      %v2582 = vpop.permute.xlu0 %2581
      %2583 = vrot.lane.b32.xlu0 %v2494, 24
      %v2584 = vpop.permute.xlu0 %2583
      %2585 = vrot.lane.b32.xlu0 %v2495, 24
      %v2586 = vpop.permute.xlu0 %2585
      %2587 = vrot.lane.b32.xlu0 %v2496, 24
      %v2588 = vpop.permute.xlu0 %2587
      %2589 = vrot.lane.b32.xlu0 %v2497, 24
      %v2590 = vpop.permute.xlu0 %2589
      %2591 = vrot.lane.b32.xlu0 %v2498, 24
      %v2592 = vpop.permute.xlu0 %2591
      %2593 = vrot.lane.b32.xlu0 %v2499, 24
      %v2594 = vpop.permute.xlu0 %2593
      %2595 = vrot.lane.b32.xlu0 %v2500, 24
      %v2596 = vpop.permute.xlu0 %2595
      %vm2629 = vcmask 228544
      %2630 = vst.msk [vmem:[#allocation5] sm:$0xff] %vm2629, %v2534
      %2631 = vst.msk [vmem:[#allocation5 + $0x10] sm:$0xff] %vm2629, %v2536
      %2632 = vst.msk [vmem:[#allocation5 + $0x20] sm:$0xff] %vm2629, %v2538
      %2633 = vst.msk [vmem:[#allocation5 + $0x30] sm:$0xff] %vm2629, %v2540
      %2634 = vst.msk [vmem:[#allocation5 + $0x40] sm:$0xff] %vm2629, %v2542
      %2635 = vst.msk [vmem:[#allocation5 + $0x50] sm:$0xff] %vm2629, %v2544
      %2636 = vst.msk [vmem:[#allocation5 + $0x60] sm:$0xff] %vm2629, %v2546
      %2637 = vst.msk [vmem:[#allocation5 + $0x70] sm:$0xff] %vm2629, %v2548
      %2638 = vst.msk [vmem:[#allocation5 + $0x80] sm:$0xff] %vm2629, %v2550
      %2639 = vst.msk [vmem:[#allocation5 + $0x90] sm:$0xff] %vm2629, %v2552
      %2640 = vst.msk [vmem:[#allocation5 + $0xa0] sm:$0xff] %vm2629, %v2554
      %2641 = vst.msk [vmem:[#allocation5 + $0xb0] sm:$0xff] %vm2629, %v2556
      %2642 = vst.msk [vmem:[#allocation5 + $0xc0] sm:$0xff] %vm2629, %v2558
      %2643 = vst.msk [vmem:[#allocation5 + $0xd0] sm:$0xff] %vm2629, %v2560
      %2644 = vst.msk [vmem:[#allocation5 + $0xe0] sm:$0xff] %vm2629, %v2562
      %2645 = vst.msk [vmem:[#allocation5 + $0xf0] sm:$0xff] %vm2629, %v2564
      %2646 = vst.msk [vmem:[#allocation5 + $0x100] sm:$0xff] %vm2629, %v2566
      %2647 = vst.msk [vmem:[#allocation5 + $0x110] sm:$0xff] %vm2629, %v2568
      %2648 = vst.msk [vmem:[#allocation5 + $0x120] sm:$0xff] %vm2629, %v2570
      %2649 = vst.msk [vmem:[#allocation5 + $0x130] sm:$0xff] %vm2629, %v2572
      %2650 = vst.msk [vmem:[#allocation5 + $0x140] sm:$0xff] %vm2629, %v2574
      %2651 = vst.msk [vmem:[#allocation5 + $0x150] sm:$0xff] %vm2629, %v2576
      %2652 = vst.msk [vmem:[#allocation5 + $0x160] sm:$0xff] %vm2629, %v2578
      %2653 = vst.msk [vmem:[#allocation5 + $0x170] sm:$0xff] %vm2629, %v2580
      %2654 = vst.msk [vmem:[#allocation5 + $0x180] sm:$0xff] %vm2629, %v2582
      %2655 = vst.msk [vmem:[#allocation5 + $0x190] sm:$0xff] %vm2629, %v2584
      %2656 = vst.msk [vmem:[#allocation5 + $0x1a0] sm:$0xff] %vm2629, %v2586
      %2657 = vst.msk [vmem:[#allocation5 + $0x1b0] sm:$0xff] %vm2629, %v2588
      %2658 = vst.msk [vmem:[#allocation5 + $0x1c0] sm:$0xff] %vm2629, %v2590
      %2659 = vst.msk [vmem:[#allocation5 + $0x1d0] sm:$0xff] %vm2629, %v2592
      %2660 = vst.msk [vmem:[#allocation5 + $0x1e0] sm:$0xff] %vm2629, %v2594
      %2661 = vst.msk [vmem:[#allocation5 + $0x1f0] sm:$0xff] %vm2629, %v2596
      %v2662 = vld [vmem:[%s583 + $0x2] sm:$0xff]
      %v2663 = vld [vmem:[%s583 + $0xa] sm:$0xff]
      %v2664 = vld [vmem:[%s583 + $0x1a] sm:$0xff]
      %v2665 = vld [vmem:[%s583 + $0x22] sm:$0xff]
      %v2666 = vld [vmem:[%s583 + $0x32] sm:$0xff]
      %v2667 = vld [vmem:[%s583 + $0x3a] sm:$0xff]
      %v2668 = vld [vmem:[%s583 + $0x4a] sm:$0xff]
      %v2669 = vld [vmem:[%s583 + $0x52] sm:$0xff]
      %v2670 = vld [vmem:[%s583 + $0x62] sm:$0xff]
      %v2671 = vld [vmem:[%s583 + $0x6a] sm:$0xff]
      %v2672 = vld [vmem:[%s583 + $0x7a] sm:$0xff]
      %v2673 = vld [vmem:[%s583 + $0x82] sm:$0xff]
      %v2674 = vld [vmem:[%s583 + $0x92] sm:$0xff]
      %v2675 = vld [vmem:[%s583 + $0x9a] sm:$0xff]
      %v2676 = vld [vmem:[%s583 + $0xaa] sm:$0xff]
      %v2677 = vld [vmem:[%s583 + $0xb2] sm:$0xff]
      %v2678 = vld [vmem:[%s583 + $0xc2] sm:$0xff]
      %v2679 = vld [vmem:[%s583 + $0xca] sm:$0xff]
      %v2680 = vld [vmem:[%s583 + $0xda] sm:$0xff]
      %v2681 = vld [vmem:[%s583 + $0xe2] sm:$0xff]
      %v2682 = vld [vmem:[%s583 + $0xf2] sm:$0xff]
      %v2683 = vld [vmem:[%s583 + $0xfa] sm:$0xff]
      %v2684 = vld [vmem:[%s583 + $0x10a] sm:$0xff]
      %v2685 = vld [vmem:[%s583 + $0x112] sm:$0xff]
      %v2686 = vld [vmem:[%s583 + $0x122] sm:$0xff]
      %v2687 = vld [vmem:[%s583 + $0x12a] sm:$0xff]
      %v2688 = vld [vmem:[%s583 + $0x13a] sm:$0xff]
      %v2689 = vld [vmem:[%s583 + $0x142] sm:$0xff]
      %v2690 = vld [vmem:[%s583 + $0x152] sm:$0xff]
      %v2691 = vld [vmem:[%s583 + $0x15a] sm:$0xff]
      %v2692 = vld [vmem:[%s583 + $0x16a] sm:$0xff]
      %v2693 = vld [vmem:[%s583 + $0x172] sm:$0xff]
      %2726 = vrot.lane.b32.xlu0 %v2662, 28
      %v2727 = vpop.permute.xlu0 %2726
      %2728 = vrot.lane.b32.xlu0 %v2663, 28
      %v2729 = vpop.permute.xlu0 %2728
      %2730 = vrot.lane.b32.xlu0 %v2664, 28
      %v2731 = vpop.permute.xlu0 %2730
      %2732 = vrot.lane.b32.xlu0 %v2665, 28
      %v2733 = vpop.permute.xlu0 %2732
      %2734 = vrot.lane.b32.xlu0 %v2666, 28
      %v2735 = vpop.permute.xlu0 %2734
      %2736 = vrot.lane.b32.xlu0 %v2667, 28
      %v2737 = vpop.permute.xlu0 %2736
      %2738 = vrot.lane.b32.xlu0 %v2668, 28
      %v2739 = vpop.permute.xlu0 %2738
      %2740 = vrot.lane.b32.xlu0 %v2669, 28
      %v2741 = vpop.permute.xlu0 %2740
      %2742 = vrot.lane.b32.xlu0 %v2670, 28
      %v2743 = vpop.permute.xlu0 %2742
      %2744 = vrot.lane.b32.xlu0 %v2671, 28
      %v2745 = vpop.permute.xlu0 %2744
      %2746 = vrot.lane.b32.xlu0 %v2672, 28
      %v2747 = vpop.permute.xlu0 %2746
      %2748 = vrot.lane.b32.xlu0 %v2673, 28
      %v2749 = vpop.permute.xlu0 %2748
      %2750 = vrot.lane.b32.xlu0 %v2674, 28
      %v2751 = vpop.permute.xlu0 %2750
      %2752 = vrot.lane.b32.xlu0 %v2675, 28
      %v2753 = vpop.permute.xlu0 %2752
      %2754 = vrot.lane.b32.xlu0 %v2676, 28
      %v2755 = vpop.permute.xlu0 %2754
      %2756 = vrot.lane.b32.xlu0 %v2677, 28
      %v2757 = vpop.permute.xlu0 %2756
      %2758 = vrot.lane.b32.xlu0 %v2678, 28
      %v2759 = vpop.permute.xlu0 %2758
      %2760 = vrot.lane.b32.xlu0 %v2679, 28
      %v2761 = vpop.permute.xlu0 %2760
      %2762 = vrot.lane.b32.xlu0 %v2680, 28
      %v2763 = vpop.permute.xlu0 %2762
      %2764 = vrot.lane.b32.xlu0 %v2681, 28
      %v2765 = vpop.permute.xlu0 %2764
      %2766 = vrot.lane.b32.xlu0 %v2682, 28
      %v2767 = vpop.permute.xlu0 %2766
      %2768 = vrot.lane.b32.xlu0 %v2683, 28
      %v2769 = vpop.permute.xlu0 %2768
      %2770 = vrot.lane.b32.xlu0 %v2684, 28
      %v2771 = vpop.permute.xlu0 %2770
      %2772 = vrot.lane.b32.xlu0 %v2685, 28
      %v2773 = vpop.permute.xlu0 %2772
      %2774 = vrot.lane.b32.xlu0 %v2686, 28
      %v2775 = vpop.permute.xlu0 %2774
      %2776 = vrot.lane.b32.xlu0 %v2687, 28
      %v2777 = vpop.permute.xlu0 %2776
      %2778 = vrot.lane.b32.xlu0 %v2688, 28
      %v2779 = vpop.permute.xlu0 %2778
      %2780 = vrot.lane.b32.xlu0 %v2689, 28
      %v2781 = vpop.permute.xlu0 %2780
      %2782 = vrot.lane.b32.xlu0 %v2690, 28
      %v2783 = vpop.permute.xlu0 %2782
      %2784 = vrot.lane.b32.xlu0 %v2691, 28
      %v2785 = vpop.permute.xlu0 %2784
      %2786 = vrot.lane.b32.xlu0 %v2692, 28
      %v2787 = vpop.permute.xlu0 %2786
      %2788 = vrot.lane.b32.xlu0 %v2693, 28
      %v2789 = vpop.permute.xlu0 %2788
      %vm2822 = vcmask 261344
      %2823 = vst.msk [vmem:[#allocation5] sm:$0xff] %vm2822, %v2727
      %2824 = vst.msk [vmem:[#allocation5 + $0x10] sm:$0xff] %vm2822, %v2729
      %2825 = vst.msk [vmem:[#allocation5 + $0x20] sm:$0xff] %vm2822, %v2731
      %2826 = vst.msk [vmem:[#allocation5 + $0x30] sm:$0xff] %vm2822, %v2733
      %2827 = vst.msk [vmem:[#allocation5 + $0x40] sm:$0xff] %vm2822, %v2735
      %2828 = vst.msk [vmem:[#allocation5 + $0x50] sm:$0xff] %vm2822, %v2737
      %2829 = vst.msk [vmem:[#allocation5 + $0x60] sm:$0xff] %vm2822, %v2739
      %2830 = vst.msk [vmem:[#allocation5 + $0x70] sm:$0xff] %vm2822, %v2741
      %2831 = vst.msk [vmem:[#allocation5 + $0x80] sm:$0xff] %vm2822, %v2743
      %2832 = vst.msk [vmem:[#allocation5 + $0x90] sm:$0xff] %vm2822, %v2745
      %2833 = vst.msk [vmem:[#allocation5 + $0xa0] sm:$0xff] %vm2822, %v2747
      %2834 = vst.msk [vmem:[#allocation5 + $0xb0] sm:$0xff] %vm2822, %v2749
      %2835 = vst.msk [vmem:[#allocation5 + $0xc0] sm:$0xff] %vm2822, %v2751
      %2836 = vst.msk [vmem:[#allocation5 + $0xd0] sm:$0xff] %vm2822, %v2753
      %2837 = vst.msk [vmem:[#allocation5 + $0xe0] sm:$0xff] %vm2822, %v2755
      %2838 = vst.msk [vmem:[#allocation5 + $0xf0] sm:$0xff] %vm2822, %v2757
      %2839 = vst.msk [vmem:[#allocation5 + $0x100] sm:$0xff] %vm2822, %v2759
      %2840 = vst.msk [vmem:[#allocation5 + $0x110] sm:$0xff] %vm2822, %v2761
      %2841 = vst.msk [vmem:[#allocation5 + $0x120] sm:$0xff] %vm2822, %v2763
      %2842 = vst.msk [vmem:[#allocation5 + $0x130] sm:$0xff] %vm2822, %v2765
      %2843 = vst.msk [vmem:[#allocation5 + $0x140] sm:$0xff] %vm2822, %v2767
      %2844 = vst.msk [vmem:[#allocation5 + $0x150] sm:$0xff] %vm2822, %v2769
      %2845 = vst.msk [vmem:[#allocation5 + $0x160] sm:$0xff] %vm2822, %v2771
      %2846 = vst.msk [vmem:[#allocation5 + $0x170] sm:$0xff] %vm2822, %v2773
      %2847 = vst.msk [vmem:[#allocation5 + $0x180] sm:$0xff] %vm2822, %v2775
      %2848 = vst.msk [vmem:[#allocation5 + $0x190] sm:$0xff] %vm2822, %v2777
      %2849 = vst.msk [vmem:[#allocation5 + $0x1a0] sm:$0xff] %vm2822, %v2779
      %2850 = vst.msk [vmem:[#allocation5 + $0x1b0] sm:$0xff] %vm2822, %v2781
      %2851 = vst.msk [vmem:[#allocation5 + $0x1c0] sm:$0xff] %vm2822, %v2783
      %2852 = vst.msk [vmem:[#allocation5 + $0x1d0] sm:$0xff] %vm2822, %v2785
      %2853 = vst.msk [vmem:[#allocation5 + $0x1e0] sm:$0xff] %vm2822, %v2787
      %2854 = vst.msk [vmem:[#allocation5 + $0x1f0] sm:$0xff] %vm2822, %v2789
      %s2855 = scalar_lea.vmem [#allocation3], 48
      %v2856 = vld [vmem:[%s2855] sm:$0xff]
      %v2857 = vld [vmem:[%s2855 + $0x8] sm:$0xff]
      %v2858 = vld [vmem:[%s2855 + $0x18] sm:$0xff]
      %v2859 = vld [vmem:[%s2855 + $0x20] sm:$0xff]
      %v2860 = vld [vmem:[%s2855 + $0x30] sm:$0xff]
      %v2861 = vld [vmem:[%s2855 + $0x38] sm:$0xff]
      %v2862 = vld [vmem:[%s2855 + $0x48] sm:$0xff]
      %v2863 = vld [vmem:[%s2855 + $0x50] sm:$0xff]
      %v2864 = vld [vmem:[%s2855 + $0x60] sm:$0xff]
      %v2865 = vld [vmem:[%s2855 + $0x68] sm:$0xff]
      %v2866 = vld [vmem:[%s2855 + $0x78] sm:$0xff]
      %v2867 = vld [vmem:[%s2855 + $0x80] sm:$0xff]
      %v2868 = vld [vmem:[%s2855 + $0x90] sm:$0xff]
      %v2869 = vld [vmem:[%s2855 + $0x98] sm:$0xff]
      %v2870 = vld [vmem:[%s2855 + $0xa8] sm:$0xff]
      %v2871 = vld [vmem:[%s2855 + $0xb0] sm:$0xff]
      %v2872 = vld [vmem:[%s2855 + $0xc0] sm:$0xff]
      %v2873 = vld [vmem:[%s2855 + $0xc8] sm:$0xff]
      %v2874 = vld [vmem:[%s2855 + $0xd8] sm:$0xff]
      %v2875 = vld [vmem:[%s2855 + $0xe0] sm:$0xff]
      %v2876 = vld [vmem:[%s2855 + $0xf0] sm:$0xff]
      %v2877 = vld [vmem:[%s2855 + $0xf8] sm:$0xff]
      %v2878 = vld [vmem:[%s2855 + $0x108] sm:$0xff]
      %v2879 = vld [vmem:[%s2855 + $0x110] sm:$0xff]
      %v2880 = vld [vmem:[%s2855 + $0x120] sm:$0xff]
      %v2881 = vld [vmem:[%s2855 + $0x128] sm:$0xff]
      %v2882 = vld [vmem:[%s2855 + $0x138] sm:$0xff]
      %v2883 = vld [vmem:[%s2855 + $0x140] sm:$0xff]
      %v2884 = vld [vmem:[%s2855 + $0x150] sm:$0xff]
      %v2885 = vld [vmem:[%s2855 + $0x158] sm:$0xff]
      %v2886 = vld [vmem:[%s2855 + $0x168] sm:$0xff]
      %v2887 = vld [vmem:[%s2855 + $0x170] sm:$0xff]
      %2920 = vrot.lane.b32.xlu0 %v2856, 32
      %v2921 = vpop.permute.xlu0 %2920
      %2922 = vrot.lane.b32.xlu0 %v2857, 32
      %v2923 = vpop.permute.xlu0 %2922
      %2924 = vrot.lane.b32.xlu0 %v2858, 32
      %v2925 = vpop.permute.xlu0 %2924
      %2926 = vrot.lane.b32.xlu0 %v2859, 32
      %v2927 = vpop.permute.xlu0 %2926
      %2928 = vrot.lane.b32.xlu0 %v2860, 32
      %v2929 = vpop.permute.xlu0 %2928
      %2930 = vrot.lane.b32.xlu0 %v2861, 32
      %v2931 = vpop.permute.xlu0 %2930
      %2932 = vrot.lane.b32.xlu0 %v2862, 32
      %v2933 = vpop.permute.xlu0 %2932
      %2934 = vrot.lane.b32.xlu0 %v2863, 32
      %v2935 = vpop.permute.xlu0 %2934
      %2936 = vrot.lane.b32.xlu0 %v2864, 32
      %v2937 = vpop.permute.xlu0 %2936
      %2938 = vrot.lane.b32.xlu0 %v2865, 32
      %v2939 = vpop.permute.xlu0 %2938
      %2940 = vrot.lane.b32.xlu0 %v2866, 32
      %v2941 = vpop.permute.xlu0 %2940
      %2942 = vrot.lane.b32.xlu0 %v2867, 32
      %v2943 = vpop.permute.xlu0 %2942
      %2944 = vrot.lane.b32.xlu0 %v2868, 32
      %v2945 = vpop.permute.xlu0 %2944
      %2946 = vrot.lane.b32.xlu0 %v2869, 32
      %v2947 = vpop.permute.xlu0 %2946
      %2948 = vrot.lane.b32.xlu0 %v2870, 32
      %v2949 = vpop.permute.xlu0 %2948
      %2950 = vrot.lane.b32.xlu0 %v2871, 32
      %v2951 = vpop.permute.xlu0 %2950
      %2952 = vrot.lane.b32.xlu0 %v2872, 32
      %v2953 = vpop.permute.xlu0 %2952
      %2954 = vrot.lane.b32.xlu0 %v2873, 32
      %v2955 = vpop.permute.xlu0 %2954
      %2956 = vrot.lane.b32.xlu0 %v2874, 32
      %v2957 = vpop.permute.xlu0 %2956
      %2958 = vrot.lane.b32.xlu0 %v2875, 32
      %v2959 = vpop.permute.xlu0 %2958
      %2960 = vrot.lane.b32.xlu0 %v2876, 32
      %v2961 = vpop.permute.xlu0 %2960
      %2962 = vrot.lane.b32.xlu0 %v2877, 32
      %v2963 = vpop.permute.xlu0 %2962
      %2964 = vrot.lane.b32.xlu0 %v2878, 32
      %v2965 = vpop.permute.xlu0 %2964
      %2966 = vrot.lane.b32.xlu0 %v2879, 32
      %v2967 = vpop.permute.xlu0 %2966
      %2968 = vrot.lane.b32.xlu0 %v2880, 32
      %v2969 = vpop.permute.xlu0 %2968
      %2970 = vrot.lane.b32.xlu0 %v2881, 32
      %v2971 = vpop.permute.xlu0 %2970
      %2972 = vrot.lane.b32.xlu0 %v2882, 32
      %v2973 = vpop.permute.xlu0 %2972
      %2974 = vrot.lane.b32.xlu0 %v2883, 32
      %v2975 = vpop.permute.xlu0 %2974
      %2976 = vrot.lane.b32.xlu0 %v2884, 32
      %v2977 = vpop.permute.xlu0 %2976
      %2978 = vrot.lane.b32.xlu0 %v2885, 32
      %v2979 = vpop.permute.xlu0 %2978
      %2980 = vrot.lane.b32.xlu0 %v2886, 32
      %v2981 = vpop.permute.xlu0 %2980
      %2982 = vrot.lane.b32.xlu0 %v2887, 32
      %v2983 = vpop.permute.xlu0 %2982
      %vm3016 = vcmask 294144
      %3017 = vst.msk [vmem:[#allocation5] sm:$0xff] %vm3016, %v2921
      %3018 = vst.msk [vmem:[#allocation5 + $0x10] sm:$0xff] %vm3016, %v2923
      %3019 = vst.msk [vmem:[#allocation5 + $0x20] sm:$0xff] %vm3016, %v2925
      %3020 = vst.msk [vmem:[#allocation5 + $0x30] sm:$0xff] %vm3016, %v2927
      %3021 = vst.msk [vmem:[#allocation5 + $0x40] sm:$0xff] %vm3016, %v2929
      %3022 = vst.msk [vmem:[#allocation5 + $0x50] sm:$0xff] %vm3016, %v2931
      %3023 = vst.msk [vmem:[#allocation5 + $0x60] sm:$0xff] %vm3016, %v2933
      %3024 = vst.msk [vmem:[#allocation5 + $0x70] sm:$0xff] %vm3016, %v2935
      %3025 = vst.msk [vmem:[#allocation5 + $0x80] sm:$0xff] %vm3016, %v2937
      %3026 = vst.msk [vmem:[#allocation5 + $0x90] sm:$0xff] %vm3016, %v2939
      %3027 = vst.msk [vmem:[#allocation5 + $0xa0] sm:$0xff] %vm3016, %v2941
      %3028 = vst.msk [vmem:[#allocation5 + $0xb0] sm:$0xff] %vm3016, %v2943
      %3029 = vst.msk [vmem:[#allocation5 + $0xc0] sm:$0xff] %vm3016, %v2945
      %3030 = vst.msk [vmem:[#allocation5 + $0xd0] sm:$0xff] %vm3016, %v2947
      %3031 = vst.msk [vmem:[#allocation5 + $0xe0] sm:$0xff] %vm3016, %v2949
      %3032 = vst.msk [vmem:[#allocation5 + $0xf0] sm:$0xff] %vm3016, %v2951
      %3033 = vst.msk [vmem:[#allocation5 + $0x100] sm:$0xff] %vm3016, %v2953
      %3034 = vst.msk [vmem:[#allocation5 + $0x110] sm:$0xff] %vm3016, %v2955
      %3035 = vst.msk [vmem:[#allocation5 + $0x120] sm:$0xff] %vm3016, %v2957
      %3036 = vst.msk [vmem:[#allocation5 + $0x130] sm:$0xff] %vm3016, %v2959
      %3037 = vst.msk [vmem:[#allocation5 + $0x140] sm:$0xff] %vm3016, %v2961
      %3038 = vst.msk [vmem:[#allocation5 + $0x150] sm:$0xff] %vm3016, %v2963
      %3039 = vst.msk [vmem:[#allocation5 + $0x160] sm:$0xff] %vm3016, %v2965
      %3040 = vst.msk [vmem:[#allocation5 + $0x170] sm:$0xff] %vm3016, %v2967
      %3041 = vst.msk [vmem:[#allocation5 + $0x180] sm:$0xff] %vm3016, %v2969
      %3042 = vst.msk [vmem:[#allocation5 + $0x190] sm:$0xff] %vm3016, %v2971
      %3043 = vst.msk [vmem:[#allocation5 + $0x1a0] sm:$0xff] %vm3016, %v2973
      %3044 = vst.msk [vmem:[#allocation5 + $0x1b0] sm:$0xff] %vm3016, %v2975
      %3045 = vst.msk [vmem:[#allocation5 + $0x1c0] sm:$0xff] %vm3016, %v2977
      %3046 = vst.msk [vmem:[#allocation5 + $0x1d0] sm:$0xff] %vm3016, %v2979
      %3047 = vst.msk [vmem:[#allocation5 + $0x1e0] sm:$0xff] %vm3016, %v2981
      %3048 = vst.msk [vmem:[#allocation5 + $0x1f0] sm:$0xff] %vm3016, %v2983
      %v3049 = vld [vmem:[%s2855 + $0x1] sm:$0xff]
      %v3050 = vld [vmem:[%s2855 + $0x9] sm:$0xff]
      %v3051 = vld [vmem:[%s2855 + $0x19] sm:$0xff]
      %v3052 = vld [vmem:[%s2855 + $0x21] sm:$0xff]
      %v3053 = vld [vmem:[%s2855 + $0x31] sm:$0xff]
      %v3054 = vld [vmem:[%s2855 + $0x39] sm:$0xff]
      %v3055 = vld [vmem:[%s2855 + $0x49] sm:$0xff]
      %v3056 = vld [vmem:[%s2855 + $0x51] sm:$0xff]
      %v3057 = vld [vmem:[%s2855 + $0x61] sm:$0xff]
      %v3058 = vld [vmem:[%s2855 + $0x69] sm:$0xff]
      %v3059 = vld [vmem:[%s2855 + $0x79] sm:$0xff]
      %v3060 = vld [vmem:[%s2855 + $0x81] sm:$0xff]
      %v3061 = vld [vmem:[%s2855 + $0x91] sm:$0xff]
      %v3062 = vld [vmem:[%s2855 + $0x99] sm:$0xff]
      %v3063 = vld [vmem:[%s2855 + $0xa9] sm:$0xff]
      %v3064 = vld [vmem:[%s2855 + $0xb1] sm:$0xff]
      %v3065 = vld [vmem:[%s2855 + $0xc1] sm:$0xff]
      %v3066 = vld [vmem:[%s2855 + $0xc9] sm:$0xff]
      %v3067 = vld [vmem:[%s2855 + $0xd9] sm:$0xff]
      %v3068 = vld [vmem:[%s2855 + $0xe1] sm:$0xff]
      %v3069 = vld [vmem:[%s2855 + $0xf1] sm:$0xff]
      %v3070 = vld [vmem:[%s2855 + $0xf9] sm:$0xff]
      %v3071 = vld [vmem:[%s2855 + $0x109] sm:$0xff]
      %v3072 = vld [vmem:[%s2855 + $0x111] sm:$0xff]
      %v3073 = vld [vmem:[%s2855 + $0x121] sm:$0xff]
      %v3074 = vld [vmem:[%s2855 + $0x129] sm:$0xff]
      %v3075 = vld [vmem:[%s2855 + $0x139] sm:$0xff]
      %v3076 = vld [vmem:[%s2855 + $0x141] sm:$0xff]
      %v3077 = vld [vmem:[%s2855 + $0x151] sm:$0xff]
      %v3078 = vld [vmem:[%s2855 + $0x159] sm:$0xff]
      %v3079 = vld [vmem:[%s2855 + $0x169] sm:$0xff]
      %v3080 = vld [vmem:[%s2855 + $0x171] sm:$0xff]
      %3113 = vrot.lane.b32.xlu0 %v3049, 36
      %v3114 = vpop.permute.xlu0 %3113
      %3115 = vrot.lane.b32.xlu0 %v3050, 36
      %v3116 = vpop.permute.xlu0 %3115
      %3117 = vrot.lane.b32.xlu0 %v3051, 36
      %v3118 = vpop.permute.xlu0 %3117
      %3119 = vrot.lane.b32.xlu0 %v3052, 36
      %v3120 = vpop.permute.xlu0 %3119
      %3121 = vrot.lane.b32.xlu0 %v3053, 36
      %v3122 = vpop.permute.xlu0 %3121
      %3123 = vrot.lane.b32.xlu0 %v3054, 36
      %v3124 = vpop.permute.xlu0 %3123
      %3125 = vrot.lane.b32.xlu0 %v3055, 36
      %v3126 = vpop.permute.xlu0 %3125
      %3127 = vrot.lane.b32.xlu0 %v3056, 36
      %v3128 = vpop.permute.xlu0 %3127
      %3129 = vrot.lane.b32.xlu0 %v3057, 36
      %v3130 = vpop.permute.xlu0 %3129
      %3131 = vrot.lane.b32.xlu0 %v3058, 36
      %v3132 = vpop.permute.xlu0 %3131
      %3133 = vrot.lane.b32.xlu0 %v3059, 36
      %v3134 = vpop.permute.xlu0 %3133
      %3135 = vrot.lane.b32.xlu0 %v3060, 36
      %v3136 = vpop.permute.xlu0 %3135
      %3137 = vrot.lane.b32.xlu0 %v3061, 36
      %v3138 = vpop.permute.xlu0 %3137
      %3139 = vrot.lane.b32.xlu0 %v3062, 36
      %v3140 = vpop.permute.xlu0 %3139
      %3141 = vrot.lane.b32.xlu0 %v3063, 36
      %v3142 = vpop.permute.xlu0 %3141
      %3143 = vrot.lane.b32.xlu0 %v3064, 36
      %v3144 = vpop.permute.xlu0 %3143
      %3145 = vrot.lane.b32.xlu0 %v3065, 36
      %v3146 = vpop.permute.xlu0 %3145
      %3147 = vrot.lane.b32.xlu0 %v3066, 36
      %v3148 = vpop.permute.xlu0 %3147
      %3149 = vrot.lane.b32.xlu0 %v3067, 36
      %v3150 = vpop.permute.xlu0 %3149
      %3151 = vrot.lane.b32.xlu0 %v3068, 36
      %v3152 = vpop.permute.xlu0 %3151
      %3153 = vrot.lane.b32.xlu0 %v3069, 36
      %v3154 = vpop.permute.xlu0 %3153
      %3155 = vrot.lane.b32.xlu0 %v3070, 36
      %v3156 = vpop.permute.xlu0 %3155
      %3157 = vrot.lane.b32.xlu0 %v3071, 36
      %v3158 = vpop.permute.xlu0 %3157
      %3159 = vrot.lane.b32.xlu0 %v3072, 36
      %v3160 = vpop.permute.xlu0 %3159
      %3161 = vrot.lane.b32.xlu0 %v3073, 36
      %v3162 = vpop.permute.xlu0 %3161
      %3163 = vrot.lane.b32.xlu0 %v3074, 36
      %v3164 = vpop.permute.xlu0 %3163
      %3165 = vrot.lane.b32.xlu0 %v3075, 36
      %v3166 = vpop.permute.xlu0 %3165
      %3167 = vrot.lane.b32.xlu0 %v3076, 36
      %v3168 = vpop.permute.xlu0 %3167
      %3169 = vrot.lane.b32.xlu0 %v3077, 36
      %v3170 = vpop.permute.xlu0 %3169
      %3171 = vrot.lane.b32.xlu0 %v3078, 36
      %v3172 = vpop.permute.xlu0 %3171
      %3173 = vrot.lane.b32.xlu0 %v3079, 36
      %v3174 = vpop.permute.xlu0 %3173
      %3175 = vrot.lane.b32.xlu0 %v3080, 36
      %v3176 = vpop.permute.xlu0 %3175
      %vm3209 = vcmask 326944
      %3210 = vst.msk [vmem:[#allocation5] sm:$0xff] %vm3209, %v3114
      %3211 = vst.msk [vmem:[#allocation5 + $0x10] sm:$0xff] %vm3209, %v3116
      %3212 = vst.msk [vmem:[#allocation5 + $0x20] sm:$0xff] %vm3209, %v3118
      %3213 = vst.msk [vmem:[#allocation5 + $0x30] sm:$0xff] %vm3209, %v3120
      %3214 = vst.msk [vmem:[#allocation5 + $0x40] sm:$0xff] %vm3209, %v3122
      %3215 = vst.msk [vmem:[#allocation5 + $0x50] sm:$0xff] %vm3209, %v3124
      %3216 = vst.msk [vmem:[#allocation5 + $0x60] sm:$0xff] %vm3209, %v3126
      %3217 = vst.msk [vmem:[#allocation5 + $0x70] sm:$0xff] %vm3209, %v3128
      %3218 = vst.msk [vmem:[#allocation5 + $0x80] sm:$0xff] %vm3209, %v3130
      %3219 = vst.msk [vmem:[#allocation5 + $0x90] sm:$0xff] %vm3209, %v3132
      %3220 = vst.msk [vmem:[#allocation5 + $0xa0] sm:$0xff] %vm3209, %v3134
      %3221 = vst.msk [vmem:[#allocation5 + $0xb0] sm:$0xff] %vm3209, %v3136
      %3222 = vst.msk [vmem:[#allocation5 + $0xc0] sm:$0xff] %vm3209, %v3138
      %3223 = vst.msk [vmem:[#allocation5 + $0xd0] sm:$0xff] %vm3209, %v3140
      %3224 = vst.msk [vmem:[#allocation5 + $0xe0] sm:$0xff] %vm3209, %v3142
      %3225 = vst.msk [vmem:[#allocation5 + $0xf0] sm:$0xff] %vm3209, %v3144
      %3226 = vst.msk [vmem:[#allocation5 + $0x100] sm:$0xff] %vm3209, %v3146
      %3227 = vst.msk [vmem:[#allocation5 + $0x110] sm:$0xff] %vm3209, %v3148
      %3228 = vst.msk [vmem:[#allocation5 + $0x120] sm:$0xff] %vm3209, %v3150
      %3229 = vst.msk [vmem:[#allocation5 + $0x130] sm:$0xff] %vm3209, %v3152
      %3230 = vst.msk [vmem:[#allocation5 + $0x140] sm:$0xff] %vm3209, %v3154
      %3231 = vst.msk [vmem:[#allocation5 + $0x150] sm:$0xff] %vm3209, %v3156
      %3232 = vst.msk [vmem:[#allocation5 + $0x160] sm:$0xff] %vm3209, %v3158
      %3233 = vst.msk [vmem:[#allocation5 + $0x170] sm:$0xff] %vm3209, %v3160
      %3234 = vst.msk [vmem:[#allocation5 + $0x180] sm:$0xff] %vm3209, %v3162
      %3235 = vst.msk [vmem:[#allocation5 + $0x190] sm:$0xff] %vm3209, %v3164
      %3236 = vst.msk [vmem:[#allocation5 + $0x1a0] sm:$0xff] %vm3209, %v3166
      %3237 = vst.msk [vmem:[#allocation5 + $0x1b0] sm:$0xff] %vm3209, %v3168
      %3238 = vst.msk [vmem:[#allocation5 + $0x1c0] sm:$0xff] %vm3209, %v3170
      %3239 = vst.msk [vmem:[#allocation5 + $0x1d0] sm:$0xff] %vm3209, %v3172
      %3240 = vst.msk [vmem:[#allocation5 + $0x1e0] sm:$0xff] %vm3209, %v3174
      %3241 = vst.msk [vmem:[#allocation5 + $0x1f0] sm:$0xff] %vm3209, %v3176
      %v3242 = vld [vmem:[%s2855 + $0x2] sm:$0xff]
      %v3243 = vld [vmem:[%s2855 + $0xa] sm:$0xff]
      %v3244 = vld [vmem:[%s2855 + $0x1a] sm:$0xff]
      %v3245 = vld [vmem:[%s2855 + $0x22] sm:$0xff]
      %v3246 = vld [vmem:[%s2855 + $0x32] sm:$0xff]
      %v3247 = vld [vmem:[%s2855 + $0x3a] sm:$0xff]
      %v3248 = vld [vmem:[%s2855 + $0x4a] sm:$0xff]
      %v3249 = vld [vmem:[%s2855 + $0x52] sm:$0xff]
      %v3250 = vld [vmem:[%s2855 + $0x62] sm:$0xff]
      %v3251 = vld [vmem:[%s2855 + $0x6a] sm:$0xff]
      %v3252 = vld [vmem:[%s2855 + $0x7a] sm:$0xff]
      %v3253 = vld [vmem:[%s2855 + $0x82] sm:$0xff]
      %v3254 = vld [vmem:[%s2855 + $0x92] sm:$0xff]
      %v3255 = vld [vmem:[%s2855 + $0x9a] sm:$0xff]
      %v3256 = vld [vmem:[%s2855 + $0xaa] sm:$0xff]
      %v3257 = vld [vmem:[%s2855 + $0xb2] sm:$0xff]
      %v3258 = vld [vmem:[%s2855 + $0xc2] sm:$0xff]
      %v3259 = vld [vmem:[%s2855 + $0xca] sm:$0xff]
      %v3260 = vld [vmem:[%s2855 + $0xda] sm:$0xff]
      %v3261 = vld [vmem:[%s2855 + $0xe2] sm:$0xff]
      %v3262 = vld [vmem:[%s2855 + $0xf2] sm:$0xff]
      %v3263 = vld [vmem:[%s2855 + $0xfa] sm:$0xff]
      %v3264 = vld [vmem:[%s2855 + $0x10a] sm:$0xff]
      %v3265 = vld [vmem:[%s2855 + $0x112] sm:$0xff]
      %v3266 = vld [vmem:[%s2855 + $0x122] sm:$0xff]
      %v3267 = vld [vmem:[%s2855 + $0x12a] sm:$0xff]
      %v3268 = vld [vmem:[%s2855 + $0x13a] sm:$0xff]
      %v3269 = vld [vmem:[%s2855 + $0x142] sm:$0xff]
      %v3270 = vld [vmem:[%s2855 + $0x152] sm:$0xff]
      %v3271 = vld [vmem:[%s2855 + $0x15a] sm:$0xff]
      %v3272 = vld [vmem:[%s2855 + $0x16a] sm:$0xff]
      %v3273 = vld [vmem:[%s2855 + $0x172] sm:$0xff]
      %3306 = vrot.lane.b32.xlu0 %v3242, 40
      %v3307 = vpop.permute.xlu0 %3306
      %3308 = vrot.lane.b32.xlu0 %v3243, 40
      %v3309 = vpop.permute.xlu0 %3308
      %3310 = vrot.lane.b32.xlu0 %v3244, 40
      %v3311 = vpop.permute.xlu0 %3310
      %3312 = vrot.lane.b32.xlu0 %v3245, 40
      %v3313 = vpop.permute.xlu0 %3312
      %3314 = vrot.lane.b32.xlu0 %v3246, 40
      %v3315 = vpop.permute.xlu0 %3314
      %3316 = vrot.lane.b32.xlu0 %v3247, 40
      %v3317 = vpop.permute.xlu0 %3316
      %3318 = vrot.lane.b32.xlu0 %v3248, 40
      %v3319 = vpop.permute.xlu0 %3318
      %3320 = vrot.lane.b32.xlu0 %v3249, 40
      %v3321 = vpop.permute.xlu0 %3320
      %3322 = vrot.lane.b32.xlu0 %v3250, 40
      %v3323 = vpop.permute.xlu0 %3322
      %3324 = vrot.lane.b32.xlu0 %v3251, 40
      %v3325 = vpop.permute.xlu0 %3324
      %3326 = vrot.lane.b32.xlu0 %v3252, 40
      %v3327 = vpop.permute.xlu0 %3326
      %3328 = vrot.lane.b32.xlu0 %v3253, 40
      %v3329 = vpop.permute.xlu0 %3328
      %3330 = vrot.lane.b32.xlu0 %v3254, 40
      %v3331 = vpop.permute.xlu0 %3330
      %3332 = vrot.lane.b32.xlu0 %v3255, 40
      %v3333 = vpop.permute.xlu0 %3332
      %3334 = vrot.lane.b32.xlu0 %v3256, 40
      %v3335 = vpop.permute.xlu0 %3334
      %3336 = vrot.lane.b32.xlu0 %v3257, 40
      %v3337 = vpop.permute.xlu0 %3336
      %3338 = vrot.lane.b32.xlu0 %v3258, 40
      %v3339 = vpop.permute.xlu0 %3338
      %3340 = vrot.lane.b32.xlu0 %v3259, 40
      %v3341 = vpop.permute.xlu0 %3340
      %3342 = vrot.lane.b32.xlu0 %v3260, 40
      %v3343 = vpop.permute.xlu0 %3342
      %3344 = vrot.lane.b32.xlu0 %v3261, 40
      %v3345 = vpop.permute.xlu0 %3344
      %3346 = vrot.lane.b32.xlu0 %v3262, 40
      %v3347 = vpop.permute.xlu0 %3346
      %3348 = vrot.lane.b32.xlu0 %v3263, 40
      %v3349 = vpop.permute.xlu0 %3348
      %3350 = vrot.lane.b32.xlu0 %v3264, 40
      %v3351 = vpop.permute.xlu0 %3350
      %3352 = vrot.lane.b32.xlu0 %v3265, 40
      %v3353 = vpop.permute.xlu0 %3352
      %3354 = vrot.lane.b32.xlu0 %v3266, 40
      %v3355 = vpop.permute.xlu0 %3354
      %3356 = vrot.lane.b32.xlu0 %v3267, 40
      %v3357 = vpop.permute.xlu0 %3356
      %3358 = vrot.lane.b32.xlu0 %v3268, 40
      %v3359 = vpop.permute.xlu0 %3358
      %3360 = vrot.lane.b32.xlu0 %v3269, 40
      %v3361 = vpop.permute.xlu0 %3360
      %3362 = vrot.lane.b32.xlu0 %v3270, 40
      %v3363 = vpop.permute.xlu0 %3362
      %3364 = vrot.lane.b32.xlu0 %v3271, 40
      %v3365 = vpop.permute.xlu0 %3364
      %3366 = vrot.lane.b32.xlu0 %v3272, 40
      %v3367 = vpop.permute.xlu0 %3366
      %3368 = vrot.lane.b32.xlu0 %v3273, 40
      %v3369 = vpop.permute.xlu0 %3368
      %vm3402 = vcmask 359744
      %3403 = vst.msk [vmem:[#allocation5] sm:$0xff] %vm3402, %v3307
      %3404 = vst.msk [vmem:[#allocation5 + $0x10] sm:$0xff] %vm3402, %v3309
      %3405 = vst.msk [vmem:[#allocation5 + $0x20] sm:$0xff] %vm3402, %v3311
      %3406 = vst.msk [vmem:[#allocation5 + $0x30] sm:$0xff] %vm3402, %v3313
      %3407 = vst.msk [vmem:[#allocation5 + $0x40] sm:$0xff] %vm3402, %v3315
      %3408 = vst.msk [vmem:[#allocation5 + $0x50] sm:$0xff] %vm3402, %v3317
      %3409 = vst.msk [vmem:[#allocation5 + $0x60] sm:$0xff] %vm3402, %v3319
      %3410 = vst.msk [vmem:[#allocation5 + $0x70] sm:$0xff] %vm3402, %v3321
      %3411 = vst.msk [vmem:[#allocation5 + $0x80] sm:$0xff] %vm3402, %v3323
      %3412 = vst.msk [vmem:[#allocation5 + $0x90] sm:$0xff] %vm3402, %v3325
      %3413 = vst.msk [vmem:[#allocation5 + $0xa0] sm:$0xff] %vm3402, %v3327
      %3414 = vst.msk [vmem:[#allocation5 + $0xb0] sm:$0xff] %vm3402, %v3329
      %3415 = vst.msk [vmem:[#allocation5 + $0xc0] sm:$0xff] %vm3402, %v3331
      %3416 = vst.msk [vmem:[#allocation5 + $0xd0] sm:$0xff] %vm3402, %v3333
      %3417 = vst.msk [vmem:[#allocation5 + $0xe0] sm:$0xff] %vm3402, %v3335
      %3418 = vst.msk [vmem:[#allocation5 + $0xf0] sm:$0xff] %vm3402, %v3337
      %3419 = vst.msk [vmem:[#allocation5 + $0x100] sm:$0xff] %vm3402, %v3339
      %3420 = vst.msk [vmem:[#allocation5 + $0x110] sm:$0xff] %vm3402, %v3341
      %3421 = vst.msk [vmem:[#allocation5 + $0x120] sm:$0xff] %vm3402, %v3343
      %3422 = vst.msk [vmem:[#allocation5 + $0x130] sm:$0xff] %vm3402, %v3345
      %3423 = vst.msk [vmem:[#allocation5 + $0x140] sm:$0xff] %vm3402, %v3347
      %3424 = vst.msk [vmem:[#allocation5 + $0x150] sm:$0xff] %vm3402, %v3349
      %3425 = vst.msk [vmem:[#allocation5 + $0x160] sm:$0xff] %vm3402, %v3351
      %3426 = vst.msk [vmem:[#allocation5 + $0x170] sm:$0xff] %vm3402, %v3353
      %3427 = vst.msk [vmem:[#allocation5 + $0x180] sm:$0xff] %vm3402, %v3355
      %3428 = vst.msk [vmem:[#allocation5 + $0x190] sm:$0xff] %vm3402, %v3357
      %3429 = vst.msk [vmem:[#allocation5 + $0x1a0] sm:$0xff] %vm3402, %v3359
      %3430 = vst.msk [vmem:[#allocation5 + $0x1b0] sm:$0xff] %vm3402, %v3361
      %3431 = vst.msk [vmem:[#allocation5 + $0x1c0] sm:$0xff] %vm3402, %v3363
      %3432 = vst.msk [vmem:[#allocation5 + $0x1d0] sm:$0xff] %vm3402, %v3365
      %3433 = vst.msk [vmem:[#allocation5 + $0x1e0] sm:$0xff] %vm3402, %v3367
      %3434 = vst.msk [vmem:[#allocation5 + $0x1f0] sm:$0xff] %vm3402, %v3369
      %v3435 = vld [vmem:[#allocation4] sm:$0xff]
      %v3436 = vld [vmem:[#allocation4 + $0x8] sm:$0xff]
      %v3437 = vld [vmem:[#allocation4 + $0x18] sm:$0xff]
      %v3438 = vld [vmem:[#allocation4 + $0x20] sm:$0xff]
      %v3439 = vld [vmem:[#allocation4 + $0x30] sm:$0xff]
      %v3440 = vld [vmem:[#allocation4 + $0x38] sm:$0xff]
      %v3441 = vld [vmem:[#allocation4 + $0x48] sm:$0xff]
      %v3442 = vld [vmem:[#allocation4 + $0x50] sm:$0xff]
      %v3443 = vld [vmem:[#allocation4 + $0x60] sm:$0xff]
      %v3444 = vld [vmem:[#allocation4 + $0x68] sm:$0xff]
      %v3445 = vld [vmem:[#allocation4 + $0x78] sm:$0xff]
      %v3446 = vld [vmem:[#allocation4 + $0x80] sm:$0xff]
      %v3447 = vld [vmem:[#allocation4 + $0x90] sm:$0xff]
      %v3448 = vld [vmem:[#allocation4 + $0x98] sm:$0xff]
      %v3449 = vld [vmem:[#allocation4 + $0xa8] sm:$0xff]
      %v3450 = vld [vmem:[#allocation4 + $0xb0] sm:$0xff]
      %v3451 = vld [vmem:[#allocation4 + $0xc0] sm:$0xff]
      %v3452 = vld [vmem:[#allocation4 + $0xc8] sm:$0xff]
      %v3453 = vld [vmem:[#allocation4 + $0xd8] sm:$0xff]
      %v3454 = vld [vmem:[#allocation4 + $0xe0] sm:$0xff]
      %v3455 = vld [vmem:[#allocation4 + $0xf0] sm:$0xff]
      %v3456 = vld [vmem:[#allocation4 + $0xf8] sm:$0xff]
      %v3457 = vld [vmem:[#allocation4 + $0x108] sm:$0xff]
      %v3458 = vld [vmem:[#allocation4 + $0x110] sm:$0xff]
      %v3459 = vld [vmem:[#allocation4 + $0x120] sm:$0xff]
      %v3460 = vld [vmem:[#allocation4 + $0x128] sm:$0xff]
      %v3461 = vld [vmem:[#allocation4 + $0x138] sm:$0xff]
      %v3462 = vld [vmem:[#allocation4 + $0x140] sm:$0xff]
      %v3463 = vld [vmem:[#allocation4 + $0x150] sm:$0xff]
      %v3464 = vld [vmem:[#allocation4 + $0x158] sm:$0xff]
      %v3465 = vld [vmem:[#allocation4 + $0x168] sm:$0xff]
      %v3466 = vld [vmem:[#allocation4 + $0x170] sm:$0xff]
      %3499 = vrot.lane.b32.xlu0 %v3435, 44
      %v3500 = vpop.permute.xlu0 %3499
      %3501 = vrot.lane.b32.xlu0 %v3436, 44
      %v3502 = vpop.permute.xlu0 %3501
      %3503 = vrot.lane.b32.xlu0 %v3437, 44
      %v3504 = vpop.permute.xlu0 %3503
      %3505 = vrot.lane.b32.xlu0 %v3438, 44
      %v3506 = vpop.permute.xlu0 %3505
      %3507 = vrot.lane.b32.xlu0 %v3439, 44
      %v3508 = vpop.permute.xlu0 %3507
      %3509 = vrot.lane.b32.xlu0 %v3440, 44
      %v3510 = vpop.permute.xlu0 %3509
      %3511 = vrot.lane.b32.xlu0 %v3441, 44
      %v3512 = vpop.permute.xlu0 %3511
      %3513 = vrot.lane.b32.xlu0 %v3442, 44
      %v3514 = vpop.permute.xlu0 %3513
      %3515 = vrot.lane.b32.xlu0 %v3443, 44
      %v3516 = vpop.permute.xlu0 %3515
      %3517 = vrot.lane.b32.xlu0 %v3444, 44
      %v3518 = vpop.permute.xlu0 %3517
      %3519 = vrot.lane.b32.xlu0 %v3445, 44
      %v3520 = vpop.permute.xlu0 %3519
      %3521 = vrot.lane.b32.xlu0 %v3446, 44
      %v3522 = vpop.permute.xlu0 %3521
      %3523 = vrot.lane.b32.xlu0 %v3447, 44
      %v3524 = vpop.permute.xlu0 %3523
      %3525 = vrot.lane.b32.xlu0 %v3448, 44
      %v3526 = vpop.permute.xlu0 %3525
      %3527 = vrot.lane.b32.xlu0 %v3449, 44
      %v3528 = vpop.permute.xlu0 %3527
      %3529 = vrot.lane.b32.xlu0 %v3450, 44
      %v3530 = vpop.permute.xlu0 %3529
      %3531 = vrot.lane.b32.xlu0 %v3451, 44
      %v3532 = vpop.permute.xlu0 %3531
      %3533 = vrot.lane.b32.xlu0 %v3452, 44
      %v3534 = vpop.permute.xlu0 %3533
      %3535 = vrot.lane.b32.xlu0 %v3453, 44
      %v3536 = vpop.permute.xlu0 %3535
      %3537 = vrot.lane.b32.xlu0 %v3454, 44
      %v3538 = vpop.permute.xlu0 %3537
      %3539 = vrot.lane.b32.xlu0 %v3455, 44
      %v3540 = vpop.permute.xlu0 %3539
      %3541 = vrot.lane.b32.xlu0 %v3456, 44
      %v3542 = vpop.permute.xlu0 %3541
      %3543 = vrot.lane.b32.xlu0 %v3457, 44
      %v3544 = vpop.permute.xlu0 %3543
      %3545 = vrot.lane.b32.xlu0 %v3458, 44
      %v3546 = vpop.permute.xlu0 %3545
      %3547 = vrot.lane.b32.xlu0 %v3459, 44
      %v3548 = vpop.permute.xlu0 %3547
      %3549 = vrot.lane.b32.xlu0 %v3460, 44
      %v3550 = vpop.permute.xlu0 %3549
      %3551 = vrot.lane.b32.xlu0 %v3461, 44
      %v3552 = vpop.permute.xlu0 %3551
      %3553 = vrot.lane.b32.xlu0 %v3462, 44
      %v3554 = vpop.permute.xlu0 %3553
      %3555 = vrot.lane.b32.xlu0 %v3463, 44
      %v3556 = vpop.permute.xlu0 %3555
      %3557 = vrot.lane.b32.xlu0 %v3464, 44
      %v3558 = vpop.permute.xlu0 %3557
      %3559 = vrot.lane.b32.xlu0 %v3465, 44
      %v3560 = vpop.permute.xlu0 %3559
      %3561 = vrot.lane.b32.xlu0 %v3466, 44
      %v3562 = vpop.permute.xlu0 %3561
      %vm3595 = vcmask 392544
      %3596 = vst.msk [vmem:[#allocation5] sm:$0xff] %vm3595, %v3500
      %3597 = vst.msk [vmem:[#allocation5 + $0x10] sm:$0xff] %vm3595, %v3502
      %3598 = vst.msk [vmem:[#allocation5 + $0x20] sm:$0xff] %vm3595, %v3504
      %3599 = vst.msk [vmem:[#allocation5 + $0x30] sm:$0xff] %vm3595, %v3506
      %3600 = vst.msk [vmem:[#allocation5 + $0x40] sm:$0xff] %vm3595, %v3508
      %3601 = vst.msk [vmem:[#allocation5 + $0x50] sm:$0xff] %vm3595, %v3510
      %3602 = vst.msk [vmem:[#allocation5 + $0x60] sm:$0xff] %vm3595, %v3512
      %3603 = vst.msk [vmem:[#allocation5 + $0x70] sm:$0xff] %vm3595, %v3514
      %3604 = vst.msk [vmem:[#allocation5 + $0x80] sm:$0xff] %vm3595, %v3516
      %3605 = vst.msk [vmem:[#allocation5 + $0x90] sm:$0xff] %vm3595, %v3518
      %3606 = vst.msk [vmem:[#allocation5 + $0xa0] sm:$0xff] %vm3595, %v3520
      %3607 = vst.msk [vmem:[#allocation5 + $0xb0] sm:$0xff] %vm3595, %v3522
      %3608 = vst.msk [vmem:[#allocation5 + $0xc0] sm:$0xff] %vm3595, %v3524
      %3609 = vst.msk [vmem:[#allocation5 + $0xd0] sm:$0xff] %vm3595, %v3526
      %3610 = vst.msk [vmem:[#allocation5 + $0xe0] sm:$0xff] %vm3595, %v3528
      %3611 = vst.msk [vmem:[#allocation5 + $0xf0] sm:$0xff] %vm3595, %v3530
      %3612 = vst.msk [vmem:[#allocation5 + $0x100] sm:$0xff] %vm3595, %v3532
      %3613 = vst.msk [vmem:[#allocation5 + $0x110] sm:$0xff] %vm3595, %v3534
      %3614 = vst.msk [vmem:[#allocation5 + $0x120] sm:$0xff] %vm3595, %v3536
      %3615 = vst.msk [vmem:[#allocation5 + $0x130] sm:$0xff] %vm3595, %v3538
      %3616 = vst.msk [vmem:[#allocation5 + $0x140] sm:$0xff] %vm3595, %v3540
      %3617 = vst.msk [vmem:[#allocation5 + $0x150] sm:$0xff] %vm3595, %v3542
      %3618 = vst.msk [vmem:[#allocation5 + $0x160] sm:$0xff] %vm3595, %v3544
      %3619 = vst.msk [vmem:[#allocation5 + $0x170] sm:$0xff] %vm3595, %v3546
      %3620 = vst.msk [vmem:[#allocation5 + $0x180] sm:$0xff] %vm3595, %v3548
      %3621 = vst.msk [vmem:[#allocation5 + $0x190] sm:$0xff] %vm3595, %v3550
      %3622 = vst.msk [vmem:[#allocation5 + $0x1a0] sm:$0xff] %vm3595, %v3552
      %3623 = vst.msk [vmem:[#allocation5 + $0x1b0] sm:$0xff] %vm3595, %v3554
      %3624 = vst.msk [vmem:[#allocation5 + $0x1c0] sm:$0xff] %vm3595, %v3556
      %3625 = vst.msk [vmem:[#allocation5 + $0x1d0] sm:$0xff] %vm3595, %v3558
      %3626 = vst.msk [vmem:[#allocation5 + $0x1e0] sm:$0xff] %vm3595, %v3560
      %3627 = vst.msk [vmem:[#allocation5 + $0x1f0] sm:$0xff] %vm3595, %v3562
      %v3628 = vld [vmem:[#allocation4 + $0x1] sm:$0xff]
      %v3629 = vld [vmem:[#allocation4 + $0x9] sm:$0xff]
      %v3630 = vld [vmem:[#allocation4 + $0x19] sm:$0xff]
      %v3631 = vld [vmem:[#allocation4 + $0x21] sm:$0xff]
      %v3632 = vld [vmem:[#allocation4 + $0x31] sm:$0xff]
      %v3633 = vld [vmem:[#allocation4 + $0x39] sm:$0xff]
      %v3634 = vld [vmem:[#allocation4 + $0x49] sm:$0xff]
      %v3635 = vld [vmem:[#allocation4 + $0x51] sm:$0xff]
      %v3636 = vld [vmem:[#allocation4 + $0x61] sm:$0xff]
      %v3637 = vld [vmem:[#allocation4 + $0x69] sm:$0xff]
      %v3638 = vld [vmem:[#allocation4 + $0x79] sm:$0xff]
      %v3639 = vld [vmem:[#allocation4 + $0x81] sm:$0xff]
      %v3640 = vld [vmem:[#allocation4 + $0x91] sm:$0xff]
      %v3641 = vld [vmem:[#allocation4 + $0x99] sm:$0xff]
      %v3642 = vld [vmem:[#allocation4 + $0xa9] sm:$0xff]
      %v3643 = vld [vmem:[#allocation4 + $0xb1] sm:$0xff]
      %v3644 = vld [vmem:[#allocation4 + $0xc1] sm:$0xff]
      %v3645 = vld [vmem:[#allocation4 + $0xc9] sm:$0xff]
      %v3646 = vld [vmem:[#allocation4 + $0xd9] sm:$0xff]
      %v3647 = vld [vmem:[#allocation4 + $0xe1] sm:$0xff]
      %v3648 = vld [vmem:[#allocation4 + $0xf1] sm:$0xff]
      %v3649 = vld [vmem:[#allocation4 + $0xf9] sm:$0xff]
      %v3650 = vld [vmem:[#allocation4 + $0x109] sm:$0xff]
      %v3651 = vld [vmem:[#allocation4 + $0x111] sm:$0xff]
      %v3652 = vld [vmem:[#allocation4 + $0x121] sm:$0xff]
      %v3653 = vld [vmem:[#allocation4 + $0x129] sm:$0xff]
      %v3654 = vld [vmem:[#allocation4 + $0x139] sm:$0xff]
      %v3655 = vld [vmem:[#allocation4 + $0x141] sm:$0xff]
      %v3656 = vld [vmem:[#allocation4 + $0x151] sm:$0xff]
      %v3657 = vld [vmem:[#allocation4 + $0x159] sm:$0xff]
      %v3658 = vld [vmem:[#allocation4 + $0x169] sm:$0xff]
      %v3659 = vld [vmem:[#allocation4 + $0x171] sm:$0xff]
      %3692 = vrot.lane.b32.xlu0 %v3628, 48
      %v3693 = vpop.permute.xlu0 %3692
      %3694 = vrot.lane.b32.xlu0 %v3629, 48
      %v3695 = vpop.permute.xlu0 %3694
      %3696 = vrot.lane.b32.xlu0 %v3630, 48
      %v3697 = vpop.permute.xlu0 %3696
      %3698 = vrot.lane.b32.xlu0 %v3631, 48
      %v3699 = vpop.permute.xlu0 %3698
      %3700 = vrot.lane.b32.xlu0 %v3632, 48
      %v3701 = vpop.permute.xlu0 %3700
      %3702 = vrot.lane.b32.xlu0 %v3633, 48
      %v3703 = vpop.permute.xlu0 %3702
      %3704 = vrot.lane.b32.xlu0 %v3634, 48
      %v3705 = vpop.permute.xlu0 %3704
      %3706 = vrot.lane.b32.xlu0 %v3635, 48
      %v3707 = vpop.permute.xlu0 %3706
      %3708 = vrot.lane.b32.xlu0 %v3636, 48
      %v3709 = vpop.permute.xlu0 %3708
      %3710 = vrot.lane.b32.xlu0 %v3637, 48
      %v3711 = vpop.permute.xlu0 %3710
      %3712 = vrot.lane.b32.xlu0 %v3638, 48
      %v3713 = vpop.permute.xlu0 %3712
      %3714 = vrot.lane.b32.xlu0 %v3639, 48
      %v3715 = vpop.permute.xlu0 %3714
      %3716 = vrot.lane.b32.xlu0 %v3640, 48
      %v3717 = vpop.permute.xlu0 %3716
      %3718 = vrot.lane.b32.xlu0 %v3641, 48
      %v3719 = vpop.permute.xlu0 %3718
      %3720 = vrot.lane.b32.xlu0 %v3642, 48
      %v3721 = vpop.permute.xlu0 %3720
      %3722 = vrot.lane.b32.xlu0 %v3643, 48
      %v3723 = vpop.permute.xlu0 %3722
      %3724 = vrot.lane.b32.xlu0 %v3644, 48
      %v3725 = vpop.permute.xlu0 %3724
      %3726 = vrot.lane.b32.xlu0 %v3645, 48
      %v3727 = vpop.permute.xlu0 %3726
      %3728 = vrot.lane.b32.xlu0 %v3646, 48
      %v3729 = vpop.permute.xlu0 %3728
      %3730 = vrot.lane.b32.xlu0 %v3647, 48
      %v3731 = vpop.permute.xlu0 %3730
      %3732 = vrot.lane.b32.xlu0 %v3648, 48
      %v3733 = vpop.permute.xlu0 %3732
      %3734 = vrot.lane.b32.xlu0 %v3649, 48
      %v3735 = vpop.permute.xlu0 %3734
      %3736 = vrot.lane.b32.xlu0 %v3650, 48
      %v3737 = vpop.permute.xlu0 %3736
      %3738 = vrot.lane.b32.xlu0 %v3651, 48
      %v3739 = vpop.permute.xlu0 %3738
      %3740 = vrot.lane.b32.xlu0 %v3652, 48
      %v3741 = vpop.permute.xlu0 %3740
      %3742 = vrot.lane.b32.xlu0 %v3653, 48
      %v3743 = vpop.permute.xlu0 %3742
      %3744 = vrot.lane.b32.xlu0 %v3654, 48
      %v3745 = vpop.permute.xlu0 %3744
      %3746 = vrot.lane.b32.xlu0 %v3655, 48
      %v3747 = vpop.permute.xlu0 %3746
      %3748 = vrot.lane.b32.xlu0 %v3656, 48
      %v3749 = vpop.permute.xlu0 %3748
      %3750 = vrot.lane.b32.xlu0 %v3657, 48
      %v3751 = vpop.permute.xlu0 %3750
      %3752 = vrot.lane.b32.xlu0 %v3658, 48
      %v3753 = vpop.permute.xlu0 %3752
      %3754 = vrot.lane.b32.xlu0 %v3659, 48
      %v3755 = vpop.permute.xlu0 %3754
      %vm3788 = vcmask 425344
      %3789 = vst.msk [vmem:[#allocation5] sm:$0xff] %vm3788, %v3693
      %3790 = vst.msk [vmem:[#allocation5 + $0x10] sm:$0xff] %vm3788, %v3695
      %3791 = vst.msk [vmem:[#allocation5 + $0x20] sm:$0xff] %vm3788, %v3697
      %3792 = vst.msk [vmem:[#allocation5 + $0x30] sm:$0xff] %vm3788, %v3699
      %3793 = vst.msk [vmem:[#allocation5 + $0x40] sm:$0xff] %vm3788, %v3701
      %3794 = vst.msk [vmem:[#allocation5 + $0x50] sm:$0xff] %vm3788, %v3703
      %3795 = vst.msk [vmem:[#allocation5 + $0x60] sm:$0xff] %vm3788, %v3705
      %3796 = vst.msk [vmem:[#allocation5 + $0x70] sm:$0xff] %vm3788, %v3707
      %3797 = vst.msk [vmem:[#allocation5 + $0x80] sm:$0xff] %vm3788, %v3709
      %3798 = vst.msk [vmem:[#allocation5 + $0x90] sm:$0xff] %vm3788, %v3711
      %3799 = vst.msk [vmem:[#allocation5 + $0xa0] sm:$0xff] %vm3788, %v3713
      %3800 = vst.msk [vmem:[#allocation5 + $0xb0] sm:$0xff] %vm3788, %v3715
      %3801 = vst.msk [vmem:[#allocation5 + $0xc0] sm:$0xff] %vm3788, %v3717
      %3802 = vst.msk [vmem:[#allocation5 + $0xd0] sm:$0xff] %vm3788, %v3719
      %3803 = vst.msk [vmem:[#allocation5 + $0xe0] sm:$0xff] %vm3788, %v3721
      %3804 = vst.msk [vmem:[#allocation5 + $0xf0] sm:$0xff] %vm3788, %v3723
      %3805 = vst.msk [vmem:[#allocation5 + $0x100] sm:$0xff] %vm3788, %v3725
      %3806 = vst.msk [vmem:[#allocation5 + $0x110] sm:$0xff] %vm3788, %v3727
      %3807 = vst.msk [vmem:[#allocation5 + $0x120] sm:$0xff] %vm3788, %v3729
      %3808 = vst.msk [vmem:[#allocation5 + $0x130] sm:$0xff] %vm3788, %v3731
      %3809 = vst.msk [vmem:[#allocation5 + $0x140] sm:$0xff] %vm3788, %v3733
      %3810 = vst.msk [vmem:[#allocation5 + $0x150] sm:$0xff] %vm3788, %v3735
      %3811 = vst.msk [vmem:[#allocation5 + $0x160] sm:$0xff] %vm3788, %v3737
      %3812 = vst.msk [vmem:[#allocation5 + $0x170] sm:$0xff] %vm3788, %v3739
      %3813 = vst.msk [vmem:[#allocation5 + $0x180] sm:$0xff] %vm3788, %v3741
      %3814 = vst.msk [vmem:[#allocation5 + $0x190] sm:$0xff] %vm3788, %v3743
      %3815 = vst.msk [vmem:[#allocation5 + $0x1a0] sm:$0xff] %vm3788, %v3745
      %3816 = vst.msk [vmem:[#allocation5 + $0x1b0] sm:$0xff] %vm3788, %v3747
      %3817 = vst.msk [vmem:[#allocation5 + $0x1c0] sm:$0xff] %vm3788, %v3749
      %3818 = vst.msk [vmem:[#allocation5 + $0x1d0] sm:$0xff] %vm3788, %v3751
      %3819 = vst.msk [vmem:[#allocation5 + $0x1e0] sm:$0xff] %vm3788, %v3753
      %3820 = vst.msk [vmem:[#allocation5 + $0x1f0] sm:$0xff] %vm3788, %v3755
      %v3821 = vld [vmem:[#allocation4 + $0x2] sm:$0xff]
      %v3822 = vld [vmem:[#allocation4 + $0xa] sm:$0xff]
      %v3823 = vld [vmem:[#allocation4 + $0x1a] sm:$0xff]
      %v3824 = vld [vmem:[#allocation4 + $0x22] sm:$0xff]
      %v3825 = vld [vmem:[#allocation4 + $0x32] sm:$0xff]
      %v3826 = vld [vmem:[#allocation4 + $0x3a] sm:$0xff]
      %v3827 = vld [vmem:[#allocation4 + $0x4a] sm:$0xff]
      %v3828 = vld [vmem:[#allocation4 + $0x52] sm:$0xff]
      %v3829 = vld [vmem:[#allocation4 + $0x62] sm:$0xff]
      %v3830 = vld [vmem:[#allocation4 + $0x6a] sm:$0xff]
      %v3831 = vld [vmem:[#allocation4 + $0x7a] sm:$0xff]
      %v3832 = vld [vmem:[#allocation4 + $0x82] sm:$0xff]
      %v3833 = vld [vmem:[#allocation4 + $0x92] sm:$0xff]
      %v3834 = vld [vmem:[#allocation4 + $0x9a] sm:$0xff]
      %v3835 = vld [vmem:[#allocation4 + $0xaa] sm:$0xff]
      %v3836 = vld [vmem:[#allocation4 + $0xb2] sm:$0xff]
      %v3837 = vld [vmem:[#allocation4 + $0xc2] sm:$0xff]
      %v3838 = vld [vmem:[#allocation4 + $0xca] sm:$0xff]
      %v3839 = vld [vmem:[#allocation4 + $0xda] sm:$0xff]
      %v3840 = vld [vmem:[#allocation4 + $0xe2] sm:$0xff]
      %v3841 = vld [vmem:[#allocation4 + $0xf2] sm:$0xff]
      %v3842 = vld [vmem:[#allocation4 + $0xfa] sm:$0xff]
      %v3843 = vld [vmem:[#allocation4 + $0x10a] sm:$0xff]
      %v3844 = vld [vmem:[#allocation4 + $0x112] sm:$0xff]
      %v3845 = vld [vmem:[#allocation4 + $0x122] sm:$0xff]
      %v3846 = vld [vmem:[#allocation4 + $0x12a] sm:$0xff]
      %v3847 = vld [vmem:[#allocation4 + $0x13a] sm:$0xff]
      %v3848 = vld [vmem:[#allocation4 + $0x142] sm:$0xff]
      %v3849 = vld [vmem:[#allocation4 + $0x152] sm:$0xff]
      %v3850 = vld [vmem:[#allocation4 + $0x15a] sm:$0xff]
      %v3851 = vld [vmem:[#allocation4 + $0x16a] sm:$0xff]
      %v3852 = vld [vmem:[#allocation4 + $0x172] sm:$0xff]
      %3885 = vrot.lane.b32.xlu0 %v3821, 52
      %v3886 = vpop.permute.xlu0 %3885
      %3887 = vrot.lane.b32.xlu0 %v3822, 52
      %v3888 = vpop.permute.xlu0 %3887
      %3889 = vrot.lane.b32.xlu0 %v3823, 52
      %v3890 = vpop.permute.xlu0 %3889
      %3891 = vrot.lane.b32.xlu0 %v3824, 52
      %v3892 = vpop.permute.xlu0 %3891
      %3893 = vrot.lane.b32.xlu0 %v3825, 52
      %v3894 = vpop.permute.xlu0 %3893
      %3895 = vrot.lane.b32.xlu0 %v3826, 52
      %v3896 = vpop.permute.xlu0 %3895
      %3897 = vrot.lane.b32.xlu0 %v3827, 52
      %v3898 = vpop.permute.xlu0 %3897
      %3899 = vrot.lane.b32.xlu0 %v3828, 52
      %v3900 = vpop.permute.xlu0 %3899
      %3901 = vrot.lane.b32.xlu0 %v3829, 52
      %v3902 = vpop.permute.xlu0 %3901
      %3903 = vrot.lane.b32.xlu0 %v3830, 52
      %v3904 = vpop.permute.xlu0 %3903
      %3905 = vrot.lane.b32.xlu0 %v3831, 52
      %v3906 = vpop.permute.xlu0 %3905
      %3907 = vrot.lane.b32.xlu0 %v3832, 52
      %v3908 = vpop.permute.xlu0 %3907
      %3909 = vrot.lane.b32.xlu0 %v3833, 52
      %v3910 = vpop.permute.xlu0 %3909
      %3911 = vrot.lane.b32.xlu0 %v3834, 52
      %v3912 = vpop.permute.xlu0 %3911
      %3913 = vrot.lane.b32.xlu0 %v3835, 52
      %v3914 = vpop.permute.xlu0 %3913
      %3915 = vrot.lane.b32.xlu0 %v3836, 52
      %v3916 = vpop.permute.xlu0 %3915
      %3917 = vrot.lane.b32.xlu0 %v3837, 52
      %v3918 = vpop.permute.xlu0 %3917
      %3919 = vrot.lane.b32.xlu0 %v3838, 52
      %v3920 = vpop.permute.xlu0 %3919
      %3921 = vrot.lane.b32.xlu0 %v3839, 52
      %v3922 = vpop.permute.xlu0 %3921
      %3923 = vrot.lane.b32.xlu0 %v3840, 52
      %v3924 = vpop.permute.xlu0 %3923
      %3925 = vrot.lane.b32.xlu0 %v3841, 52
      %v3926 = vpop.permute.xlu0 %3925
      %3927 = vrot.lane.b32.xlu0 %v3842, 52
      %v3928 = vpop.permute.xlu0 %3927
      %3929 = vrot.lane.b32.xlu0 %v3843, 52
      %v3930 = vpop.permute.xlu0 %3929
      %3931 = vrot.lane.b32.xlu0 %v3844, 52
      %v3932 = vpop.permute.xlu0 %3931
      %3933 = vrot.lane.b32.xlu0 %v3845, 52
      %v3934 = vpop.permute.xlu0 %3933
      %3935 = vrot.lane.b32.xlu0 %v3846, 52
      %v3936 = vpop.permute.xlu0 %3935
      %3937 = vrot.lane.b32.xlu0 %v3847, 52
      %v3938 = vpop.permute.xlu0 %3937
      %3939 = vrot.lane.b32.xlu0 %v3848, 52
      %v3940 = vpop.permute.xlu0 %3939
      %3941 = vrot.lane.b32.xlu0 %v3849, 52
      %v3942 = vpop.permute.xlu0 %3941
      %3943 = vrot.lane.b32.xlu0 %v3850, 52
      %v3944 = vpop.permute.xlu0 %3943
      %3945 = vrot.lane.b32.xlu0 %v3851, 52
      %v3946 = vpop.permute.xlu0 %3945
      %3947 = vrot.lane.b32.xlu0 %v3852, 52
      %v3948 = vpop.permute.xlu0 %3947
      %vm3981 = vcmask 458144
      %3982 = vst.msk [vmem:[#allocation5] sm:$0xff] %vm3981, %v3886
      %3983 = vst.msk [vmem:[#allocation5 + $0x10] sm:$0xff] %vm3981, %v3888
      %3984 = vst.msk [vmem:[#allocation5 + $0x20] sm:$0xff] %vm3981, %v3890
      %3985 = vst.msk [vmem:[#allocation5 + $0x30] sm:$0xff] %vm3981, %v3892
      %3986 = vst.msk [vmem:[#allocation5 + $0x40] sm:$0xff] %vm3981, %v3894
      %3987 = vst.msk [vmem:[#allocation5 + $0x50] sm:$0xff] %vm3981, %v3896
      %3988 = vst.msk [vmem:[#allocation5 + $0x60] sm:$0xff] %vm3981, %v3898
      %3989 = vst.msk [vmem:[#allocation5 + $0x70] sm:$0xff] %vm3981, %v3900
      %3990 = vst.msk [vmem:[#allocation5 + $0x80] sm:$0xff] %vm3981, %v3902
      %3991 = vst.msk [vmem:[#allocation5 + $0x90] sm:$0xff] %vm3981, %v3904
      %3992 = vst.msk [vmem:[#allocation5 + $0xa0] sm:$0xff] %vm3981, %v3906
      %3993 = vst.msk [vmem:[#allocation5 + $0xb0] sm:$0xff] %vm3981, %v3908
      %3994 = vst.msk [vmem:[#allocation5 + $0xc0] sm:$0xff] %vm3981, %v3910
      %3995 = vst.msk [vmem:[#allocation5 + $0xd0] sm:$0xff] %vm3981, %v3912
      %3996 = vst.msk [vmem:[#allocation5 + $0xe0] sm:$0xff] %vm3981, %v3914
      %3997 = vst.msk [vmem:[#allocation5 + $0xf0] sm:$0xff] %vm3981, %v3916
      %3998 = vst.msk [vmem:[#allocation5 + $0x100] sm:$0xff] %vm3981, %v3918
      %3999 = vst.msk [vmem:[#allocation5 + $0x110] sm:$0xff] %vm3981, %v3920
      %4000 = vst.msk [vmem:[#allocation5 + $0x120] sm:$0xff] %vm3981, %v3922
      %4001 = vst.msk [vmem:[#allocation5 + $0x130] sm:$0xff] %vm3981, %v3924
      %4002 = vst.msk [vmem:[#allocation5 + $0x140] sm:$0xff] %vm3981, %v3926
      %4003 = vst.msk [vmem:[#allocation5 + $0x150] sm:$0xff] %vm3981, %v3928
      %4004 = vst.msk [vmem:[#allocation5 + $0x160] sm:$0xff] %vm3981, %v3930
      %4005 = vst.msk [vmem:[#allocation5 + $0x170] sm:$0xff] %vm3981, %v3932
      %4006 = vst.msk [vmem:[#allocation5 + $0x180] sm:$0xff] %vm3981, %v3934
      %4007 = vst.msk [vmem:[#allocation5 + $0x190] sm:$0xff] %vm3981, %v3936
      %4008 = vst.msk [vmem:[#allocation5 + $0x1a0] sm:$0xff] %vm3981, %v3938
      %4009 = vst.msk [vmem:[#allocation5 + $0x1b0] sm:$0xff] %vm3981, %v3940
      %4010 = vst.msk [vmem:[#allocation5 + $0x1c0] sm:$0xff] %vm3981, %v3942
      %4011 = vst.msk [vmem:[#allocation5 + $0x1d0] sm:$0xff] %vm3981, %v3944
      %4012 = vst.msk [vmem:[#allocation5 + $0x1e0] sm:$0xff] %vm3981, %v3946
      %4013 = vst.msk [vmem:[#allocation5 + $0x1f0] sm:$0xff] %vm3981, %v3948
      %v4014 = vld [vmem:[#allocation4 + $0x3] sm:$0xff]
      %v4015 = vld [vmem:[#allocation4 + $0xb] sm:$0xff]
      %v4016 = vld [vmem:[#allocation4 + $0x1b] sm:$0xff]
      %v4017 = vld [vmem:[#allocation4 + $0x23] sm:$0xff]
      %v4018 = vld [vmem:[#allocation4 + $0x33] sm:$0xff]
      %v4019 = vld [vmem:[#allocation4 + $0x3b] sm:$0xff]
      %v4020 = vld [vmem:[#allocation4 + $0x4b] sm:$0xff]
      %v4021 = vld [vmem:[#allocation4 + $0x53] sm:$0xff]
      %v4022 = vld [vmem:[#allocation4 + $0x63] sm:$0xff]
      %v4023 = vld [vmem:[#allocation4 + $0x6b] sm:$0xff]
      %v4024 = vld [vmem:[#allocation4 + $0x7b] sm:$0xff]
      %v4025 = vld [vmem:[#allocation4 + $0x83] sm:$0xff]
      %v4026 = vld [vmem:[#allocation4 + $0x93] sm:$0xff]
      %v4027 = vld [vmem:[#allocation4 + $0x9b] sm:$0xff]
      %v4028 = vld [vmem:[#allocation4 + $0xab] sm:$0xff]
      %v4029 = vld [vmem:[#allocation4 + $0xb3] sm:$0xff]
      %v4030 = vld [vmem:[#allocation4 + $0xc3] sm:$0xff]
      %v4031 = vld [vmem:[#allocation4 + $0xcb] sm:$0xff]
      %v4032 = vld [vmem:[#allocation4 + $0xdb] sm:$0xff]
      %v4033 = vld [vmem:[#allocation4 + $0xe3] sm:$0xff]
      %v4034 = vld [vmem:[#allocation4 + $0xf3] sm:$0xff]
      %v4035 = vld [vmem:[#allocation4 + $0xfb] sm:$0xff]
      %v4036 = vld [vmem:[#allocation4 + $0x10b] sm:$0xff]
      %v4037 = vld [vmem:[#allocation4 + $0x113] sm:$0xff]
      %v4038 = vld [vmem:[#allocation4 + $0x123] sm:$0xff]
      %v4039 = vld [vmem:[#allocation4 + $0x12b] sm:$0xff]
      %v4040 = vld [vmem:[#allocation4 + $0x13b] sm:$0xff]
      %v4041 = vld [vmem:[#allocation4 + $0x143] sm:$0xff]
      %v4042 = vld [vmem:[#allocation4 + $0x153] sm:$0xff]
      %v4043 = vld [vmem:[#allocation4 + $0x15b] sm:$0xff]
      %v4044 = vld [vmem:[#allocation4 + $0x16b] sm:$0xff]
      %v4045 = vld [vmem:[#allocation4 + $0x173] sm:$0xff]
      %4078 = vrot.lane.b32.xlu0 %v4014, 56
      %v4079 = vpop.permute.xlu0 %4078
      %4080 = vrot.lane.b32.xlu0 %v4015, 56
      %v4081 = vpop.permute.xlu0 %4080
      %4082 = vrot.lane.b32.xlu0 %v4016, 56
      %v4083 = vpop.permute.xlu0 %4082
      %4084 = vrot.lane.b32.xlu0 %v4017, 56
      %v4085 = vpop.permute.xlu0 %4084
      %4086 = vrot.lane.b32.xlu0 %v4018, 56
      %v4087 = vpop.permute.xlu0 %4086
      %4088 = vrot.lane.b32.xlu0 %v4019, 56
      %v4089 = vpop.permute.xlu0 %4088
      %4090 = vrot.lane.b32.xlu0 %v4020, 56
      %v4091 = vpop.permute.xlu0 %4090
      %4092 = vrot.lane.b32.xlu0 %v4021, 56
      %v4093 = vpop.permute.xlu0 %4092
      %4094 = vrot.lane.b32.xlu0 %v4022, 56
      %v4095 = vpop.permute.xlu0 %4094
      %4096 = vrot.lane.b32.xlu0 %v4023, 56
      %v4097 = vpop.permute.xlu0 %4096
      %4098 = vrot.lane.b32.xlu0 %v4024, 56
      %v4099 = vpop.permute.xlu0 %4098
      %4100 = vrot.lane.b32.xlu0 %v4025, 56
      %v4101 = vpop.permute.xlu0 %4100
      %4102 = vrot.lane.b32.xlu0 %v4026, 56
      %v4103 = vpop.permute.xlu0 %4102
      %4104 = vrot.lane.b32.xlu0 %v4027, 56
      %v4105 = vpop.permute.xlu0 %4104
      %4106 = vrot.lane.b32.xlu0 %v4028, 56
      %v4107 = vpop.permute.xlu0 %4106
      %4108 = vrot.lane.b32.xlu0 %v4029, 56
      %v4109 = vpop.permute.xlu0 %4108
      %4110 = vrot.lane.b32.xlu0 %v4030, 56
      %v4111 = vpop.permute.xlu0 %4110
      %4112 = vrot.lane.b32.xlu0 %v4031, 56
      %v4113 = vpop.permute.xlu0 %4112
      %4114 = vrot.lane.b32.xlu0 %v4032, 56
      %v4115 = vpop.permute.xlu0 %4114
      %4116 = vrot.lane.b32.xlu0 %v4033, 56
      %v4117 = vpop.permute.xlu0 %4116
      %4118 = vrot.lane.b32.xlu0 %v4034, 56
      %v4119 = vpop.permute.xlu0 %4118
      %4120 = vrot.lane.b32.xlu0 %v4035, 56
      %v4121 = vpop.permute.xlu0 %4120
      %4122 = vrot.lane.b32.xlu0 %v4036, 56
      %v4123 = vpop.permute.xlu0 %4122
      %4124 = vrot.lane.b32.xlu0 %v4037, 56
      %v4125 = vpop.permute.xlu0 %4124
      %4126 = vrot.lane.b32.xlu0 %v4038, 56
      %v4127 = vpop.permute.xlu0 %4126
      %4128 = vrot.lane.b32.xlu0 %v4039, 56
      %v4129 = vpop.permute.xlu0 %4128
      %4130 = vrot.lane.b32.xlu0 %v4040, 56
      %v4131 = vpop.permute.xlu0 %4130
      %4132 = vrot.lane.b32.xlu0 %v4041, 56
      %v4133 = vpop.permute.xlu0 %4132
      %4134 = vrot.lane.b32.xlu0 %v4042, 56
      %v4135 = vpop.permute.xlu0 %4134
      %4136 = vrot.lane.b32.xlu0 %v4043, 56
      %v4137 = vpop.permute.xlu0 %4136
      %4138 = vrot.lane.b32.xlu0 %v4044, 56
      %v4139 = vpop.permute.xlu0 %4138
      %4140 = vrot.lane.b32.xlu0 %v4045, 56
      %v4141 = vpop.permute.xlu0 %4140
      %vm4174 = vcmask 490944
      %4175 = vst.msk [vmem:[#allocation5] sm:$0xff] %vm4174, %v4079
      %4176 = vst.msk [vmem:[#allocation5 + $0x10] sm:$0xff] %vm4174, %v4081
      %4177 = vst.msk [vmem:[#allocation5 + $0x20] sm:$0xff] %vm4174, %v4083
      %4178 = vst.msk [vmem:[#allocation5 + $0x30] sm:$0xff] %vm4174, %v4085
      %4179 = vst.msk [vmem:[#allocation5 + $0x40] sm:$0xff] %vm4174, %v4087
      %4180 = vst.msk [vmem:[#allocation5 + $0x50] sm:$0xff] %vm4174, %v4089
      %4181 = vst.msk [vmem:[#allocation5 + $0x60] sm:$0xff] %vm4174, %v4091
      %4182 = vst.msk [vmem:[#allocation5 + $0x70] sm:$0xff] %vm4174, %v4093
      %4183 = vst.msk [vmem:[#allocation5 + $0x80] sm:$0xff] %vm4174, %v4095
      %4184 = vst.msk [vmem:[#allocation5 + $0x90] sm:$0xff] %vm4174, %v4097
      %4185 = vst.msk [vmem:[#allocation5 + $0xa0] sm:$0xff] %vm4174, %v4099
      %4186 = vst.msk [vmem:[#allocation5 + $0xb0] sm:$0xff] %vm4174, %v4101
      %4187 = vst.msk [vmem:[#allocation5 + $0xc0] sm:$0xff] %vm4174, %v4103
      %4188 = vst.msk [vmem:[#allocation5 + $0xd0] sm:$0xff] %vm4174, %v4105
      %4189 = vst.msk [vmem:[#allocation5 + $0xe0] sm:$0xff] %vm4174, %v4107
      %4190 = vst.msk [vmem:[#allocation5 + $0xf0] sm:$0xff] %vm4174, %v4109
      %4191 = vst.msk [vmem:[#allocation5 + $0x100] sm:$0xff] %vm4174, %v4111
      %4192 = vst.msk [vmem:[#allocation5 + $0x110] sm:$0xff] %vm4174, %v4113
      %4193 = vst.msk [vmem:[#allocation5 + $0x120] sm:$0xff] %vm4174, %v4115
      %4194 = vst.msk [vmem:[#allocation5 + $0x130] sm:$0xff] %vm4174, %v4117
      %4195 = vst.msk [vmem:[#allocation5 + $0x140] sm:$0xff] %vm4174, %v4119
      %4196 = vst.msk [vmem:[#allocation5 + $0x150] sm:$0xff] %vm4174, %v4121
      %4197 = vst.msk [vmem:[#allocation5 + $0x160] sm:$0xff] %vm4174, %v4123
      %4198 = vst.msk [vmem:[#allocation5 + $0x170] sm:$0xff] %vm4174, %v4125
      %4199 = vst.msk [vmem:[#allocation5 + $0x180] sm:$0xff] %vm4174, %v4127
      %4200 = vst.msk [vmem:[#allocation5 + $0x190] sm:$0xff] %vm4174, %v4129
      %4201 = vst.msk [vmem:[#allocation5 + $0x1a0] sm:$0xff] %vm4174, %v4131
      %4202 = vst.msk [vmem:[#allocation5 + $0x1b0] sm:$0xff] %vm4174, %v4133
      %4203 = vst.msk [vmem:[#allocation5 + $0x1c0] sm:$0xff] %vm4174, %v4135
      %4204 = vst.msk [vmem:[#allocation5 + $0x1d0] sm:$0xff] %vm4174, %v4137
      %4205 = vst.msk [vmem:[#allocation5 + $0x1e0] sm:$0xff] %vm4174, %v4139
      %4206 = vst.msk [vmem:[#allocation5 + $0x1f0] sm:$0xff] %vm4174, %v4141
      %v4207 = vld [vmem:[#allocation4 + $0x4] sm:$0xff]
      %v4208 = vld [vmem:[#allocation4 + $0xc] sm:$0xff]
      %v4209 = vld [vmem:[#allocation4 + $0x1c] sm:$0xff]
      %v4210 = vld [vmem:[#allocation4 + $0x24] sm:$0xff]
      %v4211 = vld [vmem:[#allocation4 + $0x34] sm:$0xff]
      %v4212 = vld [vmem:[#allocation4 + $0x3c] sm:$0xff]
      %v4213 = vld [vmem:[#allocation4 + $0x4c] sm:$0xff]
      %v4214 = vld [vmem:[#allocation4 + $0x54] sm:$0xff]
      %v4215 = vld [vmem:[#allocation4 + $0x64] sm:$0xff]
      %v4216 = vld [vmem:[#allocation4 + $0x6c] sm:$0xff]
      %v4217 = vld [vmem:[#allocation4 + $0x7c] sm:$0xff]
      %v4218 = vld [vmem:[#allocation4 + $0x84] sm:$0xff]
      %v4219 = vld [vmem:[#allocation4 + $0x94] sm:$0xff]
      %v4220 = vld [vmem:[#allocation4 + $0x9c] sm:$0xff]
      %v4221 = vld [vmem:[#allocation4 + $0xac] sm:$0xff]
      %v4222 = vld [vmem:[#allocation4 + $0xb4] sm:$0xff]
      %v4223 = vld [vmem:[#allocation4 + $0xc4] sm:$0xff]
      %v4224 = vld [vmem:[#allocation4 + $0xcc] sm:$0xff]
      %v4225 = vld [vmem:[#allocation4 + $0xdc] sm:$0xff]
      %v4226 = vld [vmem:[#allocation4 + $0xe4] sm:$0xff]
      %v4227 = vld [vmem:[#allocation4 + $0xf4] sm:$0xff]
      %v4228 = vld [vmem:[#allocation4 + $0xfc] sm:$0xff]
      %v4229 = vld [vmem:[#allocation4 + $0x10c] sm:$0xff]
      %v4230 = vld [vmem:[#allocation4 + $0x114] sm:$0xff]
      %v4231 = vld [vmem:[#allocation4 + $0x124] sm:$0xff]
      %v4232 = vld [vmem:[#allocation4 + $0x12c] sm:$0xff]
      %v4233 = vld [vmem:[#allocation4 + $0x13c] sm:$0xff]
      %v4234 = vld [vmem:[#allocation4 + $0x144] sm:$0xff]
      %v4235 = vld [vmem:[#allocation4 + $0x154] sm:$0xff]
      %v4236 = vld [vmem:[#allocation4 + $0x15c] sm:$0xff]
      %v4237 = vld [vmem:[#allocation4 + $0x16c] sm:$0xff]
      %v4238 = vld [vmem:[#allocation4 + $0x174] sm:$0xff]
      %4271 = vrot.lane.b32.xlu0 %v4207, 60
      %v4272 = vpop.permute.xlu0 %4271
      %4273 = vrot.lane.b32.xlu0 %v4208, 60
      %v4274 = vpop.permute.xlu0 %4273
      %4275 = vrot.lane.b32.xlu0 %v4209, 60
      %v4276 = vpop.permute.xlu0 %4275
      %4277 = vrot.lane.b32.xlu0 %v4210, 60
      %v4278 = vpop.permute.xlu0 %4277
      %4279 = vrot.lane.b32.xlu0 %v4211, 60
      %v4280 = vpop.permute.xlu0 %4279
      %4281 = vrot.lane.b32.xlu0 %v4212, 60
      %v4282 = vpop.permute.xlu0 %4281
      %4283 = vrot.lane.b32.xlu0 %v4213, 60
      %v4284 = vpop.permute.xlu0 %4283
      %4285 = vrot.lane.b32.xlu0 %v4214, 60
      %v4286 = vpop.permute.xlu0 %4285
      %4287 = vrot.lane.b32.xlu0 %v4215, 60
      %v4288 = vpop.permute.xlu0 %4287
      %4289 = vrot.lane.b32.xlu0 %v4216, 60
      %v4290 = vpop.permute.xlu0 %4289
      %4291 = vrot.lane.b32.xlu0 %v4217, 60
      %v4292 = vpop.permute.xlu0 %4291
      %4293 = vrot.lane.b32.xlu0 %v4218, 60
      %v4294 = vpop.permute.xlu0 %4293
      %4295 = vrot.lane.b32.xlu0 %v4219, 60
      %v4296 = vpop.permute.xlu0 %4295
      %4297 = vrot.lane.b32.xlu0 %v4220, 60
      %v4298 = vpop.permute.xlu0 %4297
      %4299 = vrot.lane.b32.xlu0 %v4221, 60
      %v4300 = vpop.permute.xlu0 %4299
      %4301 = vrot.lane.b32.xlu0 %v4222, 60
      %v4302 = vpop.permute.xlu0 %4301
      %4303 = vrot.lane.b32.xlu0 %v4223, 60
      %v4304 = vpop.permute.xlu0 %4303
      %4305 = vrot.lane.b32.xlu0 %v4224, 60
      %v4306 = vpop.permute.xlu0 %4305
      %4307 = vrot.lane.b32.xlu0 %v4225, 60
      %v4308 = vpop.permute.xlu0 %4307
      %4309 = vrot.lane.b32.xlu0 %v4226, 60
      %v4310 = vpop.permute.xlu0 %4309
      %4311 = vrot.lane.b32.xlu0 %v4227, 60
      %v4312 = vpop.permute.xlu0 %4311
      %4313 = vrot.lane.b32.xlu0 %v4228, 60
      %v4314 = vpop.permute.xlu0 %4313
      %4315 = vrot.lane.b32.xlu0 %v4229, 60
      %v4316 = vpop.permute.xlu0 %4315
      %4317 = vrot.lane.b32.xlu0 %v4230, 60
      %v4318 = vpop.permute.xlu0 %4317
      %4319 = vrot.lane.b32.xlu0 %v4231, 60
      %v4320 = vpop.permute.xlu0 %4319
      %4321 = vrot.lane.b32.xlu0 %v4232, 60
      %v4322 = vpop.permute.xlu0 %4321
      %4323 = vrot.lane.b32.xlu0 %v4233, 60
      %v4324 = vpop.permute.xlu0 %4323
      %4325 = vrot.lane.b32.xlu0 %v4234, 60
      %v4326 = vpop.permute.xlu0 %4325
      %4327 = vrot.lane.b32.xlu0 %v4235, 60
      %v4328 = vpop.permute.xlu0 %4327
      %4329 = vrot.lane.b32.xlu0 %v4236, 60
      %v4330 = vpop.permute.xlu0 %4329
      %4331 = vrot.lane.b32.xlu0 %v4237, 60
      %v4332 = vpop.permute.xlu0 %4331
      %4333 = vrot.lane.b32.xlu0 %v4238, 60
      %v4334 = vpop.permute.xlu0 %4333
      %vm4367 = vcmask 523744
      %4368 = vst.msk [vmem:[#allocation5] sm:$0xff] %vm4367, %v4272
      %4369 = vst.msk [vmem:[#allocation5 + $0x10] sm:$0xff] %vm4367, %v4274
      %4370 = vst.msk [vmem:[#allocation5 + $0x20] sm:$0xff] %vm4367, %v4276
      %4371 = vst.msk [vmem:[#allocation5 + $0x30] sm:$0xff] %vm4367, %v4278
      %4372 = vst.msk [vmem:[#allocation5 + $0x40] sm:$0xff] %vm4367, %v4280
      %4373 = vst.msk [vmem:[#allocation5 + $0x50] sm:$0xff] %vm4367, %v4282
      %4374 = vst.msk [vmem:[#allocation5 + $0x60] sm:$0xff] %vm4367, %v4284
      %4375 = vst.msk [vmem:[#allocation5 + $0x70] sm:$0xff] %vm4367, %v4286
      %4376 = vst.msk [vmem:[#allocation5 + $0x80] sm:$0xff] %vm4367, %v4288
      %4377 = vst.msk [vmem:[#allocation5 + $0x90] sm:$0xff] %vm4367, %v4290
      %4378 = vst.msk [vmem:[#allocation5 + $0xa0] sm:$0xff] %vm4367, %v4292
      %4379 = vst.msk [vmem:[#allocation5 + $0xb0] sm:$0xff] %vm4367, %v4294
      %4380 = vst.msk [vmem:[#allocation5 + $0xc0] sm:$0xff] %vm4367, %v4296
      %4381 = vst.msk [vmem:[#allocation5 + $0xd0] sm:$0xff] %vm4367, %v4298
      %4382 = vst.msk [vmem:[#allocation5 + $0xe0] sm:$0xff] %vm4367, %v4300
      %4383 = vst.msk [vmem:[#allocation5 + $0xf0] sm:$0xff] %vm4367, %v4302
      %4384 = vst.msk [vmem:[#allocation5 + $0x100] sm:$0xff] %vm4367, %v4304
      %4385 = vst.msk [vmem:[#allocation5 + $0x110] sm:$0xff] %vm4367, %v4306
      %4386 = vst.msk [vmem:[#allocation5 + $0x120] sm:$0xff] %vm4367, %v4308
      %4387 = vst.msk [vmem:[#allocation5 + $0x130] sm:$0xff] %vm4367, %v4310
      %4388 = vst.msk [vmem:[#allocation5 + $0x140] sm:$0xff] %vm4367, %v4312
      %4389 = vst.msk [vmem:[#allocation5 + $0x150] sm:$0xff] %vm4367, %v4314
      %4390 = vst.msk [vmem:[#allocation5 + $0x160] sm:$0xff] %vm4367, %v4316
      %4391 = vst.msk [vmem:[#allocation5 + $0x170] sm:$0xff] %vm4367, %v4318
      %4392 = vst.msk [vmem:[#allocation5 + $0x180] sm:$0xff] %vm4367, %v4320
      %4393 = vst.msk [vmem:[#allocation5 + $0x190] sm:$0xff] %vm4367, %v4322
      %4394 = vst.msk [vmem:[#allocation5 + $0x1a0] sm:$0xff] %vm4367, %v4324
      %4395 = vst.msk [vmem:[#allocation5 + $0x1b0] sm:$0xff] %vm4367, %v4326
      %4396 = vst.msk [vmem:[#allocation5 + $0x1c0] sm:$0xff] %vm4367, %v4328
      %4397 = vst.msk [vmem:[#allocation5 + $0x1d0] sm:$0xff] %vm4367, %v4330
      %4398 = vst.msk [vmem:[#allocation5 + $0x1e0] sm:$0xff] %vm4367, %v4332
      %4399 = vst.msk [vmem:[#allocation5 + $0x1f0] sm:$0xff] %vm4367, %v4334
      %s4400 = scalar_lea.vmem [#allocation4], 24
      %v4401 = vld [vmem:[%s4400] sm:$0xff]
      %v4402 = vld [vmem:[%s4400 + $0x8] sm:$0xff]
      %v4403 = vld [vmem:[%s4400 + $0x18] sm:$0xff]
      %v4404 = vld [vmem:[%s4400 + $0x20] sm:$0xff]
      %v4405 = vld [vmem:[%s4400 + $0x30] sm:$0xff]
      %v4406 = vld [vmem:[%s4400 + $0x38] sm:$0xff]
      %v4407 = vld [vmem:[%s4400 + $0x48] sm:$0xff]
      %v4408 = vld [vmem:[%s4400 + $0x50] sm:$0xff]
      %v4409 = vld [vmem:[%s4400 + $0x60] sm:$0xff]
      %v4410 = vld [vmem:[%s4400 + $0x68] sm:$0xff]
      %v4411 = vld [vmem:[%s4400 + $0x78] sm:$0xff]
      %v4412 = vld [vmem:[%s4400 + $0x80] sm:$0xff]
      %v4413 = vld [vmem:[%s4400 + $0x90] sm:$0xff]
      %v4414 = vld [vmem:[%s4400 + $0x98] sm:$0xff]
      %v4415 = vld [vmem:[%s4400 + $0xa8] sm:$0xff]
      %v4416 = vld [vmem:[%s4400 + $0xb0] sm:$0xff]
      %v4417 = vld [vmem:[%s4400 + $0xc0] sm:$0xff]
      %v4418 = vld [vmem:[%s4400 + $0xc8] sm:$0xff]
      %v4419 = vld [vmem:[%s4400 + $0xd8] sm:$0xff]
      %v4420 = vld [vmem:[%s4400 + $0xe0] sm:$0xff]
      %v4421 = vld [vmem:[%s4400 + $0xf0] sm:$0xff]
      %v4422 = vld [vmem:[%s4400 + $0xf8] sm:$0xff]
      %v4423 = vld [vmem:[%s4400 + $0x108] sm:$0xff]
      %v4424 = vld [vmem:[%s4400 + $0x110] sm:$0xff]
      %v4425 = vld [vmem:[%s4400 + $0x120] sm:$0xff]
      %v4426 = vld [vmem:[%s4400 + $0x128] sm:$0xff]
      %v4427 = vld [vmem:[%s4400 + $0x138] sm:$0xff]
      %v4428 = vld [vmem:[%s4400 + $0x140] sm:$0xff]
      %v4429 = vld [vmem:[%s4400 + $0x150] sm:$0xff]
      %v4430 = vld [vmem:[%s4400 + $0x158] sm:$0xff]
      %v4431 = vld [vmem:[%s4400 + $0x168] sm:$0xff]
      %v4432 = vld [vmem:[%s4400 + $0x170] sm:$0xff]
      %4465 = vrot.lane.b32.xlu0 %v4401, 64
      %v4466 = vpop.permute.xlu0 %4465
      %4467 = vrot.lane.b32.xlu0 %v4402, 64
      %v4468 = vpop.permute.xlu0 %4467
      %4469 = vrot.lane.b32.xlu0 %v4403, 64
      %v4470 = vpop.permute.xlu0 %4469
      %4471 = vrot.lane.b32.xlu0 %v4404, 64
      %v4472 = vpop.permute.xlu0 %4471
      %4473 = vrot.lane.b32.xlu0 %v4405, 64
      %v4474 = vpop.permute.xlu0 %4473
      %4475 = vrot.lane.b32.xlu0 %v4406, 64
      %v4476 = vpop.permute.xlu0 %4475
      %4477 = vrot.lane.b32.xlu0 %v4407, 64
      %v4478 = vpop.permute.xlu0 %4477
      %4479 = vrot.lane.b32.xlu0 %v4408, 64
      %v4480 = vpop.permute.xlu0 %4479
      %4481 = vrot.lane.b32.xlu0 %v4409, 64
      %v4482 = vpop.permute.xlu0 %4481
      %4483 = vrot.lane.b32.xlu0 %v4410, 64
      %v4484 = vpop.permute.xlu0 %4483
      %4485 = vrot.lane.b32.xlu0 %v4411, 64
      %v4486 = vpop.permute.xlu0 %4485
      %4487 = vrot.lane.b32.xlu0 %v4412, 64
      %v4488 = vpop.permute.xlu0 %4487
      %4489 = vrot.lane.b32.xlu0 %v4413, 64
      %v4490 = vpop.permute.xlu0 %4489
      %4491 = vrot.lane.b32.xlu0 %v4414, 64
      %v4492 = vpop.permute.xlu0 %4491
      %4493 = vrot.lane.b32.xlu0 %v4415, 64
      %v4494 = vpop.permute.xlu0 %4493
      %4495 = vrot.lane.b32.xlu0 %v4416, 64
      %v4496 = vpop.permute.xlu0 %4495
      %4497 = vrot.lane.b32.xlu0 %v4417, 64
      %v4498 = vpop.permute.xlu0 %4497
      %4499 = vrot.lane.b32.xlu0 %v4418, 64
      %v4500 = vpop.permute.xlu0 %4499
      %4501 = vrot.lane.b32.xlu0 %v4419, 64
      %v4502 = vpop.permute.xlu0 %4501
      %4503 = vrot.lane.b32.xlu0 %v4420, 64
      %v4504 = vpop.permute.xlu0 %4503
      %4505 = vrot.lane.b32.xlu0 %v4421, 64
      %v4506 = vpop.permute.xlu0 %4505
      %4507 = vrot.lane.b32.xlu0 %v4422, 64
      %v4508 = vpop.permute.xlu0 %4507
      %4509 = vrot.lane.b32.xlu0 %v4423, 64
      %v4510 = vpop.permute.xlu0 %4509
      %4511 = vrot.lane.b32.xlu0 %v4424, 64
      %v4512 = vpop.permute.xlu0 %4511
      %4513 = vrot.lane.b32.xlu0 %v4425, 64
      %v4514 = vpop.permute.xlu0 %4513
      %4515 = vrot.lane.b32.xlu0 %v4426, 64
      %v4516 = vpop.permute.xlu0 %4515
      %4517 = vrot.lane.b32.xlu0 %v4427, 64
      %v4518 = vpop.permute.xlu0 %4517
      %4519 = vrot.lane.b32.xlu0 %v4428, 64
      %v4520 = vpop.permute.xlu0 %4519
      %4521 = vrot.lane.b32.xlu0 %v4429, 64
      %v4522 = vpop.permute.xlu0 %4521
      %4523 = vrot.lane.b32.xlu0 %v4430, 64
      %v4524 = vpop.permute.xlu0 %4523
      %4525 = vrot.lane.b32.xlu0 %v4431, 64
      %v4526 = vpop.permute.xlu0 %4525
      %4527 = vrot.lane.b32.xlu0 %v4432, 64
      %v4528 = vpop.permute.xlu0 %4527
      %vm4561 = vcmask 556544
      %4562 = vst.msk [vmem:[#allocation5] sm:$0xff] %vm4561, %v4466
      %4563 = vst.msk [vmem:[#allocation5 + $0x10] sm:$0xff] %vm4561, %v4468
      %4564 = vst.msk [vmem:[#allocation5 + $0x20] sm:$0xff] %vm4561, %v4470
      %4565 = vst.msk [vmem:[#allocation5 + $0x30] sm:$0xff] %vm4561, %v4472
      %4566 = vst.msk [vmem:[#allocation5 + $0x40] sm:$0xff] %vm4561, %v4474
      %4567 = vst.msk [vmem:[#allocation5 + $0x50] sm:$0xff] %vm4561, %v4476
      %4568 = vst.msk [vmem:[#allocation5 + $0x60] sm:$0xff] %vm4561, %v4478
      %4569 = vst.msk [vmem:[#allocation5 + $0x70] sm:$0xff] %vm4561, %v4480
      %4570 = vst.msk [vmem:[#allocation5 + $0x80] sm:$0xff] %vm4561, %v4482
      %4571 = vst.msk [vmem:[#allocation5 + $0x90] sm:$0xff] %vm4561, %v4484
      %4572 = vst.msk [vmem:[#allocation5 + $0xa0] sm:$0xff] %vm4561, %v4486
      %4573 = vst.msk [vmem:[#allocation5 + $0xb0] sm:$0xff] %vm4561, %v4488
      %4574 = vst.msk [vmem:[#allocation5 + $0xc0] sm:$0xff] %vm4561, %v4490
      %4575 = vst.msk [vmem:[#allocation5 + $0xd0] sm:$0xff] %vm4561, %v4492
      %4576 = vst.msk [vmem:[#allocation5 + $0xe0] sm:$0xff] %vm4561, %v4494
      %4577 = vst.msk [vmem:[#allocation5 + $0xf0] sm:$0xff] %vm4561, %v4496
      %4578 = vst.msk [vmem:[#allocation5 + $0x100] sm:$0xff] %vm4561, %v4498
      %4579 = vst.msk [vmem:[#allocation5 + $0x110] sm:$0xff] %vm4561, %v4500
      %4580 = vst.msk [vmem:[#allocation5 + $0x120] sm:$0xff] %vm4561, %v4502
      %4581 = vst.msk [vmem:[#allocation5 + $0x130] sm:$0xff] %vm4561, %v4504
      %4582 = vst.msk [vmem:[#allocation5 + $0x140] sm:$0xff] %vm4561, %v4506
      %4583 = vst.msk [vmem:[#allocation5 + $0x150] sm:$0xff] %vm4561, %v4508
      %4584 = vst.msk [vmem:[#allocation5 + $0x160] sm:$0xff] %vm4561, %v4510
      %4585 = vst.msk [vmem:[#allocation5 + $0x170] sm:$0xff] %vm4561, %v4512
      %4586 = vst.msk [vmem:[#allocation5 + $0x180] sm:$0xff] %vm4561, %v4514
      %4587 = vst.msk [vmem:[#allocation5 + $0x190] sm:$0xff] %vm4561, %v4516
      %4588 = vst.msk [vmem:[#allocation5 + $0x1a0] sm:$0xff] %vm4561, %v4518
      %4589 = vst.msk [vmem:[#allocation5 + $0x1b0] sm:$0xff] %vm4561, %v4520
      %4590 = vst.msk [vmem:[#allocation5 + $0x1c0] sm:$0xff] %vm4561, %v4522
      %4591 = vst.msk [vmem:[#allocation5 + $0x1d0] sm:$0xff] %vm4561, %v4524
      %4592 = vst.msk [vmem:[#allocation5 + $0x1e0] sm:$0xff] %vm4561, %v4526
      %4593 = vst.msk [vmem:[#allocation5 + $0x1f0] sm:$0xff] %vm4561, %v4528
      %v4594 = vld [vmem:[%s4400 + $0x1] sm:$0xff]
      %v4595 = vld [vmem:[%s4400 + $0x9] sm:$0xff]
      %v4596 = vld [vmem:[%s4400 + $0x19] sm:$0xff]
      %v4597 = vld [vmem:[%s4400 + $0x21] sm:$0xff]
      %v4598 = vld [vmem:[%s4400 + $0x31] sm:$0xff]
      %v4599 = vld [vmem:[%s4400 + $0x39] sm:$0xff]
      %v4600 = vld [vmem:[%s4400 + $0x49] sm:$0xff]
      %v4601 = vld [vmem:[%s4400 + $0x51] sm:$0xff]
      %v4602 = vld [vmem:[%s4400 + $0x61] sm:$0xff]
      %v4603 = vld [vmem:[%s4400 + $0x69] sm:$0xff]
      %v4604 = vld [vmem:[%s4400 + $0x79] sm:$0xff]
      %v4605 = vld [vmem:[%s4400 + $0x81] sm:$0xff]
      %v4606 = vld [vmem:[%s4400 + $0x91] sm:$0xff]
      %v4607 = vld [vmem:[%s4400 + $0x99] sm:$0xff]
      %v4608 = vld [vmem:[%s4400 + $0xa9] sm:$0xff]
      %v4609 = vld [vmem:[%s4400 + $0xb1] sm:$0xff]
      %v4610 = vld [vmem:[%s4400 + $0xc1] sm:$0xff]
      %v4611 = vld [vmem:[%s4400 + $0xc9] sm:$0xff]
      %v4612 = vld [vmem:[%s4400 + $0xd9] sm:$0xff]
      %v4613 = vld [vmem:[%s4400 + $0xe1] sm:$0xff]
      %v4614 = vld [vmem:[%s4400 + $0xf1] sm:$0xff]
      %v4615 = vld [vmem:[%s4400 + $0xf9] sm:$0xff]
      %v4616 = vld [vmem:[%s4400 + $0x109] sm:$0xff]
      %v4617 = vld [vmem:[%s4400 + $0x111] sm:$0xff]
      %v4618 = vld [vmem:[%s4400 + $0x121] sm:$0xff]
      %v4619 = vld [vmem:[%s4400 + $0x129] sm:$0xff]
      %v4620 = vld [vmem:[%s4400 + $0x139] sm:$0xff]
      %v4621 = vld [vmem:[%s4400 + $0x141] sm:$0xff]
      %v4622 = vld [vmem:[%s4400 + $0x151] sm:$0xff]
      %v4623 = vld [vmem:[%s4400 + $0x159] sm:$0xff]
      %v4624 = vld [vmem:[%s4400 + $0x169] sm:$0xff]
      %v4625 = vld [vmem:[%s4400 + $0x171] sm:$0xff]
      %4658 = vrot.lane.b32.xlu0 %v4594, 68
      %v4659 = vpop.permute.xlu0 %4658
      %4660 = vrot.lane.b32.xlu0 %v4595, 68
      %v4661 = vpop.permute.xlu0 %4660
      %4662 = vrot.lane.b32.xlu0 %v4596, 68
      %v4663 = vpop.permute.xlu0 %4662
      %4664 = vrot.lane.b32.xlu0 %v4597, 68
      %v4665 = vpop.permute.xlu0 %4664
      %4666 = vrot.lane.b32.xlu0 %v4598, 68
      %v4667 = vpop.permute.xlu0 %4666
      %4668 = vrot.lane.b32.xlu0 %v4599, 68
      %v4669 = vpop.permute.xlu0 %4668
      %4670 = vrot.lane.b32.xlu0 %v4600, 68
      %v4671 = vpop.permute.xlu0 %4670
      %4672 = vrot.lane.b32.xlu0 %v4601, 68
      %v4673 = vpop.permute.xlu0 %4672
      %4674 = vrot.lane.b32.xlu0 %v4602, 68
      %v4675 = vpop.permute.xlu0 %4674
      %4676 = vrot.lane.b32.xlu0 %v4603, 68
      %v4677 = vpop.permute.xlu0 %4676
      %4678 = vrot.lane.b32.xlu0 %v4604, 68
      %v4679 = vpop.permute.xlu0 %4678
      %4680 = vrot.lane.b32.xlu0 %v4605, 68
      %v4681 = vpop.permute.xlu0 %4680
      %4682 = vrot.lane.b32.xlu0 %v4606, 68
      %v4683 = vpop.permute.xlu0 %4682
      %4684 = vrot.lane.b32.xlu0 %v4607, 68
      %v4685 = vpop.permute.xlu0 %4684
      %4686 = vrot.lane.b32.xlu0 %v4608, 68
      %v4687 = vpop.permute.xlu0 %4686
      %4688 = vrot.lane.b32.xlu0 %v4609, 68
      %v4689 = vpop.permute.xlu0 %4688
      %4690 = vrot.lane.b32.xlu0 %v4610, 68
      %v4691 = vpop.permute.xlu0 %4690
      %4692 = vrot.lane.b32.xlu0 %v4611, 68
      %v4693 = vpop.permute.xlu0 %4692
      %4694 = vrot.lane.b32.xlu0 %v4612, 68
      %v4695 = vpop.permute.xlu0 %4694
      %4696 = vrot.lane.b32.xlu0 %v4613, 68
      %v4697 = vpop.permute.xlu0 %4696
      %4698 = vrot.lane.b32.xlu0 %v4614, 68
      %v4699 = vpop.permute.xlu0 %4698
      %4700 = vrot.lane.b32.xlu0 %v4615, 68
      %v4701 = vpop.permute.xlu0 %4700
      %4702 = vrot.lane.b32.xlu0 %v4616, 68
      %v4703 = vpop.permute.xlu0 %4702
      %4704 = vrot.lane.b32.xlu0 %v4617, 68
      %v4705 = vpop.permute.xlu0 %4704
      %4706 = vrot.lane.b32.xlu0 %v4618, 68
      %v4707 = vpop.permute.xlu0 %4706
      %4708 = vrot.lane.b32.xlu0 %v4619, 68
      %v4709 = vpop.permute.xlu0 %4708
      %4710 = vrot.lane.b32.xlu0 %v4620, 68
      %v4711 = vpop.permute.xlu0 %4710
      %4712 = vrot.lane.b32.xlu0 %v4621, 68
      %v4713 = vpop.permute.xlu0 %4712
      %4714 = vrot.lane.b32.xlu0 %v4622, 68
      %v4715 = vpop.permute.xlu0 %4714
      %4716 = vrot.lane.b32.xlu0 %v4623, 68
      %v4717 = vpop.permute.xlu0 %4716
      %4718 = vrot.lane.b32.xlu0 %v4624, 68
      %v4719 = vpop.permute.xlu0 %4718
      %4720 = vrot.lane.b32.xlu0 %v4625, 68
      %v4721 = vpop.permute.xlu0 %4720
      %vm4754 = vcmask 589344
      %4755 = vst.msk [vmem:[#allocation5] sm:$0xff] %vm4754, %v4659
      %4756 = vst.msk [vmem:[#allocation5 + $0x10] sm:$0xff] %vm4754, %v4661
      %4757 = vst.msk [vmem:[#allocation5 + $0x20] sm:$0xff] %vm4754, %v4663
      %4758 = vst.msk [vmem:[#allocation5 + $0x30] sm:$0xff] %vm4754, %v4665
      %4759 = vst.msk [vmem:[#allocation5 + $0x40] sm:$0xff] %vm4754, %v4667
      %4760 = vst.msk [vmem:[#allocation5 + $0x50] sm:$0xff] %vm4754, %v4669
      %4761 = vst.msk [vmem:[#allocation5 + $0x60] sm:$0xff] %vm4754, %v4671
      %4762 = vst.msk [vmem:[#allocation5 + $0x70] sm:$0xff] %vm4754, %v4673
      %4763 = vst.msk [vmem:[#allocation5 + $0x80] sm:$0xff] %vm4754, %v4675
      %4764 = vst.msk [vmem:[#allocation5 + $0x90] sm:$0xff] %vm4754, %v4677
      %4765 = vst.msk [vmem:[#allocation5 + $0xa0] sm:$0xff] %vm4754, %v4679
      %4766 = vst.msk [vmem:[#allocation5 + $0xb0] sm:$0xff] %vm4754, %v4681
      %4767 = vst.msk [vmem:[#allocation5 + $0xc0] sm:$0xff] %vm4754, %v4683
      %4768 = vst.msk [vmem:[#allocation5 + $0xd0] sm:$0xff] %vm4754, %v4685
      %4769 = vst.msk [vmem:[#allocation5 + $0xe0] sm:$0xff] %vm4754, %v4687
      %4770 = vst.msk [vmem:[#allocation5 + $0xf0] sm:$0xff] %vm4754, %v4689
      %4771 = vst.msk [vmem:[#allocation5 + $0x100] sm:$0xff] %vm4754, %v4691
      %4772 = vst.msk [vmem:[#allocation5 + $0x110] sm:$0xff] %vm4754, %v4693
      %4773 = vst.msk [vmem:[#allocation5 + $0x120] sm:$0xff] %vm4754, %v4695
      %4774 = vst.msk [vmem:[#allocation5 + $0x130] sm:$0xff] %vm4754, %v4697
      %4775 = vst.msk [vmem:[#allocation5 + $0x140] sm:$0xff] %vm4754, %v4699
      %4776 = vst.msk [vmem:[#allocation5 + $0x150] sm:$0xff] %vm4754, %v4701
      %4777 = vst.msk [vmem:[#allocation5 + $0x160] sm:$0xff] %vm4754, %v4703
      %4778 = vst.msk [vmem:[#allocation5 + $0x170] sm:$0xff] %vm4754, %v4705
      %4779 = vst.msk [vmem:[#allocation5 + $0x180] sm:$0xff] %vm4754, %v4707
      %4780 = vst.msk [vmem:[#allocation5 + $0x190] sm:$0xff] %vm4754, %v4709
      %4781 = vst.msk [vmem:[#allocation5 + $0x1a0] sm:$0xff] %vm4754, %v4711
      %4782 = vst.msk [vmem:[#allocation5 + $0x1b0] sm:$0xff] %vm4754, %v4713
      %4783 = vst.msk [vmem:[#allocation5 + $0x1c0] sm:$0xff] %vm4754, %v4715
      %4784 = vst.msk [vmem:[#allocation5 + $0x1d0] sm:$0xff] %vm4754, %v4717
      %4785 = vst.msk [vmem:[#allocation5 + $0x1e0] sm:$0xff] %vm4754, %v4719
      %4786 = vst.msk [vmem:[#allocation5 + $0x1f0] sm:$0xff] %vm4754, %v4721
      %v4787 = vld [vmem:[%s4400 + $0x2] sm:$0xff]
      %v4788 = vld [vmem:[%s4400 + $0xa] sm:$0xff]
      %v4789 = vld [vmem:[%s4400 + $0x1a] sm:$0xff]
      %v4790 = vld [vmem:[%s4400 + $0x22] sm:$0xff]
      %v4791 = vld [vmem:[%s4400 + $0x32] sm:$0xff]
      %v4792 = vld [vmem:[%s4400 + $0x3a] sm:$0xff]
      %v4793 = vld [vmem:[%s4400 + $0x4a] sm:$0xff]
      %v4794 = vld [vmem:[%s4400 + $0x52] sm:$0xff]
      %v4795 = vld [vmem:[%s4400 + $0x62] sm:$0xff]
      %v4796 = vld [vmem:[%s4400 + $0x6a] sm:$0xff]
      %v4797 = vld [vmem:[%s4400 + $0x7a] sm:$0xff]
      %v4798 = vld [vmem:[%s4400 + $0x82] sm:$0xff]
      %v4799 = vld [vmem:[%s4400 + $0x92] sm:$0xff]
      %v4800 = vld [vmem:[%s4400 + $0x9a] sm:$0xff]
      %v4801 = vld [vmem:[%s4400 + $0xaa] sm:$0xff]
      %v4802 = vld [vmem:[%s4400 + $0xb2] sm:$0xff]
      %v4803 = vld [vmem:[%s4400 + $0xc2] sm:$0xff]
      %v4804 = vld [vmem:[%s4400 + $0xca] sm:$0xff]
      %v4805 = vld [vmem:[%s4400 + $0xda] sm:$0xff]
      %v4806 = vld [vmem:[%s4400 + $0xe2] sm:$0xff]
      %v4807 = vld [vmem:[%s4400 + $0xf2] sm:$0xff]
      %v4808 = vld [vmem:[%s4400 + $0xfa] sm:$0xff]
      %v4809 = vld [vmem:[%s4400 + $0x10a] sm:$0xff]
      %v4810 = vld [vmem:[%s4400 + $0x112] sm:$0xff]
      %v4811 = vld [vmem:[%s4400 + $0x122] sm:$0xff]
      %v4812 = vld [vmem:[%s4400 + $0x12a] sm:$0xff]
      %v4813 = vld [vmem:[%s4400 + $0x13a] sm:$0xff]
      %v4814 = vld [vmem:[%s4400 + $0x142] sm:$0xff]
      %v4815 = vld [vmem:[%s4400 + $0x152] sm:$0xff]
      %v4816 = vld [vmem:[%s4400 + $0x15a] sm:$0xff]
      %v4817 = vld [vmem:[%s4400 + $0x16a] sm:$0xff]
      %v4818 = vld [vmem:[%s4400 + $0x172] sm:$0xff]
      %4851 = vrot.lane.b32.xlu0 %v4787, 72
      %v4852 = vpop.permute.xlu0 %4851
      %4853 = vrot.lane.b32.xlu0 %v4788, 72
      %v4854 = vpop.permute.xlu0 %4853
      %4855 = vrot.lane.b32.xlu0 %v4789, 72
      %v4856 = vpop.permute.xlu0 %4855
      %4857 = vrot.lane.b32.xlu0 %v4790, 72
      %v4858 = vpop.permute.xlu0 %4857
      %4859 = vrot.lane.b32.xlu0 %v4791, 72
      %v4860 = vpop.permute.xlu0 %4859
      %4861 = vrot.lane.b32.xlu0 %v4792, 72
      %v4862 = vpop.permute.xlu0 %4861
      %4863 = vrot.lane.b32.xlu0 %v4793, 72
      %v4864 = vpop.permute.xlu0 %4863
      %4865 = vrot.lane.b32.xlu0 %v4794, 72
      %v4866 = vpop.permute.xlu0 %4865
      %4867 = vrot.lane.b32.xlu0 %v4795, 72
      %v4868 = vpop.permute.xlu0 %4867
      %4869 = vrot.lane.b32.xlu0 %v4796, 72
      %v4870 = vpop.permute.xlu0 %4869
      %4871 = vrot.lane.b32.xlu0 %v4797, 72
      %v4872 = vpop.permute.xlu0 %4871
      %4873 = vrot.lane.b32.xlu0 %v4798, 72
      %v4874 = vpop.permute.xlu0 %4873
      %4875 = vrot.lane.b32.xlu0 %v4799, 72
      %v4876 = vpop.permute.xlu0 %4875
      %4877 = vrot.lane.b32.xlu0 %v4800, 72
      %v4878 = vpop.permute.xlu0 %4877
      %4879 = vrot.lane.b32.xlu0 %v4801, 72
      %v4880 = vpop.permute.xlu0 %4879
      %4881 = vrot.lane.b32.xlu0 %v4802, 72
      %v4882 = vpop.permute.xlu0 %4881
      %4883 = vrot.lane.b32.xlu0 %v4803, 72
      %v4884 = vpop.permute.xlu0 %4883
      %4885 = vrot.lane.b32.xlu0 %v4804, 72
      %v4886 = vpop.permute.xlu0 %4885
      %4887 = vrot.lane.b32.xlu0 %v4805, 72
      %v4888 = vpop.permute.xlu0 %4887
      %4889 = vrot.lane.b32.xlu0 %v4806, 72
      %v4890 = vpop.permute.xlu0 %4889
      %4891 = vrot.lane.b32.xlu0 %v4807, 72
      %v4892 = vpop.permute.xlu0 %4891
      %4893 = vrot.lane.b32.xlu0 %v4808, 72
      %v4894 = vpop.permute.xlu0 %4893
      %4895 = vrot.lane.b32.xlu0 %v4809, 72
      %v4896 = vpop.permute.xlu0 %4895
      %4897 = vrot.lane.b32.xlu0 %v4810, 72
      %v4898 = vpop.permute.xlu0 %4897
      %4899 = vrot.lane.b32.xlu0 %v4811, 72
      %v4900 = vpop.permute.xlu0 %4899
      %4901 = vrot.lane.b32.xlu0 %v4812, 72
      %v4902 = vpop.permute.xlu0 %4901
      %4903 = vrot.lane.b32.xlu0 %v4813, 72
      %v4904 = vpop.permute.xlu0 %4903
      %4905 = vrot.lane.b32.xlu0 %v4814, 72
      %v4906 = vpop.permute.xlu0 %4905
      %4907 = vrot.lane.b32.xlu0 %v4815, 72
      %v4908 = vpop.permute.xlu0 %4907
      %4909 = vrot.lane.b32.xlu0 %v4816, 72
      %v4910 = vpop.permute.xlu0 %4909
      %4911 = vrot.lane.b32.xlu0 %v4817, 72
      %v4912 = vpop.permute.xlu0 %4911
      %4913 = vrot.lane.b32.xlu0 %v4818, 72
      %v4914 = vpop.permute.xlu0 %4913
      %vm4947 = vcmask 622144
      %4948 = vst.msk [vmem:[#allocation5] sm:$0xff] %vm4947, %v4852
      %4949 = vst.msk [vmem:[#allocation5 + $0x10] sm:$0xff] %vm4947, %v4854
      %4950 = vst.msk [vmem:[#allocation5 + $0x20] sm:$0xff] %vm4947, %v4856
      %4951 = vst.msk [vmem:[#allocation5 + $0x30] sm:$0xff] %vm4947, %v4858
      %4952 = vst.msk [vmem:[#allocation5 + $0x40] sm:$0xff] %vm4947, %v4860
      %4953 = vst.msk [vmem:[#allocation5 + $0x50] sm:$0xff] %vm4947, %v4862
      %4954 = vst.msk [vmem:[#allocation5 + $0x60] sm:$0xff] %vm4947, %v4864
      %4955 = vst.msk [vmem:[#allocation5 + $0x70] sm:$0xff] %vm4947, %v4866
      %4956 = vst.msk [vmem:[#allocation5 + $0x80] sm:$0xff] %vm4947, %v4868
      %4957 = vst.msk [vmem:[#allocation5 + $0x90] sm:$0xff] %vm4947, %v4870
      %4958 = vst.msk [vmem:[#allocation5 + $0xa0] sm:$0xff] %vm4947, %v4872
      %4959 = vst.msk [vmem:[#allocation5 + $0xb0] sm:$0xff] %vm4947, %v4874
      %4960 = vst.msk [vmem:[#allocation5 + $0xc0] sm:$0xff] %vm4947, %v4876
      %4961 = vst.msk [vmem:[#allocation5 + $0xd0] sm:$0xff] %vm4947, %v4878
      %4962 = vst.msk [vmem:[#allocation5 + $0xe0] sm:$0xff] %vm4947, %v4880
      %4963 = vst.msk [vmem:[#allocation5 + $0xf0] sm:$0xff] %vm4947, %v4882
      %4964 = vst.msk [vmem:[#allocation5 + $0x100] sm:$0xff] %vm4947, %v4884
      %4965 = vst.msk [vmem:[#allocation5 + $0x110] sm:$0xff] %vm4947, %v4886
      %4966 = vst.msk [vmem:[#allocation5 + $0x120] sm:$0xff] %vm4947, %v4888
      %4967 = vst.msk [vmem:[#allocation5 + $0x130] sm:$0xff] %vm4947, %v4890
      %4968 = vst.msk [vmem:[#allocation5 + $0x140] sm:$0xff] %vm4947, %v4892
      %4969 = vst.msk [vmem:[#allocation5 + $0x150] sm:$0xff] %vm4947, %v4894
      %4970 = vst.msk [vmem:[#allocation5 + $0x160] sm:$0xff] %vm4947, %v4896
      %4971 = vst.msk [vmem:[#allocation5 + $0x170] sm:$0xff] %vm4947, %v4898
      %4972 = vst.msk [vmem:[#allocation5 + $0x180] sm:$0xff] %vm4947, %v4900
      %4973 = vst.msk [vmem:[#allocation5 + $0x190] sm:$0xff] %vm4947, %v4902
      %4974 = vst.msk [vmem:[#allocation5 + $0x1a0] sm:$0xff] %vm4947, %v4904
      %4975 = vst.msk [vmem:[#allocation5 + $0x1b0] sm:$0xff] %vm4947, %v4906
      %4976 = vst.msk [vmem:[#allocation5 + $0x1c0] sm:$0xff] %vm4947, %v4908
      %4977 = vst.msk [vmem:[#allocation5 + $0x1d0] sm:$0xff] %vm4947, %v4910
      %4978 = vst.msk [vmem:[#allocation5 + $0x1e0] sm:$0xff] %vm4947, %v4912
      %4979 = vst.msk [vmem:[#allocation5 + $0x1f0] sm:$0xff] %vm4947, %v4914
      %v4980 = vld [vmem:[%s4400 + $0x3] sm:$0xff]
      %v4981 = vld [vmem:[%s4400 + $0xb] sm:$0xff]
      %v4982 = vld [vmem:[%s4400 + $0x1b] sm:$0xff]
      %v4983 = vld [vmem:[%s4400 + $0x23] sm:$0xff]
      %v4984 = vld [vmem:[%s4400 + $0x33] sm:$0xff]
      %v4985 = vld [vmem:[%s4400 + $0x3b] sm:$0xff]
      %v4986 = vld [vmem:[%s4400 + $0x4b] sm:$0xff]
      %v4987 = vld [vmem:[%s4400 + $0x53] sm:$0xff]
      %v4988 = vld [vmem:[%s4400 + $0x63] sm:$0xff]
      %v4989 = vld [vmem:[%s4400 + $0x6b] sm:$0xff]
      %v4990 = vld [vmem:[%s4400 + $0x7b] sm:$0xff]
      %v4991 = vld [vmem:[%s4400 + $0x83] sm:$0xff]
      %v4992 = vld [vmem:[%s4400 + $0x93] sm:$0xff]
      %v4993 = vld [vmem:[%s4400 + $0x9b] sm:$0xff]
      %v4994 = vld [vmem:[%s4400 + $0xab] sm:$0xff]
      %v4995 = vld [vmem:[%s4400 + $0xb3] sm:$0xff]
      %v4996 = vld [vmem:[%s4400 + $0xc3] sm:$0xff]
      %v4997 = vld [vmem:[%s4400 + $0xcb] sm:$0xff]
      %v4998 = vld [vmem:[%s4400 + $0xdb] sm:$0xff]
      %v4999 = vld [vmem:[%s4400 + $0xe3] sm:$0xff]
      %v5000 = vld [vmem:[%s4400 + $0xf3] sm:$0xff]
      %v5001 = vld [vmem:[%s4400 + $0xfb] sm:$0xff]
      %v5002 = vld [vmem:[%s4400 + $0x10b] sm:$0xff]
      %v5003 = vld [vmem:[%s4400 + $0x113] sm:$0xff]
      %v5004 = vld [vmem:[%s4400 + $0x123] sm:$0xff]
      %v5005 = vld [vmem:[%s4400 + $0x12b] sm:$0xff]
      %v5006 = vld [vmem:[%s4400 + $0x13b] sm:$0xff]
      %v5007 = vld [vmem:[%s4400 + $0x143] sm:$0xff]
      %v5008 = vld [vmem:[%s4400 + $0x153] sm:$0xff]
      %v5009 = vld [vmem:[%s4400 + $0x15b] sm:$0xff]
      %v5010 = vld [vmem:[%s4400 + $0x16b] sm:$0xff]
      %v5011 = vld [vmem:[%s4400 + $0x173] sm:$0xff]
      %5044 = vrot.lane.b32.xlu0 %v4980, 76
      %v5045 = vpop.permute.xlu0 %5044
      %5046 = vrot.lane.b32.xlu0 %v4981, 76
      %v5047 = vpop.permute.xlu0 %5046
      %5048 = vrot.lane.b32.xlu0 %v4982, 76
      %v5049 = vpop.permute.xlu0 %5048
      %5050 = vrot.lane.b32.xlu0 %v4983, 76
      %v5051 = vpop.permute.xlu0 %5050
      %5052 = vrot.lane.b32.xlu0 %v4984, 76
      %v5053 = vpop.permute.xlu0 %5052
      %5054 = vrot.lane.b32.xlu0 %v4985, 76
      %v5055 = vpop.permute.xlu0 %5054
      %5056 = vrot.lane.b32.xlu0 %v4986, 76
      %v5057 = vpop.permute.xlu0 %5056
      %5058 = vrot.lane.b32.xlu0 %v4987, 76
      %v5059 = vpop.permute.xlu0 %5058
      %5060 = vrot.lane.b32.xlu0 %v4988, 76
      %v5061 = vpop.permute.xlu0 %5060
      %5062 = vrot.lane.b32.xlu0 %v4989, 76
      %v5063 = vpop.permute.xlu0 %5062
      %5064 = vrot.lane.b32.xlu0 %v4990, 76
      %v5065 = vpop.permute.xlu0 %5064
      %5066 = vrot.lane.b32.xlu0 %v4991, 76
      %v5067 = vpop.permute.xlu0 %5066
      %5068 = vrot.lane.b32.xlu0 %v4992, 76
      %v5069 = vpop.permute.xlu0 %5068
      %5070 = vrot.lane.b32.xlu0 %v4993, 76
      %v5071 = vpop.permute.xlu0 %5070
      %5072 = vrot.lane.b32.xlu0 %v4994, 76
      %v5073 = vpop.permute.xlu0 %5072
      %5074 = vrot.lane.b32.xlu0 %v4995, 76
      %v5075 = vpop.permute.xlu0 %5074
      %5076 = vrot.lane.b32.xlu0 %v4996, 76
      %v5077 = vpop.permute.xlu0 %5076
      %5078 = vrot.lane.b32.xlu0 %v4997, 76
      %v5079 = vpop.permute.xlu0 %5078
      %5080 = vrot.lane.b32.xlu0 %v4998, 76
      %v5081 = vpop.permute.xlu0 %5080
      %5082 = vrot.lane.b32.xlu0 %v4999, 76
      %v5083 = vpop.permute.xlu0 %5082
      %5084 = vrot.lane.b32.xlu0 %v5000, 76
      %v5085 = vpop.permute.xlu0 %5084
      %5086 = vrot.lane.b32.xlu0 %v5001, 76
      %v5087 = vpop.permute.xlu0 %5086
      %5088 = vrot.lane.b32.xlu0 %v5002, 76
      %v5089 = vpop.permute.xlu0 %5088
      %5090 = vrot.lane.b32.xlu0 %v5003, 76
      %v5091 = vpop.permute.xlu0 %5090
      %5092 = vrot.lane.b32.xlu0 %v5004, 76
      %v5093 = vpop.permute.xlu0 %5092
      %5094 = vrot.lane.b32.xlu0 %v5005, 76
      %v5095 = vpop.permute.xlu0 %5094
      %5096 = vrot.lane.b32.xlu0 %v5006, 76
      %v5097 = vpop.permute.xlu0 %5096
      %5098 = vrot.lane.b32.xlu0 %v5007, 76
      %v5099 = vpop.permute.xlu0 %5098
      %5100 = vrot.lane.b32.xlu0 %v5008, 76
      %v5101 = vpop.permute.xlu0 %5100
      %5102 = vrot.lane.b32.xlu0 %v5009, 76
      %v5103 = vpop.permute.xlu0 %5102
      %5104 = vrot.lane.b32.xlu0 %v5010, 76
      %v5105 = vpop.permute.xlu0 %5104
      %5106 = vrot.lane.b32.xlu0 %v5011, 76
      %v5107 = vpop.permute.xlu0 %5106
      %vm5140 = vcmask 654944
      %5141 = vst.msk [vmem:[#allocation5] sm:$0xff] %vm5140, %v5045
      %5142 = vst.msk [vmem:[#allocation5 + $0x10] sm:$0xff] %vm5140, %v5047
      %5143 = vst.msk [vmem:[#allocation5 + $0x20] sm:$0xff] %vm5140, %v5049
      %5144 = vst.msk [vmem:[#allocation5 + $0x30] sm:$0xff] %vm5140, %v5051
      %5145 = vst.msk [vmem:[#allocation5 + $0x40] sm:$0xff] %vm5140, %v5053
      %5146 = vst.msk [vmem:[#allocation5 + $0x50] sm:$0xff] %vm5140, %v5055
      %5147 = vst.msk [vmem:[#allocation5 + $0x60] sm:$0xff] %vm5140, %v5057
      %5148 = vst.msk [vmem:[#allocation5 + $0x70] sm:$0xff] %vm5140, %v5059
      %5149 = vst.msk [vmem:[#allocation5 + $0x80] sm:$0xff] %vm5140, %v5061
      %5150 = vst.msk [vmem:[#allocation5 + $0x90] sm:$0xff] %vm5140, %v5063
      %5151 = vst.msk [vmem:[#allocation5 + $0xa0] sm:$0xff] %vm5140, %v5065
      %5152 = vst.msk [vmem:[#allocation5 + $0xb0] sm:$0xff] %vm5140, %v5067
      %5153 = vst.msk [vmem:[#allocation5 + $0xc0] sm:$0xff] %vm5140, %v5069
      %5154 = vst.msk [vmem:[#allocation5 + $0xd0] sm:$0xff] %vm5140, %v5071
      %5155 = vst.msk [vmem:[#allocation5 + $0xe0] sm:$0xff] %vm5140, %v5073
      %5156 = vst.msk [vmem:[#allocation5 + $0xf0] sm:$0xff] %vm5140, %v5075
      %5157 = vst.msk [vmem:[#allocation5 + $0x100] sm:$0xff] %vm5140, %v5077
      %5158 = vst.msk [vmem:[#allocation5 + $0x110] sm:$0xff] %vm5140, %v5079
      %5159 = vst.msk [vmem:[#allocation5 + $0x120] sm:$0xff] %vm5140, %v5081
      %5160 = vst.msk [vmem:[#allocation5 + $0x130] sm:$0xff] %vm5140, %v5083
      %5161 = vst.msk [vmem:[#allocation5 + $0x140] sm:$0xff] %vm5140, %v5085
      %5162 = vst.msk [vmem:[#allocation5 + $0x150] sm:$0xff] %vm5140, %v5087
      %5163 = vst.msk [vmem:[#allocation5 + $0x160] sm:$0xff] %vm5140, %v5089
      %5164 = vst.msk [vmem:[#allocation5 + $0x170] sm:$0xff] %vm5140, %v5091
      %5165 = vst.msk [vmem:[#allocation5 + $0x180] sm:$0xff] %vm5140, %v5093
      %5166 = vst.msk [vmem:[#allocation5 + $0x190] sm:$0xff] %vm5140, %v5095
      %5167 = vst.msk [vmem:[#allocation5 + $0x1a0] sm:$0xff] %vm5140, %v5097
      %5168 = vst.msk [vmem:[#allocation5 + $0x1b0] sm:$0xff] %vm5140, %v5099
      %5169 = vst.msk [vmem:[#allocation5 + $0x1c0] sm:$0xff] %vm5140, %v5101
      %5170 = vst.msk [vmem:[#allocation5 + $0x1d0] sm:$0xff] %vm5140, %v5103
      %5171 = vst.msk [vmem:[#allocation5 + $0x1e0] sm:$0xff] %vm5140, %v5105
      %5172 = vst.msk [vmem:[#allocation5 + $0x1f0] sm:$0xff] %vm5140, %v5107
      %v5173 = vld [vmem:[%s4400 + $0x4] sm:$0xff]
      %v5174 = vld [vmem:[%s4400 + $0xc] sm:$0xff]
      %v5175 = vld [vmem:[%s4400 + $0x1c] sm:$0xff]
      %v5176 = vld [vmem:[%s4400 + $0x24] sm:$0xff]
      %v5177 = vld [vmem:[%s4400 + $0x34] sm:$0xff]
      %v5178 = vld [vmem:[%s4400 + $0x3c] sm:$0xff]
      %v5179 = vld [vmem:[%s4400 + $0x4c] sm:$0xff]
      %v5180 = vld [vmem:[%s4400 + $0x54] sm:$0xff]
      %v5181 = vld [vmem:[%s4400 + $0x64] sm:$0xff]
      %v5182 = vld [vmem:[%s4400 + $0x6c] sm:$0xff]
      %v5183 = vld [vmem:[%s4400 + $0x7c] sm:$0xff]
      %v5184 = vld [vmem:[%s4400 + $0x84] sm:$0xff]
      %v5185 = vld [vmem:[%s4400 + $0x94] sm:$0xff]
      %v5186 = vld [vmem:[%s4400 + $0x9c] sm:$0xff]
      %v5187 = vld [vmem:[%s4400 + $0xac] sm:$0xff]
      %v5188 = vld [vmem:[%s4400 + $0xb4] sm:$0xff]
      %v5189 = vld [vmem:[%s4400 + $0xc4] sm:$0xff]
      %v5190 = vld [vmem:[%s4400 + $0xcc] sm:$0xff]
      %v5191 = vld [vmem:[%s4400 + $0xdc] sm:$0xff]
      %v5192 = vld [vmem:[%s4400 + $0xe4] sm:$0xff]
      %v5193 = vld [vmem:[%s4400 + $0xf4] sm:$0xff]
      %v5194 = vld [vmem:[%s4400 + $0xfc] sm:$0xff]
      %v5195 = vld [vmem:[%s4400 + $0x10c] sm:$0xff]
      %v5196 = vld [vmem:[%s4400 + $0x114] sm:$0xff]
      %v5197 = vld [vmem:[%s4400 + $0x124] sm:$0xff]
      %v5198 = vld [vmem:[%s4400 + $0x12c] sm:$0xff]
      %v5199 = vld [vmem:[%s4400 + $0x13c] sm:$0xff]
      %v5200 = vld [vmem:[%s4400 + $0x144] sm:$0xff]
      %v5201 = vld [vmem:[%s4400 + $0x154] sm:$0xff]
      %v5202 = vld [vmem:[%s4400 + $0x15c] sm:$0xff]
      %v5203 = vld [vmem:[%s4400 + $0x16c] sm:$0xff]
      %v5204 = vld [vmem:[%s4400 + $0x174] sm:$0xff]
      %5237 = vrot.lane.b32.xlu0 %v5173, 80
      %v5238 = vpop.permute.xlu0 %5237
      %5239 = vrot.lane.b32.xlu0 %v5174, 80
      %v5240 = vpop.permute.xlu0 %5239
      %5241 = vrot.lane.b32.xlu0 %v5175, 80
      %v5242 = vpop.permute.xlu0 %5241
      %5243 = vrot.lane.b32.xlu0 %v5176, 80
      %v5244 = vpop.permute.xlu0 %5243
      %5245 = vrot.lane.b32.xlu0 %v5177, 80
      %v5246 = vpop.permute.xlu0 %5245
      %5247 = vrot.lane.b32.xlu0 %v5178, 80
      %v5248 = vpop.permute.xlu0 %5247
      %5249 = vrot.lane.b32.xlu0 %v5179, 80
      %v5250 = vpop.permute.xlu0 %5249
      %5251 = vrot.lane.b32.xlu0 %v5180, 80
      %v5252 = vpop.permute.xlu0 %5251
      %5253 = vrot.lane.b32.xlu0 %v5181, 80
      %v5254 = vpop.permute.xlu0 %5253
      %5255 = vrot.lane.b32.xlu0 %v5182, 80
      %v5256 = vpop.permute.xlu0 %5255
      %5257 = vrot.lane.b32.xlu0 %v5183, 80
      %v5258 = vpop.permute.xlu0 %5257
      %5259 = vrot.lane.b32.xlu0 %v5184, 80
      %v5260 = vpop.permute.xlu0 %5259
      %5261 = vrot.lane.b32.xlu0 %v5185, 80
      %v5262 = vpop.permute.xlu0 %5261
      %5263 = vrot.lane.b32.xlu0 %v5186, 80
      %v5264 = vpop.permute.xlu0 %5263
      %5265 = vrot.lane.b32.xlu0 %v5187, 80
      %v5266 = vpop.permute.xlu0 %5265
      %5267 = vrot.lane.b32.xlu0 %v5188, 80
      %v5268 = vpop.permute.xlu0 %5267
      %5269 = vrot.lane.b32.xlu0 %v5189, 80
      %v5270 = vpop.permute.xlu0 %5269
      %5271 = vrot.lane.b32.xlu0 %v5190, 80
      %v5272 = vpop.permute.xlu0 %5271
      %5273 = vrot.lane.b32.xlu0 %v5191, 80
      %v5274 = vpop.permute.xlu0 %5273
      %5275 = vrot.lane.b32.xlu0 %v5192, 80
      %v5276 = vpop.permute.xlu0 %5275
      %5277 = vrot.lane.b32.xlu0 %v5193, 80
      %v5278 = vpop.permute.xlu0 %5277
      %5279 = vrot.lane.b32.xlu0 %v5194, 80
      %v5280 = vpop.permute.xlu0 %5279
      %5281 = vrot.lane.b32.xlu0 %v5195, 80
      %v5282 = vpop.permute.xlu0 %5281
      %5283 = vrot.lane.b32.xlu0 %v5196, 80
      %v5284 = vpop.permute.xlu0 %5283
      %5285 = vrot.lane.b32.xlu0 %v5197, 80
      %v5286 = vpop.permute.xlu0 %5285
      %5287 = vrot.lane.b32.xlu0 %v5198, 80
      %v5288 = vpop.permute.xlu0 %5287
      %5289 = vrot.lane.b32.xlu0 %v5199, 80
      %v5290 = vpop.permute.xlu0 %5289
      %5291 = vrot.lane.b32.xlu0 %v5200, 80
      %v5292 = vpop.permute.xlu0 %5291
      %5293 = vrot.lane.b32.xlu0 %v5201, 80
      %v5294 = vpop.permute.xlu0 %5293
      %5295 = vrot.lane.b32.xlu0 %v5202, 80
      %v5296 = vpop.permute.xlu0 %5295
      %5297 = vrot.lane.b32.xlu0 %v5203, 80
      %v5298 = vpop.permute.xlu0 %5297
      %5299 = vrot.lane.b32.xlu0 %v5204, 80
      %v5300 = vpop.permute.xlu0 %5299
      %vm5333 = vcmask 687744
      %5334 = vst.msk [vmem:[#allocation5] sm:$0xff] %vm5333, %v5238
      %5335 = vst.msk [vmem:[#allocation5 + $0x10] sm:$0xff] %vm5333, %v5240
      %5336 = vst.msk [vmem:[#allocation5 + $0x20] sm:$0xff] %vm5333, %v5242
      %5337 = vst.msk [vmem:[#allocation5 + $0x30] sm:$0xff] %vm5333, %v5244
      %5338 = vst.msk [vmem:[#allocation5 + $0x40] sm:$0xff] %vm5333, %v5246
      %5339 = vst.msk [vmem:[#allocation5 + $0x50] sm:$0xff] %vm5333, %v5248
      %5340 = vst.msk [vmem:[#allocation5 + $0x60] sm:$0xff] %vm5333, %v5250
      %5341 = vst.msk [vmem:[#allocation5 + $0x70] sm:$0xff] %vm5333, %v5252
      %5342 = vst.msk [vmem:[#allocation5 + $0x80] sm:$0xff] %vm5333, %v5254
      %5343 = vst.msk [vmem:[#allocation5 + $0x90] sm:$0xff] %vm5333, %v5256
      %5344 = vst.msk [vmem:[#allocation5 + $0xa0] sm:$0xff] %vm5333, %v5258
      %5345 = vst.msk [vmem:[#allocation5 + $0xb0] sm:$0xff] %vm5333, %v5260
      %5346 = vst.msk [vmem:[#allocation5 + $0xc0] sm:$0xff] %vm5333, %v5262
      %5347 = vst.msk [vmem:[#allocation5 + $0xd0] sm:$0xff] %vm5333, %v5264
      %5348 = vst.msk [vmem:[#allocation5 + $0xe0] sm:$0xff] %vm5333, %v5266
      %5349 = vst.msk [vmem:[#allocation5 + $0xf0] sm:$0xff] %vm5333, %v5268
      %5350 = vst.msk [vmem:[#allocation5 + $0x100] sm:$0xff] %vm5333, %v5270
      %5351 = vst.msk [vmem:[#allocation5 + $0x110] sm:$0xff] %vm5333, %v5272
      %5352 = vst.msk [vmem:[#allocation5 + $0x120] sm:$0xff] %vm5333, %v5274
      %5353 = vst.msk [vmem:[#allocation5 + $0x130] sm:$0xff] %vm5333, %v5276
      %5354 = vst.msk [vmem:[#allocation5 + $0x140] sm:$0xff] %vm5333, %v5278
      %5355 = vst.msk [vmem:[#allocation5 + $0x150] sm:$0xff] %vm5333, %v5280
      %5356 = vst.msk [vmem:[#allocation5 + $0x160] sm:$0xff] %vm5333, %v5282
      %5357 = vst.msk [vmem:[#allocation5 + $0x170] sm:$0xff] %vm5333, %v5284
      %5358 = vst.msk [vmem:[#allocation5 + $0x180] sm:$0xff] %vm5333, %v5286
      %5359 = vst.msk [vmem:[#allocation5 + $0x190] sm:$0xff] %vm5333, %v5288
      %5360 = vst.msk [vmem:[#allocation5 + $0x1a0] sm:$0xff] %vm5333, %v5290
      %5361 = vst.msk [vmem:[#allocation5 + $0x1b0] sm:$0xff] %vm5333, %v5292
      %5362 = vst.msk [vmem:[#allocation5 + $0x1c0] sm:$0xff] %vm5333, %v5294
      %5363 = vst.msk [vmem:[#allocation5 + $0x1d0] sm:$0xff] %vm5333, %v5296
      %5364 = vst.msk [vmem:[#allocation5 + $0x1e0] sm:$0xff] %vm5333, %v5298
      %5365 = vst.msk [vmem:[#allocation5 + $0x1f0] sm:$0xff] %vm5333, %v5300
      %v5366 = vld [vmem:[%s805] sm:$0xff]
      %v5367 = vld [vmem:[%s805 + $0x8] sm:$0xff]
      %v5368 = vld [vmem:[%s805 + $0x18] sm:$0xff]
      %v5369 = vld [vmem:[%s805 + $0x20] sm:$0xff]
      %v5370 = vld [vmem:[%s805 + $0x30] sm:$0xff]
      %v5371 = vld [vmem:[%s805 + $0x38] sm:$0xff]
      %v5372 = vld [vmem:[%s805 + $0x48] sm:$0xff]
      %v5373 = vld [vmem:[%s805 + $0x50] sm:$0xff]
      %v5374 = vld [vmem:[%s805 + $0x60] sm:$0xff]
      %v5375 = vld [vmem:[%s805 + $0x68] sm:$0xff]
      %v5376 = vld [vmem:[%s805 + $0x78] sm:$0xff]
      %v5377 = vld [vmem:[%s805 + $0x80] sm:$0xff]
      %v5378 = vld [vmem:[%s805 + $0x90] sm:$0xff]
      %v5379 = vld [vmem:[%s805 + $0x98] sm:$0xff]
      %v5380 = vld [vmem:[%s805 + $0xa8] sm:$0xff]
      %v5381 = vld [vmem:[%s805 + $0xb0] sm:$0xff]
      %v5382 = vld [vmem:[%s805 + $0xc0] sm:$0xff]
      %v5383 = vld [vmem:[%s805 + $0xc8] sm:$0xff]
      %v5384 = vld [vmem:[%s805 + $0xd8] sm:$0xff]
      %v5385 = vld [vmem:[%s805 + $0xe0] sm:$0xff]
      %v5386 = vld [vmem:[%s805 + $0xf0] sm:$0xff]
      %v5387 = vld [vmem:[%s805 + $0xf8] sm:$0xff]
      %v5388 = vld [vmem:[%s805 + $0x108] sm:$0xff]
      %v5389 = vld [vmem:[%s805 + $0x110] sm:$0xff]
      %v5390 = vld [vmem:[%s805 + $0x120] sm:$0xff]
      %v5391 = vld [vmem:[%s805 + $0x128] sm:$0xff]
      %v5392 = vld [vmem:[%s805 + $0x138] sm:$0xff]
      %v5393 = vld [vmem:[%s805 + $0x140] sm:$0xff]
      %v5394 = vld [vmem:[%s805 + $0x150] sm:$0xff]
      %v5395 = vld [vmem:[%s805 + $0x158] sm:$0xff]
      %v5396 = vld [vmem:[%s805 + $0x168] sm:$0xff]
      %v5397 = vld [vmem:[%s805 + $0x170] sm:$0xff]
      %5430 = vrot.lane.b32.xlu0 %v5366, 84
      %v5431 = vpop.permute.xlu0 %5430
      %5432 = vrot.lane.b32.xlu0 %v5367, 84
      %v5433 = vpop.permute.xlu0 %5432
      %5434 = vrot.lane.b32.xlu0 %v5368, 84
      %v5435 = vpop.permute.xlu0 %5434
      %5436 = vrot.lane.b32.xlu0 %v5369, 84
      %v5437 = vpop.permute.xlu0 %5436
      %5438 = vrot.lane.b32.xlu0 %v5370, 84
      %v5439 = vpop.permute.xlu0 %5438
      %5440 = vrot.lane.b32.xlu0 %v5371, 84
      %v5441 = vpop.permute.xlu0 %5440
      %5442 = vrot.lane.b32.xlu0 %v5372, 84
      %v5443 = vpop.permute.xlu0 %5442
      %5444 = vrot.lane.b32.xlu0 %v5373, 84
      %v5445 = vpop.permute.xlu0 %5444
      %5446 = vrot.lane.b32.xlu0 %v5374, 84
      %v5447 = vpop.permute.xlu0 %5446
      %5448 = vrot.lane.b32.xlu0 %v5375, 84
      %v5449 = vpop.permute.xlu0 %5448
      %5450 = vrot.lane.b32.xlu0 %v5376, 84
      %v5451 = vpop.permute.xlu0 %5450
      %5452 = vrot.lane.b32.xlu0 %v5377, 84
      %v5453 = vpop.permute.xlu0 %5452
      %5454 = vrot.lane.b32.xlu0 %v5378, 84
      %v5455 = vpop.permute.xlu0 %5454
      %5456 = vrot.lane.b32.xlu0 %v5379, 84
      %v5457 = vpop.permute.xlu0 %5456
      %5458 = vrot.lane.b32.xlu0 %v5380, 84
      %v5459 = vpop.permute.xlu0 %5458
      %5460 = vrot.lane.b32.xlu0 %v5381, 84
      %v5461 = vpop.permute.xlu0 %5460
      %5462 = vrot.lane.b32.xlu0 %v5382, 84
      %v5463 = vpop.permute.xlu0 %5462
      %5464 = vrot.lane.b32.xlu0 %v5383, 84
      %v5465 = vpop.permute.xlu0 %5464
      %5466 = vrot.lane.b32.xlu0 %v5384, 84
      %v5467 = vpop.permute.xlu0 %5466
      %5468 = vrot.lane.b32.xlu0 %v5385, 84
      %v5469 = vpop.permute.xlu0 %5468
      %5470 = vrot.lane.b32.xlu0 %v5386, 84
      %v5471 = vpop.permute.xlu0 %5470
      %5472 = vrot.lane.b32.xlu0 %v5387, 84
      %v5473 = vpop.permute.xlu0 %5472
      %5474 = vrot.lane.b32.xlu0 %v5388, 84
      %v5475 = vpop.permute.xlu0 %5474
      %5476 = vrot.lane.b32.xlu0 %v5389, 84
      %v5477 = vpop.permute.xlu0 %5476
      %5478 = vrot.lane.b32.xlu0 %v5390, 84
      %v5479 = vpop.permute.xlu0 %5478
      %5480 = vrot.lane.b32.xlu0 %v5391, 84
      %v5481 = vpop.permute.xlu0 %5480
      %5482 = vrot.lane.b32.xlu0 %v5392, 84
      %v5483 = vpop.permute.xlu0 %5482
      %5484 = vrot.lane.b32.xlu0 %v5393, 84
      %v5485 = vpop.permute.xlu0 %5484
      %5486 = vrot.lane.b32.xlu0 %v5394, 84
      %v5487 = vpop.permute.xlu0 %5486
      %5488 = vrot.lane.b32.xlu0 %v5395, 84
      %v5489 = vpop.permute.xlu0 %5488
      %5490 = vrot.lane.b32.xlu0 %v5396, 84
      %v5491 = vpop.permute.xlu0 %5490
      %5492 = vrot.lane.b32.xlu0 %v5397, 84
      %v5493 = vpop.permute.xlu0 %5492
      %vm5526 = vcmask 720544
      %5527 = vst.msk [vmem:[#allocation5] sm:$0xff] %vm5526, %v5431
      %5528 = vst.msk [vmem:[#allocation5 + $0x10] sm:$0xff] %vm5526, %v5433
      %5529 = vst.msk [vmem:[#allocation5 + $0x20] sm:$0xff] %vm5526, %v5435
      %5530 = vst.msk [vmem:[#allocation5 + $0x30] sm:$0xff] %vm5526, %v5437
      %5531 = vst.msk [vmem:[#allocation5 + $0x40] sm:$0xff] %vm5526, %v5439
      %5532 = vst.msk [vmem:[#allocation5 + $0x50] sm:$0xff] %vm5526, %v5441
      %5533 = vst.msk [vmem:[#allocation5 + $0x60] sm:$0xff] %vm5526, %v5443
      %5534 = vst.msk [vmem:[#allocation5 + $0x70] sm:$0xff] %vm5526, %v5445
      %5535 = vst.msk [vmem:[#allocation5 + $0x80] sm:$0xff] %vm5526, %v5447
      %5536 = vst.msk [vmem:[#allocation5 + $0x90] sm:$0xff] %vm5526, %v5449
      %5537 = vst.msk [vmem:[#allocation5 + $0xa0] sm:$0xff] %vm5526, %v5451
      %5538 = vst.msk [vmem:[#allocation5 + $0xb0] sm:$0xff] %vm5526, %v5453
      %5539 = vst.msk [vmem:[#allocation5 + $0xc0] sm:$0xff] %vm5526, %v5455
      %5540 = vst.msk [vmem:[#allocation5 + $0xd0] sm:$0xff] %vm5526, %v5457
      %5541 = vst.msk [vmem:[#allocation5 + $0xe0] sm:$0xff] %vm5526, %v5459
      %5542 = vst.msk [vmem:[#allocation5 + $0xf0] sm:$0xff] %vm5526, %v5461
      %5543 = vst.msk [vmem:[#allocation5 + $0x100] sm:$0xff] %vm5526, %v5463
      %5544 = vst.msk [vmem:[#allocation5 + $0x110] sm:$0xff] %vm5526, %v5465
      %5545 = vst.msk [vmem:[#allocation5 + $0x120] sm:$0xff] %vm5526, %v5467
      %5546 = vst.msk [vmem:[#allocation5 + $0x130] sm:$0xff] %vm5526, %v5469
      %5547 = vst.msk [vmem:[#allocation5 + $0x140] sm:$0xff] %vm5526, %v5471
      %5548 = vst.msk [vmem:[#allocation5 + $0x150] sm:$0xff] %vm5526, %v5473
      %5549 = vst.msk [vmem:[#allocation5 + $0x160] sm:$0xff] %vm5526, %v5475
      %5550 = vst.msk [vmem:[#allocation5 + $0x170] sm:$0xff] %vm5526, %v5477
      %5551 = vst.msk [vmem:[#allocation5 + $0x180] sm:$0xff] %vm5526, %v5479
      %5552 = vst.msk [vmem:[#allocation5 + $0x190] sm:$0xff] %vm5526, %v5481
      %5553 = vst.msk [vmem:[#allocation5 + $0x1a0] sm:$0xff] %vm5526, %v5483
      %5554 = vst.msk [vmem:[#allocation5 + $0x1b0] sm:$0xff] %vm5526, %v5485
      %5555 = vst.msk [vmem:[#allocation5 + $0x1c0] sm:$0xff] %vm5526, %v5487
      %5556 = vst.msk [vmem:[#allocation5 + $0x1d0] sm:$0xff] %vm5526, %v5489
      %5557 = vst.msk [vmem:[#allocation5 + $0x1e0] sm:$0xff] %vm5526, %v5491
      %5558 = vst.msk [vmem:[#allocation5 + $0x1f0] sm:$0xff] %vm5526, %v5493
      %v5559 = vld [vmem:[%s805 + $0x1] sm:$0xff]
      %v5560 = vld [vmem:[%s805 + $0x9] sm:$0xff]
      %v5561 = vld [vmem:[%s805 + $0x19] sm:$0xff]
      %v5562 = vld [vmem:[%s805 + $0x21] sm:$0xff]
      %v5563 = vld [vmem:[%s805 + $0x31] sm:$0xff]
      %v5564 = vld [vmem:[%s805 + $0x39] sm:$0xff]
      %v5565 = vld [vmem:[%s805 + $0x49] sm:$0xff]
      %v5566 = vld [vmem:[%s805 + $0x51] sm:$0xff]
      %v5567 = vld [vmem:[%s805 + $0x61] sm:$0xff]
      %v5568 = vld [vmem:[%s805 + $0x69] sm:$0xff]
      %v5569 = vld [vmem:[%s805 + $0x79] sm:$0xff]
      %v5570 = vld [vmem:[%s805 + $0x81] sm:$0xff]
      %v5571 = vld [vmem:[%s805 + $0x91] sm:$0xff]
      %v5572 = vld [vmem:[%s805 + $0x99] sm:$0xff]
      %v5573 = vld [vmem:[%s805 + $0xa9] sm:$0xff]
      %v5574 = vld [vmem:[%s805 + $0xb1] sm:$0xff]
      %v5575 = vld [vmem:[%s805 + $0xc1] sm:$0xff]
      %v5576 = vld [vmem:[%s805 + $0xc9] sm:$0xff]
      %v5577 = vld [vmem:[%s805 + $0xd9] sm:$0xff]
      %v5578 = vld [vmem:[%s805 + $0xe1] sm:$0xff]
      %v5579 = vld [vmem:[%s805 + $0xf1] sm:$0xff]
      %v5580 = vld [vmem:[%s805 + $0xf9] sm:$0xff]
      %v5581 = vld [vmem:[%s805 + $0x109] sm:$0xff]
      %v5582 = vld [vmem:[%s805 + $0x111] sm:$0xff]
      %v5583 = vld [vmem:[%s805 + $0x121] sm:$0xff]
      %v5584 = vld [vmem:[%s805 + $0x129] sm:$0xff]
      %v5585 = vld [vmem:[%s805 + $0x139] sm:$0xff]
      %v5586 = vld [vmem:[%s805 + $0x141] sm:$0xff]
      %v5587 = vld [vmem:[%s805 + $0x151] sm:$0xff]
      %v5588 = vld [vmem:[%s805 + $0x159] sm:$0xff]
      %v5589 = vld [vmem:[%s805 + $0x169] sm:$0xff]
      %v5590 = vld [vmem:[%s805 + $0x171] sm:$0xff]
      %5623 = vrot.lane.b32.xlu0 %v5559, 88
      %v5624 = vpop.permute.xlu0 %5623
      %5625 = vrot.lane.b32.xlu0 %v5560, 88
      %v5626 = vpop.permute.xlu0 %5625
      %5627 = vrot.lane.b32.xlu0 %v5561, 88
      %v5628 = vpop.permute.xlu0 %5627
      %5629 = vrot.lane.b32.xlu0 %v5562, 88
      %v5630 = vpop.permute.xlu0 %5629
      %5631 = vrot.lane.b32.xlu0 %v5563, 88
      %v5632 = vpop.permute.xlu0 %5631
      %5633 = vrot.lane.b32.xlu0 %v5564, 88
      %v5634 = vpop.permute.xlu0 %5633
      %5635 = vrot.lane.b32.xlu0 %v5565, 88
      %v5636 = vpop.permute.xlu0 %5635
      %5637 = vrot.lane.b32.xlu0 %v5566, 88
      %v5638 = vpop.permute.xlu0 %5637
      %5639 = vrot.lane.b32.xlu0 %v5567, 88
      %v5640 = vpop.permute.xlu0 %5639
      %5641 = vrot.lane.b32.xlu0 %v5568, 88
      %v5642 = vpop.permute.xlu0 %5641
      %5643 = vrot.lane.b32.xlu0 %v5569, 88
      %v5644 = vpop.permute.xlu0 %5643
      %5645 = vrot.lane.b32.xlu0 %v5570, 88
      %v5646 = vpop.permute.xlu0 %5645
      %5647 = vrot.lane.b32.xlu0 %v5571, 88
      %v5648 = vpop.permute.xlu0 %5647
      %5649 = vrot.lane.b32.xlu0 %v5572, 88
      %v5650 = vpop.permute.xlu0 %5649
      %5651 = vrot.lane.b32.xlu0 %v5573, 88
      %v5652 = vpop.permute.xlu0 %5651
      %5653 = vrot.lane.b32.xlu0 %v5574, 88
      %v5654 = vpop.permute.xlu0 %5653
      %5655 = vrot.lane.b32.xlu0 %v5575, 88
      %v5656 = vpop.permute.xlu0 %5655
      %5657 = vrot.lane.b32.xlu0 %v5576, 88
      %v5658 = vpop.permute.xlu0 %5657
      %5659 = vrot.lane.b32.xlu0 %v5577, 88
      %v5660 = vpop.permute.xlu0 %5659
      %5661 = vrot.lane.b32.xlu0 %v5578, 88
      %v5662 = vpop.permute.xlu0 %5661
      %5663 = vrot.lane.b32.xlu0 %v5579, 88
      %v5664 = vpop.permute.xlu0 %5663
      %5665 = vrot.lane.b32.xlu0 %v5580, 88
      %v5666 = vpop.permute.xlu0 %5665
      %5667 = vrot.lane.b32.xlu0 %v5581, 88
      %v5668 = vpop.permute.xlu0 %5667
      %5669 = vrot.lane.b32.xlu0 %v5582, 88
      %v5670 = vpop.permute.xlu0 %5669
      %5671 = vrot.lane.b32.xlu0 %v5583, 88
      %v5672 = vpop.permute.xlu0 %5671
      %5673 = vrot.lane.b32.xlu0 %v5584, 88
      %v5674 = vpop.permute.xlu0 %5673
      %5675 = vrot.lane.b32.xlu0 %v5585, 88
      %v5676 = vpop.permute.xlu0 %5675
      %5677 = vrot.lane.b32.xlu0 %v5586, 88
      %v5678 = vpop.permute.xlu0 %5677
      %5679 = vrot.lane.b32.xlu0 %v5587, 88
      %v5680 = vpop.permute.xlu0 %5679
      %5681 = vrot.lane.b32.xlu0 %v5588, 88
      %v5682 = vpop.permute.xlu0 %5681
      %5683 = vrot.lane.b32.xlu0 %v5589, 88
      %v5684 = vpop.permute.xlu0 %5683
      %5685 = vrot.lane.b32.xlu0 %v5590, 88
      %v5686 = vpop.permute.xlu0 %5685
      %vm5719 = vcmask 753344
      %5720 = vst.msk [vmem:[#allocation5] sm:$0xff] %vm5719, %v5624
      %5721 = vst.msk [vmem:[#allocation5 + $0x10] sm:$0xff] %vm5719, %v5626
      %5722 = vst.msk [vmem:[#allocation5 + $0x20] sm:$0xff] %vm5719, %v5628
      %5723 = vst.msk [vmem:[#allocation5 + $0x30] sm:$0xff] %vm5719, %v5630
      %5724 = vst.msk [vmem:[#allocation5 + $0x40] sm:$0xff] %vm5719, %v5632
      %5725 = vst.msk [vmem:[#allocation5 + $0x50] sm:$0xff] %vm5719, %v5634
      %5726 = vst.msk [vmem:[#allocation5 + $0x60] sm:$0xff] %vm5719, %v5636
      %5727 = vst.msk [vmem:[#allocation5 + $0x70] sm:$0xff] %vm5719, %v5638
      %5728 = vst.msk [vmem:[#allocation5 + $0x80] sm:$0xff] %vm5719, %v5640
      %5729 = vst.msk [vmem:[#allocation5 + $0x90] sm:$0xff] %vm5719, %v5642
      %5730 = vst.msk [vmem:[#allocation5 + $0xa0] sm:$0xff] %vm5719, %v5644
      %5731 = vst.msk [vmem:[#allocation5 + $0xb0] sm:$0xff] %vm5719, %v5646
      %5732 = vst.msk [vmem:[#allocation5 + $0xc0] sm:$0xff] %vm5719, %v5648
      %5733 = vst.msk [vmem:[#allocation5 + $0xd0] sm:$0xff] %vm5719, %v5650
      %5734 = vst.msk [vmem:[#allocation5 + $0xe0] sm:$0xff] %vm5719, %v5652
      %5735 = vst.msk [vmem:[#allocation5 + $0xf0] sm:$0xff] %vm5719, %v5654
      %5736 = vst.msk [vmem:[#allocation5 + $0x100] sm:$0xff] %vm5719, %v5656
      %5737 = vst.msk [vmem:[#allocation5 + $0x110] sm:$0xff] %vm5719, %v5658
      %5738 = vst.msk [vmem:[#allocation5 + $0x120] sm:$0xff] %vm5719, %v5660
      %5739 = vst.msk [vmem:[#allocation5 + $0x130] sm:$0xff] %vm5719, %v5662
      %5740 = vst.msk [vmem:[#allocation5 + $0x140] sm:$0xff] %vm5719, %v5664
      %5741 = vst.msk [vmem:[#allocation5 + $0x150] sm:$0xff] %vm5719, %v5666
      %5742 = vst.msk [vmem:[#allocation5 + $0x160] sm:$0xff] %vm5719, %v5668
      %5743 = vst.msk [vmem:[#allocation5 + $0x170] sm:$0xff] %vm5719, %v5670
      %5744 = vst.msk [vmem:[#allocation5 + $0x180] sm:$0xff] %vm5719, %v5672
      %5745 = vst.msk [vmem:[#allocation5 + $0x190] sm:$0xff] %vm5719, %v5674
      %5746 = vst.msk [vmem:[#allocation5 + $0x1a0] sm:$0xff] %vm5719, %v5676
      %5747 = vst.msk [vmem:[#allocation5 + $0x1b0] sm:$0xff] %vm5719, %v5678
      %5748 = vst.msk [vmem:[#allocation5 + $0x1c0] sm:$0xff] %vm5719, %v5680
      %5749 = vst.msk [vmem:[#allocation5 + $0x1d0] sm:$0xff] %vm5719, %v5682
      %5750 = vst.msk [vmem:[#allocation5 + $0x1e0] sm:$0xff] %vm5719, %v5684
      %5751 = vst.msk [vmem:[#allocation5 + $0x1f0] sm:$0xff] %vm5719, %v5686
      %v5752 = vld [vmem:[%s805 + $0x2] sm:$0xff]
      %v5753 = vld [vmem:[%s805 + $0xa] sm:$0xff]
      %v5754 = vld [vmem:[%s805 + $0x1a] sm:$0xff]
      %v5755 = vld [vmem:[%s805 + $0x22] sm:$0xff]
      %v5756 = vld [vmem:[%s805 + $0x32] sm:$0xff]
      %v5757 = vld [vmem:[%s805 + $0x3a] sm:$0xff]
      %v5758 = vld [vmem:[%s805 + $0x4a] sm:$0xff]
      %v5759 = vld [vmem:[%s805 + $0x52] sm:$0xff]
      %v5760 = vld [vmem:[%s805 + $0x62] sm:$0xff]
      %v5761 = vld [vmem:[%s805 + $0x6a] sm:$0xff]
      %v5762 = vld [vmem:[%s805 + $0x7a] sm:$0xff]
      %v5763 = vld [vmem:[%s805 + $0x82] sm:$0xff]
      %v5764 = vld [vmem:[%s805 + $0x92] sm:$0xff]
      %v5765 = vld [vmem:[%s805 + $0x9a] sm:$0xff]
      %v5766 = vld [vmem:[%s805 + $0xaa] sm:$0xff]
      %v5767 = vld [vmem:[%s805 + $0xb2] sm:$0xff]
      %v5768 = vld [vmem:[%s805 + $0xc2] sm:$0xff]
      %v5769 = vld [vmem:[%s805 + $0xca] sm:$0xff]
      %v5770 = vld [vmem:[%s805 + $0xda] sm:$0xff]
      %v5771 = vld [vmem:[%s805 + $0xe2] sm:$0xff]
      %v5772 = vld [vmem:[%s805 + $0xf2] sm:$0xff]
      %v5773 = vld [vmem:[%s805 + $0xfa] sm:$0xff]
      %v5774 = vld [vmem:[%s805 + $0x10a] sm:$0xff]
      %v5775 = vld [vmem:[%s805 + $0x112] sm:$0xff]
      %v5776 = vld [vmem:[%s805 + $0x122] sm:$0xff]
      %v5777 = vld [vmem:[%s805 + $0x12a] sm:$0xff]
      %v5778 = vld [vmem:[%s805 + $0x13a] sm:$0xff]
      %v5779 = vld [vmem:[%s805 + $0x142] sm:$0xff]
      %v5780 = vld [vmem:[%s805 + $0x152] sm:$0xff]
      %v5781 = vld [vmem:[%s805 + $0x15a] sm:$0xff]
      %v5782 = vld [vmem:[%s805 + $0x16a] sm:$0xff]
      %v5783 = vld [vmem:[%s805 + $0x172] sm:$0xff]
      %5816 = vrot.lane.b32.xlu0 %v5752, 92
      %v5817 = vpop.permute.xlu0 %5816
      %5818 = vrot.lane.b32.xlu0 %v5753, 92
      %v5819 = vpop.permute.xlu0 %5818
      %5820 = vrot.lane.b32.xlu0 %v5754, 92
      %v5821 = vpop.permute.xlu0 %5820
      %5822 = vrot.lane.b32.xlu0 %v5755, 92
      %v5823 = vpop.permute.xlu0 %5822
      %5824 = vrot.lane.b32.xlu0 %v5756, 92
      %v5825 = vpop.permute.xlu0 %5824
      %5826 = vrot.lane.b32.xlu0 %v5757, 92
      %v5827 = vpop.permute.xlu0 %5826
      %5828 = vrot.lane.b32.xlu0 %v5758, 92
      %v5829 = vpop.permute.xlu0 %5828
      %5830 = vrot.lane.b32.xlu0 %v5759, 92
      %v5831 = vpop.permute.xlu0 %5830
      %5832 = vrot.lane.b32.xlu0 %v5760, 92
      %v5833 = vpop.permute.xlu0 %5832
      %5834 = vrot.lane.b32.xlu0 %v5761, 92
      %v5835 = vpop.permute.xlu0 %5834
      %5836 = vrot.lane.b32.xlu0 %v5762, 92
      %v5837 = vpop.permute.xlu0 %5836
      %5838 = vrot.lane.b32.xlu0 %v5763, 92
      %v5839 = vpop.permute.xlu0 %5838
      %5840 = vrot.lane.b32.xlu0 %v5764, 92
      %v5841 = vpop.permute.xlu0 %5840
      %5842 = vrot.lane.b32.xlu0 %v5765, 92
      %v5843 = vpop.permute.xlu0 %5842
      %5844 = vrot.lane.b32.xlu0 %v5766, 92
      %v5845 = vpop.permute.xlu0 %5844
      %5846 = vrot.lane.b32.xlu0 %v5767, 92
      %v5847 = vpop.permute.xlu0 %5846
      %5848 = vrot.lane.b32.xlu0 %v5768, 92
      %v5849 = vpop.permute.xlu0 %5848
      %5850 = vrot.lane.b32.xlu0 %v5769, 92
      %v5851 = vpop.permute.xlu0 %5850
      %5852 = vrot.lane.b32.xlu0 %v5770, 92
      %v5853 = vpop.permute.xlu0 %5852
      %5854 = vrot.lane.b32.xlu0 %v5771, 92
      %v5855 = vpop.permute.xlu0 %5854
      %5856 = vrot.lane.b32.xlu0 %v5772, 92
      %v5857 = vpop.permute.xlu0 %5856
      %5858 = vrot.lane.b32.xlu0 %v5773, 92
      %v5859 = vpop.permute.xlu0 %5858
      %5860 = vrot.lane.b32.xlu0 %v5774, 92
      %v5861 = vpop.permute.xlu0 %5860
      %5862 = vrot.lane.b32.xlu0 %v5775, 92
      %v5863 = vpop.permute.xlu0 %5862
      %5864 = vrot.lane.b32.xlu0 %v5776, 92
      %v5865 = vpop.permute.xlu0 %5864
      %5866 = vrot.lane.b32.xlu0 %v5777, 92
      %v5867 = vpop.permute.xlu0 %5866
      %5868 = vrot.lane.b32.xlu0 %v5778, 92
      %v5869 = vpop.permute.xlu0 %5868
      %5870 = vrot.lane.b32.xlu0 %v5779, 92
      %v5871 = vpop.permute.xlu0 %5870
      %5872 = vrot.lane.b32.xlu0 %v5780, 92
      %v5873 = vpop.permute.xlu0 %5872
      %5874 = vrot.lane.b32.xlu0 %v5781, 92
      %v5875 = vpop.permute.xlu0 %5874
      %5876 = vrot.lane.b32.xlu0 %v5782, 92
      %v5877 = vpop.permute.xlu0 %5876
      %5878 = vrot.lane.b32.xlu0 %v5783, 92
      %v5879 = vpop.permute.xlu0 %5878
      %vm5912 = vcmask 786144
      %5913 = vst.msk [vmem:[#allocation5] sm:$0xff] %vm5912, %v5817
      %5914 = vst.msk [vmem:[#allocation5 + $0x10] sm:$0xff] %vm5912, %v5819
      %5915 = vst.msk [vmem:[#allocation5 + $0x20] sm:$0xff] %vm5912, %v5821
      %5916 = vst.msk [vmem:[#allocation5 + $0x30] sm:$0xff] %vm5912, %v5823
      %5917 = vst.msk [vmem:[#allocation5 + $0x40] sm:$0xff] %vm5912, %v5825
      %5918 = vst.msk [vmem:[#allocation5 + $0x50] sm:$0xff] %vm5912, %v5827
      %5919 = vst.msk [vmem:[#allocation5 + $0x60] sm:$0xff] %vm5912, %v5829
      %5920 = vst.msk [vmem:[#allocation5 + $0x70] sm:$0xff] %vm5912, %v5831
      %5921 = vst.msk [vmem:[#allocation5 + $0x80] sm:$0xff] %vm5912, %v5833
      %5922 = vst.msk [vmem:[#allocation5 + $0x90] sm:$0xff] %vm5912, %v5835
      %5923 = vst.msk [vmem:[#allocation5 + $0xa0] sm:$0xff] %vm5912, %v5837
      %5924 = vst.msk [vmem:[#allocation5 + $0xb0] sm:$0xff] %vm5912, %v5839
      %5925 = vst.msk [vmem:[#allocation5 + $0xc0] sm:$0xff] %vm5912, %v5841
      %5926 = vst.msk [vmem:[#allocation5 + $0xd0] sm:$0xff] %vm5912, %v5843
      %5927 = vst.msk [vmem:[#allocation5 + $0xe0] sm:$0xff] %vm5912, %v5845
      %5928 = vst.msk [vmem:[#allocation5 + $0xf0] sm:$0xff] %vm5912, %v5847
      %5929 = vst.msk [vmem:[#allocation5 + $0x100] sm:$0xff] %vm5912, %v5849
      %5930 = vst.msk [vmem:[#allocation5 + $0x110] sm:$0xff] %vm5912, %v5851
      %5931 = vst.msk [vmem:[#allocation5 + $0x120] sm:$0xff] %vm5912, %v5853
      %5932 = vst.msk [vmem:[#allocation5 + $0x130] sm:$0xff] %vm5912, %v5855
      %5933 = vst.msk [vmem:[#allocation5 + $0x140] sm:$0xff] %vm5912, %v5857
      %5934 = vst.msk [vmem:[#allocation5 + $0x150] sm:$0xff] %vm5912, %v5859
      %5935 = vst.msk [vmem:[#allocation5 + $0x160] sm:$0xff] %vm5912, %v5861
      %5936 = vst.msk [vmem:[#allocation5 + $0x170] sm:$0xff] %vm5912, %v5863
      %5937 = vst.msk [vmem:[#allocation5 + $0x180] sm:$0xff] %vm5912, %v5865
      %5938 = vst.msk [vmem:[#allocation5 + $0x190] sm:$0xff] %vm5912, %v5867
      %5939 = vst.msk [vmem:[#allocation5 + $0x1a0] sm:$0xff] %vm5912, %v5869
      %5940 = vst.msk [vmem:[#allocation5 + $0x1b0] sm:$0xff] %vm5912, %v5871
      %5941 = vst.msk [vmem:[#allocation5 + $0x1c0] sm:$0xff] %vm5912, %v5873
      %5942 = vst.msk [vmem:[#allocation5 + $0x1d0] sm:$0xff] %vm5912, %v5875
      %5943 = vst.msk [vmem:[#allocation5 + $0x1e0] sm:$0xff] %vm5912, %v5877
      %5944 = vst.msk [vmem:[#allocation5 + $0x1f0] sm:$0xff] %vm5912, %v5879
      %v5945 = vld [vmem:[%s805 + $0x3] sm:$0xff]
      %v5946 = vld [vmem:[%s805 + $0xb] sm:$0xff]
      %v5947 = vld [vmem:[%s805 + $0x1b] sm:$0xff]
      %v5948 = vld [vmem:[%s805 + $0x23] sm:$0xff]
      %v5949 = vld [vmem:[%s805 + $0x33] sm:$0xff]
      %v5950 = vld [vmem:[%s805 + $0x3b] sm:$0xff]
      %v5951 = vld [vmem:[%s805 + $0x4b] sm:$0xff]
      %v5952 = vld [vmem:[%s805 + $0x53] sm:$0xff]
      %v5953 = vld [vmem:[%s805 + $0x63] sm:$0xff]
      %v5954 = vld [vmem:[%s805 + $0x6b] sm:$0xff]
      %v5955 = vld [vmem:[%s805 + $0x7b] sm:$0xff]
      %v5956 = vld [vmem:[%s805 + $0x83] sm:$0xff]
      %v5957 = vld [vmem:[%s805 + $0x93] sm:$0xff]
      %v5958 = vld [vmem:[%s805 + $0x9b] sm:$0xff]
      %v5959 = vld [vmem:[%s805 + $0xab] sm:$0xff]
      %v5960 = vld [vmem:[%s805 + $0xb3] sm:$0xff]
      %v5961 = vld [vmem:[%s805 + $0xc3] sm:$0xff]
      %v5962 = vld [vmem:[%s805 + $0xcb] sm:$0xff]
      %v5963 = vld [vmem:[%s805 + $0xdb] sm:$0xff]
      %v5964 = vld [vmem:[%s805 + $0xe3] sm:$0xff]
      %v5965 = vld [vmem:[%s805 + $0xf3] sm:$0xff]
      %v5966 = vld [vmem:[%s805 + $0xfb] sm:$0xff]
      %v5967 = vld [vmem:[%s805 + $0x10b] sm:$0xff]
      %v5968 = vld [vmem:[%s805 + $0x113] sm:$0xff]
      %v5969 = vld [vmem:[%s805 + $0x123] sm:$0xff]
      %v5970 = vld [vmem:[%s805 + $0x12b] sm:$0xff]
      %v5971 = vld [vmem:[%s805 + $0x13b] sm:$0xff]
      %v5972 = vld [vmem:[%s805 + $0x143] sm:$0xff]
      %v5973 = vld [vmem:[%s805 + $0x153] sm:$0xff]
      %v5974 = vld [vmem:[%s805 + $0x15b] sm:$0xff]
      %v5975 = vld [vmem:[%s805 + $0x16b] sm:$0xff]
      %v5976 = vld [vmem:[%s805 + $0x173] sm:$0xff]
      %6009 = vrot.lane.b32.xlu0 %v5945, 96
      %v6010 = vpop.permute.xlu0 %6009
      %6011 = vrot.lane.b32.xlu0 %v5946, 96
      %v6012 = vpop.permute.xlu0 %6011
      %6013 = vrot.lane.b32.xlu0 %v5947, 96
      %v6014 = vpop.permute.xlu0 %6013
      %6015 = vrot.lane.b32.xlu0 %v5948, 96
      %v6016 = vpop.permute.xlu0 %6015
      %6017 = vrot.lane.b32.xlu0 %v5949, 96
      %v6018 = vpop.permute.xlu0 %6017
      %6019 = vrot.lane.b32.xlu0 %v5950, 96
      %v6020 = vpop.permute.xlu0 %6019
      %6021 = vrot.lane.b32.xlu0 %v5951, 96
      %v6022 = vpop.permute.xlu0 %6021
      %6023 = vrot.lane.b32.xlu0 %v5952, 96
      %v6024 = vpop.permute.xlu0 %6023
      %6025 = vrot.lane.b32.xlu0 %v5953, 96
      %v6026 = vpop.permute.xlu0 %6025
      %6027 = vrot.lane.b32.xlu0 %v5954, 96
      %v6028 = vpop.permute.xlu0 %6027
      %6029 = vrot.lane.b32.xlu0 %v5955, 96
      %v6030 = vpop.permute.xlu0 %6029
      %6031 = vrot.lane.b32.xlu0 %v5956, 96
      %v6032 = vpop.permute.xlu0 %6031
      %6033 = vrot.lane.b32.xlu0 %v5957, 96
      %v6034 = vpop.permute.xlu0 %6033
      %6035 = vrot.lane.b32.xlu0 %v5958, 96
      %v6036 = vpop.permute.xlu0 %6035
      %6037 = vrot.lane.b32.xlu0 %v5959, 96
      %v6038 = vpop.permute.xlu0 %6037
      %6039 = vrot.lane.b32.xlu0 %v5960, 96
      %v6040 = vpop.permute.xlu0 %6039
      %6041 = vrot.lane.b32.xlu0 %v5961, 96
      %v6042 = vpop.permute.xlu0 %6041
      %6043 = vrot.lane.b32.xlu0 %v5962, 96
      %v6044 = vpop.permute.xlu0 %6043
      %6045 = vrot.lane.b32.xlu0 %v5963, 96
      %v6046 = vpop.permute.xlu0 %6045
      %6047 = vrot.lane.b32.xlu0 %v5964, 96
      %v6048 = vpop.permute.xlu0 %6047
      %6049 = vrot.lane.b32.xlu0 %v5965, 96
      %v6050 = vpop.permute.xlu0 %6049
      %6051 = vrot.lane.b32.xlu0 %v5966, 96
      %v6052 = vpop.permute.xlu0 %6051
      %6053 = vrot.lane.b32.xlu0 %v5967, 96
      %v6054 = vpop.permute.xlu0 %6053
      %6055 = vrot.lane.b32.xlu0 %v5968, 96
      %v6056 = vpop.permute.xlu0 %6055
      %6057 = vrot.lane.b32.xlu0 %v5969, 96
      %v6058 = vpop.permute.xlu0 %6057
      %6059 = vrot.lane.b32.xlu0 %v5970, 96
      %v6060 = vpop.permute.xlu0 %6059
      %6061 = vrot.lane.b32.xlu0 %v5971, 96
      %v6062 = vpop.permute.xlu0 %6061
      %6063 = vrot.lane.b32.xlu0 %v5972, 96
      %v6064 = vpop.permute.xlu0 %6063
      %6065 = vrot.lane.b32.xlu0 %v5973, 96
      %v6066 = vpop.permute.xlu0 %6065
      %6067 = vrot.lane.b32.xlu0 %v5974, 96
      %v6068 = vpop.permute.xlu0 %6067
      %6069 = vrot.lane.b32.xlu0 %v5975, 96
      %v6070 = vpop.permute.xlu0 %6069
      %6071 = vrot.lane.b32.xlu0 %v5976, 96
      %v6072 = vpop.permute.xlu0 %6071
      %vm6105 = vcmask 818944
      %6106 = vst.msk [vmem:[#allocation5] sm:$0xff] %vm6105, %v6010
      %6107 = vst.msk [vmem:[#allocation5 + $0x10] sm:$0xff] %vm6105, %v6012
      %6108 = vst.msk [vmem:[#allocation5 + $0x20] sm:$0xff] %vm6105, %v6014
      %6109 = vst.msk [vmem:[#allocation5 + $0x30] sm:$0xff] %vm6105, %v6016
      %6110 = vst.msk [vmem:[#allocation5 + $0x40] sm:$0xff] %vm6105, %v6018
      %6111 = vst.msk [vmem:[#allocation5 + $0x50] sm:$0xff] %vm6105, %v6020
      %6112 = vst.msk [vmem:[#allocation5 + $0x60] sm:$0xff] %vm6105, %v6022
      %6113 = vst.msk [vmem:[#allocation5 + $0x70] sm:$0xff] %vm6105, %v6024
      %6114 = vst.msk [vmem:[#allocation5 + $0x80] sm:$0xff] %vm6105, %v6026
      %6115 = vst.msk [vmem:[#allocation5 + $0x90] sm:$0xff] %vm6105, %v6028
      %6116 = vst.msk [vmem:[#allocation5 + $0xa0] sm:$0xff] %vm6105, %v6030
      %6117 = vst.msk [vmem:[#allocation5 + $0xb0] sm:$0xff] %vm6105, %v6032
      %6118 = vst.msk [vmem:[#allocation5 + $0xc0] sm:$0xff] %vm6105, %v6034
      %6119 = vst.msk [vmem:[#allocation5 + $0xd0] sm:$0xff] %vm6105, %v6036
      %6120 = vst.msk [vmem:[#allocation5 + $0xe0] sm:$0xff] %vm6105, %v6038
      %6121 = vst.msk [vmem:[#allocation5 + $0xf0] sm:$0xff] %vm6105, %v6040
      %6122 = vst.msk [vmem:[#allocation5 + $0x100] sm:$0xff] %vm6105, %v6042
      %6123 = vst.msk [vmem:[#allocation5 + $0x110] sm:$0xff] %vm6105, %v6044
      %6124 = vst.msk [vmem:[#allocation5 + $0x120] sm:$0xff] %vm6105, %v6046
      %6125 = vst.msk [vmem:[#allocation5 + $0x130] sm:$0xff] %vm6105, %v6048
      %6126 = vst.msk [vmem:[#allocation5 + $0x140] sm:$0xff] %vm6105, %v6050
      %6127 = vst.msk [vmem:[#allocation5 + $0x150] sm:$0xff] %vm6105, %v6052
      %6128 = vst.msk [vmem:[#allocation5 + $0x160] sm:$0xff] %vm6105, %v6054
      %6129 = vst.msk [vmem:[#allocation5 + $0x170] sm:$0xff] %vm6105, %v6056
      %6130 = vst.msk [vmem:[#allocation5 + $0x180] sm:$0xff] %vm6105, %v6058
      %6131 = vst.msk [vmem:[#allocation5 + $0x190] sm:$0xff] %vm6105, %v6060
      %6132 = vst.msk [vmem:[#allocation5 + $0x1a0] sm:$0xff] %vm6105, %v6062
      %6133 = vst.msk [vmem:[#allocation5 + $0x1b0] sm:$0xff] %vm6105, %v6064
      %6134 = vst.msk [vmem:[#allocation5 + $0x1c0] sm:$0xff] %vm6105, %v6066
      %6135 = vst.msk [vmem:[#allocation5 + $0x1d0] sm:$0xff] %vm6105, %v6068
      %6136 = vst.msk [vmem:[#allocation5 + $0x1e0] sm:$0xff] %vm6105, %v6070
      %6137 = vst.msk [vmem:[#allocation5 + $0x1f0] sm:$0xff] %vm6105, %v6072
      %v6138 = vld [vmem:[%s805 + $0x4] sm:$0xff]
      %v6139 = vld [vmem:[%s805 + $0xc] sm:$0xff]
      %v6140 = vld [vmem:[%s805 + $0x1c] sm:$0xff]
      %v6141 = vld [vmem:[%s805 + $0x24] sm:$0xff]
      %v6142 = vld [vmem:[%s805 + $0x34] sm:$0xff]
      %v6143 = vld [vmem:[%s805 + $0x3c] sm:$0xff]
      %v6144 = vld [vmem:[%s805 + $0x4c] sm:$0xff]
      %v6145 = vld [vmem:[%s805 + $0x54] sm:$0xff]
      %v6146 = vld [vmem:[%s805 + $0x64] sm:$0xff]
      %v6147 = vld [vmem:[%s805 + $0x6c] sm:$0xff]
      %v6148 = vld [vmem:[%s805 + $0x7c] sm:$0xff]
      %v6149 = vld [vmem:[%s805 + $0x84] sm:$0xff]
      %v6150 = vld [vmem:[%s805 + $0x94] sm:$0xff]
      %v6151 = vld [vmem:[%s805 + $0x9c] sm:$0xff]
      %v6152 = vld [vmem:[%s805 + $0xac] sm:$0xff]
      %v6153 = vld [vmem:[%s805 + $0xb4] sm:$0xff]
      %v6154 = vld [vmem:[%s805 + $0xc4] sm:$0xff]
      %v6155 = vld [vmem:[%s805 + $0xcc] sm:$0xff]
      %v6156 = vld [vmem:[%s805 + $0xdc] sm:$0xff]
      %v6157 = vld [vmem:[%s805 + $0xe4] sm:$0xff]
      %v6158 = vld [vmem:[%s805 + $0xf4] sm:$0xff]
      %v6159 = vld [vmem:[%s805 + $0xfc] sm:$0xff]
      %v6160 = vld [vmem:[%s805 + $0x10c] sm:$0xff]
      %v6161 = vld [vmem:[%s805 + $0x114] sm:$0xff]
      %v6162 = vld [vmem:[%s805 + $0x124] sm:$0xff]
      %v6163 = vld [vmem:[%s805 + $0x12c] sm:$0xff]
      %v6164 = vld [vmem:[%s805 + $0x13c] sm:$0xff]
      %v6165 = vld [vmem:[%s805 + $0x144] sm:$0xff]
      %v6166 = vld [vmem:[%s805 + $0x154] sm:$0xff]
      %v6167 = vld [vmem:[%s805 + $0x15c] sm:$0xff]
      %v6168 = vld [vmem:[%s805 + $0x16c] sm:$0xff]
      %v6169 = vld [vmem:[%s805 + $0x174] sm:$0xff]
      %6202 = vrot.lane.b32.xlu0 %v6138, 100
      %v6203 = vpop.permute.xlu0 %6202
      %6204 = vrot.lane.b32.xlu0 %v6139, 100
      %v6205 = vpop.permute.xlu0 %6204
      %6206 = vrot.lane.b32.xlu0 %v6140, 100
      %v6207 = vpop.permute.xlu0 %6206
      %6208 = vrot.lane.b32.xlu0 %v6141, 100
      %v6209 = vpop.permute.xlu0 %6208
      %6210 = vrot.lane.b32.xlu0 %v6142, 100
      %v6211 = vpop.permute.xlu0 %6210
      %6212 = vrot.lane.b32.xlu0 %v6143, 100
      %v6213 = vpop.permute.xlu0 %6212
      %6214 = vrot.lane.b32.xlu0 %v6144, 100
      %v6215 = vpop.permute.xlu0 %6214
      %6216 = vrot.lane.b32.xlu0 %v6145, 100
      %v6217 = vpop.permute.xlu0 %6216
      %6218 = vrot.lane.b32.xlu0 %v6146, 100
      %v6219 = vpop.permute.xlu0 %6218
      %6220 = vrot.lane.b32.xlu0 %v6147, 100
      %v6221 = vpop.permute.xlu0 %6220
      %6222 = vrot.lane.b32.xlu0 %v6148, 100
      %v6223 = vpop.permute.xlu0 %6222
      %6224 = vrot.lane.b32.xlu0 %v6149, 100
      %v6225 = vpop.permute.xlu0 %6224
      %6226 = vrot.lane.b32.xlu0 %v6150, 100
      %v6227 = vpop.permute.xlu0 %6226
      %6228 = vrot.lane.b32.xlu0 %v6151, 100
      %v6229 = vpop.permute.xlu0 %6228
      %6230 = vrot.lane.b32.xlu0 %v6152, 100
      %v6231 = vpop.permute.xlu0 %6230
      %6232 = vrot.lane.b32.xlu0 %v6153, 100
      %v6233 = vpop.permute.xlu0 %6232
      %6234 = vrot.lane.b32.xlu0 %v6154, 100
      %v6235 = vpop.permute.xlu0 %6234
      %6236 = vrot.lane.b32.xlu0 %v6155, 100
      %v6237 = vpop.permute.xlu0 %6236
      %6238 = vrot.lane.b32.xlu0 %v6156, 100
      %v6239 = vpop.permute.xlu0 %6238
      %6240 = vrot.lane.b32.xlu0 %v6157, 100
      %v6241 = vpop.permute.xlu0 %6240
      %6242 = vrot.lane.b32.xlu0 %v6158, 100
      %v6243 = vpop.permute.xlu0 %6242
      %6244 = vrot.lane.b32.xlu0 %v6159, 100
      %v6245 = vpop.permute.xlu0 %6244
      %6246 = vrot.lane.b32.xlu0 %v6160, 100
      %v6247 = vpop.permute.xlu0 %6246
      %6248 = vrot.lane.b32.xlu0 %v6161, 100
      %v6249 = vpop.permute.xlu0 %6248
      %6250 = vrot.lane.b32.xlu0 %v6162, 100
      %v6251 = vpop.permute.xlu0 %6250
      %6252 = vrot.lane.b32.xlu0 %v6163, 100
      %v6253 = vpop.permute.xlu0 %6252
      %6254 = vrot.lane.b32.xlu0 %v6164, 100
      %v6255 = vpop.permute.xlu0 %6254
      %6256 = vrot.lane.b32.xlu0 %v6165, 100
      %v6257 = vpop.permute.xlu0 %6256
      %6258 = vrot.lane.b32.xlu0 %v6166, 100
      %v6259 = vpop.permute.xlu0 %6258
      %6260 = vrot.lane.b32.xlu0 %v6167, 100
      %v6261 = vpop.permute.xlu0 %6260
      %6262 = vrot.lane.b32.xlu0 %v6168, 100
      %v6263 = vpop.permute.xlu0 %6262
      %6264 = vrot.lane.b32.xlu0 %v6169, 100
      %v6265 = vpop.permute.xlu0 %6264
      %vm6298 = vcmask 851744
      %6299 = vst.msk [vmem:[#allocation5] sm:$0xff] %vm6298, %v6203
      %6300 = vst.msk [vmem:[#allocation5 + $0x10] sm:$0xff] %vm6298, %v6205
      %6301 = vst.msk [vmem:[#allocation5 + $0x20] sm:$0xff] %vm6298, %v6207
      %6302 = vst.msk [vmem:[#allocation5 + $0x30] sm:$0xff] %vm6298, %v6209
      %6303 = vst.msk [vmem:[#allocation5 + $0x40] sm:$0xff] %vm6298, %v6211
      %6304 = vst.msk [vmem:[#allocation5 + $0x50] sm:$0xff] %vm6298, %v6213
      %6305 = vst.msk [vmem:[#allocation5 + $0x60] sm:$0xff] %vm6298, %v6215
      %6306 = vst.msk [vmem:[#allocation5 + $0x70] sm:$0xff] %vm6298, %v6217
      %6307 = vst.msk [vmem:[#allocation5 + $0x80] sm:$0xff] %vm6298, %v6219
      %6308 = vst.msk [vmem:[#allocation5 + $0x90] sm:$0xff] %vm6298, %v6221
      %6309 = vst.msk [vmem:[#allocation5 + $0xa0] sm:$0xff] %vm6298, %v6223
      %6310 = vst.msk [vmem:[#allocation5 + $0xb0] sm:$0xff] %vm6298, %v6225
      %6311 = vst.msk [vmem:[#allocation5 + $0xc0] sm:$0xff] %vm6298, %v6227
      %6312 = vst.msk [vmem:[#allocation5 + $0xd0] sm:$0xff] %vm6298, %v6229
      %6313 = vst.msk [vmem:[#allocation5 + $0xe0] sm:$0xff] %vm6298, %v6231
      %6314 = vst.msk [vmem:[#allocation5 + $0xf0] sm:$0xff] %vm6298, %v6233
      %6315 = vst.msk [vmem:[#allocation5 + $0x100] sm:$0xff] %vm6298, %v6235
      %6316 = vst.msk [vmem:[#allocation5 + $0x110] sm:$0xff] %vm6298, %v6237
      %6317 = vst.msk [vmem:[#allocation5 + $0x120] sm:$0xff] %vm6298, %v6239
      %6318 = vst.msk [vmem:[#allocation5 + $0x130] sm:$0xff] %vm6298, %v6241
      %6319 = vst.msk [vmem:[#allocation5 + $0x140] sm:$0xff] %vm6298, %v6243
      %6320 = vst.msk [vmem:[#allocation5 + $0x150] sm:$0xff] %vm6298, %v6245
      %6321 = vst.msk [vmem:[#allocation5 + $0x160] sm:$0xff] %vm6298, %v6247
      %6322 = vst.msk [vmem:[#allocation5 + $0x170] sm:$0xff] %vm6298, %v6249
      %6323 = vst.msk [vmem:[#allocation5 + $0x180] sm:$0xff] %vm6298, %v6251
      %6324 = vst.msk [vmem:[#allocation5 + $0x190] sm:$0xff] %vm6298, %v6253
      %6325 = vst.msk [vmem:[#allocation5 + $0x1a0] sm:$0xff] %vm6298, %v6255
      %6326 = vst.msk [vmem:[#allocation5 + $0x1b0] sm:$0xff] %vm6298, %v6257
      %6327 = vst.msk [vmem:[#allocation5 + $0x1c0] sm:$0xff] %vm6298, %v6259
      %6328 = vst.msk [vmem:[#allocation5 + $0x1d0] sm:$0xff] %vm6298, %v6261
      %6329 = vst.msk [vmem:[#allocation5 + $0x1e0] sm:$0xff] %vm6298, %v6263
      %6330 = vst.msk [vmem:[#allocation5 + $0x1f0] sm:$0xff] %vm6298, %v6265
      %s6331 = scalar_lea.vmem [#allocation4], 72
      %v6332 = vld [vmem:[%s6331] sm:$0xff]
      %v6333 = vld [vmem:[%s6331 + $0x8] sm:$0xff]
      %v6334 = vld [vmem:[%s6331 + $0x18] sm:$0xff]
      %v6335 = vld [vmem:[%s6331 + $0x20] sm:$0xff]
      %v6336 = vld [vmem:[%s6331 + $0x30] sm:$0xff]
      %v6337 = vld [vmem:[%s6331 + $0x38] sm:$0xff]
      %v6338 = vld [vmem:[%s6331 + $0x48] sm:$0xff]
      %v6339 = vld [vmem:[%s6331 + $0x50] sm:$0xff]
      %v6340 = vld [vmem:[%s6331 + $0x60] sm:$0xff]
      %v6341 = vld [vmem:[%s6331 + $0x68] sm:$0xff]
      %v6342 = vld [vmem:[%s6331 + $0x78] sm:$0xff]
      %v6343 = vld [vmem:[%s6331 + $0x80] sm:$0xff]
      %v6344 = vld [vmem:[%s6331 + $0x90] sm:$0xff]
      %v6345 = vld [vmem:[%s6331 + $0x98] sm:$0xff]
      %v6346 = vld [vmem:[%s6331 + $0xa8] sm:$0xff]
      %v6347 = vld [vmem:[%s6331 + $0xb0] sm:$0xff]
      %v6348 = vld [vmem:[%s6331 + $0xc0] sm:$0xff]
      %v6349 = vld [vmem:[%s6331 + $0xc8] sm:$0xff]
      %v6350 = vld [vmem:[%s6331 + $0xd8] sm:$0xff]
      %v6351 = vld [vmem:[%s6331 + $0xe0] sm:$0xff]
      %v6352 = vld [vmem:[%s6331 + $0xf0] sm:$0xff]
      %v6353 = vld [vmem:[%s6331 + $0xf8] sm:$0xff]
      %v6354 = vld [vmem:[%s6331 + $0x108] sm:$0xff]
      %v6355 = vld [vmem:[%s6331 + $0x110] sm:$0xff]
      %v6356 = vld [vmem:[%s6331 + $0x120] sm:$0xff]
      %v6357 = vld [vmem:[%s6331 + $0x128] sm:$0xff]
      %v6358 = vld [vmem:[%s6331 + $0x138] sm:$0xff]
      %v6359 = vld [vmem:[%s6331 + $0x140] sm:$0xff]
      %v6360 = vld [vmem:[%s6331 + $0x150] sm:$0xff]
      %v6361 = vld [vmem:[%s6331 + $0x158] sm:$0xff]
      %v6362 = vld [vmem:[%s6331 + $0x168] sm:$0xff]
      %v6363 = vld [vmem:[%s6331 + $0x170] sm:$0xff]
      %6396 = vrot.lane.b32.xlu0 %v6332, 104
      %v6397 = vpop.permute.xlu0 %6396
      %6398 = vrot.lane.b32.xlu0 %v6333, 104
      %v6399 = vpop.permute.xlu0 %6398
      %6400 = vrot.lane.b32.xlu0 %v6334, 104
      %v6401 = vpop.permute.xlu0 %6400
      %6402 = vrot.lane.b32.xlu0 %v6335, 104
      %v6403 = vpop.permute.xlu0 %6402
      %6404 = vrot.lane.b32.xlu0 %v6336, 104
      %v6405 = vpop.permute.xlu0 %6404
      %6406 = vrot.lane.b32.xlu0 %v6337, 104
      %v6407 = vpop.permute.xlu0 %6406
      %6408 = vrot.lane.b32.xlu0 %v6338, 104
      %v6409 = vpop.permute.xlu0 %6408
      %6410 = vrot.lane.b32.xlu0 %v6339, 104
      %v6411 = vpop.permute.xlu0 %6410
      %6412 = vrot.lane.b32.xlu0 %v6340, 104
      %v6413 = vpop.permute.xlu0 %6412
      %6414 = vrot.lane.b32.xlu0 %v6341, 104
      %v6415 = vpop.permute.xlu0 %6414
      %6416 = vrot.lane.b32.xlu0 %v6342, 104
      %v6417 = vpop.permute.xlu0 %6416
      %6418 = vrot.lane.b32.xlu0 %v6343, 104
      %v6419 = vpop.permute.xlu0 %6418
      %6420 = vrot.lane.b32.xlu0 %v6344, 104
      %v6421 = vpop.permute.xlu0 %6420
      %6422 = vrot.lane.b32.xlu0 %v6345, 104
      %v6423 = vpop.permute.xlu0 %6422
      %6424 = vrot.lane.b32.xlu0 %v6346, 104
      %v6425 = vpop.permute.xlu0 %6424
      %6426 = vrot.lane.b32.xlu0 %v6347, 104
      %v6427 = vpop.permute.xlu0 %6426
      %6428 = vrot.lane.b32.xlu0 %v6348, 104
      %v6429 = vpop.permute.xlu0 %6428
      %6430 = vrot.lane.b32.xlu0 %v6349, 104
      %v6431 = vpop.permute.xlu0 %6430
      %6432 = vrot.lane.b32.xlu0 %v6350, 104
      %v6433 = vpop.permute.xlu0 %6432
      %6434 = vrot.lane.b32.xlu0 %v6351, 104
      %v6435 = vpop.permute.xlu0 %6434
      %6436 = vrot.lane.b32.xlu0 %v6352, 104
      %v6437 = vpop.permute.xlu0 %6436
      %6438 = vrot.lane.b32.xlu0 %v6353, 104
      %v6439 = vpop.permute.xlu0 %6438
      %6440 = vrot.lane.b32.xlu0 %v6354, 104
      %v6441 = vpop.permute.xlu0 %6440
      %6442 = vrot.lane.b32.xlu0 %v6355, 104
      %v6443 = vpop.permute.xlu0 %6442
      %6444 = vrot.lane.b32.xlu0 %v6356, 104
      %v6445 = vpop.permute.xlu0 %6444
      %6446 = vrot.lane.b32.xlu0 %v6357, 104
      %v6447 = vpop.permute.xlu0 %6446
      %6448 = vrot.lane.b32.xlu0 %v6358, 104
      %v6449 = vpop.permute.xlu0 %6448
      %6450 = vrot.lane.b32.xlu0 %v6359, 104
      %v6451 = vpop.permute.xlu0 %6450
      %6452 = vrot.lane.b32.xlu0 %v6360, 104
      %v6453 = vpop.permute.xlu0 %6452
      %6454 = vrot.lane.b32.xlu0 %v6361, 104
      %v6455 = vpop.permute.xlu0 %6454
      %6456 = vrot.lane.b32.xlu0 %v6362, 104
      %v6457 = vpop.permute.xlu0 %6456
      %6458 = vrot.lane.b32.xlu0 %v6363, 104
      %v6459 = vpop.permute.xlu0 %6458
      %vm6492 = vcmask 884544
      %6493 = vst.msk [vmem:[#allocation5] sm:$0xff] %vm6492, %v6397
      %6494 = vst.msk [vmem:[#allocation5 + $0x10] sm:$0xff] %vm6492, %v6399
      %6495 = vst.msk [vmem:[#allocation5 + $0x20] sm:$0xff] %vm6492, %v6401
      %6496 = vst.msk [vmem:[#allocation5 + $0x30] sm:$0xff] %vm6492, %v6403
      %6497 = vst.msk [vmem:[#allocation5 + $0x40] sm:$0xff] %vm6492, %v6405
      %6498 = vst.msk [vmem:[#allocation5 + $0x50] sm:$0xff] %vm6492, %v6407
      %6499 = vst.msk [vmem:[#allocation5 + $0x60] sm:$0xff] %vm6492, %v6409
      %6500 = vst.msk [vmem:[#allocation5 + $0x70] sm:$0xff] %vm6492, %v6411
      %6501 = vst.msk [vmem:[#allocation5 + $0x80] sm:$0xff] %vm6492, %v6413
      %6502 = vst.msk [vmem:[#allocation5 + $0x90] sm:$0xff] %vm6492, %v6415
      %6503 = vst.msk [vmem:[#allocation5 + $0xa0] sm:$0xff] %vm6492, %v6417
      %6504 = vst.msk [vmem:[#allocation5 + $0xb0] sm:$0xff] %vm6492, %v6419
      %6505 = vst.msk [vmem:[#allocation5 + $0xc0] sm:$0xff] %vm6492, %v6421
      %6506 = vst.msk [vmem:[#allocation5 + $0xd0] sm:$0xff] %vm6492, %v6423
      %6507 = vst.msk [vmem:[#allocation5 + $0xe0] sm:$0xff] %vm6492, %v6425
      %6508 = vst.msk [vmem:[#allocation5 + $0xf0] sm:$0xff] %vm6492, %v6427
      %6509 = vst.msk [vmem:[#allocation5 + $0x100] sm:$0xff] %vm6492, %v6429
      %6510 = vst.msk [vmem:[#allocation5 + $0x110] sm:$0xff] %vm6492, %v6431
      %6511 = vst.msk [vmem:[#allocation5 + $0x120] sm:$0xff] %vm6492, %v6433
      %6512 = vst.msk [vmem:[#allocation5 + $0x130] sm:$0xff] %vm6492, %v6435
      %6513 = vst.msk [vmem:[#allocation5 + $0x140] sm:$0xff] %vm6492, %v6437
      %6514 = vst.msk [vmem:[#allocation5 + $0x150] sm:$0xff] %vm6492, %v6439
      %6515 = vst.msk [vmem:[#allocation5 + $0x160] sm:$0xff] %vm6492, %v6441
      %6516 = vst.msk [vmem:[#allocation5 + $0x170] sm:$0xff] %vm6492, %v6443
      %6517 = vst.msk [vmem:[#allocation5 + $0x180] sm:$0xff] %vm6492, %v6445
      %6518 = vst.msk [vmem:[#allocation5 + $0x190] sm:$0xff] %vm6492, %v6447
      %6519 = vst.msk [vmem:[#allocation5 + $0x1a0] sm:$0xff] %vm6492, %v6449
      %6520 = vst.msk [vmem:[#allocation5 + $0x1b0] sm:$0xff] %vm6492, %v6451
      %6521 = vst.msk [vmem:[#allocation5 + $0x1c0] sm:$0xff] %vm6492, %v6453
      %6522 = vst.msk [vmem:[#allocation5 + $0x1d0] sm:$0xff] %vm6492, %v6455
      %6523 = vst.msk [vmem:[#allocation5 + $0x1e0] sm:$0xff] %vm6492, %v6457
      %6524 = vst.msk [vmem:[#allocation5 + $0x1f0] sm:$0xff] %vm6492, %v6459
      %v6525 = vld [vmem:[%s6331 + $0x1] sm:$0xff]
      %v6526 = vld [vmem:[%s6331 + $0x9] sm:$0xff]
      %v6527 = vld [vmem:[%s6331 + $0x19] sm:$0xff]
      %v6528 = vld [vmem:[%s6331 + $0x21] sm:$0xff]
      %v6529 = vld [vmem:[%s6331 + $0x31] sm:$0xff]
      %v6530 = vld [vmem:[%s6331 + $0x39] sm:$0xff]
      %v6531 = vld [vmem:[%s6331 + $0x49] sm:$0xff]
      %v6532 = vld [vmem:[%s6331 + $0x51] sm:$0xff]
      %v6533 = vld [vmem:[%s6331 + $0x61] sm:$0xff]
      %v6534 = vld [vmem:[%s6331 + $0x69] sm:$0xff]
      %v6535 = vld [vmem:[%s6331 + $0x79] sm:$0xff]
      %v6536 = vld [vmem:[%s6331 + $0x81] sm:$0xff]
      %v6537 = vld [vmem:[%s6331 + $0x91] sm:$0xff]
      %v6538 = vld [vmem:[%s6331 + $0x99] sm:$0xff]
      %v6539 = vld [vmem:[%s6331 + $0xa9] sm:$0xff]
      %v6540 = vld [vmem:[%s6331 + $0xb1] sm:$0xff]
      %v6541 = vld [vmem:[%s6331 + $0xc1] sm:$0xff]
      %v6542 = vld [vmem:[%s6331 + $0xc9] sm:$0xff]
      %v6543 = vld [vmem:[%s6331 + $0xd9] sm:$0xff]
      %v6544 = vld [vmem:[%s6331 + $0xe1] sm:$0xff]
      %v6545 = vld [vmem:[%s6331 + $0xf1] sm:$0xff]
      %v6546 = vld [vmem:[%s6331 + $0xf9] sm:$0xff]
      %v6547 = vld [vmem:[%s6331 + $0x109] sm:$0xff]
      %v6548 = vld [vmem:[%s6331 + $0x111] sm:$0xff]
      %v6549 = vld [vmem:[%s6331 + $0x121] sm:$0xff]
      %v6550 = vld [vmem:[%s6331 + $0x129] sm:$0xff]
      %v6551 = vld [vmem:[%s6331 + $0x139] sm:$0xff]
      %v6552 = vld [vmem:[%s6331 + $0x141] sm:$0xff]
      %v6553 = vld [vmem:[%s6331 + $0x151] sm:$0xff]
      %v6554 = vld [vmem:[%s6331 + $0x159] sm:$0xff]
      %v6555 = vld [vmem:[%s6331 + $0x169] sm:$0xff]
      %v6556 = vld [vmem:[%s6331 + $0x171] sm:$0xff]
      %6589 = vrot.lane.b32.xlu0 %v6525, 108
      %v6590 = vpop.permute.xlu0 %6589
      %6591 = vrot.lane.b32.xlu0 %v6526, 108
      %v6592 = vpop.permute.xlu0 %6591
      %6593 = vrot.lane.b32.xlu0 %v6527, 108
      %v6594 = vpop.permute.xlu0 %6593
      %6595 = vrot.lane.b32.xlu0 %v6528, 108
      %v6596 = vpop.permute.xlu0 %6595
      %6597 = vrot.lane.b32.xlu0 %v6529, 108
      %v6598 = vpop.permute.xlu0 %6597
      %6599 = vrot.lane.b32.xlu0 %v6530, 108
      %v6600 = vpop.permute.xlu0 %6599
      %6601 = vrot.lane.b32.xlu0 %v6531, 108
      %v6602 = vpop.permute.xlu0 %6601
      %6603 = vrot.lane.b32.xlu0 %v6532, 108
      %v6604 = vpop.permute.xlu0 %6603
      %6605 = vrot.lane.b32.xlu0 %v6533, 108
      %v6606 = vpop.permute.xlu0 %6605
      %6607 = vrot.lane.b32.xlu0 %v6534, 108
      %v6608 = vpop.permute.xlu0 %6607
      %6609 = vrot.lane.b32.xlu0 %v6535, 108
      %v6610 = vpop.permute.xlu0 %6609
      %6611 = vrot.lane.b32.xlu0 %v6536, 108
      %v6612 = vpop.permute.xlu0 %6611
      %6613 = vrot.lane.b32.xlu0 %v6537, 108
      %v6614 = vpop.permute.xlu0 %6613
      %6615 = vrot.lane.b32.xlu0 %v6538, 108
      %v6616 = vpop.permute.xlu0 %6615
      %6617 = vrot.lane.b32.xlu0 %v6539, 108
      %v6618 = vpop.permute.xlu0 %6617
      %6619 = vrot.lane.b32.xlu0 %v6540, 108
      %v6620 = vpop.permute.xlu0 %6619
      %6621 = vrot.lane.b32.xlu0 %v6541, 108
      %v6622 = vpop.permute.xlu0 %6621
      %6623 = vrot.lane.b32.xlu0 %v6542, 108
      %v6624 = vpop.permute.xlu0 %6623
      %6625 = vrot.lane.b32.xlu0 %v6543, 108
      %v6626 = vpop.permute.xlu0 %6625
      %6627 = vrot.lane.b32.xlu0 %v6544, 108
      %v6628 = vpop.permute.xlu0 %6627
      %6629 = vrot.lane.b32.xlu0 %v6545, 108
      %v6630 = vpop.permute.xlu0 %6629
      %6631 = vrot.lane.b32.xlu0 %v6546, 108
      %v6632 = vpop.permute.xlu0 %6631
      %6633 = vrot.lane.b32.xlu0 %v6547, 108
      %v6634 = vpop.permute.xlu0 %6633
      %6635 = vrot.lane.b32.xlu0 %v6548, 108
      %v6636 = vpop.permute.xlu0 %6635
      %6637 = vrot.lane.b32.xlu0 %v6549, 108
      %v6638 = vpop.permute.xlu0 %6637
      %6639 = vrot.lane.b32.xlu0 %v6550, 108
      %v6640 = vpop.permute.xlu0 %6639
      %6641 = vrot.lane.b32.xlu0 %v6551, 108
      %v6642 = vpop.permute.xlu0 %6641
      %6643 = vrot.lane.b32.xlu0 %v6552, 108
      %v6644 = vpop.permute.xlu0 %6643
      %6645 = vrot.lane.b32.xlu0 %v6553, 108
      %v6646 = vpop.permute.xlu0 %6645
      %6647 = vrot.lane.b32.xlu0 %v6554, 108
      %v6648 = vpop.permute.xlu0 %6647
      %6649 = vrot.lane.b32.xlu0 %v6555, 108
      %v6650 = vpop.permute.xlu0 %6649
      %6651 = vrot.lane.b32.xlu0 %v6556, 108
      %v6652 = vpop.permute.xlu0 %6651
      %vm6685 = vcmask 917344
      %6686 = vst.msk [vmem:[#allocation5] sm:$0xff] %vm6685, %v6590
      %6687 = vst.msk [vmem:[#allocation5 + $0x10] sm:$0xff] %vm6685, %v6592
      %6688 = vst.msk [vmem:[#allocation5 + $0x20] sm:$0xff] %vm6685, %v6594
      %6689 = vst.msk [vmem:[#allocation5 + $0x30] sm:$0xff] %vm6685, %v6596
      %6690 = vst.msk [vmem:[#allocation5 + $0x40] sm:$0xff] %vm6685, %v6598
      %6691 = vst.msk [vmem:[#allocation5 + $0x50] sm:$0xff] %vm6685, %v6600
      %6692 = vst.msk [vmem:[#allocation5 + $0x60] sm:$0xff] %vm6685, %v6602
      %6693 = vst.msk [vmem:[#allocation5 + $0x70] sm:$0xff] %vm6685, %v6604
      %6694 = vst.msk [vmem:[#allocation5 + $0x80] sm:$0xff] %vm6685, %v6606
      %6695 = vst.msk [vmem:[#allocation5 + $0x90] sm:$0xff] %vm6685, %v6608
      %6696 = vst.msk [vmem:[#allocation5 + $0xa0] sm:$0xff] %vm6685, %v6610
      %6697 = vst.msk [vmem:[#allocation5 + $0xb0] sm:$0xff] %vm6685, %v6612
      %6698 = vst.msk [vmem:[#allocation5 + $0xc0] sm:$0xff] %vm6685, %v6614
      %6699 = vst.msk [vmem:[#allocation5 + $0xd0] sm:$0xff] %vm6685, %v6616
      %6700 = vst.msk [vmem:[#allocation5 + $0xe0] sm:$0xff] %vm6685, %v6618
      %6701 = vst.msk [vmem:[#allocation5 + $0xf0] sm:$0xff] %vm6685, %v6620
      %6702 = vst.msk [vmem:[#allocation5 + $0x100] sm:$0xff] %vm6685, %v6622
      %6703 = vst.msk [vmem:[#allocation5 + $0x110] sm:$0xff] %vm6685, %v6624
      %6704 = vst.msk [vmem:[#allocation5 + $0x120] sm:$0xff] %vm6685, %v6626
      %6705 = vst.msk [vmem:[#allocation5 + $0x130] sm:$0xff] %vm6685, %v6628
      %6706 = vst.msk [vmem:[#allocation5 + $0x140] sm:$0xff] %vm6685, %v6630
      %6707 = vst.msk [vmem:[#allocation5 + $0x150] sm:$0xff] %vm6685, %v6632
      %6708 = vst.msk [vmem:[#allocation5 + $0x160] sm:$0xff] %vm6685, %v6634
      %6709 = vst.msk [vmem:[#allocation5 + $0x170] sm:$0xff] %vm6685, %v6636
      %6710 = vst.msk [vmem:[#allocation5 + $0x180] sm:$0xff] %vm6685, %v6638
      %6711 = vst.msk [vmem:[#allocation5 + $0x190] sm:$0xff] %vm6685, %v6640
      %6712 = vst.msk [vmem:[#allocation5 + $0x1a0] sm:$0xff] %vm6685, %v6642
      %6713 = vst.msk [vmem:[#allocation5 + $0x1b0] sm:$0xff] %vm6685, %v6644
      %6714 = vst.msk [vmem:[#allocation5 + $0x1c0] sm:$0xff] %vm6685, %v6646
      %6715 = vst.msk [vmem:[#allocation5 + $0x1d0] sm:$0xff] %vm6685, %v6648
      %6716 = vst.msk [vmem:[#allocation5 + $0x1e0] sm:$0xff] %vm6685, %v6650
      %6717 = vst.msk [vmem:[#allocation5 + $0x1f0] sm:$0xff] %vm6685, %v6652
      %v6718 = vld [vmem:[%s6331 + $0x2] sm:$0xff]
      %v6719 = vld [vmem:[%s6331 + $0xa] sm:$0xff]
      %v6720 = vld [vmem:[%s6331 + $0x1a] sm:$0xff]
      %v6721 = vld [vmem:[%s6331 + $0x22] sm:$0xff]
      %v6722 = vld [vmem:[%s6331 + $0x32] sm:$0xff]
      %v6723 = vld [vmem:[%s6331 + $0x3a] sm:$0xff]
      %v6724 = vld [vmem:[%s6331 + $0x4a] sm:$0xff]
      %v6725 = vld [vmem:[%s6331 + $0x52] sm:$0xff]
      %v6726 = vld [vmem:[%s6331 + $0x62] sm:$0xff]
      %v6727 = vld [vmem:[%s6331 + $0x6a] sm:$0xff]
      %v6728 = vld [vmem:[%s6331 + $0x7a] sm:$0xff]
      %v6729 = vld [vmem:[%s6331 + $0x82] sm:$0xff]
      %v6730 = vld [vmem:[%s6331 + $0x92] sm:$0xff]
      %v6731 = vld [vmem:[%s6331 + $0x9a] sm:$0xff]
      %v6732 = vld [vmem:[%s6331 + $0xaa] sm:$0xff]
      %v6733 = vld [vmem:[%s6331 + $0xb2] sm:$0xff]
      %v6734 = vld [vmem:[%s6331 + $0xc2] sm:$0xff]
      %v6735 = vld [vmem:[%s6331 + $0xca] sm:$0xff]
      %v6736 = vld [vmem:[%s6331 + $0xda] sm:$0xff]
      %v6737 = vld [vmem:[%s6331 + $0xe2] sm:$0xff]
      %v6738 = vld [vmem:[%s6331 + $0xf2] sm:$0xff]
      %v6739 = vld [vmem:[%s6331 + $0xfa] sm:$0xff]
      %v6740 = vld [vmem:[%s6331 + $0x10a] sm:$0xff]
      %v6741 = vld [vmem:[%s6331 + $0x112] sm:$0xff]
      %v6742 = vld [vmem:[%s6331 + $0x122] sm:$0xff]
      %v6743 = vld [vmem:[%s6331 + $0x12a] sm:$0xff]
      %v6744 = vld [vmem:[%s6331 + $0x13a] sm:$0xff]
      %v6745 = vld [vmem:[%s6331 + $0x142] sm:$0xff]
      %v6746 = vld [vmem:[%s6331 + $0x152] sm:$0xff]
      %v6747 = vld [vmem:[%s6331 + $0x15a] sm:$0xff]
      %v6748 = vld [vmem:[%s6331 + $0x16a] sm:$0xff]
      %v6749 = vld [vmem:[%s6331 + $0x172] sm:$0xff]
      %6782 = vrot.lane.b32.xlu0 %v6718, 112
      %v6783 = vpop.permute.xlu0 %6782
      %6784 = vrot.lane.b32.xlu0 %v6719, 112
      %v6785 = vpop.permute.xlu0 %6784
      %6786 = vrot.lane.b32.xlu0 %v6720, 112
      %v6787 = vpop.permute.xlu0 %6786
      %6788 = vrot.lane.b32.xlu0 %v6721, 112
      %v6789 = vpop.permute.xlu0 %6788
      %6790 = vrot.lane.b32.xlu0 %v6722, 112
      %v6791 = vpop.permute.xlu0 %6790
      %6792 = vrot.lane.b32.xlu0 %v6723, 112
      %v6793 = vpop.permute.xlu0 %6792
      %6794 = vrot.lane.b32.xlu0 %v6724, 112
      %v6795 = vpop.permute.xlu0 %6794
      %6796 = vrot.lane.b32.xlu0 %v6725, 112
      %v6797 = vpop.permute.xlu0 %6796
      %6798 = vrot.lane.b32.xlu0 %v6726, 112
      %v6799 = vpop.permute.xlu0 %6798
      %6800 = vrot.lane.b32.xlu0 %v6727, 112
      %v6801 = vpop.permute.xlu0 %6800
      %6802 = vrot.lane.b32.xlu0 %v6728, 112
      %v6803 = vpop.permute.xlu0 %6802
      %6804 = vrot.lane.b32.xlu0 %v6729, 112
      %v6805 = vpop.permute.xlu0 %6804
      %6806 = vrot.lane.b32.xlu0 %v6730, 112
      %v6807 = vpop.permute.xlu0 %6806
      %6808 = vrot.lane.b32.xlu0 %v6731, 112
      %v6809 = vpop.permute.xlu0 %6808
      %6810 = vrot.lane.b32.xlu0 %v6732, 112
      %v6811 = vpop.permute.xlu0 %6810
      %6812 = vrot.lane.b32.xlu0 %v6733, 112
      %v6813 = vpop.permute.xlu0 %6812
      %6814 = vrot.lane.b32.xlu0 %v6734, 112
      %v6815 = vpop.permute.xlu0 %6814
      %6816 = vrot.lane.b32.xlu0 %v6735, 112
      %v6817 = vpop.permute.xlu0 %6816
      %6818 = vrot.lane.b32.xlu0 %v6736, 112
      %v6819 = vpop.permute.xlu0 %6818
      %6820 = vrot.lane.b32.xlu0 %v6737, 112
      %v6821 = vpop.permute.xlu0 %6820
      %6822 = vrot.lane.b32.xlu0 %v6738, 112
      %v6823 = vpop.permute.xlu0 %6822
      %6824 = vrot.lane.b32.xlu0 %v6739, 112
      %v6825 = vpop.permute.xlu0 %6824
      %6826 = vrot.lane.b32.xlu0 %v6740, 112
      %v6827 = vpop.permute.xlu0 %6826
      %6828 = vrot.lane.b32.xlu0 %v6741, 112
      %v6829 = vpop.permute.xlu0 %6828
      %6830 = vrot.lane.b32.xlu0 %v6742, 112
      %v6831 = vpop.permute.xlu0 %6830
      %6832 = vrot.lane.b32.xlu0 %v6743, 112
      %v6833 = vpop.permute.xlu0 %6832
      %6834 = vrot.lane.b32.xlu0 %v6744, 112
      %v6835 = vpop.permute.xlu0 %6834
      %6836 = vrot.lane.b32.xlu0 %v6745, 112
      %v6837 = vpop.permute.xlu0 %6836
      %6838 = vrot.lane.b32.xlu0 %v6746, 112
      %v6839 = vpop.permute.xlu0 %6838
      %6840 = vrot.lane.b32.xlu0 %v6747, 112
      %v6841 = vpop.permute.xlu0 %6840
      %6842 = vrot.lane.b32.xlu0 %v6748, 112
      %v6843 = vpop.permute.xlu0 %6842
      %6844 = vrot.lane.b32.xlu0 %v6749, 112
      %v6845 = vpop.permute.xlu0 %6844
      %vm6878 = vcmask 950144
      %6879 = vst.msk [vmem:[#allocation5] sm:$0xff] %vm6878, %v6783
      %6880 = vst.msk [vmem:[#allocation5 + $0x10] sm:$0xff] %vm6878, %v6785
      %6881 = vst.msk [vmem:[#allocation5 + $0x20] sm:$0xff] %vm6878, %v6787
      %6882 = vst.msk [vmem:[#allocation5 + $0x30] sm:$0xff] %vm6878, %v6789
      %6883 = vst.msk [vmem:[#allocation5 + $0x40] sm:$0xff] %vm6878, %v6791
      %6884 = vst.msk [vmem:[#allocation5 + $0x50] sm:$0xff] %vm6878, %v6793
      %6885 = vst.msk [vmem:[#allocation5 + $0x60] sm:$0xff] %vm6878, %v6795
      %6886 = vst.msk [vmem:[#allocation5 + $0x70] sm:$0xff] %vm6878, %v6797
      %6887 = vst.msk [vmem:[#allocation5 + $0x80] sm:$0xff] %vm6878, %v6799
      %6888 = vst.msk [vmem:[#allocation5 + $0x90] sm:$0xff] %vm6878, %v6801
      %6889 = vst.msk [vmem:[#allocation5 + $0xa0] sm:$0xff] %vm6878, %v6803
      %6890 = vst.msk [vmem:[#allocation5 + $0xb0] sm:$0xff] %vm6878, %v6805
      %6891 = vst.msk [vmem:[#allocation5 + $0xc0] sm:$0xff] %vm6878, %v6807
      %6892 = vst.msk [vmem:[#allocation5 + $0xd0] sm:$0xff] %vm6878, %v6809
      %6893 = vst.msk [vmem:[#allocation5 + $0xe0] sm:$0xff] %vm6878, %v6811
      %6894 = vst.msk [vmem:[#allocation5 + $0xf0] sm:$0xff] %vm6878, %v6813
      %6895 = vst.msk [vmem:[#allocation5 + $0x100] sm:$0xff] %vm6878, %v6815
      %6896 = vst.msk [vmem:[#allocation5 + $0x110] sm:$0xff] %vm6878, %v6817
      %6897 = vst.msk [vmem:[#allocation5 + $0x120] sm:$0xff] %vm6878, %v6819
      %6898 = vst.msk [vmem:[#allocation5 + $0x130] sm:$0xff] %vm6878, %v6821
      %6899 = vst.msk [vmem:[#allocation5 + $0x140] sm:$0xff] %vm6878, %v6823
      %6900 = vst.msk [vmem:[#allocation5 + $0x150] sm:$0xff] %vm6878, %v6825
      %6901 = vst.msk [vmem:[#allocation5 + $0x160] sm:$0xff] %vm6878, %v6827
      %6902 = vst.msk [vmem:[#allocation5 + $0x170] sm:$0xff] %vm6878, %v6829
      %6903 = vst.msk [vmem:[#allocation5 + $0x180] sm:$0xff] %vm6878, %v6831
      %6904 = vst.msk [vmem:[#allocation5 + $0x190] sm:$0xff] %vm6878, %v6833
      %6905 = vst.msk [vmem:[#allocation5 + $0x1a0] sm:$0xff] %vm6878, %v6835
      %6906 = vst.msk [vmem:[#allocation5 + $0x1b0] sm:$0xff] %vm6878, %v6837
      %6907 = vst.msk [vmem:[#allocation5 + $0x1c0] sm:$0xff] %vm6878, %v6839
      %6908 = vst.msk [vmem:[#allocation5 + $0x1d0] sm:$0xff] %vm6878, %v6841
      %6909 = vst.msk [vmem:[#allocation5 + $0x1e0] sm:$0xff] %vm6878, %v6843
      %6910 = vst.msk [vmem:[#allocation5 + $0x1f0] sm:$0xff] %vm6878, %v6845
      %v6911 = vld [vmem:[%s6331 + $0x3] sm:$0xff]
      %v6912 = vld [vmem:[%s6331 + $0xb] sm:$0xff]
      %v6913 = vld [vmem:[%s6331 + $0x1b] sm:$0xff]
      %v6914 = vld [vmem:[%s6331 + $0x23] sm:$0xff]
      %v6915 = vld [vmem:[%s6331 + $0x33] sm:$0xff]
      %v6916 = vld [vmem:[%s6331 + $0x3b] sm:$0xff]
      %v6917 = vld [vmem:[%s6331 + $0x4b] sm:$0xff]
      %v6918 = vld [vmem:[%s6331 + $0x53] sm:$0xff]
      %v6919 = vld [vmem:[%s6331 + $0x63] sm:$0xff]
      %v6920 = vld [vmem:[%s6331 + $0x6b] sm:$0xff]
      %v6921 = vld [vmem:[%s6331 + $0x7b] sm:$0xff]
      %v6922 = vld [vmem:[%s6331 + $0x83] sm:$0xff]
      %v6923 = vld [vmem:[%s6331 + $0x93] sm:$0xff]
      %v6924 = vld [vmem:[%s6331 + $0x9b] sm:$0xff]
      %v6925 = vld [vmem:[%s6331 + $0xab] sm:$0xff]
      %v6926 = vld [vmem:[%s6331 + $0xb3] sm:$0xff]
      %v6927 = vld [vmem:[%s6331 + $0xc3] sm:$0xff]
      %v6928 = vld [vmem:[%s6331 + $0xcb] sm:$0xff]
      %v6929 = vld [vmem:[%s6331 + $0xdb] sm:$0xff]
      %v6930 = vld [vmem:[%s6331 + $0xe3] sm:$0xff]
      %v6931 = vld [vmem:[%s6331 + $0xf3] sm:$0xff]
      %v6932 = vld [vmem:[%s6331 + $0xfb] sm:$0xff]
      %v6933 = vld [vmem:[%s6331 + $0x10b] sm:$0xff]
      %v6934 = vld [vmem:[%s6331 + $0x113] sm:$0xff]
      %v6935 = vld [vmem:[%s6331 + $0x123] sm:$0xff]
      %v6936 = vld [vmem:[%s6331 + $0x12b] sm:$0xff]
      %v6937 = vld [vmem:[%s6331 + $0x13b] sm:$0xff]
      %v6938 = vld [vmem:[%s6331 + $0x143] sm:$0xff]
      %v6939 = vld [vmem:[%s6331 + $0x153] sm:$0xff]
      %v6940 = vld [vmem:[%s6331 + $0x15b] sm:$0xff]
      %v6941 = vld [vmem:[%s6331 + $0x16b] sm:$0xff]
      %v6942 = vld [vmem:[%s6331 + $0x173] sm:$0xff]
      %6975 = vrot.lane.b32.xlu0 %v6911, 116
      %v6976 = vpop.permute.xlu0 %6975
      %6977 = vrot.lane.b32.xlu0 %v6912, 116
      %v6978 = vpop.permute.xlu0 %6977
      %6979 = vrot.lane.b32.xlu0 %v6913, 116
      %v6980 = vpop.permute.xlu0 %6979
      %6981 = vrot.lane.b32.xlu0 %v6914, 116
      %v6982 = vpop.permute.xlu0 %6981
      %6983 = vrot.lane.b32.xlu0 %v6915, 116
      %v6984 = vpop.permute.xlu0 %6983
      %6985 = vrot.lane.b32.xlu0 %v6916, 116
      %v6986 = vpop.permute.xlu0 %6985
      %6987 = vrot.lane.b32.xlu0 %v6917, 116
      %v6988 = vpop.permute.xlu0 %6987
      %6989 = vrot.lane.b32.xlu0 %v6918, 116
      %v6990 = vpop.permute.xlu0 %6989
      %6991 = vrot.lane.b32.xlu0 %v6919, 116
      %v6992 = vpop.permute.xlu0 %6991
      %6993 = vrot.lane.b32.xlu0 %v6920, 116
      %v6994 = vpop.permute.xlu0 %6993
      %6995 = vrot.lane.b32.xlu0 %v6921, 116
      %v6996 = vpop.permute.xlu0 %6995
      %6997 = vrot.lane.b32.xlu0 %v6922, 116
      %v6998 = vpop.permute.xlu0 %6997
      %6999 = vrot.lane.b32.xlu0 %v6923, 116
      %v7000 = vpop.permute.xlu0 %6999
      %7001 = vrot.lane.b32.xlu0 %v6924, 116
      %v7002 = vpop.permute.xlu0 %7001
      %7003 = vrot.lane.b32.xlu0 %v6925, 116
      %v7004 = vpop.permute.xlu0 %7003
      %7005 = vrot.lane.b32.xlu0 %v6926, 116
      %v7006 = vpop.permute.xlu0 %7005
      %7007 = vrot.lane.b32.xlu0 %v6927, 116
      %v7008 = vpop.permute.xlu0 %7007
      %7009 = vrot.lane.b32.xlu0 %v6928, 116
      %v7010 = vpop.permute.xlu0 %7009
      %7011 = vrot.lane.b32.xlu0 %v6929, 116
      %v7012 = vpop.permute.xlu0 %7011
      %7013 = vrot.lane.b32.xlu0 %v6930, 116
      %v7014 = vpop.permute.xlu0 %7013
      %7015 = vrot.lane.b32.xlu0 %v6931, 116
      %v7016 = vpop.permute.xlu0 %7015
      %7017 = vrot.lane.b32.xlu0 %v6932, 116
      %v7018 = vpop.permute.xlu0 %7017
      %7019 = vrot.lane.b32.xlu0 %v6933, 116
      %v7020 = vpop.permute.xlu0 %7019
      %7021 = vrot.lane.b32.xlu0 %v6934, 116
      %v7022 = vpop.permute.xlu0 %7021
      %7023 = vrot.lane.b32.xlu0 %v6935, 116
      %v7024 = vpop.permute.xlu0 %7023
      %7025 = vrot.lane.b32.xlu0 %v6936, 116
      %v7026 = vpop.permute.xlu0 %7025
      %7027 = vrot.lane.b32.xlu0 %v6937, 116
      %v7028 = vpop.permute.xlu0 %7027
      %7029 = vrot.lane.b32.xlu0 %v6938, 116
      %v7030 = vpop.permute.xlu0 %7029
      %7031 = vrot.lane.b32.xlu0 %v6939, 116
      %v7032 = vpop.permute.xlu0 %7031
      %7033 = vrot.lane.b32.xlu0 %v6940, 116
      %v7034 = vpop.permute.xlu0 %7033
      %7035 = vrot.lane.b32.xlu0 %v6941, 116
      %v7036 = vpop.permute.xlu0 %7035
      %7037 = vrot.lane.b32.xlu0 %v6942, 116
      %v7038 = vpop.permute.xlu0 %7037
      %vm7071 = vcmask 982944
      %7072 = vst.msk [vmem:[#allocation5] sm:$0xff] %vm7071, %v6976
      %7073 = vst.msk [vmem:[#allocation5 + $0x10] sm:$0xff] %vm7071, %v6978
      %7074 = vst.msk [vmem:[#allocation5 + $0x20] sm:$0xff] %vm7071, %v6980
      %7075 = vst.msk [vmem:[#allocation5 + $0x30] sm:$0xff] %vm7071, %v6982
      %7076 = vst.msk [vmem:[#allocation5 + $0x40] sm:$0xff] %vm7071, %v6984
      %7077 = vst.msk [vmem:[#allocation5 + $0x50] sm:$0xff] %vm7071, %v6986
      %7078 = vst.msk [vmem:[#allocation5 + $0x60] sm:$0xff] %vm7071, %v6988
      %7079 = vst.msk [vmem:[#allocation5 + $0x70] sm:$0xff] %vm7071, %v6990
      %7080 = vst.msk [vmem:[#allocation5 + $0x80] sm:$0xff] %vm7071, %v6992
      %7081 = vst.msk [vmem:[#allocation5 + $0x90] sm:$0xff] %vm7071, %v6994
      %7082 = vst.msk [vmem:[#allocation5 + $0xa0] sm:$0xff] %vm7071, %v6996
      %7083 = vst.msk [vmem:[#allocation5 + $0xb0] sm:$0xff] %vm7071, %v6998
      %7084 = vst.msk [vmem:[#allocation5 + $0xc0] sm:$0xff] %vm7071, %v7000
      %7085 = vst.msk [vmem:[#allocation5 + $0xd0] sm:$0xff] %vm7071, %v7002
      %7086 = vst.msk [vmem:[#allocation5 + $0xe0] sm:$0xff] %vm7071, %v7004
      %7087 = vst.msk [vmem:[#allocation5 + $0xf0] sm:$0xff] %vm7071, %v7006
      %7088 = vst.msk [vmem:[#allocation5 + $0x100] sm:$0xff] %vm7071, %v7008
      %7089 = vst.msk [vmem:[#allocation5 + $0x110] sm:$0xff] %vm7071, %v7010
      %7090 = vst.msk [vmem:[#allocation5 + $0x120] sm:$0xff] %vm7071, %v7012
      %7091 = vst.msk [vmem:[#allocation5 + $0x130] sm:$0xff] %vm7071, %v7014
      %7092 = vst.msk [vmem:[#allocation5 + $0x140] sm:$0xff] %vm7071, %v7016
      %7093 = vst.msk [vmem:[#allocation5 + $0x150] sm:$0xff] %vm7071, %v7018
      %7094 = vst.msk [vmem:[#allocation5 + $0x160] sm:$0xff] %vm7071, %v7020
      %7095 = vst.msk [vmem:[#allocation5 + $0x170] sm:$0xff] %vm7071, %v7022
      %7096 = vst.msk [vmem:[#allocation5 + $0x180] sm:$0xff] %vm7071, %v7024
      %7097 = vst.msk [vmem:[#allocation5 + $0x190] sm:$0xff] %vm7071, %v7026
      %7098 = vst.msk [vmem:[#allocation5 + $0x1a0] sm:$0xff] %vm7071, %v7028
      %7099 = vst.msk [vmem:[#allocation5 + $0x1b0] sm:$0xff] %vm7071, %v7030
      %7100 = vst.msk [vmem:[#allocation5 + $0x1c0] sm:$0xff] %vm7071, %v7032
      %7101 = vst.msk [vmem:[#allocation5 + $0x1d0] sm:$0xff] %vm7071, %v7034
      %7102 = vst.msk [vmem:[#allocation5 + $0x1e0] sm:$0xff] %vm7071, %v7036
      %7103 = vst.msk [vmem:[#allocation5 + $0x1f0] sm:$0xff] %vm7071, %v7038
      %v7104 = vld [vmem:[%s6331 + $0x4] sm:$0xff]
      %v7105 = vld [vmem:[%s6331 + $0xc] sm:$0xff]
      %v7106 = vld [vmem:[%s6331 + $0x1c] sm:$0xff]
      %v7107 = vld [vmem:[%s6331 + $0x24] sm:$0xff]
      %v7108 = vld [vmem:[%s6331 + $0x34] sm:$0xff]
      %v7109 = vld [vmem:[%s6331 + $0x3c] sm:$0xff]
      %v7110 = vld [vmem:[%s6331 + $0x4c] sm:$0xff]
      %v7111 = vld [vmem:[%s6331 + $0x54] sm:$0xff]
      %v7112 = vld [vmem:[%s6331 + $0x64] sm:$0xff]
      %v7113 = vld [vmem:[%s6331 + $0x6c] sm:$0xff]
      %v7114 = vld [vmem:[%s6331 + $0x7c] sm:$0xff]
      %v7115 = vld [vmem:[%s6331 + $0x84] sm:$0xff]
      %v7116 = vld [vmem:[%s6331 + $0x94] sm:$0xff]
      %v7117 = vld [vmem:[%s6331 + $0x9c] sm:$0xff]
      %v7118 = vld [vmem:[%s6331 + $0xac] sm:$0xff]
      %v7119 = vld [vmem:[%s6331 + $0xb4] sm:$0xff]
      %v7120 = vld [vmem:[%s6331 + $0xc4] sm:$0xff]
      %v7121 = vld [vmem:[%s6331 + $0xcc] sm:$0xff]
      %v7122 = vld [vmem:[%s6331 + $0xdc] sm:$0xff]
      %v7123 = vld [vmem:[%s6331 + $0xe4] sm:$0xff]
      %v7124 = vld [vmem:[%s6331 + $0xf4] sm:$0xff]
      %v7125 = vld [vmem:[%s6331 + $0xfc] sm:$0xff]
      %v7126 = vld [vmem:[%s6331 + $0x10c] sm:$0xff]
      %v7127 = vld [vmem:[%s6331 + $0x114] sm:$0xff]
      %v7128 = vld [vmem:[%s6331 + $0x124] sm:$0xff]
      %v7129 = vld [vmem:[%s6331 + $0x12c] sm:$0xff]
      %v7130 = vld [vmem:[%s6331 + $0x13c] sm:$0xff]
      %v7131 = vld [vmem:[%s6331 + $0x144] sm:$0xff]
      %v7132 = vld [vmem:[%s6331 + $0x154] sm:$0xff]
      %v7133 = vld [vmem:[%s6331 + $0x15c] sm:$0xff]
      %v7134 = vld [vmem:[%s6331 + $0x16c] sm:$0xff]
      %v7135 = vld [vmem:[%s6331 + $0x174] sm:$0xff]
      %7168 = vrot.lane.b32.xlu0 %v7104, 120
      %v7169 = vpop.permute.xlu0 %7168
      %7170 = vrot.lane.b32.xlu0 %v7105, 120
      %v7171 = vpop.permute.xlu0 %7170
      %7172 = vrot.lane.b32.xlu0 %v7106, 120
      %v7173 = vpop.permute.xlu0 %7172
      %7174 = vrot.lane.b32.xlu0 %v7107, 120
      %v7175 = vpop.permute.xlu0 %7174
      %7176 = vrot.lane.b32.xlu0 %v7108, 120
      %v7177 = vpop.permute.xlu0 %7176
      %7178 = vrot.lane.b32.xlu0 %v7109, 120
      %v7179 = vpop.permute.xlu0 %7178
      %7180 = vrot.lane.b32.xlu0 %v7110, 120
      %v7181 = vpop.permute.xlu0 %7180
      %7182 = vrot.lane.b32.xlu0 %v7111, 120
      %v7183 = vpop.permute.xlu0 %7182
      %7184 = vrot.lane.b32.xlu0 %v7112, 120
      %v7185 = vpop.permute.xlu0 %7184
      %7186 = vrot.lane.b32.xlu0 %v7113, 120
      %v7187 = vpop.permute.xlu0 %7186
      %7188 = vrot.lane.b32.xlu0 %v7114, 120
      %v7189 = vpop.permute.xlu0 %7188
      %7190 = vrot.lane.b32.xlu0 %v7115, 120
      %v7191 = vpop.permute.xlu0 %7190
      %7192 = vrot.lane.b32.xlu0 %v7116, 120
      %v7193 = vpop.permute.xlu0 %7192
      %7194 = vrot.lane.b32.xlu0 %v7117, 120
      %v7195 = vpop.permute.xlu0 %7194
      %7196 = vrot.lane.b32.xlu0 %v7118, 120
      %v7197 = vpop.permute.xlu0 %7196
      %7198 = vrot.lane.b32.xlu0 %v7119, 120
      %v7199 = vpop.permute.xlu0 %7198
      %7200 = vrot.lane.b32.xlu0 %v7120, 120
      %v7201 = vpop.permute.xlu0 %7200
      %7202 = vrot.lane.b32.xlu0 %v7121, 120
      %v7203 = vpop.permute.xlu0 %7202
      %7204 = vrot.lane.b32.xlu0 %v7122, 120
      %v7205 = vpop.permute.xlu0 %7204
      %7206 = vrot.lane.b32.xlu0 %v7123, 120
      %v7207 = vpop.permute.xlu0 %7206
      %7208 = vrot.lane.b32.xlu0 %v7124, 120
      %v7209 = vpop.permute.xlu0 %7208
      %7210 = vrot.lane.b32.xlu0 %v7125, 120
      %v7211 = vpop.permute.xlu0 %7210
      %7212 = vrot.lane.b32.xlu0 %v7126, 120
      %v7213 = vpop.permute.xlu0 %7212
      %7214 = vrot.lane.b32.xlu0 %v7127, 120
      %v7215 = vpop.permute.xlu0 %7214
      %7216 = vrot.lane.b32.xlu0 %v7128, 120
      %v7217 = vpop.permute.xlu0 %7216
      %7218 = vrot.lane.b32.xlu0 %v7129, 120
      %v7219 = vpop.permute.xlu0 %7218
      %7220 = vrot.lane.b32.xlu0 %v7130, 120
      %v7221 = vpop.permute.xlu0 %7220
      %7222 = vrot.lane.b32.xlu0 %v7131, 120
      %v7223 = vpop.permute.xlu0 %7222
      %7224 = vrot.lane.b32.xlu0 %v7132, 120
      %v7225 = vpop.permute.xlu0 %7224
      %7226 = vrot.lane.b32.xlu0 %v7133, 120
      %v7227 = vpop.permute.xlu0 %7226
      %7228 = vrot.lane.b32.xlu0 %v7134, 120
      %v7229 = vpop.permute.xlu0 %7228
      %7230 = vrot.lane.b32.xlu0 %v7135, 120
      %v7231 = vpop.permute.xlu0 %7230
      %vm7264 = vcmask 1015744
      %7265 = vst.msk [vmem:[#allocation5] sm:$0xff] %vm7264, %v7169
      %7266 = vst.msk [vmem:[#allocation5 + $0x10] sm:$0xff] %vm7264, %v7171
      %7267 = vst.msk [vmem:[#allocation5 + $0x20] sm:$0xff] %vm7264, %v7173
      %7268 = vst.msk [vmem:[#allocation5 + $0x30] sm:$0xff] %vm7264, %v7175
      %7269 = vst.msk [vmem:[#allocation5 + $0x40] sm:$0xff] %vm7264, %v7177
      %7270 = vst.msk [vmem:[#allocation5 + $0x50] sm:$0xff] %vm7264, %v7179
      %7271 = vst.msk [vmem:[#allocation5 + $0x60] sm:$0xff] %vm7264, %v7181
      %7272 = vst.msk [vmem:[#allocation5 + $0x70] sm:$0xff] %vm7264, %v7183
      %7273 = vst.msk [vmem:[#allocation5 + $0x80] sm:$0xff] %vm7264, %v7185
      %7274 = vst.msk [vmem:[#allocation5 + $0x90] sm:$0xff] %vm7264, %v7187
      %7275 = vst.msk [vmem:[#allocation5 + $0xa0] sm:$0xff] %vm7264, %v7189
      %7276 = vst.msk [vmem:[#allocation5 + $0xb0] sm:$0xff] %vm7264, %v7191
      %7277 = vst.msk [vmem:[#allocation5 + $0xc0] sm:$0xff] %vm7264, %v7193
      %7278 = vst.msk [vmem:[#allocation5 + $0xd0] sm:$0xff] %vm7264, %v7195
      %7279 = vst.msk [vmem:[#allocation5 + $0xe0] sm:$0xff] %vm7264, %v7197
      %7280 = vst.msk [vmem:[#allocation5 + $0xf0] sm:$0xff] %vm7264, %v7199
      %7281 = vst.msk [vmem:[#allocation5 + $0x100] sm:$0xff] %vm7264, %v7201
      %7282 = vst.msk [vmem:[#allocation5 + $0x110] sm:$0xff] %vm7264, %v7203
      %7283 = vst.msk [vmem:[#allocation5 + $0x120] sm:$0xff] %vm7264, %v7205
      %7284 = vst.msk [vmem:[#allocation5 + $0x130] sm:$0xff] %vm7264, %v7207
      %7285 = vst.msk [vmem:[#allocation5 + $0x140] sm:$0xff] %vm7264, %v7209
      %7286 = vst.msk [vmem:[#allocation5 + $0x150] sm:$0xff] %vm7264, %v7211
      %7287 = vst.msk [vmem:[#allocation5 + $0x160] sm:$0xff] %vm7264, %v7213
      %7288 = vst.msk [vmem:[#allocation5 + $0x170] sm:$0xff] %vm7264, %v7215
      %7289 = vst.msk [vmem:[#allocation5 + $0x180] sm:$0xff] %vm7264, %v7217
      %7290 = vst.msk [vmem:[#allocation5 + $0x190] sm:$0xff] %vm7264, %v7219
      %7291 = vst.msk [vmem:[#allocation5 + $0x1a0] sm:$0xff] %vm7264, %v7221
      %7292 = vst.msk [vmem:[#allocation5 + $0x1b0] sm:$0xff] %vm7264, %v7223
      %7293 = vst.msk [vmem:[#allocation5 + $0x1c0] sm:$0xff] %vm7264, %v7225
      %7294 = vst.msk [vmem:[#allocation5 + $0x1d0] sm:$0xff] %vm7264, %v7227
      %7295 = vst.msk [vmem:[#allocation5 + $0x1e0] sm:$0xff] %vm7264, %v7229
      %7296 = vst.msk [vmem:[#allocation5 + $0x1f0] sm:$0xff] %vm7264, %v7231
      %s7297 = scalar_lea.vmem [#allocation4], 96
      %v7298 = vld [vmem:[%s7297] sm:$0xff]
      %v7299 = vld [vmem:[%s7297 + $0x8] sm:$0xff]
      %v7300 = vld [vmem:[%s7297 + $0x18] sm:$0xff]
      %v7301 = vld [vmem:[%s7297 + $0x20] sm:$0xff]
      %v7302 = vld [vmem:[%s7297 + $0x30] sm:$0xff]
      %v7303 = vld [vmem:[%s7297 + $0x38] sm:$0xff]
      %v7304 = vld [vmem:[%s7297 + $0x48] sm:$0xff]
      %v7305 = vld [vmem:[%s7297 + $0x50] sm:$0xff]
      %v7306 = vld [vmem:[%s7297 + $0x60] sm:$0xff]
      %v7307 = vld [vmem:[%s7297 + $0x68] sm:$0xff]
      %v7308 = vld [vmem:[%s7297 + $0x78] sm:$0xff]
      %v7309 = vld [vmem:[%s7297 + $0x80] sm:$0xff]
      %v7310 = vld [vmem:[%s7297 + $0x90] sm:$0xff]
      %v7311 = vld [vmem:[%s7297 + $0x98] sm:$0xff]
      %v7312 = vld [vmem:[%s7297 + $0xa8] sm:$0xff]
      %v7313 = vld [vmem:[%s7297 + $0xb0] sm:$0xff]
      %v7314 = vld [vmem:[%s7297 + $0xc0] sm:$0xff]
      %v7315 = vld [vmem:[%s7297 + $0xc8] sm:$0xff]
      %v7316 = vld [vmem:[%s7297 + $0xd8] sm:$0xff]
      %v7317 = vld [vmem:[%s7297 + $0xe0] sm:$0xff]
      %v7318 = vld [vmem:[%s7297 + $0xf0] sm:$0xff]
      %v7319 = vld [vmem:[%s7297 + $0xf8] sm:$0xff]
      %v7320 = vld [vmem:[%s7297 + $0x108] sm:$0xff]
      %v7321 = vld [vmem:[%s7297 + $0x110] sm:$0xff]
      %v7322 = vld [vmem:[%s7297 + $0x120] sm:$0xff]
      %v7323 = vld [vmem:[%s7297 + $0x128] sm:$0xff]
      %v7324 = vld [vmem:[%s7297 + $0x138] sm:$0xff]
      %v7325 = vld [vmem:[%s7297 + $0x140] sm:$0xff]
      %v7326 = vld [vmem:[%s7297 + $0x150] sm:$0xff]
      %v7327 = vld [vmem:[%s7297 + $0x158] sm:$0xff]
      %v7328 = vld [vmem:[%s7297 + $0x168] sm:$0xff]
      %v7329 = vld [vmem:[%s7297 + $0x170] sm:$0xff]
      %7362 = vrot.lane.b32.xlu0 %v7298, 124
      %v7363 = vpop.permute.xlu0 %7362
      %7364 = vrot.lane.b32.xlu0 %v7299, 124
      %v7365 = vpop.permute.xlu0 %7364
      %7366 = vrot.lane.b32.xlu0 %v7300, 124
      %v7367 = vpop.permute.xlu0 %7366
      %7368 = vrot.lane.b32.xlu0 %v7301, 124
      %v7369 = vpop.permute.xlu0 %7368
      %7370 = vrot.lane.b32.xlu0 %v7302, 124
      %v7371 = vpop.permute.xlu0 %7370
      %7372 = vrot.lane.b32.xlu0 %v7303, 124
      %v7373 = vpop.permute.xlu0 %7372
      %7374 = vrot.lane.b32.xlu0 %v7304, 124
      %v7375 = vpop.permute.xlu0 %7374
      %7376 = vrot.lane.b32.xlu0 %v7305, 124
      %v7377 = vpop.permute.xlu0 %7376
      %7378 = vrot.lane.b32.xlu0 %v7306, 124
      %v7379 = vpop.permute.xlu0 %7378
      %7380 = vrot.lane.b32.xlu0 %v7307, 124
      %v7381 = vpop.permute.xlu0 %7380
      %7382 = vrot.lane.b32.xlu0 %v7308, 124
      %v7383 = vpop.permute.xlu0 %7382
      %7384 = vrot.lane.b32.xlu0 %v7309, 124
      %v7385 = vpop.permute.xlu0 %7384
      %7386 = vrot.lane.b32.xlu0 %v7310, 124
      %v7387 = vpop.permute.xlu0 %7386
      %7388 = vrot.lane.b32.xlu0 %v7311, 124
      %v7389 = vpop.permute.xlu0 %7388
      %7390 = vrot.lane.b32.xlu0 %v7312, 124
      %v7391 = vpop.permute.xlu0 %7390
      %7392 = vrot.lane.b32.xlu0 %v7313, 124
      %v7393 = vpop.permute.xlu0 %7392
      %7394 = vrot.lane.b32.xlu0 %v7314, 124
      %v7395 = vpop.permute.xlu0 %7394
      %7396 = vrot.lane.b32.xlu0 %v7315, 124
      %v7397 = vpop.permute.xlu0 %7396
      %7398 = vrot.lane.b32.xlu0 %v7316, 124
      %v7399 = vpop.permute.xlu0 %7398
      %7400 = vrot.lane.b32.xlu0 %v7317, 124
      %v7401 = vpop.permute.xlu0 %7400
      %7402 = vrot.lane.b32.xlu0 %v7318, 124
      %v7403 = vpop.permute.xlu0 %7402
      %7404 = vrot.lane.b32.xlu0 %v7319, 124
      %v7405 = vpop.permute.xlu0 %7404
      %7406 = vrot.lane.b32.xlu0 %v7320, 124
      %v7407 = vpop.permute.xlu0 %7406
      %7408 = vrot.lane.b32.xlu0 %v7321, 124
      %v7409 = vpop.permute.xlu0 %7408
      %7410 = vrot.lane.b32.xlu0 %v7322, 124
      %v7411 = vpop.permute.xlu0 %7410
      %7412 = vrot.lane.b32.xlu0 %v7323, 124
      %v7413 = vpop.permute.xlu0 %7412
      %7414 = vrot.lane.b32.xlu0 %v7324, 124
      %v7415 = vpop.permute.xlu0 %7414
      %7416 = vrot.lane.b32.xlu0 %v7325, 124
      %v7417 = vpop.permute.xlu0 %7416
      %7418 = vrot.lane.b32.xlu0 %v7326, 124
      %v7419 = vpop.permute.xlu0 %7418
      %7420 = vrot.lane.b32.xlu0 %v7327, 124
      %v7421 = vpop.permute.xlu0 %7420
      %7422 = vrot.lane.b32.xlu0 %v7328, 124
      %v7423 = vpop.permute.xlu0 %7422
      %7424 = vrot.lane.b32.xlu0 %v7329, 124
      %v7425 = vpop.permute.xlu0 %7424
      %vm7458 = vcmask 1048544
      %7459 = vst.msk [vmem:[#allocation5] sm:$0xff] %vm7458, %v7363
      %7460 = vst.msk [vmem:[#allocation5 + $0x10] sm:$0xff] %vm7458, %v7365
      %7461 = vst.msk [vmem:[#allocation5 + $0x20] sm:$0xff] %vm7458, %v7367
      %7462 = vst.msk [vmem:[#allocation5 + $0x30] sm:$0xff] %vm7458, %v7369
      %7463 = vst.msk [vmem:[#allocation5 + $0x40] sm:$0xff] %vm7458, %v7371
      %7464 = vst.msk [vmem:[#allocation5 + $0x50] sm:$0xff] %vm7458, %v7373
      %7465 = vst.msk [vmem:[#allocation5 + $0x60] sm:$0xff] %vm7458, %v7375
      %7466 = vst.msk [vmem:[#allocation5 + $0x70] sm:$0xff] %vm7458, %v7377
      %7467 = vst.msk [vmem:[#allocation5 + $0x80] sm:$0xff] %vm7458, %v7379
      %7468 = vst.msk [vmem:[#allocation5 + $0x90] sm:$0xff] %vm7458, %v7381
      %7469 = vst.msk [vmem:[#allocation5 + $0xa0] sm:$0xff] %vm7458, %v7383
      %7470 = vst.msk [vmem:[#allocation5 + $0xb0] sm:$0xff] %vm7458, %v7385
      %7471 = vst.msk [vmem:[#allocation5 + $0xc0] sm:$0xff] %vm7458, %v7387
      %7472 = vst.msk [vmem:[#allocation5 + $0xd0] sm:$0xff] %vm7458, %v7389
      %7473 = vst.msk [vmem:[#allocation5 + $0xe0] sm:$0xff] %vm7458, %v7391
      %7474 = vst.msk [vmem:[#allocation5 + $0xf0] sm:$0xff] %vm7458, %v7393
      %7475 = vst.msk [vmem:[#allocation5 + $0x100] sm:$0xff] %vm7458, %v7395
      %7476 = vst.msk [vmem:[#allocation5 + $0x110] sm:$0xff] %vm7458, %v7397
      %7477 = vst.msk [vmem:[#allocation5 + $0x120] sm:$0xff] %vm7458, %v7399
      %7478 = vst.msk [vmem:[#allocation5 + $0x130] sm:$0xff] %vm7458, %v7401
      %7479 = vst.msk [vmem:[#allocation5 + $0x140] sm:$0xff] %vm7458, %v7403
      %7480 = vst.msk [vmem:[#allocation5 + $0x150] sm:$0xff] %vm7458, %v7405
      %7481 = vst.msk [vmem:[#allocation5 + $0x160] sm:$0xff] %vm7458, %v7407
      %7482 = vst.msk [vmem:[#allocation5 + $0x170] sm:$0xff] %vm7458, %v7409
      %7483 = vst.msk [vmem:[#allocation5 + $0x180] sm:$0xff] %vm7458, %v7411
      %7484 = vst.msk [vmem:[#allocation5 + $0x190] sm:$0xff] %vm7458, %v7413
      %7485 = vst.msk [vmem:[#allocation5 + $0x1a0] sm:$0xff] %vm7458, %v7415
      %7486 = vst.msk [vmem:[#allocation5 + $0x1b0] sm:$0xff] %vm7458, %v7417
      %7487 = vst.msk [vmem:[#allocation5 + $0x1c0] sm:$0xff] %vm7458, %v7419
      %7488 = vst.msk [vmem:[#allocation5 + $0x1d0] sm:$0xff] %vm7458, %v7421
      %7489 = vst.msk [vmem:[#allocation5 + $0x1e0] sm:$0xff] %vm7458, %v7423
      %7490 = vst.msk [vmem:[#allocation5 + $0x1f0] sm:$0xff] %vm7458, %v7425
      %v7491 = vld [vmem:[%s7297 + $0x1] sm:$0xff]
      %v7492 = vld [vmem:[%s7297 + $0x9] sm:$0xff]
      %v7493 = vld [vmem:[%s7297 + $0x19] sm:$0xff]
      %v7494 = vld [vmem:[%s7297 + $0x21] sm:$0xff]
      %v7495 = vld [vmem:[%s7297 + $0x31] sm:$0xff]
      %v7496 = vld [vmem:[%s7297 + $0x39] sm:$0xff]
      %v7497 = vld [vmem:[%s7297 + $0x49] sm:$0xff]
      %v7498 = vld [vmem:[%s7297 + $0x51] sm:$0xff]
      %v7499 = vld [vmem:[%s7297 + $0x61] sm:$0xff]
      %v7500 = vld [vmem:[%s7297 + $0x69] sm:$0xff]
      %v7501 = vld [vmem:[%s7297 + $0x79] sm:$0xff]
      %v7502 = vld [vmem:[%s7297 + $0x81] sm:$0xff]
      %v7503 = vld [vmem:[%s7297 + $0x91] sm:$0xff]
      %v7504 = vld [vmem:[%s7297 + $0x99] sm:$0xff]
      %v7505 = vld [vmem:[%s7297 + $0xa9] sm:$0xff]
      %v7506 = vld [vmem:[%s7297 + $0xb1] sm:$0xff]
      %v7507 = vld [vmem:[%s7297 + $0xc1] sm:$0xff]
      %v7508 = vld [vmem:[%s7297 + $0xc9] sm:$0xff]
      %v7509 = vld [vmem:[%s7297 + $0xd9] sm:$0xff]
      %v7510 = vld [vmem:[%s7297 + $0xe1] sm:$0xff]
      %v7511 = vld [vmem:[%s7297 + $0xf1] sm:$0xff]
      %v7512 = vld [vmem:[%s7297 + $0xf9] sm:$0xff]
      %v7513 = vld [vmem:[%s7297 + $0x109] sm:$0xff]
      %v7514 = vld [vmem:[%s7297 + $0x111] sm:$0xff]
      %v7515 = vld [vmem:[%s7297 + $0x121] sm:$0xff]
      %v7516 = vld [vmem:[%s7297 + $0x129] sm:$0xff]
      %v7517 = vld [vmem:[%s7297 + $0x139] sm:$0xff]
      %v7518 = vld [vmem:[%s7297 + $0x141] sm:$0xff]
      %v7519 = vld [vmem:[%s7297 + $0x151] sm:$0xff]
      %v7520 = vld [vmem:[%s7297 + $0x159] sm:$0xff]
      %v7521 = vld [vmem:[%s7297 + $0x169] sm:$0xff]
      %v7522 = vld [vmem:[%s7297 + $0x171] sm:$0xff]
      %7523 = vst.msk [vmem:[#allocation5 + $0x8] sm:$0xff] %vm282, %v7491
      %7524 = vst.msk [vmem:[#allocation5 + $0x18] sm:$0xff] %vm282, %v7492
      %7525 = vst.msk [vmem:[#allocation5 + $0x28] sm:$0xff] %vm282, %v7493
      %7526 = vst.msk [vmem:[#allocation5 + $0x38] sm:$0xff] %vm282, %v7494
      %7527 = vst.msk [vmem:[#allocation5 + $0x48] sm:$0xff] %vm282, %v7495
      %7528 = vst.msk [vmem:[#allocation5 + $0x58] sm:$0xff] %vm282, %v7496
      %7529 = vst.msk [vmem:[#allocation5 + $0x68] sm:$0xff] %vm282, %v7497
      %7530 = vst.msk [vmem:[#allocation5 + $0x78] sm:$0xff] %vm282, %v7498
      %7531 = vst.msk [vmem:[#allocation5 + $0x88] sm:$0xff] %vm282, %v7499
      %7532 = vst.msk [vmem:[#allocation5 + $0x98] sm:$0xff] %vm282, %v7500
      %7533 = vst.msk [vmem:[#allocation5 + $0xa8] sm:$0xff] %vm282, %v7501
      %7534 = vst.msk [vmem:[#allocation5 + $0xb8] sm:$0xff] %vm282, %v7502
      %7535 = vst.msk [vmem:[#allocation5 + $0xc8] sm:$0xff] %vm282, %v7503
      %7536 = vst.msk [vmem:[#allocation5 + $0xd8] sm:$0xff] %vm282, %v7504
      %7537 = vst.msk [vmem:[#allocation5 + $0xe8] sm:$0xff] %vm282, %v7505
      %7538 = vst.msk [vmem:[#allocation5 + $0xf8] sm:$0xff] %vm282, %v7506
      %7539 = vst.msk [vmem:[#allocation5 + $0x108] sm:$0xff] %vm282, %v7507
      %7540 = vst.msk [vmem:[#allocation5 + $0x118] sm:$0xff] %vm282, %v7508
      %7541 = vst.msk [vmem:[#allocation5 + $0x128] sm:$0xff] %vm282, %v7509
      %7542 = vst.msk [vmem:[#allocation5 + $0x138] sm:$0xff] %vm282, %v7510
      %7543 = vst.msk [vmem:[#allocation5 + $0x148] sm:$0xff] %vm282, %v7511
      %7544 = vst.msk [vmem:[#allocation5 + $0x158] sm:$0xff] %vm282, %v7512
      %7545 = vst.msk [vmem:[#allocation5 + $0x168] sm:$0xff] %vm282, %v7513
      %7546 = vst.msk [vmem:[#allocation5 + $0x178] sm:$0xff] %vm282, %v7514
      %7547 = vst.msk [vmem:[#allocation5 + $0x188] sm:$0xff] %vm282, %v7515
      %7548 = vst.msk [vmem:[#allocation5 + $0x198] sm:$0xff] %vm282, %v7516
      %7549 = vst.msk [vmem:[#allocation5 + $0x1a8] sm:$0xff] %vm282, %v7517
      %7550 = vst.msk [vmem:[#allocation5 + $0x1b8] sm:$0xff] %vm282, %v7518
      %7551 = vst.msk [vmem:[#allocation5 + $0x1c8] sm:$0xff] %vm282, %v7519
      %7552 = vst.msk [vmem:[#allocation5 + $0x1d8] sm:$0xff] %vm282, %v7520
      %7553 = vst.msk [vmem:[#allocation5 + $0x1e8] sm:$0xff] %vm282, %v7521
      %7554 = vst.msk [vmem:[#allocation5 + $0x1f8] sm:$0xff] %vm282, %v7522
      %v7555 = vld [vmem:[%s7297 + $0x2] sm:$0xff]
      %v7556 = vld [vmem:[%s7297 + $0xa] sm:$0xff]
      %v7557 = vld [vmem:[%s7297 + $0x1a] sm:$0xff]
      %v7558 = vld [vmem:[%s7297 + $0x22] sm:$0xff]
      %v7559 = vld [vmem:[%s7297 + $0x32] sm:$0xff]
      %v7560 = vld [vmem:[%s7297 + $0x3a] sm:$0xff]
      %v7561 = vld [vmem:[%s7297 + $0x4a] sm:$0xff]
      %v7562 = vld [vmem:[%s7297 + $0x52] sm:$0xff]
      %v7563 = vld [vmem:[%s7297 + $0x62] sm:$0xff]
      %v7564 = vld [vmem:[%s7297 + $0x6a] sm:$0xff]
      %v7565 = vld [vmem:[%s7297 + $0x7a] sm:$0xff]
      %v7566 = vld [vmem:[%s7297 + $0x82] sm:$0xff]
      %v7567 = vld [vmem:[%s7297 + $0x92] sm:$0xff]
      %v7568 = vld [vmem:[%s7297 + $0x9a] sm:$0xff]
      %v7569 = vld [vmem:[%s7297 + $0xaa] sm:$0xff]
      %v7570 = vld [vmem:[%s7297 + $0xb2] sm:$0xff]
      %v7571 = vld [vmem:[%s7297 + $0xc2] sm:$0xff]
      %v7572 = vld [vmem:[%s7297 + $0xca] sm:$0xff]
      %v7573 = vld [vmem:[%s7297 + $0xda] sm:$0xff]
      %v7574 = vld [vmem:[%s7297 + $0xe2] sm:$0xff]
      %v7575 = vld [vmem:[%s7297 + $0xf2] sm:$0xff]
      %v7576 = vld [vmem:[%s7297 + $0xfa] sm:$0xff]
      %v7577 = vld [vmem:[%s7297 + $0x10a] sm:$0xff]
      %v7578 = vld [vmem:[%s7297 + $0x112] sm:$0xff]
      %v7579 = vld [vmem:[%s7297 + $0x122] sm:$0xff]
      %v7580 = vld [vmem:[%s7297 + $0x12a] sm:$0xff]
      %v7581 = vld [vmem:[%s7297 + $0x13a] sm:$0xff]
      %v7582 = vld [vmem:[%s7297 + $0x142] sm:$0xff]
      %v7583 = vld [vmem:[%s7297 + $0x152] sm:$0xff]
      %v7584 = vld [vmem:[%s7297 + $0x15a] sm:$0xff]
      %v7585 = vld [vmem:[%s7297 + $0x16a] sm:$0xff]
      %v7586 = vld [vmem:[%s7297 + $0x172] sm:$0xff]
      %7619 = vrot.lane.b32.xlu0 %v7555, 4
      %v7620 = vpop.permute.xlu0 %7619
      %7621 = vrot.lane.b32.xlu0 %v7556, 4
      %v7622 = vpop.permute.xlu0 %7621
      %7623 = vrot.lane.b32.xlu0 %v7557, 4
      %v7624 = vpop.permute.xlu0 %7623
      %7625 = vrot.lane.b32.xlu0 %v7558, 4
      %v7626 = vpop.permute.xlu0 %7625
      %7627 = vrot.lane.b32.xlu0 %v7559, 4
      %v7628 = vpop.permute.xlu0 %7627
      %7629 = vrot.lane.b32.xlu0 %v7560, 4
      %v7630 = vpop.permute.xlu0 %7629
      %7631 = vrot.lane.b32.xlu0 %v7561, 4
      %v7632 = vpop.permute.xlu0 %7631
      %7633 = vrot.lane.b32.xlu0 %v7562, 4
      %v7634 = vpop.permute.xlu0 %7633
      %7635 = vrot.lane.b32.xlu0 %v7563, 4
      %v7636 = vpop.permute.xlu0 %7635
      %7637 = vrot.lane.b32.xlu0 %v7564, 4
      %v7638 = vpop.permute.xlu0 %7637
      %7639 = vrot.lane.b32.xlu0 %v7565, 4
      %v7640 = vpop.permute.xlu0 %7639
      %7641 = vrot.lane.b32.xlu0 %v7566, 4
      %v7642 = vpop.permute.xlu0 %7641
      %7643 = vrot.lane.b32.xlu0 %v7567, 4
      %v7644 = vpop.permute.xlu0 %7643
      %7645 = vrot.lane.b32.xlu0 %v7568, 4
      %v7646 = vpop.permute.xlu0 %7645
      %7647 = vrot.lane.b32.xlu0 %v7569, 4
      %v7648 = vpop.permute.xlu0 %7647
      %7649 = vrot.lane.b32.xlu0 %v7570, 4
      %v7650 = vpop.permute.xlu0 %7649
      %7651 = vrot.lane.b32.xlu0 %v7571, 4
      %v7652 = vpop.permute.xlu0 %7651
      %7653 = vrot.lane.b32.xlu0 %v7572, 4
      %v7654 = vpop.permute.xlu0 %7653
      %7655 = vrot.lane.b32.xlu0 %v7573, 4
      %v7656 = vpop.permute.xlu0 %7655
      %7657 = vrot.lane.b32.xlu0 %v7574, 4
      %v7658 = vpop.permute.xlu0 %7657
      %7659 = vrot.lane.b32.xlu0 %v7575, 4
      %v7660 = vpop.permute.xlu0 %7659
      %7661 = vrot.lane.b32.xlu0 %v7576, 4
      %v7662 = vpop.permute.xlu0 %7661
      %7663 = vrot.lane.b32.xlu0 %v7577, 4
      %v7664 = vpop.permute.xlu0 %7663
      %7665 = vrot.lane.b32.xlu0 %v7578, 4
      %v7666 = vpop.permute.xlu0 %7665
      %7667 = vrot.lane.b32.xlu0 %v7579, 4
      %v7668 = vpop.permute.xlu0 %7667
      %7669 = vrot.lane.b32.xlu0 %v7580, 4
      %v7670 = vpop.permute.xlu0 %7669
      %7671 = vrot.lane.b32.xlu0 %v7581, 4
      %v7672 = vpop.permute.xlu0 %7671
      %7673 = vrot.lane.b32.xlu0 %v7582, 4
      %v7674 = vpop.permute.xlu0 %7673
      %7675 = vrot.lane.b32.xlu0 %v7583, 4
      %v7676 = vpop.permute.xlu0 %7675
      %7677 = vrot.lane.b32.xlu0 %v7584, 4
      %v7678 = vpop.permute.xlu0 %7677
      %7679 = vrot.lane.b32.xlu0 %v7585, 4
      %v7680 = vpop.permute.xlu0 %7679
      %7681 = vrot.lane.b32.xlu0 %v7586, 4
      %v7682 = vpop.permute.xlu0 %7681
      %7715 = vst.msk [vmem:[#allocation5 + $0x8] sm:$0xff] %vm1664, %v7620
      %7716 = vst.msk [vmem:[#allocation5 + $0x18] sm:$0xff] %vm1664, %v7622
      %7717 = vst.msk [vmem:[#allocation5 + $0x28] sm:$0xff] %vm1664, %v7624
      %7718 = vst.msk [vmem:[#allocation5 + $0x38] sm:$0xff] %vm1664, %v7626
      %7719 = vst.msk [vmem:[#allocation5 + $0x48] sm:$0xff] %vm1664, %v7628
      %7720 = vst.msk [vmem:[#allocation5 + $0x58] sm:$0xff] %vm1664, %v7630
      %7721 = vst.msk [vmem:[#allocation5 + $0x68] sm:$0xff] %vm1664, %v7632
      %7722 = vst.msk [vmem:[#allocation5 + $0x78] sm:$0xff] %vm1664, %v7634
      %7723 = vst.msk [vmem:[#allocation5 + $0x88] sm:$0xff] %vm1664, %v7636
      %7724 = vst.msk [vmem:[#allocation5 + $0x98] sm:$0xff] %vm1664, %v7638
      %7725 = vst.msk [vmem:[#allocation5 + $0xa8] sm:$0xff] %vm1664, %v7640
      %7726 = vst.msk [vmem:[#allocation5 + $0xb8] sm:$0xff] %vm1664, %v7642
      %7727 = vst.msk [vmem:[#allocation5 + $0xc8] sm:$0xff] %vm1664, %v7644
      %7728 = vst.msk [vmem:[#allocation5 + $0xd8] sm:$0xff] %vm1664, %v7646
      %7729 = vst.msk [vmem:[#allocation5 + $0xe8] sm:$0xff] %vm1664, %v7648
      %7730 = vst.msk [vmem:[#allocation5 + $0xf8] sm:$0xff] %vm1664, %v7650
      %7731 = vst.msk [vmem:[#allocation5 + $0x108] sm:$0xff] %vm1664, %v7652
      %7732 = vst.msk [vmem:[#allocation5 + $0x118] sm:$0xff] %vm1664, %v7654
      %7733 = vst.msk [vmem:[#allocation5 + $0x128] sm:$0xff] %vm1664, %v7656
      %7734 = vst.msk [vmem:[#allocation5 + $0x138] sm:$0xff] %vm1664, %v7658
      %7735 = vst.msk [vmem:[#allocation5 + $0x148] sm:$0xff] %vm1664, %v7660
      %7736 = vst.msk [vmem:[#allocation5 + $0x158] sm:$0xff] %vm1664, %v7662
      %7737 = vst.msk [vmem:[#allocation5 + $0x168] sm:$0xff] %vm1664, %v7664
      %7738 = vst.msk [vmem:[#allocation5 + $0x178] sm:$0xff] %vm1664, %v7666
      %7739 = vst.msk [vmem:[#allocation5 + $0x188] sm:$0xff] %vm1664, %v7668
      %7740 = vst.msk [vmem:[#allocation5 + $0x198] sm:$0xff] %vm1664, %v7670
      %7741 = vst.msk [vmem:[#allocation5 + $0x1a8] sm:$0xff] %vm1664, %v7672
      %7742 = vst.msk [vmem:[#allocation5 + $0x1b8] sm:$0xff] %vm1664, %v7674
      %7743 = vst.msk [vmem:[#allocation5 + $0x1c8] sm:$0xff] %vm1664, %v7676
      %7744 = vst.msk [vmem:[#allocation5 + $0x1d8] sm:$0xff] %vm1664, %v7678
      %7745 = vst.msk [vmem:[#allocation5 + $0x1e8] sm:$0xff] %vm1664, %v7680
      %7746 = vst.msk [vmem:[#allocation5 + $0x1f8] sm:$0xff] %vm1664, %v7682
      %v7747 = vld [vmem:[%s7297 + $0x3] sm:$0xff]
      %v7748 = vld [vmem:[%s7297 + $0xb] sm:$0xff]
      %v7749 = vld [vmem:[%s7297 + $0x1b] sm:$0xff]
      %v7750 = vld [vmem:[%s7297 + $0x23] sm:$0xff]
      %v7751 = vld [vmem:[%s7297 + $0x33] sm:$0xff]
      %v7752 = vld [vmem:[%s7297 + $0x3b] sm:$0xff]
      %v7753 = vld [vmem:[%s7297 + $0x4b] sm:$0xff]
      %v7754 = vld [vmem:[%s7297 + $0x53] sm:$0xff]
      %v7755 = vld [vmem:[%s7297 + $0x63] sm:$0xff]
      %v7756 = vld [vmem:[%s7297 + $0x6b] sm:$0xff]
      %v7757 = vld [vmem:[%s7297 + $0x7b] sm:$0xff]
      %v7758 = vld [vmem:[%s7297 + $0x83] sm:$0xff]
      %v7759 = vld [vmem:[%s7297 + $0x93] sm:$0xff]
      %v7760 = vld [vmem:[%s7297 + $0x9b] sm:$0xff]
      %v7761 = vld [vmem:[%s7297 + $0xab] sm:$0xff]
      %v7762 = vld [vmem:[%s7297 + $0xb3] sm:$0xff]
      %v7763 = vld [vmem:[%s7297 + $0xc3] sm:$0xff]
      %v7764 = vld [vmem:[%s7297 + $0xcb] sm:$0xff]
      %v7765 = vld [vmem:[%s7297 + $0xdb] sm:$0xff]
      %v7766 = vld [vmem:[%s7297 + $0xe3] sm:$0xff]
      %v7767 = vld [vmem:[%s7297 + $0xf3] sm:$0xff]
      %v7768 = vld [vmem:[%s7297 + $0xfb] sm:$0xff]
      %v7769 = vld [vmem:[%s7297 + $0x10b] sm:$0xff]
      %v7770 = vld [vmem:[%s7297 + $0x113] sm:$0xff]
      %v7771 = vld [vmem:[%s7297 + $0x123] sm:$0xff]
      %v7772 = vld [vmem:[%s7297 + $0x12b] sm:$0xff]
      %v7773 = vld [vmem:[%s7297 + $0x13b] sm:$0xff]
      %v7774 = vld [vmem:[%s7297 + $0x143] sm:$0xff]
      %v7775 = vld [vmem:[%s7297 + $0x153] sm:$0xff]
      %v7776 = vld [vmem:[%s7297 + $0x15b] sm:$0xff]
      %v7777 = vld [vmem:[%s7297 + $0x16b] sm:$0xff]
      %v7778 = vld [vmem:[%s7297 + $0x173] sm:$0xff]
      %7811 = vrot.lane.b32.xlu0 %v7747, 8
      %v7812 = vpop.permute.xlu0 %7811
      %7813 = vrot.lane.b32.xlu0 %v7748, 8
      %v7814 = vpop.permute.xlu0 %7813
      %7815 = vrot.lane.b32.xlu0 %v7749, 8
      %v7816 = vpop.permute.xlu0 %7815
      %7817 = vrot.lane.b32.xlu0 %v7750, 8
      %v7818 = vpop.permute.xlu0 %7817
      %7819 = vrot.lane.b32.xlu0 %v7751, 8
      %v7820 = vpop.permute.xlu0 %7819
      %7821 = vrot.lane.b32.xlu0 %v7752, 8
      %v7822 = vpop.permute.xlu0 %7821
      %7823 = vrot.lane.b32.xlu0 %v7753, 8
      %v7824 = vpop.permute.xlu0 %7823
      %7825 = vrot.lane.b32.xlu0 %v7754, 8
      %v7826 = vpop.permute.xlu0 %7825
      %7827 = vrot.lane.b32.xlu0 %v7755, 8
      %v7828 = vpop.permute.xlu0 %7827
      %7829 = vrot.lane.b32.xlu0 %v7756, 8
      %v7830 = vpop.permute.xlu0 %7829
      %7831 = vrot.lane.b32.xlu0 %v7757, 8
      %v7832 = vpop.permute.xlu0 %7831
      %7833 = vrot.lane.b32.xlu0 %v7758, 8
      %v7834 = vpop.permute.xlu0 %7833
      %7835 = vrot.lane.b32.xlu0 %v7759, 8
      %v7836 = vpop.permute.xlu0 %7835
      %7837 = vrot.lane.b32.xlu0 %v7760, 8
      %v7838 = vpop.permute.xlu0 %7837
      %7839 = vrot.lane.b32.xlu0 %v7761, 8
      %v7840 = vpop.permute.xlu0 %7839
      %7841 = vrot.lane.b32.xlu0 %v7762, 8
      %v7842 = vpop.permute.xlu0 %7841
      %7843 = vrot.lane.b32.xlu0 %v7763, 8
      %v7844 = vpop.permute.xlu0 %7843
      %7845 = vrot.lane.b32.xlu0 %v7764, 8
      %v7846 = vpop.permute.xlu0 %7845
      %7847 = vrot.lane.b32.xlu0 %v7765, 8
      %v7848 = vpop.permute.xlu0 %7847
      %7849 = vrot.lane.b32.xlu0 %v7766, 8
      %v7850 = vpop.permute.xlu0 %7849
      %7851 = vrot.lane.b32.xlu0 %v7767, 8
      %v7852 = vpop.permute.xlu0 %7851
      %7853 = vrot.lane.b32.xlu0 %v7768, 8
      %v7854 = vpop.permute.xlu0 %7853
      %7855 = vrot.lane.b32.xlu0 %v7769, 8
      %v7856 = vpop.permute.xlu0 %7855
      %7857 = vrot.lane.b32.xlu0 %v7770, 8
      %v7858 = vpop.permute.xlu0 %7857
      %7859 = vrot.lane.b32.xlu0 %v7771, 8
      %v7860 = vpop.permute.xlu0 %7859
      %7861 = vrot.lane.b32.xlu0 %v7772, 8
      %v7862 = vpop.permute.xlu0 %7861
      %7863 = vrot.lane.b32.xlu0 %v7773, 8
      %v7864 = vpop.permute.xlu0 %7863
      %7865 = vrot.lane.b32.xlu0 %v7774, 8
      %v7866 = vpop.permute.xlu0 %7865
      %7867 = vrot.lane.b32.xlu0 %v7775, 8
      %v7868 = vpop.permute.xlu0 %7867
      %7869 = vrot.lane.b32.xlu0 %v7776, 8
      %v7870 = vpop.permute.xlu0 %7869
      %7871 = vrot.lane.b32.xlu0 %v7777, 8
      %v7872 = vpop.permute.xlu0 %7871
      %7873 = vrot.lane.b32.xlu0 %v7778, 8
      %v7874 = vpop.permute.xlu0 %7873
      %7907 = vst.msk [vmem:[#allocation5 + $0x8] sm:$0xff] %vm1857, %v7812
      %7908 = vst.msk [vmem:[#allocation5 + $0x18] sm:$0xff] %vm1857, %v7814
      %7909 = vst.msk [vmem:[#allocation5 + $0x28] sm:$0xff] %vm1857, %v7816
      %7910 = vst.msk [vmem:[#allocation5 + $0x38] sm:$0xff] %vm1857, %v7818
      %7911 = vst.msk [vmem:[#allocation5 + $0x48] sm:$0xff] %vm1857, %v7820
      %7912 = vst.msk [vmem:[#allocation5 + $0x58] sm:$0xff] %vm1857, %v7822
      %7913 = vst.msk [vmem:[#allocation5 + $0x68] sm:$0xff] %vm1857, %v7824
      %7914 = vst.msk [vmem:[#allocation5 + $0x78] sm:$0xff] %vm1857, %v7826
      %7915 = vst.msk [vmem:[#allocation5 + $0x88] sm:$0xff] %vm1857, %v7828
      %7916 = vst.msk [vmem:[#allocation5 + $0x98] sm:$0xff] %vm1857, %v7830
      %7917 = vst.msk [vmem:[#allocation5 + $0xa8] sm:$0xff] %vm1857, %v7832
      %7918 = vst.msk [vmem:[#allocation5 + $0xb8] sm:$0xff] %vm1857, %v7834
      %7919 = vst.msk [vmem:[#allocation5 + $0xc8] sm:$0xff] %vm1857, %v7836
      %7920 = vst.msk [vmem:[#allocation5 + $0xd8] sm:$0xff] %vm1857, %v7838
      %7921 = vst.msk [vmem:[#allocation5 + $0xe8] sm:$0xff] %vm1857, %v7840
      %7922 = vst.msk [vmem:[#allocation5 + $0xf8] sm:$0xff] %vm1857, %v7842
      %7923 = vst.msk [vmem:[#allocation5 + $0x108] sm:$0xff] %vm1857, %v7844
      %7924 = vst.msk [vmem:[#allocation5 + $0x118] sm:$0xff] %vm1857, %v7846
      %7925 = vst.msk [vmem:[#allocation5 + $0x128] sm:$0xff] %vm1857, %v7848
      %7926 = vst.msk [vmem:[#allocation5 + $0x138] sm:$0xff] %vm1857, %v7850
      %7927 = vst.msk [vmem:[#allocation5 + $0x148] sm:$0xff] %vm1857, %v7852
      %7928 = vst.msk [vmem:[#allocation5 + $0x158] sm:$0xff] %vm1857, %v7854
      %7929 = vst.msk [vmem:[#allocation5 + $0x168] sm:$0xff] %vm1857, %v7856
      %7930 = vst.msk [vmem:[#allocation5 + $0x178] sm:$0xff] %vm1857, %v7858
      %7931 = vst.msk [vmem:[#allocation5 + $0x188] sm:$0xff] %vm1857, %v7860
      %7932 = vst.msk [vmem:[#allocation5 + $0x198] sm:$0xff] %vm1857, %v7862
      %7933 = vst.msk [vmem:[#allocation5 + $0x1a8] sm:$0xff] %vm1857, %v7864
      %7934 = vst.msk [vmem:[#allocation5 + $0x1b8] sm:$0xff] %vm1857, %v7866
      %7935 = vst.msk [vmem:[#allocation5 + $0x1c8] sm:$0xff] %vm1857, %v7868
      %7936 = vst.msk [vmem:[#allocation5 + $0x1d8] sm:$0xff] %vm1857, %v7870
      %7937 = vst.msk [vmem:[#allocation5 + $0x1e8] sm:$0xff] %vm1857, %v7872
      %7938 = vst.msk [vmem:[#allocation5 + $0x1f8] sm:$0xff] %vm1857, %v7874
      %v7939 = vld [vmem:[%s7297 + $0x4] sm:$0xff]
      %v7940 = vld [vmem:[%s7297 + $0xc] sm:$0xff]
      %v7941 = vld [vmem:[%s7297 + $0x1c] sm:$0xff]
      %v7942 = vld [vmem:[%s7297 + $0x24] sm:$0xff]
      %v7943 = vld [vmem:[%s7297 + $0x34] sm:$0xff]
      %v7944 = vld [vmem:[%s7297 + $0x3c] sm:$0xff]
      %v7945 = vld [vmem:[%s7297 + $0x4c] sm:$0xff]
      %v7946 = vld [vmem:[%s7297 + $0x54] sm:$0xff]
      %v7947 = vld [vmem:[%s7297 + $0x64] sm:$0xff]
      %v7948 = vld [vmem:[%s7297 + $0x6c] sm:$0xff]
      %v7949 = vld [vmem:[%s7297 + $0x7c] sm:$0xff]
      %v7950 = vld [vmem:[%s7297 + $0x84] sm:$0xff]
      %v7951 = vld [vmem:[%s7297 + $0x94] sm:$0xff]
      %v7952 = vld [vmem:[%s7297 + $0x9c] sm:$0xff]
      %v7953 = vld [vmem:[%s7297 + $0xac] sm:$0xff]
      %v7954 = vld [vmem:[%s7297 + $0xb4] sm:$0xff]
      %v7955 = vld [vmem:[%s7297 + $0xc4] sm:$0xff]
      %v7956 = vld [vmem:[%s7297 + $0xcc] sm:$0xff]
      %v7957 = vld [vmem:[%s7297 + $0xdc] sm:$0xff]
      %v7958 = vld [vmem:[%s7297 + $0xe4] sm:$0xff]
      %v7959 = vld [vmem:[%s7297 + $0xf4] sm:$0xff]
      %v7960 = vld [vmem:[%s7297 + $0xfc] sm:$0xff]
      %v7961 = vld [vmem:[%s7297 + $0x10c] sm:$0xff]
      %v7962 = vld [vmem:[%s7297 + $0x114] sm:$0xff]
      %v7963 = vld [vmem:[%s7297 + $0x124] sm:$0xff]
      %v7964 = vld [vmem:[%s7297 + $0x12c] sm:$0xff]
      %v7965 = vld [vmem:[%s7297 + $0x13c] sm:$0xff]
      %v7966 = vld [vmem:[%s7297 + $0x144] sm:$0xff]
      %v7967 = vld [vmem:[%s7297 + $0x154] sm:$0xff]
      %v7968 = vld [vmem:[%s7297 + $0x15c] sm:$0xff]
      %v7969 = vld [vmem:[%s7297 + $0x16c] sm:$0xff]
      %v7970 = vld [vmem:[%s7297 + $0x174] sm:$0xff]
      %8003 = vrot.lane.b32.xlu0 %v7939, 12
      %v8004 = vpop.permute.xlu0 %8003
      %8005 = vrot.lane.b32.xlu0 %v7940, 12
      %v8006 = vpop.permute.xlu0 %8005
      %8007 = vrot.lane.b32.xlu0 %v7941, 12
      %v8008 = vpop.permute.xlu0 %8007
      %8009 = vrot.lane.b32.xlu0 %v7942, 12
      %v8010 = vpop.permute.xlu0 %8009
      %8011 = vrot.lane.b32.xlu0 %v7943, 12
      %v8012 = vpop.permute.xlu0 %8011
      %8013 = vrot.lane.b32.xlu0 %v7944, 12
      %v8014 = vpop.permute.xlu0 %8013
      %8015 = vrot.lane.b32.xlu0 %v7945, 12
      %v8016 = vpop.permute.xlu0 %8015
      %8017 = vrot.lane.b32.xlu0 %v7946, 12
      %v8018 = vpop.permute.xlu0 %8017
      %8019 = vrot.lane.b32.xlu0 %v7947, 12
      %v8020 = vpop.permute.xlu0 %8019
      %8021 = vrot.lane.b32.xlu0 %v7948, 12
      %v8022 = vpop.permute.xlu0 %8021
      %8023 = vrot.lane.b32.xlu0 %v7949, 12
      %v8024 = vpop.permute.xlu0 %8023
      %8025 = vrot.lane.b32.xlu0 %v7950, 12
      %v8026 = vpop.permute.xlu0 %8025
      %8027 = vrot.lane.b32.xlu0 %v7951, 12
      %v8028 = vpop.permute.xlu0 %8027
      %8029 = vrot.lane.b32.xlu0 %v7952, 12
      %v8030 = vpop.permute.xlu0 %8029
      %8031 = vrot.lane.b32.xlu0 %v7953, 12
      %v8032 = vpop.permute.xlu0 %8031
      %8033 = vrot.lane.b32.xlu0 %v7954, 12
      %v8034 = vpop.permute.xlu0 %8033
      %8035 = vrot.lane.b32.xlu0 %v7955, 12
      %v8036 = vpop.permute.xlu0 %8035
      %8037 = vrot.lane.b32.xlu0 %v7956, 12
      %v8038 = vpop.permute.xlu0 %8037
      %8039 = vrot.lane.b32.xlu0 %v7957, 12
      %v8040 = vpop.permute.xlu0 %8039
      %8041 = vrot.lane.b32.xlu0 %v7958, 12
      %v8042 = vpop.permute.xlu0 %8041
      %8043 = vrot.lane.b32.xlu0 %v7959, 12
      %v8044 = vpop.permute.xlu0 %8043
      %8045 = vrot.lane.b32.xlu0 %v7960, 12
      %v8046 = vpop.permute.xlu0 %8045
      %8047 = vrot.lane.b32.xlu0 %v7961, 12
      %v8048 = vpop.permute.xlu0 %8047
      %8049 = vrot.lane.b32.xlu0 %v7962, 12
      %v8050 = vpop.permute.xlu0 %8049
      %8051 = vrot.lane.b32.xlu0 %v7963, 12
      %v8052 = vpop.permute.xlu0 %8051
      %8053 = vrot.lane.b32.xlu0 %v7964, 12
      %v8054 = vpop.permute.xlu0 %8053
      %8055 = vrot.lane.b32.xlu0 %v7965, 12
      %v8056 = vpop.permute.xlu0 %8055
      %8057 = vrot.lane.b32.xlu0 %v7966, 12
      %v8058 = vpop.permute.xlu0 %8057
      %8059 = vrot.lane.b32.xlu0 %v7967, 12
      %v8060 = vpop.permute.xlu0 %8059
      %8061 = vrot.lane.b32.xlu0 %v7968, 12
      %v8062 = vpop.permute.xlu0 %8061
      %8063 = vrot.lane.b32.xlu0 %v7969, 12
      %v8064 = vpop.permute.xlu0 %8063
      %8065 = vrot.lane.b32.xlu0 %v7970, 12
      %v8066 = vpop.permute.xlu0 %8065
      %8099 = vst.msk [vmem:[#allocation5 + $0x8] sm:$0xff] %vm2050, %v8004
      %8100 = vst.msk [vmem:[#allocation5 + $0x18] sm:$0xff] %vm2050, %v8006
      %8101 = vst.msk [vmem:[#allocation5 + $0x28] sm:$0xff] %vm2050, %v8008
      %8102 = vst.msk [vmem:[#allocation5 + $0x38] sm:$0xff] %vm2050, %v8010
      %8103 = vst.msk [vmem:[#allocation5 + $0x48] sm:$0xff] %vm2050, %v8012
      %8104 = vst.msk [vmem:[#allocation5 + $0x58] sm:$0xff] %vm2050, %v8014
      %8105 = vst.msk [vmem:[#allocation5 + $0x68] sm:$0xff] %vm2050, %v8016
      %8106 = vst.msk [vmem:[#allocation5 + $0x78] sm:$0xff] %vm2050, %v8018
      %8107 = vst.msk [vmem:[#allocation5 + $0x88] sm:$0xff] %vm2050, %v8020
      %8108 = vst.msk [vmem:[#allocation5 + $0x98] sm:$0xff] %vm2050, %v8022
      %8109 = vst.msk [vmem:[#allocation5 + $0xa8] sm:$0xff] %vm2050, %v8024
      %8110 = vst.msk [vmem:[#allocation5 + $0xb8] sm:$0xff] %vm2050, %v8026
      %8111 = vst.msk [vmem:[#allocation5 + $0xc8] sm:$0xff] %vm2050, %v8028
      %8112 = vst.msk [vmem:[#allocation5 + $0xd8] sm:$0xff] %vm2050, %v8030
      %8113 = vst.msk [vmem:[#allocation5 + $0xe8] sm:$0xff] %vm2050, %v8032
      %8114 = vst.msk [vmem:[#allocation5 + $0xf8] sm:$0xff] %vm2050, %v8034
      %8115 = vst.msk [vmem:[#allocation5 + $0x108] sm:$0xff] %vm2050, %v8036
      %8116 = vst.msk [vmem:[#allocation5 + $0x118] sm:$0xff] %vm2050, %v8038
      %8117 = vst.msk [vmem:[#allocation5 + $0x128] sm:$0xff] %vm2050, %v8040
      %8118 = vst.msk [vmem:[#allocation5 + $0x138] sm:$0xff] %vm2050, %v8042
      %8119 = vst.msk [vmem:[#allocation5 + $0x148] sm:$0xff] %vm2050, %v8044
      %8120 = vst.msk [vmem:[#allocation5 + $0x158] sm:$0xff] %vm2050, %v8046
      %8121 = vst.msk [vmem:[#allocation5 + $0x168] sm:$0xff] %vm2050, %v8048
      %8122 = vst.msk [vmem:[#allocation5 + $0x178] sm:$0xff] %vm2050, %v8050
      %8123 = vst.msk [vmem:[#allocation5 + $0x188] sm:$0xff] %vm2050, %v8052
      %8124 = vst.msk [vmem:[#allocation5 + $0x198] sm:$0xff] %vm2050, %v8054
      %8125 = vst.msk [vmem:[#allocation5 + $0x1a8] sm:$0xff] %vm2050, %v8056
      %8126 = vst.msk [vmem:[#allocation5 + $0x1b8] sm:$0xff] %vm2050, %v8058
      %8127 = vst.msk [vmem:[#allocation5 + $0x1c8] sm:$0xff] %vm2050, %v8060
      %8128 = vst.msk [vmem:[#allocation5 + $0x1d8] sm:$0xff] %vm2050, %v8062
      %8129 = vst.msk [vmem:[#allocation5 + $0x1e8] sm:$0xff] %vm2050, %v8064
      %8130 = vst.msk [vmem:[#allocation5 + $0x1f8] sm:$0xff] %vm2050, %v8066
      %v8131 = vld [vmem:[#allocation5] sm:$0xff]
      %v8132 = vld [vmem:[#allocation5 + $0x8] sm:$0xff]
      %v8133 = vld [vmem:[#allocation5 + $0x10] sm:$0xff]
      %v8134 = vld [vmem:[#allocation5 + $0x18] sm:$0xff]
      %v8135 = vld [vmem:[#allocation5 + $0x20] sm:$0xff]
      %v8136 = vld [vmem:[#allocation5 + $0x28] sm:$0xff]
      %v8137 = vld [vmem:[#allocation5 + $0x30] sm:$0xff]
      %v8138 = vld [vmem:[#allocation5 + $0x38] sm:$0xff]
      %v8139 = vld [vmem:[#allocation5 + $0x40] sm:$0xff]
      %v8140 = vld [vmem:[#allocation5 + $0x48] sm:$0xff]
      %v8141 = vld [vmem:[#allocation5 + $0x50] sm:$0xff]
      %v8142 = vld [vmem:[#allocation5 + $0x58] sm:$0xff]
      %v8143 = vld [vmem:[#allocation5 + $0x60] sm:$0xff]
      %v8144 = vld [vmem:[#allocation5 + $0x68] sm:$0xff]
      %v8145 = vld [vmem:[#allocation5 + $0x70] sm:$0xff]
      %v8146 = vld [vmem:[#allocation5 + $0x78] sm:$0xff]
      %v8147 = vld [vmem:[#allocation5 + $0x80] sm:$0xff]
      %v8148 = vld [vmem:[#allocation5 + $0x88] sm:$0xff]
      %v8149 = vld [vmem:[#allocation5 + $0x90] sm:$0xff]
      %v8150 = vld [vmem:[#allocation5 + $0x98] sm:$0xff]
      %v8151 = vld [vmem:[#allocation5 + $0xa0] sm:$0xff]
      %v8152 = vld [vmem:[#allocation5 + $0xa8] sm:$0xff]
      %v8153 = vld [vmem:[#allocation5 + $0xb0] sm:$0xff]
      %v8154 = vld [vmem:[#allocation5 + $0xb8] sm:$0xff]
      %v8155 = vld [vmem:[#allocation5 + $0xc0] sm:$0xff]
      %v8156 = vld [vmem:[#allocation5 + $0xc8] sm:$0xff]
      %v8157 = vld [vmem:[#allocation5 + $0xd0] sm:$0xff]
      %v8158 = vld [vmem:[#allocation5 + $0xd8] sm:$0xff]
      %v8159 = vld [vmem:[#allocation5 + $0xe0] sm:$0xff]
      %v8160 = vld [vmem:[#allocation5 + $0xe8] sm:$0xff]
      %v8161 = vld [vmem:[#allocation5 + $0xf0] sm:$0xff]
      %v8162 = vld [vmem:[#allocation5 + $0xf8] sm:$0xff]
      %v8163 = vld [vmem:[#allocation5 + $0x100] sm:$0xff]
      %v8164 = vld [vmem:[#allocation5 + $0x108] sm:$0xff]
      %v8165 = vld [vmem:[#allocation5 + $0x110] sm:$0xff]
      %v8166 = vld [vmem:[#allocation5 + $0x118] sm:$0xff]
      %v8167 = vld [vmem:[#allocation5 + $0x120] sm:$0xff]
      %v8168 = vld [vmem:[#allocation5 + $0x128] sm:$0xff]
      %v8169 = vld [vmem:[#allocation5 + $0x130] sm:$0xff]
      %v8170 = vld [vmem:[#allocation5 + $0x138] sm:$0xff]
      %v8171 = vld [vmem:[#allocation5 + $0x140] sm:$0xff]
      %v8172 = vld [vmem:[#allocation5 + $0x148] sm:$0xff]
      %v8173 = vld [vmem:[#allocation5 + $0x150] sm:$0xff]
      %v8174 = vld [vmem:[#allocation5 + $0x158] sm:$0xff]
      %v8175 = vld [vmem:[#allocation5 + $0x160] sm:$0xff]
      %v8176 = vld [vmem:[#allocation5 + $0x168] sm:$0xff]
      %v8177 = vld [vmem:[#allocation5 + $0x170] sm:$0xff]
      %v8178 = vld [vmem:[#allocation5 + $0x178] sm:$0xff]
      %v8179 = vld [vmem:[#allocation5 + $0x180] sm:$0xff]
      %v8180 = vld [vmem:[#allocation5 + $0x188] sm:$0xff]
      %v8181 = vld [vmem:[#allocation5 + $0x190] sm:$0xff]
      %v8182 = vld [vmem:[#allocation5 + $0x198] sm:$0xff]
      %v8183 = vld [vmem:[#allocation5 + $0x1a0] sm:$0xff]
      %v8184 = vld [vmem:[#allocation5 + $0x1a8] sm:$0xff]
      %v8185 = vld [vmem:[#allocation5 + $0x1b0] sm:$0xff]
      %v8186 = vld [vmem:[#allocation5 + $0x1b8] sm:$0xff]
      %v8187 = vld [vmem:[#allocation5 + $0x1c0] sm:$0xff]
      %v8188 = vld [vmem:[#allocation5 + $0x1c8] sm:$0xff]
      %v8189 = vld [vmem:[#allocation5 + $0x1d0] sm:$0xff]
      %v8190 = vld [vmem:[#allocation5 + $0x1d8] sm:$0xff]
      %v8191 = vld [vmem:[#allocation5 + $0x1e0] sm:$0xff]
      %v8192 = vld [vmem:[#allocation5 + $0x1e8] sm:$0xff]
      %v8193 = vld [vmem:[#allocation5 + $0x1f0] sm:$0xff]
      %v8194 = vld [vmem:[#allocation5 + $0x1f8] sm:$0xff]
      %v8195 = vpack.c.bf16 %v8133, %v8131
      %v8196 = vpack.c.bf16 %v8134, %v8132
      %v8197 = vpack.c.bf16 %v8137, %v8135
      %v8198 = vpack.c.bf16 %v8138, %v8136
      %v8199 = vpack.c.bf16 %v8141, %v8139
      %v8200 = vpack.c.bf16 %v8142, %v8140
      %v8201 = vpack.c.bf16 %v8145, %v8143
      %v8202 = vpack.c.bf16 %v8146, %v8144
      %v8203 = vpack.c.bf16 %v8149, %v8147
      %v8204 = vpack.c.bf16 %v8150, %v8148
      %v8205 = vpack.c.bf16 %v8153, %v8151
      %v8206 = vpack.c.bf16 %v8154, %v8152
      %v8207 = vpack.c.bf16 %v8157, %v8155
      %v8208 = vpack.c.bf16 %v8158, %v8156
      %v8209 = vpack.c.bf16 %v8161, %v8159
      %v8210 = vpack.c.bf16 %v8162, %v8160
      %v8211 = vpack.c.bf16 %v8165, %v8163
      %v8212 = vpack.c.bf16 %v8166, %v8164
      %v8213 = vpack.c.bf16 %v8169, %v8167
      %v8214 = vpack.c.bf16 %v8170, %v8168
      %v8215 = vpack.c.bf16 %v8173, %v8171
      %v8216 = vpack.c.bf16 %v8174, %v8172
      %v8217 = vpack.c.bf16 %v8177, %v8175
      %v8218 = vpack.c.bf16 %v8178, %v8176
      %v8219 = vpack.c.bf16 %v8181, %v8179
      %v8220 = vpack.c.bf16 %v8182, %v8180
      %v8221 = vpack.c.bf16 %v8185, %v8183
      %v8222 = vpack.c.bf16 %v8186, %v8184
      %v8223 = vpack.c.bf16 %v8189, %v8187
      %v8224 = vpack.c.bf16 %v8190, %v8188
      %v8225 = vpack.c.bf16 %v8193, %v8191
      %v8226 = vpack.c.bf16 %v8194, %v8192
      %v8227 = vld [vmem:[%s3] sm:$0xf]
      %v8228 = vld [vmem:[%s3 + $0x4] sm:$0xf]
      %v8229 = vld [vmem:[%s3 + $0x8] sm:$0xf]
      %v8230 = vld [vmem:[%s3 + $0xc] sm:$0xf]
      %v8231 = vld [vmem:[%s3 + $0x10] sm:$0xf]
      %v8232 = vld [vmem:[%s3 + $0x14] sm:$0xf]
      %v8233 = vld [vmem:[%s3 + $0x18] sm:$0xf]
      %v8234 = vld [vmem:[%s3 + $0x1c] sm:$0xf]
      %v8235 = vld [vmem:[%s3 + $0x20] sm:$0xf]
      %v8236 = vld [vmem:[%s3 + $0x24] sm:$0xf]
      %v8237 = vld [vmem:[%s3 + $0x28] sm:$0xf]
      %v8238 = vld [vmem:[%s3 + $0x2c] sm:$0xf]
      %v8239 = vld [vmem:[%s3 + $0x30] sm:$0xf]
      %v8240 = vld [vmem:[%s3 + $0x34] sm:$0xf]
      %v8241 = vld [vmem:[%s3 + $0x38] sm:$0xf]
      %v8242 = vld [vmem:[%s3 + $0x3c] sm:$0xf]
      %v8243 = vld [vmem:[%s3 + $0x40] sm:$0xf]
      %v8244 = vld [vmem:[%s3 + $0x44] sm:$0xf]
      %v8245 = vld [vmem:[%s4] sm:$0x1]
      %v8247 = vlaneseq
      %v8248 = vshrl.u32 %v8247, 7
      %v8249 = vsub.s32 0, %v8248
      %v8250 = vrot.slane %v8245, %v8249
      %v8270 = vunpack.c.l.b16 %v8227
      %v8271 = vunpack.c.l.b16 %v8228
      %v8272 = vunpack.c.l.b16 %v8229
      %v8273 = vunpack.c.l.b16 %v8230
      %v8274 = vunpack.c.l.b16 %v8231
      %v8275 = vunpack.c.l.b16 %v8232
      %v8276 = vunpack.c.l.b16 %v8233
      %v8277 = vunpack.c.l.b16 %v8234
      %v8278 = vunpack.c.l.b16 %v8235
      %v8279 = vunpack.c.l.b16 %v8236
      %v8280 = vunpack.c.l.b16 %v8237
      %v8281 = vunpack.c.l.b16 %v8238
      %v8282 = vunpack.c.l.b16 %v8239
      %v8283 = vunpack.c.l.b16 %v8240
      %v8284 = vunpack.c.l.b16 %v8241
      %v8285 = vunpack.c.l.b16 %v8242
      %v8286 = vunpack.c.l.b16 %v8243
      %v8287 = vunpack.c.l.b16 %v8244
      %v8288 = vpack.c.b16 %v8271, %v8270
      %v8289 = vpack.c.b16 %v8273, %v8272
      %v8290 = vpack.c.b16 %v8275, %v8274
      %v8291 = vpack.c.b16 %v8277, %v8276
      %v8292 = vpack.c.b16 %v8279, %v8278
      %v8293 = vpack.c.b16 %v8281, %v8280
      %v8294 = vpack.c.b16 %v8283, %v8282
      %v8295 = vpack.c.b16 %v8285, %v8284
      %v8296 = vpack.c.b16 %v8287, %v8286
      %vm8306 = vcmask 130048
      %v8308 = vsel %vm8306, %v8196, 0
      %v8311 = vsel %vm8306, %v8198, 0
      %v8314 = vsel %vm8306, %v8200, 0
      %v8317 = vsel %vm8306, %v8202, 0
      %v8320 = vsel %vm8306, %v8204, 0
      %v8323 = vsel %vm8306, %v8206, 0
      %v8326 = vsel %vm8306, %v8208, 0
      %v8329 = vsel %vm8306, %v8210, 0
      %v8332 = vsel %vm8306, %v8212, 0
      %v8335 = vsel %vm8306, %v8214, 0
      %v8338 = vsel %vm8306, %v8216, 0
      %v8341 = vsel %vm8306, %v8218, 0
      %v8344 = vsel %vm8306, %v8220, 0
      %v8347 = vsel %vm8306, %v8222, 0
      %v8350 = vsel %vm8306, %v8224, 0
      %v8353 = vsel %vm8306, %v8226, 0
      %8355 = vmatprep.subr.bf16.mxu0 0
      %8356 = vmatpush1.bf16.msra.mxu0 %v8288
      %8357 = vmatprep.subr.bf16.mxu0 0
      %8358 = vmatpush1.bf16.msra.mxu0 %v8289
      %8359 = vmatprep.subr.bf16.mxu0 0
      %8360 = vmatpush1.bf16.msra.mxu0 %v8290
      %8361 = vmatprep.subr.bf16.mxu0 0
      %8362 = vmatpush1.bf16.msra.mxu0 %v8291
      %8363 = vmatprep.subr.bf16.mxu0 0
      %8364 = vmatpush1.bf16.msra.mxu0 %v8292
      %8365 = vmatprep.subr.bf16.mxu0 0
      %8366 = vmatpush1.bf16.msra.mxu0 %v8293
      %8367 = vmatprep.subr.bf16.mxu0 0
      %8368 = vmatpush1.bf16.msra.mxu0 %v8294
      %8369 = vmatprep.subr.bf16.mxu0 0
      %8370 = vmatpush1.bf16.msra.mxu0 %v8295
      %8371 = vmatprep.subr.bf16.mxu0 0
      %8372 = vmatpush1.bf16.msra.mxu0 %v8296
      %8373 = vmatprep.subr.bf16.mxu0 0
      %8374 = vmatpush1.bf16.msra.mxu0 0
      %8375 = vmatprep.subr.bf16.mxu0 0
      %8376 = vmatpush1.bf16.msra.mxu0 0
      %8377 = vmatprep.subr.bf16.mxu0 0
      %8378 = vmatpush1.bf16.msra.mxu0 0
      %8379 = vmatprep.subr.bf16.mxu0 0
      %8380 = vmatpush1.bf16.msra.mxu0 0
      %8381 = vmatprep.subr.bf16.mxu0 0
      %8382 = vmatpush1.bf16.msra.mxu0 0
      %8383 = vmatprep.subr.bf16.mxu0 0
      %8384 = vmatpush1.bf16.msra.mxu0 0
      %8385 = vmatprep.subr.bf16.mxu0 0
      %8386 = vmatpush1.bf16.msra.mxu0 0
      %8387 = vmatprep.mubr.bf16.mxu0 %v8308
      %8388 = vmatmul.mubr.bf16.gmra.mrb[0].mxu0 %v8195
      %v8389 = vpop.f32.mrb[0].mxu0
      %v8390 = vadd.f32 %v8250, %v8389
      %v8391 = vpop.f32.mrb[0].mxu0
      %v8392 = vpop.f32.mrb[0].mxu0
      %v8393 = vadd.f32 %v8250, %v8392
      %v8394 = vpop.f32.mrb[0].mxu0
      %8395 = vmatprep.mubr.bf16.mxu0 %v8311
      %8396 = vmatmul.mubr.bf16.gmra.mrb[0].mxu0 %v8197
      %v8397 = vpop.f32.mrb[0].mxu0
      %v8398 = vadd.f32 %v8250, %v8397
      %v8399 = vpop.f32.mrb[0].mxu0
      %v8400 = vpop.f32.mrb[0].mxu0
      %v8401 = vadd.f32 %v8250, %v8400
      %v8402 = vpop.f32.mrb[0].mxu0
      %8403 = vmatprep.mubr.bf16.mxu0 %v8314
      %8404 = vmatmul.mubr.bf16.gmra.mrb[0].mxu0 %v8199
      %v8405 = vpop.f32.mrb[0].mxu0
      %v8406 = vadd.f32 %v8250, %v8405
      %v8407 = vpop.f32.mrb[0].mxu0
      %v8408 = vpop.f32.mrb[0].mxu0
      %v8409 = vadd.f32 %v8250, %v8408
      %v8410 = vpop.f32.mrb[0].mxu0
      %8411 = vmatprep.mubr.bf16.mxu0 %v8317
      %8412 = vmatmul.mubr.bf16.gmra.mrb[0].mxu0 %v8201
      %v8413 = vpop.f32.mrb[0].mxu0
      %v8414 = vadd.f32 %v8250, %v8413
      %v8415 = vpop.f32.mrb[0].mxu0
      %v8416 = vpop.f32.mrb[0].mxu0
      %v8417 = vadd.f32 %v8250, %v8416
      %v8418 = vpop.f32.mrb[0].mxu0
      %8419 = vmatprep.mubr.bf16.mxu0 %v8320
      %8420 = vmatmul.mubr.bf16.gmra.mrb[0].mxu0 %v8203
      %v8421 = vpop.f32.mrb[0].mxu0
      %v8422 = vadd.f32 %v8250, %v8421
      %v8423 = vpop.f32.mrb[0].mxu0
      %v8424 = vpop.f32.mrb[0].mxu0
      %v8425 = vadd.f32 %v8250, %v8424
      %v8426 = vpop.f32.mrb[0].mxu0
      %8427 = vmatprep.mubr.bf16.mxu0 %v8323
      %8428 = vmatmul.mubr.bf16.gmra.mrb[0].mxu0 %v8205
      %v8429 = vpop.f32.mrb[0].mxu0
      %v8430 = vadd.f32 %v8250, %v8429
      %v8431 = vpop.f32.mrb[0].mxu0
      %v8432 = vpop.f32.mrb[0].mxu0
      %v8433 = vadd.f32 %v8250, %v8432
      %v8434 = vpop.f32.mrb[0].mxu0
      %8435 = vmatprep.mubr.bf16.mxu0 %v8326
      %8436 = vmatmul.mubr.bf16.gmra.mrb[0].mxu0 %v8207
      %v8437 = vpop.f32.mrb[0].mxu0
      %v8438 = vadd.f32 %v8250, %v8437
      %v8439 = vpop.f32.mrb[0].mxu0
      %v8440 = vpop.f32.mrb[0].mxu0
      %v8441 = vadd.f32 %v8250, %v8440
      %v8442 = vpop.f32.mrb[0].mxu0
      %8443 = vmatprep.mubr.bf16.mxu0 %v8329
      %8444 = vmatmul.mubr.bf16.gmra.mrb[0].mxu0 %v8209
      %v8445 = vpop.f32.mrb[0].mxu0
      %v8446 = vadd.f32 %v8250, %v8445
      %v8447 = vpop.f32.mrb[0].mxu0
      %v8448 = vpop.f32.mrb[0].mxu0
      %v8449 = vadd.f32 %v8250, %v8448
      %v8450 = vpop.f32.mrb[0].mxu0
      %8451 = vmatprep.mubr.bf16.mxu0 %v8332
      %8452 = vmatmul.mubr.bf16.gmra.mrb[0].mxu0 %v8211
      %v8453 = vpop.f32.mrb[0].mxu0
      %v8454 = vadd.f32 %v8250, %v8453
      %v8455 = vpop.f32.mrb[0].mxu0
      %v8456 = vpop.f32.mrb[0].mxu0
      %v8457 = vadd.f32 %v8250, %v8456
      %v8458 = vpop.f32.mrb[0].mxu0
      %8459 = vmatprep.mubr.bf16.mxu0 %v8335
      %8460 = vmatmul.mubr.bf16.gmra.mrb[0].mxu0 %v8213
      %v8461 = vpop.f32.mrb[0].mxu0
      %v8462 = vadd.f32 %v8250, %v8461
      %v8463 = vpop.f32.mrb[0].mxu0
      %v8464 = vpop.f32.mrb[0].mxu0
      %v8465 = vadd.f32 %v8250, %v8464
      %v8466 = vpop.f32.mrb[0].mxu0
      %8467 = vmatprep.mubr.bf16.mxu0 %v8338
      %8468 = vmatmul.mubr.bf16.gmra.mrb[0].mxu0 %v8215
      %v8469 = vpop.f32.mrb[0].mxu0
      %v8470 = vadd.f32 %v8250, %v8469
      %v8471 = vpop.f32.mrb[0].mxu0
      %v8472 = vpop.f32.mrb[0].mxu0
      %v8473 = vadd.f32 %v8250, %v8472
      %v8474 = vpop.f32.mrb[0].mxu0
      %8475 = vmatprep.mubr.bf16.mxu0 %v8341
      %8476 = vmatmul.mubr.bf16.gmra.mrb[0].mxu0 %v8217
      %v8477 = vpop.f32.mrb[0].mxu0
      %v8478 = vadd.f32 %v8250, %v8477
      %v8479 = vpop.f32.mrb[0].mxu0
      %v8480 = vpop.f32.mrb[0].mxu0
      %v8481 = vadd.f32 %v8250, %v8480
      %v8482 = vpop.f32.mrb[0].mxu0
      %8483 = vmatprep.mubr.bf16.mxu0 %v8344
      %8484 = vmatmul.mubr.bf16.gmra.mrb[0].mxu0 %v8219
      %v8485 = vpop.f32.mrb[0].mxu0
      %v8486 = vadd.f32 %v8250, %v8485
      %v8487 = vpop.f32.mrb[0].mxu0
      %v8488 = vpop.f32.mrb[0].mxu0
      %v8489 = vadd.f32 %v8250, %v8488
      %v8490 = vpop.f32.mrb[0].mxu0
      %8491 = vmatprep.mubr.bf16.mxu0 %v8347
      %8492 = vmatmul.mubr.bf16.gmra.mrb[0].mxu0 %v8221
      %v8493 = vpop.f32.mrb[0].mxu0
      %v8494 = vadd.f32 %v8250, %v8493
      %v8495 = vpop.f32.mrb[0].mxu0
      %v8496 = vpop.f32.mrb[0].mxu0
      %v8497 = vadd.f32 %v8250, %v8496
      %v8498 = vpop.f32.mrb[0].mxu0
      %8499 = vmatprep.mubr.bf16.mxu0 %v8350
      %8500 = vmatmul.mubr.bf16.gmra.mrb[0].mxu0 %v8223
      %v8501 = vpop.f32.mrb[0].mxu0
      %v8502 = vadd.f32 %v8250, %v8501
      %v8503 = vpop.f32.mrb[0].mxu0
      %v8504 = vpop.f32.mrb[0].mxu0
      %v8505 = vadd.f32 %v8250, %v8504
      %v8506 = vpop.f32.mrb[0].mxu0
      %8507 = vmatprep.mubr.bf16.mxu0 %v8353
      %8508 = vmatmul.mubr.bf16.gmra.mrb[0].mxu0 %v8225
      %v8509 = vpop.f32.mrb[0].mxu0
      %v8510 = vadd.f32 %v8250, %v8509
      %v8511 = vpop.f32.mrb[0].mxu0
      %v8512 = vpop.f32.mrb[0].mxu0
      %v8513 = vadd.f32 %v8250, %v8512
      %v8514 = vpop.f32.mrb[0].mxu0
      %8515 = vdwg.mxu0
      %v8516 = vmax.f32 %v8390, 0.0
      %v8517 = vmax.f32 %v8393, 0.0
      %v8518 = vmax.f32 %v8398, 0.0
      %v8519 = vmax.f32 %v8401, 0.0
      %v8520 = vmax.f32 %v8406, 0.0
      %v8521 = vmax.f32 %v8409, 0.0
      %v8522 = vmax.f32 %v8414, 0.0
      %v8523 = vmax.f32 %v8417, 0.0
      %v8524 = vmax.f32 %v8422, 0.0
      %v8525 = vmax.f32 %v8425, 0.0
      %v8526 = vmax.f32 %v8430, 0.0
      %v8527 = vmax.f32 %v8433, 0.0
      %v8528 = vmax.f32 %v8438, 0.0
      %v8529 = vmax.f32 %v8441, 0.0
      %v8530 = vmax.f32 %v8446, 0.0
      %v8531 = vmax.f32 %v8449, 0.0
      %v8532 = vmax.f32 %v8454, 0.0
      %v8533 = vmax.f32 %v8457, 0.0
      %v8534 = vmax.f32 %v8462, 0.0
      %v8535 = vmax.f32 %v8465, 0.0
      %v8536 = vmax.f32 %v8470, 0.0
      %v8537 = vmax.f32 %v8473, 0.0
      %v8538 = vmax.f32 %v8478, 0.0
      %v8539 = vmax.f32 %v8481, 0.0
      %v8540 = vmax.f32 %v8486, 0.0
      %v8541 = vmax.f32 %v8489, 0.0
      %v8542 = vmax.f32 %v8494, 0.0
      %v8543 = vmax.f32 %v8497, 0.0
      %v8544 = vmax.f32 %v8502, 0.0
      %v8545 = vmax.f32 %v8505, 0.0
      %v8546 = vmax.f32 %v8510, 0.0
      %v8547 = vmax.f32 %v8513, 0.0
      %8548 = vst [vmem:[%s224] sm:$0xff] %v8516
      %8549 = vst [vmem:[%s224 + $0x8] sm:$0xff] %v8517
      %8550 = vst [vmem:[%s224 + $0x10] sm:$0xff] %v8518
      %8551 = vst [vmem:[%s224 + $0x18] sm:$0xff] %v8519
      %8552 = vst [vmem:[%s224 + $0x20] sm:$0xff] %v8520
      %8553 = vst [vmem:[%s224 + $0x28] sm:$0xff] %v8521
      %8554 = vst [vmem:[%s224 + $0x30] sm:$0xff] %v8522
      %8555 = vst [vmem:[%s224 + $0x38] sm:$0xff] %v8523
      %8556 = vst [vmem:[%s224 + $0x40] sm:$0xff] %v8524
      %8557 = vst [vmem:[%s224 + $0x48] sm:$0xff] %v8525
      %8558 = vst [vmem:[%s224 + $0x50] sm:$0xff] %v8526
      %8559 = vst [vmem:[%s224 + $0x58] sm:$0xff] %v8527
      %8560 = vst [vmem:[%s224 + $0x60] sm:$0xff] %v8528
      %8561 = vst [vmem:[%s224 + $0x68] sm:$0xff] %v8529
      %8562 = vst [vmem:[%s224 + $0x70] sm:$0xff] %v8530
      %8563 = vst [vmem:[%s224 + $0x78] sm:$0xff] %v8531
      %8564 = vst [vmem:[%s224 + $0x80] sm:$0xff] %v8532
      %8565 = vst [vmem:[%s224 + $0x88] sm:$0xff] %v8533
      %8566 = vst [vmem:[%s224 + $0x90] sm:$0xff] %v8534
      %8567 = vst [vmem:[%s224 + $0x98] sm:$0xff] %v8535
      %8568 = vst [vmem:[%s224 + $0xa0] sm:$0xff] %v8536
      %8569 = vst [vmem:[%s224 + $0xa8] sm:$0xff] %v8537
      %8570 = vst [vmem:[%s224 + $0xb0] sm:$0xff] %v8538
      %8571 = vst [vmem:[%s224 + $0xb8] sm:$0xff] %v8539
      %8572 = vst [vmem:[%s224 + $0xc0] sm:$0xff] %v8540
      %8573 = vst [vmem:[%s224 + $0xc8] sm:$0xff] %v8541
      %8574 = vst [vmem:[%s224 + $0xd0] sm:$0xff] %v8542
      %8575 = vst [vmem:[%s224 + $0xd8] sm:$0xff] %v8543
      %8576 = vst [vmem:[%s224 + $0xe0] sm:$0xff] %v8544
      %8577 = vst [vmem:[%s224 + $0xe8] sm:$0xff] %v8545
      %8578 = vst [vmem:[%s224 + $0xf0] sm:$0xff] %v8546
      %8579 = vst [vmem:[%s224 + $0xf8] sm:$0xff] %v8547
      %p8580 = scmp.lt.s32.totalorder %s16, 1
      %s8581 = scalar_select %p8580, %s16, 1
      %s8582 = smul.addr %s8581, 32
      %s8583 = smul.addr %s8582, 8
      %s8584 = scalar_lea.vmem %s5, %s8583
      // Predicated region
      $region41: #{inception_forward.1} parent=39 // pred_check
        %p8585 = pneg %p144
      $region42: #{inception_forward.1} parent=39 // pred_check_branch
        %8587 = sbr.rel (%p8585) target = $region44
      $region43: #{inception_forward.1} parent=39 // pred_region
        _
      $region44: #{inception_forward.1} parent=39 // pred_fallthru
        _
    $region40: #{inception_forward.1} parent=5 // pred_fallthru
      _
    %p8588 = scmp.le.s32.totalorder 2, %s11
    // Predicated region
    $region45: #{inception_forward.1} parent=5 // pred_check
      %p8589 = pneg %p8588
    $region46: #{inception_forward.1} parent=5 // pred_check_branch
      %8591 = sbr.rel (%p8589) target = $region48
    $region47: #{inception_forward.1} parent=5 // pred_region
      %s8592 = ssub.s32 %s11, 2
      // Predicated region
      $region49: #{inception_forward.1} parent=47 // pred_check
        %p8593 = pneg %p150
      $region50: #{inception_forward.1} parent=47 // pred_check_branch
        %8595 = sbr.rel (%p8593) target = $region52
      $region51: #{inception_forward.1} parent=47 // pred_region
        %p8596 = scmp.lt.s32.totalorder %s17, 1
        %s8597 = scalar_select %p8596, %s17, 1
        %s8598 = smul.addr %s8597, 32
        %s8599 = smul.addr %s8598, 8
        %s8600 = scalar_lea.vmem %s5, %s8599
      $region52: #{inception_forward.1} parent=47 // pred_fallthru
        _
    $region48: #{inception_forward.1} parent=5 // pred_fallthru
      _
  $region6: #{inception_forward.1} parent=0 // loop_footer
    %s15 = sadd.s32 1, %s11
  $region7: #{inception_forward.1} parent=0 // loop_footer_branch
    %10 = sbr.rel target = $region3
  $region8: #{inception_forward.1} parent=0 // loop_exit
    _

</llo_original>
